<compile_context>
chip_gen: v5e
topology: v5e:2x2
jax: 0.10.0
libtpu: 0.0.40
codegen_flags: <defaults>
</compile_context>

<pallas_src>
import functools

import jax
import jax.numpy as jnp
from jax.experimental import pallas as pl
from jax.experimental.pallas import tpu as pltpu

EPS = 1e-5  # PyTorch BatchNorm2d default eps
F32 = jnp.float32
BF16 = jnp.bfloat16


def _act(y, act):
    if act == "lrelu":
        return jnp.where(y > 0, y, 0.2 * y)
    if act == "relu":
        return jnp.maximum(y, 0.0)
    if act == "tanh":
        return jnp.tanh(y)
    return y


def _bn_normalize(zs, gamma, beta):
    """Training-mode BatchNorm over the rows of all f32 blocks in `zs`."""
    count = sum(z.shape[0] for z in zs)
    mean = sum(jnp.sum(z, axis=0, keepdims=True) for z in zs) / count
    var = sum(jnp.sum(jnp.square(z - mean), axis=0, keepdims=True) for z in zs) / count
    scale = gamma * jax.lax.rsqrt(var + EPS)
    shift = beta - mean * scale
    return [z * scale + shift for z in zs]


def _full_spec(shape):
    n = len(shape)
    return pl.BlockSpec(shape, lambda i, _n=n: (0,) * _n)


_PARAMS = pltpu.CompilerParams(dimension_semantics=("arbitrary",))


# ---------------------------------------------------------------------------
# Kernels
# ---------------------------------------------------------------------------
def _down_bn_act_kernel(a_ref, w_ref, g_ref, bt_ref, o_ref, *, act):
    z = jnp.dot(a_ref[...], w_ref[...], preferred_element_type=F32)
    (z,) = _bn_normalize([z], g_ref[...], bt_ref[...])
    o_ref[...] = _act(z, act)


def _down_bias_act_kernel(a_ref, w_ref, b_ref, o_ref, *, act):
    z = jnp.dot(a_ref[...], w_ref[...], preferred_element_type=F32)
    o_ref[...] = _act(z + b_ref[...], act)


def _up_bn_act_kernel(au_ref, ad_ref, wu_ref, wd_ref, g_ref, bt_ref, o_ref, *, act):
    # Split-K: u-part and d-part of the (never materialised) skip concat.
    zs = [jnp.dot(au_ref[p], wu_ref[p], preferred_element_type=F32)
          + jnp.dot(ad_ref[p], wd_ref[p], preferred_element_type=F32)
          for p in range(4)]
    zs = _bn_normalize(zs, g_ref[...], bt_ref[...])
    # Lane-dense store: 4 parities side by side on the lane axis.
    o_ref[...] = jnp.concatenate([_act(z, act) for z in zs], axis=-1)


def _up_bias_act_kernel(au_ref, ad_ref, wu_ref, wd_ref, b_ref, o_ref, *, act):
    outs = []
    for p in range(4):
        z = (jnp.dot(au_ref[p], wu_ref[p], preferred_element_type=F32)
             + jnp.dot(ad_ref[p], wd_ref[p], preferred_element_type=F32))
        outs.append(_act(z + b_ref[...], act))
    o_ref[...] = jnp.concatenate(outs, axis=-1)


def _mid_fused_kernel(a4_ref, w4_ref, g4_ref, bt4_ref,
                      wbn_ref, bbn_ref, wu4_ref, gu_ref, btu_ref,
                      d4_ref, u4_ref, *, n):
    """down4 (conv+BN+lrelu) -> bottleneck (conv+relu) -> up4 (convT+BN+relu),
    all in one kernel.  a4 rows are ordered (oh, ow, n)."""
    z4 = jnp.dot(a4_ref[...], w4_ref[...], preferred_element_type=F32)
    (d4,) = _bn_normalize([z4], g4_ref[...], bt4_ref[...])
    d4 = _act(d4, "lrelu")
    d4_ref[...] = d4
    # Bottleneck conv (2x2 -> 1x1): only kernel taps (1..2, 1..2) touch
    # non-padded input; tap (oh+1, ow+1) multiplies d4 spatial (oh, ow),
    # i.e. rows [s*n : (s+1)*n] of the (oh, ow, n)-ordered d4.
    d4b = d4.astype(BF16)
    acc = jnp.dot(d4b[0:n, :], wbn_ref[0], preferred_element_type=F32)
    for s in range(1, 4):
        acc = acc + jnp.dot(d4b[s * n:(s + 1) * n, :], wbn_ref[s],
                            preferred_element_type=F32)
    bneck = _act(acc + bbn_ref[...], "relu").astype(BF16)
    # up4 ConvTranspose (1x1 -> 2x2): output parity (pr, pc) only uses kernel
    # tap (1+pr, 1+pc).  BN over all 4 parities, then ReLU, lane-dense store.
    zs = [jnp.dot(bneck, wu4_ref[p], preferred_element_type=F32) for p in range(4)]
    zs = _bn_normalize(zs, gu_ref[...], btu_ref[...])
    u4_ref[...] = jnp.concatenate([_act(z, "relu") for z in zs], axis=-1)


# ---------------------------------------------------------------------------
# pallas_call wrappers
# ---------------------------------------------------------------------------
def _call_down(a, w, bias, bn, act):
    M, _ = a.shape
    Cout = w.shape[1]
    a = a.astype(BF16)
    w = w.astype(BF16)
    row = lambda v: v.reshape(1, Cout).astype(F32)
    if bn is None:
        kern = functools.partial(_down_bias_act_kernel, act=act)
        args = (a, w, row(bias))
    else:
        gamma, beta = bn
        kern = functools.partial(_down_bn_act_kernel, act=act)
        args = (a, w, row(gamma), row(beta))   # pre-BN bias is a no-op: dropped
    return pl.pallas_call(
        kern,
        out_shape=jax.ShapeDtypeStruct((M, Cout), F32),
        grid=(1,),
        in_specs=[_full_spec(t.shape) for t in args],
        out_specs=_full_spec((M, Cout)),
        compiler_params=_PARAMS,
    )(*args)


def _call_up(au, ad, wu, wd, bias, bn, act):
    _, Mp, _ = au.shape
    Cout = wu.shape[2]
    au, ad, wu, wd = (t.astype(BF16) for t in (au, ad, wu, wd))
    row = lambda v: v.reshape(1, Cout).astype(F32)
    if bn is None:
        kern = functools.partial(_up_bias_act_kernel, act=act)
        args = (au, ad, wu, wd, row(bias))
    else:
        gamma, beta = bn
        kern = functools.partial(_up_bn_act_kernel, act=act)
        args = (au, ad, wu, wd, row(gamma), row(beta))
    return pl.pallas_call(
        kern,
        out_shape=jax.ShapeDtypeStruct((Mp, 4 * Cout), F32),
        grid=(1,),
        in_specs=[_full_spec(t.shape) for t in args],
        out_specs=_full_spec((Mp, 4 * Cout)),
        compiler_params=_PARAMS,
    )(*args)


# ---------------------------------------------------------------------------
# im2col helpers (cheap XLA slicing glue) and layer wrappers
# ---------------------------------------------------------------------------
def _downsample_patches(x):
    """im2col for Conv2d(k=4, s=2, p=1).  x NHWC -> (N, OH, OW, 16*Cin),
    columns ordered (kh, kw, cin)."""
    N, H, W, _ = x.shape
    OH, OW = H // 2, W // 2
    xp = jnp.pad(x, ((0, 0), (1, 1), (1, 1), (0, 0)))
    taps = [xp[:, kh:kh + 2 * OH:2, kw:kw + 2 * OW:2, :]
            for kh in range(4) for kw in range(4)]
    return jnp.concatenate(taps, axis=-1)


def _downsample_weight(w):
    """(Cout, Cin, 4, 4) -> (16*Cin, Cout), rows ordered (kh, kw, cin)."""
    Cout = w.shape[0]
    return jnp.transpose(w, (2, 3, 1, 0)).reshape(-1, Cout)


def conv_down(x, w, bias, bn, act):
    """Conv2d(k=4, s=2, p=1) [+ BN(train)] + act.  x: NHWC, w: (Cout, Cin, 4, 4)."""
    N, H, W, Cin = x.shape
    Cout = w.shape[0]
    OH, OW = H // 2, W // 2
    a = _downsample_patches(x).reshape(N * OH * OW, 16 * Cin)
    y = _call_down(a, _downsample_weight(w), bias, bn, act)
    return y.reshape(N, OH, OW, Cout)


def _upsample_patches(x):
    """Per-parity stride-1 2x2 im2col for ConvTranspose2d(k=4, s=2, p=1).
    x NHWC -> (4, N*H*W, 4*C); parity p = pr*2 + pc, columns (da, db, cin)."""
    N, H, W, C = x.shape
    xp = jnp.pad(x, ((0, 0), (1, 1), (1, 1), (0, 0)))
    planes = []
    for pr in (0, 1):
        for pc in (0, 1):
            sub = xp[:, pr:pr + H + 1, pc:pc + W + 1, :]
            taps = [sub[:, da:da + H, db:db + W, :]
                    for da in (0, 1) for db in (0, 1)]
            planes.append(jnp.concatenate(taps, axis=-1).reshape(N * H * W, 4 * C))
    return jnp.stack(planes, axis=0)


def _upsample_weight(w):
    """(Cin, Cout, 4, 4) -> (4, 4*Cin, Cout); the sub-tap (da, db) of output
    parity (pr, pc) uses kernel tap (kh, kw) = (3-pr-2*da, 3-pc-2*db)."""
    mats = []
    for pr in (0, 1):
        for pc in (0, 1):
            wt = [w[:, :, 3 - pr - 2 * da, 3 - pc - 2 * db]
                  for da in (0, 1) for db in (0, 1)]
            mats.append(jnp.concatenate(wt, axis=0))
    return jnp.stack(mats, axis=0)


def conv_up(u, d, w, bias, bn, act):
    """ConvTranspose2d(k=4, s=2, p=1) on channel-concat([u, d]) [+BN] + act.
    The concat is never materialised: K is split between the two sources and
    accumulated with two dots inside the kernel."""
    N, H, W, Cu = u.shape
    Cout = w.shape[1]
    au = _upsample_patches(u)
    ad = _upsample_patches(d)
    wu = _upsample_weight(w[:Cu])
    wd = _upsample_weight(w[Cu:])
    y = _call_up(au, ad, wu, wd, bias, bn, act)      # (N*H*W, 4*Cout) lane-dense
    y = y.reshape(N, H, W, 2, 2, Cout)
    y = jnp.transpose(y, (0, 1, 3, 2, 4, 5))         # (N, H, pr, W, pc, C)
    return y.reshape(N, 2 * H, 2 * W, Cout)


def mid_block(d3, params):
    """down4 + bottleneck + up4 fused into ONE pallas_call.  At the 32x32
    toy size d4 is 2x2 and the bottleneck 1x1, so all three layers are pure
    GEMMs and their activations stay resident in VMEM for the whole block."""
    N, H, W, Cin = d3.shape
    OH, OW = H // 2, W // 2
    assert OH == 2 and OW == 2, "fused middle block assumes a 32x32 input"

    w4, _ = params["down4"]
    g4, bt4 = params["bn_d4"]
    wbn, bbn = params["bottleneck"]
    wu4, _ = params["up4"]
    gu, btu = params["bn_u4"]
    C4, Cb, Cu = w4.shape[0], wbn.shape[0], wu4.shape[1]

    # down4 im2col, rows re-ordered to (oh, ow, n) so the in-kernel bottleneck
    # contraction only needs static row slices.
    a4 = _downsample_patches(d3)                               # (N, 2, 2, 16*Cin)
    a4 = jnp.transpose(a4, (1, 2, 0, 3)).reshape(N * 4, 16 * Cin)
    w4m = _downsample_weight(w4)                               # (16*Cin, C4)
    # Bottleneck weight per d4 spatial position s=(oh, ow): kernel tap (oh+1, ow+1).
    wbn_s = jnp.stack([wbn[:, :, s // 2 + 1, s % 2 + 1].T for s in range(4)], 0)
    # up4 weight per output parity p=(pr, pc): kernel tap (1+pr, 1+pc).
    wu4_p = jnp.stack([wu4[:, :, 1 + pr, 1 + pc]
                       for pr in (0, 1) for pc in (0, 1)], 0)

    row = lambda v, c: v.reshape(1, c).astype(F32)
    args = (a4.astype(BF16), w4m.astype(BF16), row(g4, C4), row(bt4, C4),
            wbn_s.astype(BF16), row(bbn, Cb), wu4_p.astype(BF16),
            row(gu, Cu), row(btu, Cu))
    d4_flat, u4_flat = pl.pallas_call(
        functools.partial(_mid_fused_kernel, n=N),
        out_shape=(jax.ShapeDtypeStruct((N * 4, C4), F32),
                   jax.ShapeDtypeStruct((N, 4 * Cu), F32)),
        grid=(1,),
        in_specs=[_full_spec(t.shape) for t in args],
        out_specs=(_full_spec((N * 4, C4)), _full_spec((N, 4 * Cu))),
        compiler_params=_PARAMS,
    )(*args)
    d4 = jnp.transpose(d4_flat.reshape(OH, OW, N, C4), (2, 0, 1, 3))  # NHWC
    u4 = u4_flat.reshape(N, 2, 2, Cu)                                 # NHWC
    return d4, u4


# ---------------------------------------------------------------------------
# Parameters + forward
# ---------------------------------------------------------------------------
def init_params(key, in_channels=3, out_channels=3, f=8):
    # Biases of BN-followed convs exist here (to mirror the torch module) but
    # are never fed to the kernels: training-mode BN makes them a no-op.
    def conv_p(k, cout, cin):
        k1, k2 = jax.random.split(k)
        return (jax.random.normal(k1, (cout, cin, 4, 4), jnp.float32) * 0.05,
                jax.random.normal(k2, (cout,), jnp.float32) * 0.05)

    def convT_p(k, cin, cout):
        k1, k2 = jax.random.split(k)
        return (jax.random.normal(k1, (cin, cout, 4, 4), jnp.float32) * 0.05,
                jax.random.normal(k2, (cout,), jnp.float32) * 0.05)

    def bn_p(c):  # PyTorch default init: gamma=1, beta=0
        return (jnp.ones((c,), jnp.float32), jnp.zeros((c,), jnp.float32))

    ks = jax.random.split(key, 10)
    return {
        "down1": conv_p(ks[0], f, in_channels),
        "down2": conv_p(ks[1], f * 2, f), "bn_d2": bn_p(f * 2),
        "down3": conv_p(ks[2], f * 4, f * 2), "bn_d3": bn_p(f * 4),
        "down4": conv_p(ks[3], f * 8, f * 4), "bn_d4": bn_p(f * 8),
        "bottleneck": conv_p(ks[4], f * 8, f * 8),
        "up4": convT_p(ks[5], f * 8, f * 8), "bn_u4": bn_p(f * 8),
        "up3": convT_p(ks[6], f * 8 * 2, f * 4), "bn_u3": bn_p(f * 4),
        "up2": convT_p(ks[7], f * 4 * 2, f * 2), "bn_u2": bn_p(f * 2),
        "up1": convT_p(ks[8], f * 2 * 2, f), "bn_u1": bn_p(f),
        "final": convT_p(ks[9], f * 2, out_channels),
    }


def unet_forward(params, x_nchw):
    x = jnp.transpose(x_nchw, (0, 2, 3, 1))  # NCHW -> NHWC
    d1 = conv_down(x, *params["down1"], None, "lrelu")
    d2 = conv_down(d1, *params["down2"], params["bn_d2"], "lrelu")
    d3 = conv_down(d2, *params["down3"], params["bn_d3"], "lrelu")
    d4, u4 = mid_block(d3, params)           # down4 + bottleneck + up4 fused
    u3 = conv_up(u4, d4, *params["up3"], params["bn_u3"], "relu")
    u2 = conv_up(u3, d3, *params["up2"], params["bn_u2"], "relu")
    u1 = conv_up(u2, d2, *params["up1"], params["bn_u1"], "relu")
    out = conv_up(u1, d1, *params["final"], None, "tanh")
    return jnp.transpose(out, (0, 3, 1, 2))  # NHWC -> NCHW


if __name__ == "__main__":
    key = jax.random.PRNGKey(0)
    pkey, xkey = jax.random.split(key)
    params = init_params(pkey, in_channels=3, out_channels=3, f=8)
    x = jax.random.normal(xkey, (2, 3, 32, 32), jnp.float32)  # NCHW, like PyTorch

    out = jax.jit(unet_forward)(params, x)
    out = jax.block_until_ready(out)

    assert out.shape == (2, 3, 32, 32), out.shape
    assert bool(jnp.all(jnp.isfinite(out)))
    assert bool(jnp.all(jnp.abs(out) <= 1.0))  # tanh output range
    print("KERNEL_OK")
</pallas_src>

<mosaic_0001>
module attributes {stable_mosaic.version = 11 : i64} {
  func.func @_down_bias_act_kernel(%arg0: i32, %arg1: memref<512x48xbf16, #tpu.memory_space<vmem>>, %arg2: memref<48x8xbf16, #tpu.memory_space<vmem>>, %arg3: memref<1x8xf32, #tpu.memory_space<vmem>>, %arg4: memref<512x8xf32, #tpu.memory_space<vmem>>) attributes {dimension_semantics = [#tpu.dimension_semantics<arbitrary>], iteration_bounds = array<i64: 1>, scalar_prefetch = 0 : i64, scratch_operands = 0 : i64, tpu.core_type = #tpu.core_type<tc>, window_params = [{pipeline_mode = #tpu.pipeline_mode<synchronous>, transform_indices = @transform_0, window_bounds = array<i64: 512, 48>}, {pipeline_mode = #tpu.pipeline_mode<synchronous>, transform_indices = @transform_1, window_bounds = array<i64: 48, 8>}, {pipeline_mode = #tpu.pipeline_mode<synchronous>, transform_indices = @transform_2, window_bounds = array<i64: 1, 8>}, {pipeline_mode = #tpu.pipeline_mode<synchronous>, transform_indices = @transform_3, window_bounds = array<i64: 512, 8>}]} {
    %c0 = arith.constant 0 : index
    %c0_0 = arith.constant 0 : index
    %0 = vector.load %arg1[%c0, %c0_0] : memref<512x48xbf16, #tpu.memory_space<vmem>>, vector<512x48xbf16>
    %c0_1 = arith.constant 0 : index
    %c0_2 = arith.constant 0 : index
    %1 = vector.load %arg2[%c0_1, %c0_2] : memref<48x8xbf16, #tpu.memory_space<vmem>>, vector<48x8xbf16>
    %cst = arith.constant dense<0.000000e+00> : vector<512x8xf32>
    %2 = tpu.matmul %0, %1, %cst {dimension_numbers = #tpu.dot_dimension_numbers<[1], [0], [0], [1], [0, 0, 1, 1], [], []>} : vector<512x48xbf16>, vector<48x8xbf16>, vector<512x8xf32> -> vector<512x8xf32>
    %c0_3 = arith.constant 0 : index
    %c0_4 = arith.constant 0 : index
    %3 = vector.load %arg3[%c0_3, %c0_4] : memref<1x8xf32, #tpu.memory_space<vmem>>, vector<1x8xf32>
    %4 = vector.broadcast %3 : vector<1x8xf32> to vector<512x8xf32>
    %5 = arith.addf %2, %4 : vector<512x8xf32>
    %cst_5 = arith.constant 0.000000e+00 : f32
    %6 = vector.broadcast %cst_5 : f32 to vector<512x8xf32>
    %7 = arith.cmpf ogt, %5, %6 : vector<512x8xf32>
    %cst_6 = arith.constant 2.000000e-01 : f32
    %8 = vector.broadcast %cst_6 : f32 to vector<512x8xf32>
    %9 = arith.mulf %8, %5 : vector<512x8xf32>
    %10 = arith.select %7, %5, %9 : vector<512x8xi1>, vector<512x8xf32>
    %c0_7 = arith.constant 0 : index
    %c0_8 = arith.constant 0 : index
    %11 = vector.load %arg4[%c0_7, %c0_8] : memref<512x8xf32, #tpu.memory_space<vmem>>, vector<512x8xf32>
    tpu.vector_store %arg4[%c0_7, %c0_8], %10 {strides = array<i32>} : memref<512x8xf32, #tpu.memory_space<vmem>>, vector<512x8xf32>,
    return
  }
  func.func @transform_0(%arg0: i32) -> (i32, i32) {
    %c0_i32 = arith.constant 0 : i32
    %c0_i32_0 = arith.constant 0 : i32
    %c0_i32_1 = arith.constant 0 : i32
    return %c0_i32, %c0_i32_0 : i32, i32
  }
  func.func @transform_1(%arg0: i32) -> (i32, i32) {
    %c0_i32 = arith.constant 0 : i32
    %c0_i32_0 = arith.constant 0 : i32
    %c0_i32_1 = arith.constant 0 : i32
    return %c0_i32, %c0_i32_0 : i32, i32
  }
  func.func @transform_2(%arg0: i32) -> (i32, i32) {
    %c0_i32 = arith.constant 0 : i32
    %c0_i32_0 = arith.constant 0 : i32
    %c0_i32_1 = arith.constant 0 : i32
    return %c0_i32, %c0_i32_0 : i32, i32
  }
  func.func @transform_3(%arg0: i32) -> (i32, i32) {
    %c0_i32 = arith.constant 0 : i32
    %c0_i32_0 = arith.constant 0 : i32
    %c0_i32_1 = arith.constant 0 : i32
    return %c0_i32, %c0_i32_0 : i32, i32
  }
}

module attributes {stable_mosaic.version = 11 : i64} {
  func.func @_down_bn_act_kernel(%arg0: i32, %arg1: memref<128x128xbf16, #tpu.memory_space<vmem>>, %arg2: memref<128x16xbf16, #tpu.memory_space<vmem>>, %arg3: memref<1x16xf32, #tpu.memory_space<vmem>>, %arg4: memref<1x16xf32, #tpu.memory_space<vmem>>, %arg5: memref<128x16xf32, #tpu.memory_space<vmem>>) attributes {dimension_semantics = [#tpu.dimension_semantics<arbitrary>], iteration_bounds = array<i64: 1>, scalar_prefetch = 0 : i64, scratch_operands = 0 : i64, tpu.core_type = #tpu.core_type<tc>, window_params = [{pipeline_mode = #tpu.pipeline_mode<synchronous>, transform_indices = @transform_0, window_bounds = array<i64: 128, 128>}, {pipeline_mode = #tpu.pipeline_mode<synchronous>, transform_indices = @transform_1, window_bounds = array<i64: 128, 16>}, {pipeline_mode = #tpu.pipeline_mode<synchronous>, transform_indices = @transform_2, window_bounds = array<i64: 1, 16>}, {pipeline_mode = #tpu.pipeline_mode<synchronous>, transform_indices = @transform_3, window_bounds = array<i64: 1, 16>}, {pipeline_mode = #tpu.pipeline_mode<synchronous>, transform_indices = @transform_4, window_bounds = array<i64: 128, 16>}]} {
    %c0 = arith.constant 0 : index
    %c0_0 = arith.constant 0 : index
    %0 = vector.load %arg1[%c0, %c0_0] : memref<128x128xbf16, #tpu.memory_space<vmem>>, vector<128x128xbf16>
    %c0_1 = arith.constant 0 : index
    %c0_2 = arith.constant 0 : index
    %1 = vector.load %arg2[%c0_1, %c0_2] : memref<128x16xbf16, #tpu.memory_space<vmem>>, vector<128x16xbf16>
    %cst = arith.constant dense<0.000000e+00> : vector<128x16xf32>
    %2 = tpu.matmul %0, %1, %cst {dimension_numbers = #tpu.dot_dimension_numbers<[1], [0], [0], [1], [0, 0, 1, 1], [], []>} : vector<128x128xbf16>, vector<128x16xbf16>, vector<128x16xf32> -> vector<128x16xf32>
    %c0_3 = arith.constant 0 : index
    %c0_4 = arith.constant 0 : index
    %3 = vector.load %arg3[%c0_3, %c0_4] : memref<1x16xf32, #tpu.memory_space<vmem>>, vector<1x16xf32>
    %c0_5 = arith.constant 0 : index
    %c0_6 = arith.constant 0 : index
    %4 = vector.load %arg4[%c0_5, %c0_6] : memref<1x16xf32, #tpu.memory_space<vmem>>, vector<1x16xf32>
    %cst_7 = arith.constant dense<0.000000e+00> : vector<16xf32>
    %5 = vector.multi_reduction <add>, %2, %cst_7 [0] : vector<128x16xf32> to vector<16xf32>
    %6 = vector.shape_cast %5 : vector<16xf32> to vector<1x16xf32>
    %cst_8 = arith.constant 0.000000e+00 : f32
    %7 = vector.broadcast %cst_8 : f32 to vector<1x16xf32>
    %8 = arith.addf %7, %6 : vector<1x16xf32>
    %cst_9 = arith.constant 1.280000e+02 : f32
    %9 = vector.broadcast %cst_9 : f32 to vector<1x16xf32>
    %10 = arith.divf %8, %9 : vector<1x16xf32>
    %11 = vector.broadcast %10 : vector<1x16xf32> to vector<128x16xf32>
    %12 = arith.subf %2, %11 : vector<128x16xf32>
    %13 = arith.mulf %12, %12 : vector<128x16xf32>
    %cst_10 = arith.constant dense<0.000000e+00> : vector<16xf32>
    %14 = vector.multi_reduction <add>, %13, %cst_10 [0] : vector<128x16xf32> to vector<16xf32>
    %15 = vector.shape_cast %14 : vector<16xf32> to vector<1x16xf32>
    %cst_11 = arith.constant 0.000000e+00 : f32
    %16 = vector.broadcast %cst_11 : f32 to vector<1x16xf32>
    %17 = arith.addf %16, %15 : vector<1x16xf32>
    %cst_12 = arith.constant 1.280000e+02 : f32
    %18 = vector.broadcast %cst_12 : f32 to vector<1x16xf32>
    %19 = arith.divf %17, %18 : vector<1x16xf32>
    %cst_13 = arith.constant 9.99999974E-6 : f32
    %20 = vector.broadcast %cst_13 : f32 to vector<1x16xf32>
    %21 = arith.addf %19, %20 : vector<1x16xf32>
    %22 = math.rsqrt %21 : vector<1x16xf32>
    %23 = arith.mulf %3, %22 : vector<1x16xf32>
    %24 = arith.mulf %10, %23 : vector<1x16xf32>
    %25 = arith.subf %4, %24 : vector<1x16xf32>
    %26 = vector.broadcast %23 : vector<1x16xf32> to vector<128x16xf32>
    %27 = arith.mulf %2, %26 : vector<128x16xf32>
    %28 = vector.broadcast %25 : vector<1x16xf32> to vector<128x16xf32>
    %29 = arith.addf %27, %28 : vector<128x16xf32>
    %cst_14 = arith.constant 0.000000e+00 : f32
    %30 = vector.broadcast %cst_14 : f32 to vector<128x16xf32>
    %31 = arith.cmpf ogt, %29, %30 : vector<128x16xf32>
    %cst_15 = arith.constant 2.000000e-01 : f32
    %32 = vector.broadcast %cst_15 : f32 to vector<128x16xf32>
    %33 = arith.mulf %32, %29 : vector<128x16xf32>
    %34 = arith.select %31, %29, %33 : vector<128x16xi1>, vector<128x16xf32>
    %c0_16 = arith.constant 0 : index
    %c0_17 = arith.constant 0 : index
    %35 = vector.load %arg5[%c0_16, %c0_17] : memref<128x16xf32, #tpu.memory_space<vmem>>, vector<128x16xf32>
    tpu.vector_store %arg5[%c0_16, %c0_17], %34 {strides = array<i32>} : memref<128x16xf32, #tpu.memory_space<vmem>>, vector<128x16xf32>,
    return
  }
  func.func @transform_0(%arg0: i32) -> (i32, i32) {
    %c0_i32 = arith.constant 0 : i32
    %c0_i32_0 = arith.constant 0 : i32
    %c0_i32_1 = arith.constant 0 : i32
    return %c0_i32, %c0_i32_0 : i32, i32
  }
  func.func @transform_1(%arg0: i32) -> (i32, i32) {
    %c0_i32 = arith.constant 0 : i32
    %c0_i32_0 = arith.constant 0 : i32
    %c0_i32_1 = arith.constant 0 : i32
    return %c0_i32, %c0_i32_0 : i32, i32
  }
  func.func @transform_2(%arg0: i32) -> (i32, i32) {
    %c0_i32 = arith.constant 0 : i32
    %c0_i32_0 = arith.constant 0 : i32
    %c0_i32_1 = arith.constant 0 : i32
    return %c0_i32, %c0_i32_0 : i32, i32
  }
  func.func @transform_3(%arg0: i32) -> (i32, i32) {
    %c0_i32 = arith.constant 0 : i32
    %c0_i32_0 = arith.constant 0 : i32
    %c0_i32_1 = arith.constant 0 : i32
    return %c0_i32, %c0_i32_0 : i32, i32
  }
  func.func @transform_4(%arg0: i32) -> (i32, i32) {
    %c0_i32 = arith.constant 0 : i32
    %c0_i32_0 = arith.constant 0 : i32
    %c0_i32_1 = arith.constant 0 : i32
    return %c0_i32, %c0_i32_0 : i32, i32
  }
}

module attributes {stable_mosaic.version = 11 : i64} {
  func.func @_down_bn_act_kernel(%arg0: i32, %arg1: memref<32x256xbf16, #tpu.memory_space<vmem>>, %arg2: memref<256x32xbf16, #tpu.memory_space<vmem>>, %arg3: memref<1x32xf32, #tpu.memory_space<vmem>>, %arg4: memref<1x32xf32, #tpu.memory_space<vmem>>, %arg5: memref<32x32xf32, #tpu.memory_space<vmem>>) attributes {dimension_semantics = [#tpu.dimension_semantics<arbitrary>], iteration_bounds = array<i64: 1>, scalar_prefetch = 0 : i64, scratch_operands = 0 : i64, tpu.core_type = #tpu.core_type<tc>, window_params = [{pipeline_mode = #tpu.pipeline_mode<synchronous>, transform_indices = @transform_0, window_bounds = array<i64: 32, 256>}, {pipeline_mode = #tpu.pipeline_mode<synchronous>, transform_indices = @transform_1, window_bounds = array<i64: 256, 32>}, {pipeline_mode = #tpu.pipeline_mode<synchronous>, transform_indices = @transform_2, window_bounds = array<i64: 1, 32>}, {pipeline_mode = #tpu.pipeline_mode<synchronous>, transform_indices = @transform_3, window_bounds = array<i64: 1, 32>}, {pipeline_mode = #tpu.pipeline_mode<synchronous>, transform_indices = @transform_4, window_bounds = array<i64: 32, 32>}]} {
    %c0 = arith.constant 0 : index
    %c0_0 = arith.constant 0 : index
    %0 = vector.load %arg1[%c0, %c0_0] : memref<32x256xbf16, #tpu.memory_space<vmem>>, vector<32x256xbf16>
    %c0_1 = arith.constant 0 : index
    %c0_2 = arith.constant 0 : index
    %1 = vector.load %arg2[%c0_1, %c0_2] : memref<256x32xbf16, #tpu.memory_space<vmem>>, vector<256x32xbf16>
    %cst = arith.constant dense<0.000000e+00> : vector<32x32xf32>
    %2 = tpu.matmul %0, %1, %cst {dimension_numbers = #tpu.dot_dimension_numbers<[1], [0], [0], [1], [0, 0, 1, 1], [], []>} : vector<32x256xbf16>, vector<256x32xbf16>, vector<32x32xf32> -> vector<32x32xf32>
    %c0_3 = arith.constant 0 : index
    %c0_4 = arith.constant 0 : index
    %3 = vector.load %arg3[%c0_3, %c0_4] : memref<1x32xf32, #tpu.memory_space<vmem>>, vector<1x32xf32>
    %c0_5 = arith.constant 0 : index
    %c0_6 = arith.constant 0 : index
    %4 = vector.load %arg4[%c0_5, %c0_6] : memref<1x32xf32, #tpu.memory_space<vmem>>, vector<1x32xf32>
    %cst_7 = arith.constant dense<0.000000e+00> : vector<32xf32>
    %5 = vector.multi_reduction <add>, %2, %cst_7 [0] : vector<32x32xf32> to vector<32xf32>
    %6 = vector.shape_cast %5 : vector<32xf32> to vector<1x32xf32>
    %cst_8 = arith.constant 0.000000e+00 : f32
    %7 = vector.broadcast %cst_8 : f32 to vector<1x32xf32>
    %8 = arith.addf %7, %6 : vector<1x32xf32>
    %cst_9 = arith.constant 3.200000e+01 : f32
    %9 = vector.broadcast %cst_9 : f32 to vector<1x32xf32>
    %10 = arith.divf %8, %9 : vector<1x32xf32>
    %11 = vector.broadcast %10 : vector<1x32xf32> to vector<32x32xf32>
    %12 = arith.subf %2, %11 : vector<32x32xf32>
    %13 = arith.mulf %12, %12 : vector<32x32xf32>
    %cst_10 = arith.constant dense<0.000000e+00> : vector<32xf32>
    %14 = vector.multi_reduction <add>, %13, %cst_10 [0] : vector<32x32xf32> to vector<32xf32>
    %15 = vector.shape_cast %14 : vector<32xf32> to vector<1x32xf32>
    %cst_11 = arith.constant 0.000000e+00 : f32
    %16 = vector.broadcast %cst_11 : f32 to vector<1x32xf32>
    %17 = arith.addf %16, %15 : vector<1x32xf32>
    %cst_12 = arith.constant 3.200000e+01 : f32
    %18 = vector.broadcast %cst_12 : f32 to vector<1x32xf32>
    %19 = arith.divf %17, %18 : vector<1x32xf32>
    %cst_13 = arith.constant 9.99999974E-6 : f32
    %20 = vector.broadcast %cst_13 : f32 to vector<1x32xf32>
    %21 = arith.addf %19, %20 : vector<1x32xf32>
    %22 = math.rsqrt %21 : vector<1x32xf32>
    %23 = arith.mulf %3, %22 : vector<1x32xf32>
    %24 = arith.mulf %10, %23 : vector<1x32xf32>
    %25 = arith.subf %4, %24 : vector<1x32xf32>
    %26 = vector.broadcast %23 : vector<1x32xf32> to vector<32x32xf32>
    %27 = arith.mulf %2, %26 : vector<32x32xf32>
    %28 = vector.broadcast %25 : vector<1x32xf32> to vector<32x32xf32>
    %29 = arith.addf %27, %28 : vector<32x32xf32>
    %cst_14 = arith.constant 0.000000e+00 : f32
    %30 = vector.broadcast %cst_14 : f32 to vector<32x32xf32>
    %31 = arith.cmpf ogt, %29, %30 : vector<32x32xf32>
    %cst_15 = arith.constant 2.000000e-01 : f32
    %32 = vector.broadcast %cst_15 : f32 to vector<32x32xf32>
    %33 = arith.mulf %32, %29 : vector<32x32xf32>
    %34 = arith.select %31, %29, %33 : vector<32x32xi1>, vector<32x32xf32>
    %c0_16 = arith.constant 0 : index
    %c0_17 = arith.constant 0 : index
    %35 = vector.load %arg5[%c0_16, %c0_17] : memref<32x32xf32, #tpu.memory_space<vmem>>, vector<32x32xf32>
    tpu.vector_store %arg5[%c0_16, %c0_17], %34 {strides = array<i32>} : memref<32x32xf32, #tpu.memory_space<vmem>>, vector<32x32xf32>,
    return
  }
  func.func @transform_0(%arg0: i32) -> (i32, i32) {
    %c0_i32 = arith.constant 0 : i32
    %c0_i32_0 = arith.constant 0 : i32
    %c0_i32_1 = arith.constant 0 : i32
    return %c0_i32, %c0_i32_0 : i32, i32
  }
  func.func @transform_1(%arg0: i32) -> (i32, i32) {
    %c0_i32 = arith.constant 0 : i32
    %c0_i32_0 = arith.constant 0 : i32
    %c0_i32_1 = arith.constant 0 : i32
    return %c0_i32, %c0_i32_0 : i32, i32
  }
  func.func @transform_2(%arg0: i32) -> (i32, i32) {
    %c0_i32 = arith.constant 0 : i32
    %c0_i32_0 = arith.constant 0 : i32
    %c0_i32_1 = arith.constant 0 : i32
    return %c0_i32, %c0_i32_0 : i32, i32
  }
  func.func @transform_3(%arg0: i32) -> (i32, i32) {
    %c0_i32 = arith.constant 0 : i32
    %c0_i32_0 = arith.constant 0 : i32
    %c0_i32_1 = arith.constant 0 : i32
    return %c0_i32, %c0_i32_0 : i32, i32
  }
  func.func @transform_4(%arg0: i32) -> (i32, i32) {
    %c0_i32 = arith.constant 0 : i32
    %c0_i32_0 = arith.constant 0 : i32
    %c0_i32_1 = arith.constant 0 : i32
    return %c0_i32, %c0_i32_0 : i32, i32
  }
}

module attributes {stable_mosaic.version = 11 : i64} {
  func.func @_mid_fused_kernel(%arg0: i32, %arg1: memref<8x512xbf16, #tpu.memory_space<vmem>>, %arg2: memref<512x64xbf16, #tpu.memory_space<vmem>>, %arg3: memref<1x64xf32, #tpu.memory_space<vmem>>, %arg4: memref<1x64xf32, #tpu.memory_space<vmem>>, %arg5: memref<4x64x64xbf16, #tpu.memory_space<vmem>>, %arg6: memref<1x64xf32, #tpu.memory_space<vmem>>, %arg7: memref<4x64x64xbf16, #tpu.memory_space<vmem>>, %arg8: memref<1x64xf32, #tpu.memory_space<vmem>>, %arg9: memref<1x64xf32, #tpu.memory_space<vmem>>, %arg10: memref<8x64xf32, #tpu.memory_space<vmem>>, %arg11: memref<2x256xf32, #tpu.memory_space<vmem>>) attributes {dimension_semantics = [#tpu.dimension_semantics<arbitrary>], iteration_bounds = array<i64: 1>, scalar_prefetch = 0 : i64, scratch_operands = 0 : i64, tpu.core_type = #tpu.core_type<tc>, window_params = [{pipeline_mode = #tpu.pipeline_mode<synchronous>, transform_indices = @transform_0, window_bounds = array<i64: 8, 512>}, {pipeline_mode = #tpu.pipeline_mode<synchronous>, transform_indices = @transform_1, window_bounds = array<i64: 512, 64>}, {pipeline_mode = #tpu.pipeline_mode<synchronous>, transform_indices = @transform_2, window_bounds = array<i64: 1, 64>}, {pipeline_mode = #tpu.pipeline_mode<synchronous>, transform_indices = @transform_3, window_bounds = array<i64: 1, 64>}, {pipeline_mode = #tpu.pipeline_mode<synchronous>, transform_indices = @transform_4, window_bounds = array<i64: 4, 64, 64>}, {pipeline_mode = #tpu.pipeline_mode<synchronous>, transform_indices = @transform_5, window_bounds = array<i64: 1, 64>}, {pipeline_mode = #tpu.pipeline_mode<synchronous>, transform_indices = @transform_6, window_bounds = array<i64: 4, 64, 64>}, {pipeline_mode = #tpu.pipeline_mode<synchronous>, transform_indices = @transform_7, window_bounds = array<i64: 1, 64>}, {pipeline_mode = #tpu.pipeline_mode<synchronous>, transform_indices = @transform_8, window_bounds = array<i64: 1, 64>}, {pipeline_mode = #tpu.pipeline_mode<synchronous>, transform_indices = @transform_9, window_bounds = array<i64: 8, 64>}, {pipeline_mode = #tpu.pipeline_mode<synchronous>, transform_indices = @transform_10, window_bounds = array<i64: 2, 256>}]} {
    %c0 = arith.constant 0 : index
    %c0_0 = arith.constant 0 : index
    %0 = vector.load %arg1[%c0, %c0_0] : memref<8x512xbf16, #tpu.memory_space<vmem>>, vector<8x512xbf16>
    %c0_1 = arith.constant 0 : index
    %c0_2 = arith.constant 0 : index
    %1 = vector.load %arg2[%c0_1, %c0_2] : memref<512x64xbf16, #tpu.memory_space<vmem>>, vector<512x64xbf16>
    %cst = arith.constant dense<0.000000e+00> : vector<8x64xf32>
    %2 = tpu.matmul %0, %1, %cst {dimension_numbers = #tpu.dot_dimension_numbers<[1], [0], [0], [1], [0, 0, 1, 1], [], []>} : vector<8x512xbf16>, vector<512x64xbf16>, vector<8x64xf32> -> vector<8x64xf32>
    %c0_3 = arith.constant 0 : index
    %c0_4 = arith.constant 0 : index
    %3 = vector.load %arg3[%c0_3, %c0_4] : memref<1x64xf32, #tpu.memory_space<vmem>>, vector<1x64xf32>
    %c0_5 = arith.constant 0 : index
    %c0_6 = arith.constant 0 : index
    %4 = vector.load %arg4[%c0_5, %c0_6] : memref<1x64xf32, #tpu.memory_space<vmem>>, vector<1x64xf32>
    %cst_7 = arith.constant dense<0.000000e+00> : vector<64xf32>
    %5 = vector.multi_reduction <add>, %2, %cst_7 [0] : vector<8x64xf32> to vector<64xf32>
    %6 = vector.shape_cast %5 : vector<64xf32> to vector<1x64xf32>
    %cst_8 = arith.constant 0.000000e+00 : f32
    %7 = vector.broadcast %cst_8 : f32 to vector<1x64xf32>
    %8 = arith.addf %7, %6 : vector<1x64xf32>
    %cst_9 = arith.constant 8.000000e+00 : f32
    %9 = vector.broadcast %cst_9 : f32 to vector<1x64xf32>
    %10 = arith.divf %8, %9 : vector<1x64xf32>
    %11 = vector.broadcast %10 : vector<1x64xf32> to vector<8x64xf32>
    %12 = arith.subf %2, %11 : vector<8x64xf32>
    %13 = arith.mulf %12, %12 : vector<8x64xf32>
    %cst_10 = arith.constant dense<0.000000e+00> : vector<64xf32>
    %14 = vector.multi_reduction <add>, %13, %cst_10 [0] : vector<8x64xf32> to vector<64xf32>
    %15 = vector.shape_cast %14 : vector<64xf32> to vector<1x64xf32>
    %cst_11 = arith.constant 0.000000e+00 : f32
    %16 = vector.broadcast %cst_11 : f32 to vector<1x64xf32>
    %17 = arith.addf %16, %15 : vector<1x64xf32>
    %cst_12 = arith.constant 8.000000e+00 : f32
    %18 = vector.broadcast %cst_12 : f32 to vector<1x64xf32>
    %19 = arith.divf %17, %18 : vector<1x64xf32>
    %cst_13 = arith.constant 9.99999974E-6 : f32
    %20 = vector.broadcast %cst_13 : f32 to vector<1x64xf32>
    %21 = arith.addf %19, %20 : vector<1x64xf32>
    %22 = math.rsqrt %21 : vector<1x64xf32>
    %23 = arith.mulf %3, %22 : vector<1x64xf32>
    %24 = arith.mulf %10, %23 : vector<1x64xf32>
    %25 = arith.subf %4, %24 : vector<1x64xf32>
    %26 = vector.broadcast %23 : vector<1x64xf32> to vector<8x64xf32>
    %27 = arith.mulf %2, %26 : vector<8x64xf32>
    %28 = vector.broadcast %25 : vector<1x64xf32> to vector<8x64xf32>
    %29 = arith.addf %27, %28 : vector<8x64xf32>
    %cst_14 = arith.constant 0.000000e+00 : f32
    %30 = vector.broadcast %cst_14 : f32 to vector<8x64xf32>
    %31 = arith.cmpf ogt, %29, %30 : vector<8x64xf32>
    %cst_15 = arith.constant 2.000000e-01 : f32
    %32 = vector.broadcast %cst_15 : f32 to vector<8x64xf32>
    %33 = arith.mulf %32, %29 : vector<8x64xf32>
    %34 = arith.select %31, %29, %33 : vector<8x64xi1>, vector<8x64xf32>
    %c0_16 = arith.constant 0 : index
    %c0_17 = arith.constant 0 : index
    %35 = vector.load %arg10[%c0_16, %c0_17] : memref<8x64xf32, #tpu.memory_space<vmem>>, vector<8x64xf32>
    tpu.vector_store %arg10[%c0_16, %c0_17], %34 {strides = array<i32>} : memref<8x64xf32, #tpu.memory_space<vmem>>, vector<8x64xf32>,
    %36 = arith.truncf %34 : vector<8x64xf32> to vector<8x64xbf16>
    %37 = vector.extract_strided_slice %36 {offsets = [0, 0], sizes = [2, 64], strides = [1, 1]} : vector<8x64xbf16> to vector<2x64xbf16>
    %c0_18 = arith.constant 0 : index
    %c0_19 = arith.constant 0 : index
    %c0_20 = arith.constant 0 : index
    %38 = vector.load %arg5[%c0_18, %c0_19, %c0_20] : memref<4x64x64xbf16, #tpu.memory_space<vmem>>, vector<1x64x64xbf16>
    %39 = vector.shape_cast %38 : vector<1x64x64xbf16> to vector<64x64xbf16>
    %cst_21 = arith.constant dense<0.000000e+00> : vector<2x64xf32>
    %40 = tpu.matmul %37, %39, %cst_21 {dimension_numbers = #tpu.dot_dimension_numbers<[1], [0], [0], [1], [0, 0, 1, 1], [], []>} : vector<2x64xbf16>, vector<64x64xbf16>, vector<2x64xf32> -> vector<2x64xf32>
    %41 = vector.extract_strided_slice %36 {offsets = [2, 0], sizes = [2, 64], strides = [1, 1]} : vector<8x64xbf16> to vector<2x64xbf16>
    %c1 = arith.constant 1 : index
    %c0_22 = arith.constant 0 : index
    %c0_23 = arith.constant 0 : index
    %42 = vector.load %arg5[%c1, %c0_22, %c0_23] : memref<4x64x64xbf16, #tpu.memory_space<vmem>>, vector<1x64x64xbf16>
    %43 = vector.shape_cast %42 : vector<1x64x64xbf16> to vector<64x64xbf16>
    %cst_24 = arith.constant dense<0.000000e+00> : vector<2x64xf32>
    %44 = tpu.matmul %41, %43, %cst_24 {dimension_numbers = #tpu.dot_dimension_numbers<[1], [0], [0], [1], [0, 0, 1, 1], [], []>} : vector<2x64xbf16>, vector<64x64xbf16>, vector<2x64xf32> -> vector<2x64xf32>
    %45 = arith.addf %40, %44 : vector<2x64xf32>
    %46 = vector.extract_strided_slice %36 {offsets = [4, 0], sizes = [2, 64], strides = [1, 1]} : vector<8x64xbf16> to vector<2x64xbf16>
    %c2 = arith.constant 2 : index
    %c0_25 = arith.constant 0 : index
    %c0_26 = arith.constant 0 : index
    %47 = vector.load %arg5[%c2, %c0_25, %c0_26] : memref<4x64x64xbf16, #tpu.memory_space<vmem>>, vector<1x64x64xbf16>
    %48 = vector.shape_cast %47 : vector<1x64x64xbf16> to vector<64x64xbf16>
    %cst_27 = arith.constant dense<0.000000e+00> : vector<2x64xf32>
    %49 = tpu.matmul %46, %48, %cst_27 {dimension_numbers = #tpu.dot_dimension_numbers<[1], [0], [0], [1], [0, 0, 1, 1], [], []>} : vector<2x64xbf16>, vector<64x64xbf16>, vector<2x64xf32> -> vector<2x64xf32>
    %50 = arith.addf %45, %49 : vector<2x64xf32>
    %51 = vector.extract_strided_slice %36 {offsets = [6, 0], sizes = [2, 64], strides = [1, 1]} : vector<8x64xbf16> to vector<2x64xbf16>
    %c3 = arith.constant 3 : index
    %c0_28 = arith.constant 0 : index
    %c0_29 = arith.constant 0 : index
    %52 = vector.load %arg5[%c3, %c0_28, %c0_29] : memref<4x64x64xbf16, #tpu.memory_space<vmem>>, vector<1x64x64xbf16>
    %53 = vector.shape_cast %52 : vector<1x64x64xbf16> to vector<64x64xbf16>
    %cst_30 = arith.constant dense<0.000000e+00> : vector<2x64xf32>
    %54 = tpu.matmul %51, %53, %cst_30 {dimension_numbers = #tpu.dot_dimension_numbers<[1], [0], [0], [1], [0, 0, 1, 1], [], []>} : vector<2x64xbf16>, vector<64x64xbf16>, vector<2x64xf32> -> vector<2x64xf32>
    %55 = arith.addf %50, %54 : vector<2x64xf32>
    %c0_31 = arith.constant 0 : index
    %c0_32 = arith.constant 0 : index
    %56 = vector.load %arg6[%c0_31, %c0_32] : memref<1x64xf32, #tpu.memory_space<vmem>>, vector<1x64xf32>
    %57 = vector.broadcast %56 : vector<1x64xf32> to vector<2x64xf32>
    %58 = arith.addf %55, %57 : vector<2x64xf32>
    %cst_33 = arith.constant 0.000000e+00 : f32
    %59 = vector.broadcast %cst_33 : f32 to vector<2x64xf32>
    %60 = arith.maximumf %58, %59 : vector<2x64xf32>
    %61 = arith.truncf %60 : vector<2x64xf32> to vector<2x64xbf16>
    %c0_34 = arith.constant 0 : index
    %c0_35 = arith.constant 0 : index
    %c0_36 = arith.constant 0 : index
    %62 = vector.load %arg7[%c0_34, %c0_35, %c0_36] : memref<4x64x64xbf16, #tpu.memory_space<vmem>>, vector<1x64x64xbf16>
    %63 = vector.shape_cast %62 : vector<1x64x64xbf16> to vector<64x64xbf16>
    %cst_37 = arith.constant dense<0.000000e+00> : vector<2x64xf32>
    %64 = tpu.matmul %61, %63, %cst_37 {dimension_numbers = #tpu.dot_dimension_numbers<[1], [0], [0], [1], [0, 0, 1, 1], [], []>} : vector<2x64xbf16>, vector<64x64xbf16>, vector<2x64xf32> -> vector<2x64xf32>
    %c1_38 = arith.constant 1 : index
    %c0_39 = arith.constant 0 : index
    %c0_40 = arith.constant 0 : index
    %65 = vector.load %arg7[%c1_38, %c0_39, %c0_40] : memref<4x64x64xbf16, #tpu.memory_space<vmem>>, vector<1x64x64xbf16>
    %66 = vector.shape_cast %65 : vector<1x64x64xbf16> to vector<64x64xbf16>
    %cst_41 = arith.constant dense<0.000000e+00> : vector<2x64xf32>
    %67 = tpu.matmul %61, %66, %cst_41 {dimension_numbers = #tpu.dot_dimension_numbers<[1], [0], [0], [1], [0, 0, 1, 1], [], []>} : vector<2x64xbf16>, vector<64x64xbf16>, vector<2x64xf32> -> vector<2x64xf32>
    %c2_42 = arith.constant 2 : index
    %c0_43 = arith.constant 0 : index
    %c0_44 = arith.constant 0 : index
    %68 = vector.load %arg7[%c2_42, %c0_43, %c0_44] : memref<4x64x64xbf16, #tpu.memory_space<vmem>>, vector<1x64x64xbf16>
    %69 = vector.shape_cast %68 : vector<1x64x64xbf16> to vector<64x64xbf16>
    %cst_45 = arith.constant dense<0.000000e+00> : vector<2x64xf32>
    %70 = tpu.matmul %61, %69, %cst_45 {dimension_numbers = #tpu.dot_dimension_numbers<[1], [0], [0], [1], [0, 0, 1, 1], [], []>} : vector<2x64xbf16>, vector<64x64xbf16>, vector<2x64xf32> -> vector<2x64xf32>
    %c3_46 = arith.constant 3 : index
    %c0_47 = arith.constant 0 : index
    %c0_48 = arith.constant 0 : index
    %71 = vector.load %arg7[%c3_46, %c0_47, %c0_48] : memref<4x64x64xbf16, #tpu.memory_space<vmem>>, vector<1x64x64xbf16>
    %72 = vector.shape_cast %71 : vector<1x64x64xbf16> to vector<64x64xbf16>
    %cst_49 = arith.constant dense<0.000000e+00> : vector<2x64xf32>
    %73 = tpu.matmul %61, %72, %cst_49 {dimension_numbers = #tpu.dot_dimension_numbers<[1], [0], [0], [1], [0, 0, 1, 1], [], []>} : vector<2x64xbf16>, vector<64x64xbf16>, vector<2x64xf32> -> vector<2x64xf32>
    %c0_50 = arith.constant 0 : index
    %c0_51 = arith.constant 0 : index
    %74 = vector.load %arg8[%c0_50, %c0_51] : memref<1x64xf32, #tpu.memory_space<vmem>>, vector<1x64xf32>
    %c0_52 = arith.constant 0 : index
    %c0_53 = arith.constant 0 : index
    %75 = vector.load %arg9[%c0_52, %c0_53] : memref<1x64xf32, #tpu.memory_space<vmem>>, vector<1x64xf32>
    %cst_54 = arith.constant dense<0.000000e+00> : vector<64xf32>
    %76 = vector.multi_reduction <add>, %64, %cst_54 [0] : vector<2x64xf32> to vector<64xf32>
    %77 = vector.shape_cast %76 : vector<64xf32> to vector<1x64xf32>
    %cst_55 = arith.constant 0.000000e+00 : f32
    %78 = vector.broadcast %cst_55 : f32 to vector<1x64xf32>
    %79 = arith.addf %78, %77 : vector<1x64xf32>
    %cst_56 = arith.constant dense<0.000000e+00> : vector<64xf32>
    %80 = vector.multi_reduction <add>, %67, %cst_56 [0] : vector<2x64xf32> to vector<64xf32>
    %81 = vector.shape_cast %80 : vector<64xf32> to vector<1x64xf32>
    %82 = arith.addf %79, %81 : vector<1x64xf32>
    %cst_57 = arith.constant dense<0.000000e+00> : vector<64xf32>
    %83 = vector.multi_reduction <add>, %70, %cst_57 [0] : vector<2x64xf32> to vector<64xf32>
    %84 = vector.shape_cast %83 : vector<64xf32> to vector<1x64xf32>
    %85 = arith.addf %82, %84 : vector<1x64xf32>
    %cst_58 = arith.constant dense<0.000000e+00> : vector<64xf32>
    %86 = vector.multi_reduction <add>, %73, %cst_58 [0] : vector<2x64xf32> to vector<64xf32>
    %87 = vector.shape_cast %86 : vector<64xf32> to vector<1x64xf32>
    %88 = arith.addf %85, %87 : vector<1x64xf32>
    %cst_59 = arith.constant 8.000000e+00 : f32
    %89 = vector.broadcast %cst_59 : f32 to vector<1x64xf32>
    %90 = arith.divf %88, %89 : vector<1x64xf32>
    %91 = vector.broadcast %90 : vector<1x64xf32> to vector<2x64xf32>
    %92 = arith.subf %64, %91 : vector<2x64xf32>
    %93 = arith.mulf %92, %92 : vector<2x64xf32>
    %cst_60 = arith.constant dense<0.000000e+00> : vector<64xf32>
    %94 = vector.multi_reduction <add>, %93, %cst_60 [0] : vector<2x64xf32> to vector<64xf32>
    %95 = vector.shape_cast %94 : vector<64xf32> to vector<1x64xf32>
    %cst_61 = arith.constant 0.000000e+00 : f32
    %96 = vector.broadcast %cst_61 : f32 to vector<1x64xf32>
    %97 = arith.addf %96, %95 : vector<1x64xf32>
    %98 = vector.broadcast %90 : vector<1x64xf32> to vector<2x64xf32>
    %99 = arith.subf %67, %98 : vector<2x64xf32>
    %100 = arith.mulf %99, %99 : vector<2x64xf32>
    %cst_62 = arith.constant dense<0.000000e+00> : vector<64xf32>
    %101 = vector.multi_reduction <add>, %100, %cst_62 [0] : vector<2x64xf32> to vector<64xf32>
    %102 = vector.shape_cast %101 : vector<64xf32> to vector<1x64xf32>
    %103 = arith.addf %97, %102 : vector<1x64xf32>
    %104 = vector.broadcast %90 : vector<1x64xf32> to vector<2x64xf32>
    %105 = arith.subf %70, %104 : vector<2x64xf32>
    %106 = arith.mulf %105, %105 : vector<2x64xf32>
    %cst_63 = arith.constant dense<0.000000e+00> : vector<64xf32>
    %107 = vector.multi_reduction <add>, %106, %cst_63 [0] : vector<2x64xf32> to vector<64xf32>
    %108 = vector.shape_cast %107 : vector<64xf32> to vector<1x64xf32>
    %109 = arith.addf %103, %108 : vector<1x64xf32>
    %110 = vector.broadcast %90 : vector<1x64xf32> to vector<2x64xf32>
    %111 = arith.subf %73, %110 : vector<2x64xf32>
    %112 = arith.mulf %111, %111 : vector<2x64xf32>
    %cst_64 = arith.constant dense<0.000000e+00> : vector<64xf32>
    %113 = vector.multi_reduction <add>, %112, %cst_64 [0] : vector<2x64xf32> to vector<64xf32>
    %114 = vector.shape_cast %113 : vector<64xf32> to vector<1x64xf32>
    %115 = arith.addf %109, %114 : vector<1x64xf32>
    %cst_65 = arith.constant 8.000000e+00 : f32
    %116 = vector.broadcast %cst_65 : f32 to vector<1x64xf32>
    %117 = arith.divf %115, %116 : vector<1x64xf32>
    %cst_66 = arith.constant 9.99999974E-6 : f32
    %118 = vector.broadcast %cst_66 : f32 to vector<1x64xf32>
    %119 = arith.addf %117, %118 : vector<1x64xf32>
    %120 = math.rsqrt %119 : vector<1x64xf32>
    %121 = arith.mulf %74, %120 : vector<1x64xf32>
    %122 = arith.mulf %90, %121 : vector<1x64xf32>
    %123 = arith.subf %75, %122 : vector<1x64xf32>
    %124 = vector.broadcast %121 : vector<1x64xf32> to vector<2x64xf32>
    %125 = arith.mulf %64, %124 : vector<2x64xf32>
    %126 = vector.broadcast %123 : vector<1x64xf32> to vector<2x64xf32>
    %127 = arith.addf %125, %126 : vector<2x64xf32>
    %128 = vector.broadcast %121 : vector<1x64xf32> to vector<2x64xf32>
    %129 = arith.mulf %67, %128 : vector<2x64xf32>
    %130 = vector.broadcast %123 : vector<1x64xf32> to vector<2x64xf32>
    %131 = arith.addf %129, %130 : vector<2x64xf32>
    %132 = vector.broadcast %121 : vector<1x64xf32> to vector<2x64xf32>
    %133 = arith.mulf %70, %132 : vector<2x64xf32>
    %134 = vector.broadcast %123 : vector<1x64xf32> to vector<2x64xf32>
    %135 = arith.addf %133, %134 : vector<2x64xf32>
    %136 = vector.broadcast %121 : vector<1x64xf32> to vector<2x64xf32>
    %137 = arith.mulf %73, %136 : vector<2x64xf32>
    %138 = vector.broadcast %123 : vector<1x64xf32> to vector<2x64xf32>
    %139 = arith.addf %137, %138 : vector<2x64xf32>
    %cst_67 = arith.constant 0.000000e+00 : f32
    %140 = vector.broadcast %cst_67 : f32 to vector<2x64xf32>
    %141 = arith.maximumf %127, %140 : vector<2x64xf32>
    %cst_68 = arith.constant 0.000000e+00 : f32
    %142 = vector.broadcast %cst_68 : f32 to vector<2x64xf32>
    %143 = arith.maximumf %131, %142 : vector<2x64xf32>
    %cst_69 = arith.constant 0.000000e+00 : f32
    %144 = vector.broadcast %cst_69 : f32 to vector<2x64xf32>
    %145 = arith.maximumf %135, %144 : vector<2x64xf32>
    %cst_70 = arith.constant 0.000000e+00 : f32
    %146 = vector.broadcast %cst_70 : f32 to vector<2x64xf32>
    %147 = arith.maximumf %139, %146 : vector<2x64xf32>
    %148 = tpu.concatenate %141, %143, %145, %147 in 1 : vector<2x64xf32>, vector<2x64xf32>, vector<2x64xf32>, vector<2x64xf32> -> vector<2x256xf32>
    %c0_71 = arith.constant 0 : index
    %c0_72 = arith.constant 0 : index
    %149 = vector.load %arg11[%c0_71, %c0_72] : memref<2x256xf32, #tpu.memory_space<vmem>>, vector<2x256xf32>
    tpu.vector_store %arg11[%c0_71, %c0_72], %148 {strides = array<i32>} : memref<2x256xf32, #tpu.memory_space<vmem>>, vector<2x256xf32>,
    return
  }
  func.func @transform_0(%arg0: i32) -> (i32, i32) {
    %c0_i32 = arith.constant 0 : i32
    %c0_i32_0 = arith.constant 0 : i32
    %c0_i32_1 = arith.constant 0 : i32
    return %c0_i32, %c0_i32_0 : i32, i32
  }
  func.func @transform_1(%arg0: i32) -> (i32, i32) {
    %c0_i32 = arith.constant 0 : i32
    %c0_i32_0 = arith.constant 0 : i32
    %c0_i32_1 = arith.constant 0 : i32
    return %c0_i32, %c0_i32_0 : i32, i32
  }
  func.func @transform_2(%arg0: i32) -> (i32, i32) {
    %c0_i32 = arith.constant 0 : i32
    %c0_i32_0 = arith.constant 0 : i32
    %c0_i32_1 = arith.constant 0 : i32
    return %c0_i32, %c0_i32_0 : i32, i32
  }
  func.func @transform_3(%arg0: i32) -> (i32, i32) {
    %c0_i32 = arith.constant 0 : i32
    %c0_i32_0 = arith.constant 0 : i32
    %c0_i32_1 = arith.constant 0 : i32
    return %c0_i32, %c0_i32_0 : i32, i32
  }
  func.func @transform_4(%arg0: i32) -> (i32, i32, i32) {
    %c0_i32 = arith.constant 0 : i32
    %c0_i32_0 = arith.constant 0 : i32
    %c0_i32_1 = arith.constant 0 : i32
    %c0_i32_2 = arith.constant 0 : i32
    return %c0_i32, %c0_i32_0, %c0_i32_1 : i32, i32, i32
  }
  func.func @transform_5(%arg0: i32) -> (i32, i32) {
    %c0_i32 = arith.constant 0 : i32
    %c0_i32_0 = arith.constant 0 : i32
    %c0_i32_1 = arith.constant 0 : i32
    return %c0_i32, %c0_i32_0 : i32, i32
  }
  func.func @transform_6(%arg0: i32) -> (i32, i32, i32) {
    %c0_i32 = arith.constant 0 : i32
    %c0_i32_0 = arith.constant 0 : i32
    %c0_i32_1 = arith.constant 0 : i32
    %c0_i32_2 = arith.constant 0 : i32
    return %c0_i32, %c0_i32_0, %c0_i32_1 : i32, i32, i32
  }
  func.func @transform_7(%arg0: i32) -> (i32, i32) {
    %c0_i32 = arith.constant 0 : i32
    %c0_i32_0 = arith.constant 0 : i32
    %c0_i32_1 = arith.constant 0 : i32
    return %c0_i32, %c0_i32_0 : i32, i32
  }
  func.func @transform_8(%arg0: i32) -> (i32, i32) {
    %c0_i32 = arith.constant 0 : i32
    %c0_i32_0 = arith.constant 0 : i32
    %c0_i32_1 = arith.constant 0 : i32
    return %c0_i32, %c0_i32_0 : i32, i32
  }
  func.func @transform_9(%arg0: i32) -> (i32, i32) {
    %c0_i32 = arith.constant 0 : i32
    %c0_i32_0 = arith.constant 0 : i32
    %c0_i32_1 = arith.constant 0 : i32
    return %c0_i32, %c0_i32_0 : i32, i32
  }
  func.func @transform_10(%arg0: i32) -> (i32, i32) {
    %c0_i32 = arith.constant 0 : i32
    %c0_i32_0 = arith.constant 0 : i32
    %c0_i32_1 = arith.constant 0 : i32
    return %c0_i32, %c0_i32_0 : i32, i32
  }
}

module attributes {stable_mosaic.version = 11 : i64} {
  func.func @_up_bn_act_kernel(%arg0: i32, %arg1: memref<4x8x256xbf16, #tpu.memory_space<vmem>>, %arg2: memref<4x8x256xbf16, #tpu.memory_space<vmem>>, %arg3: memref<4x256x32xbf16, #tpu.memory_space<vmem>>, %arg4: memref<4x256x32xbf16, #tpu.memory_space<vmem>>, %arg5: memref<1x32xf32, #tpu.memory_space<vmem>>, %arg6: memref<1x32xf32, #tpu.memory_space<vmem>>, %arg7: memref<8x128xf32, #tpu.memory_space<vmem>>) attributes {dimension_semantics = [#tpu.dimension_semantics<arbitrary>], iteration_bounds = array<i64: 1>, scalar_prefetch = 0 : i64, scratch_operands = 0 : i64, tpu.core_type = #tpu.core_type<tc>, window_params = [{pipeline_mode = #tpu.pipeline_mode<synchronous>, transform_indices = @transform_0, window_bounds = array<i64: 4, 8, 256>}, {pipeline_mode = #tpu.pipeline_mode<synchronous>, transform_indices = @transform_1, window_bounds = array<i64: 4, 8, 256>}, {pipeline_mode = #tpu.pipeline_mode<synchronous>, transform_indices = @transform_2, window_bounds = array<i64: 4, 256, 32>}, {pipeline_mode = #tpu.pipeline_mode<synchronous>, transform_indices = @transform_3, window_bounds = array<i64: 4, 256, 32>}, {pipeline_mode = #tpu.pipeline_mode<synchronous>, transform_indices = @transform_4, window_bounds = array<i64: 1, 32>}, {pipeline_mode = #tpu.pipeline_mode<synchronous>, transform_indices = @transform_5, window_bounds = array<i64: 1, 32>}, {pipeline_mode = #tpu.pipeline_mode<synchronous>, transform_indices = @transform_6, window_bounds = array<i64: 8, 128>}]} {
    %c0 = arith.constant 0 : index
    %c0_0 = arith.constant 0 : index
    %c0_1 = arith.constant 0 : index
    %0 = vector.load %arg1[%c0, %c0_0, %c0_1] : memref<4x8x256xbf16, #tpu.memory_space<vmem>>, vector<1x8x256xbf16>
    %1 = vector.shape_cast %0 : vector<1x8x256xbf16> to vector<8x256xbf16>
    %c0_2 = arith.constant 0 : index
    %c0_3 = arith.constant 0 : index
    %c0_4 = arith.constant 0 : index
    %2 = vector.load %arg3[%c0_2, %c0_3, %c0_4] : memref<4x256x32xbf16, #tpu.memory_space<vmem>>, vector<1x256x32xbf16>
    %3 = vector.shape_cast %2 : vector<1x256x32xbf16> to vector<256x32xbf16>
    %cst = arith.constant dense<0.000000e+00> : vector<8x32xf32>
    %4 = tpu.matmul %1, %3, %cst {dimension_numbers = #tpu.dot_dimension_numbers<[1], [0], [0], [1], [0, 0, 1, 1], [], []>} : vector<8x256xbf16>, vector<256x32xbf16>, vector<8x32xf32> -> vector<8x32xf32>
    %c0_5 = arith.constant 0 : index
    %c0_6 = arith.constant 0 : index
    %c0_7 = arith.constant 0 : index
    %5 = vector.load %arg2[%c0_5, %c0_6, %c0_7] : memref<4x8x256xbf16, #tpu.memory_space<vmem>>, vector<1x8x256xbf16>
    %6 = vector.shape_cast %5 : vector<1x8x256xbf16> to vector<8x256xbf16>
    %c0_8 = arith.constant 0 : index
    %c0_9 = arith.constant 0 : index
    %c0_10 = arith.constant 0 : index
    %7 = vector.load %arg4[%c0_8, %c0_9, %c0_10] : memref<4x256x32xbf16, #tpu.memory_space<vmem>>, vector<1x256x32xbf16>
    %8 = vector.shape_cast %7 : vector<1x256x32xbf16> to vector<256x32xbf16>
    %cst_11 = arith.constant dense<0.000000e+00> : vector<8x32xf32>
    %9 = tpu.matmul %6, %8, %cst_11 {dimension_numbers = #tpu.dot_dimension_numbers<[1], [0], [0], [1], [0, 0, 1, 1], [], []>} : vector<8x256xbf16>, vector<256x32xbf16>, vector<8x32xf32> -> vector<8x32xf32>
    %10 = arith.addf %4, %9 : vector<8x32xf32>
    %c1 = arith.constant 1 : index
    %c0_12 = arith.constant 0 : index
    %c0_13 = arith.constant 0 : index
    %11 = vector.load %arg1[%c1, %c0_12, %c0_13] : memref<4x8x256xbf16, #tpu.memory_space<vmem>>, vector<1x8x256xbf16>
    %12 = vector.shape_cast %11 : vector<1x8x256xbf16> to vector<8x256xbf16>
    %c1_14 = arith.constant 1 : index
    %c0_15 = arith.constant 0 : index
    %c0_16 = arith.constant 0 : index
    %13 = vector.load %arg3[%c1_14, %c0_15, %c0_16] : memref<4x256x32xbf16, #tpu.memory_space<vmem>>, vector<1x256x32xbf16>
    %14 = vector.shape_cast %13 : vector<1x256x32xbf16> to vector<256x32xbf16>
    %cst_17 = arith.constant dense<0.000000e+00> : vector<8x32xf32>
    %15 = tpu.matmul %12, %14, %cst_17 {dimension_numbers = #tpu.dot_dimension_numbers<[1], [0], [0], [1], [0, 0, 1, 1], [], []>} : vector<8x256xbf16>, vector<256x32xbf16>, vector<8x32xf32> -> vector<8x32xf32>
    %c1_18 = arith.constant 1 : index
    %c0_19 = arith.constant 0 : index
    %c0_20 = arith.constant 0 : index
    %16 = vector.load %arg2[%c1_18, %c0_19, %c0_20] : memref<4x8x256xbf16, #tpu.memory_space<vmem>>, vector<1x8x256xbf16>
    %17 = vector.shape_cast %16 : vector<1x8x256xbf16> to vector<8x256xbf16>
    %c1_21 = arith.constant 1 : index
    %c0_22 = arith.constant 0 : index
    %c0_23 = arith.constant 0 : index
    %18 = vector.load %arg4[%c1_21, %c0_22, %c0_23] : memref<4x256x32xbf16, #tpu.memory_space<vmem>>, vector<1x256x32xbf16>
    %19 = vector.shape_cast %18 : vector<1x256x32xbf16> to vector<256x32xbf16>
    %cst_24 = arith.constant dense<0.000000e+00> : vector<8x32xf32>
    %20 = tpu.matmul %17, %19, %cst_24 {dimension_numbers = #tpu.dot_dimension_numbers<[1], [0], [0], [1], [0, 0, 1, 1], [], []>} : vector<8x256xbf16>, vector<256x32xbf16>, vector<8x32xf32> -> vector<8x32xf32>
    %21 = arith.addf %15, %20 : vector<8x32xf32>
    %c2 = arith.constant 2 : index
    %c0_25 = arith.constant 0 : index
    %c0_26 = arith.constant 0 : index
    %22 = vector.load %arg1[%c2, %c0_25, %c0_26] : memref<4x8x256xbf16, #tpu.memory_space<vmem>>, vector<1x8x256xbf16>
    %23 = vector.shape_cast %22 : vector<1x8x256xbf16> to vector<8x256xbf16>
    %c2_27 = arith.constant 2 : index
    %c0_28 = arith.constant 0 : index
    %c0_29 = arith.constant 0 : index
    %24 = vector.load %arg3[%c2_27, %c0_28, %c0_29] : memref<4x256x32xbf16, #tpu.memory_space<vmem>>, vector<1x256x32xbf16>
    %25 = vector.shape_cast %24 : vector<1x256x32xbf16> to vector<256x32xbf16>
    %cst_30 = arith.constant dense<0.000000e+00> : vector<8x32xf32>
    %26 = tpu.matmul %23, %25, %cst_30 {dimension_numbers = #tpu.dot_dimension_numbers<[1], [0], [0], [1], [0, 0, 1, 1], [], []>} : vector<8x256xbf16>, vector<256x32xbf16>, vector<8x32xf32> -> vector<8x32xf32>
    %c2_31 = arith.constant 2 : index
    %c0_32 = arith.constant 0 : index
    %c0_33 = arith.constant 0 : index
    %27 = vector.load %arg2[%c2_31, %c0_32, %c0_33] : memref<4x8x256xbf16, #tpu.memory_space<vmem>>, vector<1x8x256xbf16>
    %28 = vector.shape_cast %27 : vector<1x8x256xbf16> to vector<8x256xbf16>
    %c2_34 = arith.constant 2 : index
    %c0_35 = arith.constant 0 : index
    %c0_36 = arith.constant 0 : index
    %29 = vector.load %arg4[%c2_34, %c0_35, %c0_36] : memref<4x256x32xbf16, #tpu.memory_space<vmem>>, vector<1x256x32xbf16>
    %30 = vector.shape_cast %29 : vector<1x256x32xbf16> to vector<256x32xbf16>
    %cst_37 = arith.constant dense<0.000000e+00> : vector<8x32xf32>
    %31 = tpu.matmul %28, %30, %cst_37 {dimension_numbers = #tpu.dot_dimension_numbers<[1], [0], [0], [1], [0, 0, 1, 1], [], []>} : vector<8x256xbf16>, vector<256x32xbf16>, vector<8x32xf32> -> vector<8x32xf32>
    %32 = arith.addf %26, %31 : vector<8x32xf32>
    %c3 = arith.constant 3 : index
    %c0_38 = arith.constant 0 : index
    %c0_39 = arith.constant 0 : index
    %33 = vector.load %arg1[%c3, %c0_38, %c0_39] : memref<4x8x256xbf16, #tpu.memory_space<vmem>>, vector<1x8x256xbf16>
    %34 = vector.shape_cast %33 : vector<1x8x256xbf16> to vector<8x256xbf16>
    %c3_40 = arith.constant 3 : index
    %c0_41 = arith.constant 0 : index
    %c0_42 = arith.constant 0 : index
    %35 = vector.load %arg3[%c3_40, %c0_41, %c0_42] : memref<4x256x32xbf16, #tpu.memory_space<vmem>>, vector<1x256x32xbf16>
    %36 = vector.shape_cast %35 : vector<1x256x32xbf16> to vector<256x32xbf16>
    %cst_43 = arith.constant dense<0.000000e+00> : vector<8x32xf32>
    %37 = tpu.matmul %34, %36, %cst_43 {dimension_numbers = #tpu.dot_dimension_numbers<[1], [0], [0], [1], [0, 0, 1, 1], [], []>} : vector<8x256xbf16>, vector<256x32xbf16>, vector<8x32xf32> -> vector<8x32xf32>
    %c3_44 = arith.constant 3 : index
    %c0_45 = arith.constant 0 : index
    %c0_46 = arith.constant 0 : index
    %38 = vector.load %arg2[%c3_44, %c0_45, %c0_46] : memref<4x8x256xbf16, #tpu.memory_space<vmem>>, vector<1x8x256xbf16>
    %39 = vector.shape_cast %38 : vector<1x8x256xbf16> to vector<8x256xbf16>
    %c3_47 = arith.constant 3 : index
    %c0_48 = arith.constant 0 : index
    %c0_49 = arith.constant 0 : index
    %40 = vector.load %arg4[%c3_47, %c0_48, %c0_49] : memref<4x256x32xbf16, #tpu.memory_space<vmem>>, vector<1x256x32xbf16>
    %41 = vector.shape_cast %40 : vector<1x256x32xbf16> to vector<256x32xbf16>
    %cst_50 = arith.constant dense<0.000000e+00> : vector<8x32xf32>
    %42 = tpu.matmul %39, %41, %cst_50 {dimension_numbers = #tpu.dot_dimension_numbers<[1], [0], [0], [1], [0, 0, 1, 1], [], []>} : vector<8x256xbf16>, vector<256x32xbf16>, vector<8x32xf32> -> vector<8x32xf32>
    %43 = arith.addf %37, %42 : vector<8x32xf32>
    %c0_51 = arith.constant 0 : index
    %c0_52 = arith.constant 0 : index
    %44 = vector.load %arg5[%c0_51, %c0_52] : memref<1x32xf32, #tpu.memory_space<vmem>>, vector<1x32xf32>
    %c0_53 = arith.constant 0 : index
    %c0_54 = arith.constant 0 : index
    %45 = vector.load %arg6[%c0_53, %c0_54] : memref<1x32xf32, #tpu.memory_space<vmem>>, vector<1x32xf32>
    %cst_55 = arith.constant dense<0.000000e+00> : vector<32xf32>
    %46 = vector.multi_reduction <add>, %10, %cst_55 [0] : vector<8x32xf32> to vector<32xf32>
    %47 = vector.shape_cast %46 : vector<32xf32> to vector<1x32xf32>
    %cst_56 = arith.constant 0.000000e+00 : f32
    %48 = vector.broadcast %cst_56 : f32 to vector<1x32xf32>
    %49 = arith.addf %48, %47 : vector<1x32xf32>
    %cst_57 = arith.constant dense<0.000000e+00> : vector<32xf32>
    %50 = vector.multi_reduction <add>, %21, %cst_57 [0] : vector<8x32xf32> to vector<32xf32>
    %51 = vector.shape_cast %50 : vector<32xf32> to vector<1x32xf32>
    %52 = arith.addf %49, %51 : vector<1x32xf32>
    %cst_58 = arith.constant dense<0.000000e+00> : vector<32xf32>
    %53 = vector.multi_reduction <add>, %32, %cst_58 [0] : vector<8x32xf32> to vector<32xf32>
    %54 = vector.shape_cast %53 : vector<32xf32> to vector<1x32xf32>
    %55 = arith.addf %52, %54 : vector<1x32xf32>
    %cst_59 = arith.constant dense<0.000000e+00> : vector<32xf32>
    %56 = vector.multi_reduction <add>, %43, %cst_59 [0] : vector<8x32xf32> to vector<32xf32>
    %57 = vector.shape_cast %56 : vector<32xf32> to vector<1x32xf32>
    %58 = arith.addf %55, %57 : vector<1x32xf32>
    %cst_60 = arith.constant 3.200000e+01 : f32
    %59 = vector.broadcast %cst_60 : f32 to vector<1x32xf32>
    %60 = arith.divf %58, %59 : vector<1x32xf32>
    %61 = vector.broadcast %60 : vector<1x32xf32> to vector<8x32xf32>
    %62 = arith.subf %10, %61 : vector<8x32xf32>
    %63 = arith.mulf %62, %62 : vector<8x32xf32>
    %cst_61 = arith.constant dense<0.000000e+00> : vector<32xf32>
    %64 = vector.multi_reduction <add>, %63, %cst_61 [0] : vector<8x32xf32> to vector<32xf32>
    %65 = vector.shape_cast %64 : vector<32xf32> to vector<1x32xf32>
    %cst_62 = arith.constant 0.000000e+00 : f32
    %66 = vector.broadcast %cst_62 : f32 to vector<1x32xf32>
    %67 = arith.addf %66, %65 : vector<1x32xf32>
    %68 = vector.broadcast %60 : vector<1x32xf32> to vector<8x32xf32>
    %69 = arith.subf %21, %68 : vector<8x32xf32>
    %70 = arith.mulf %69, %69 : vector<8x32xf32>
    %cst_63 = arith.constant dense<0.000000e+00> : vector<32xf32>
    %71 = vector.multi_reduction <add>, %70, %cst_63 [0] : vector<8x32xf32> to vector<32xf32>
    %72 = vector.shape_cast %71 : vector<32xf32> to vector<1x32xf32>
    %73 = arith.addf %67, %72 : vector<1x32xf32>
    %74 = vector.broadcast %60 : vector<1x32xf32> to vector<8x32xf32>
    %75 = arith.subf %32, %74 : vector<8x32xf32>
    %76 = arith.mulf %75, %75 : vector<8x32xf32>
    %cst_64 = arith.constant dense<0.000000e+00> : vector<32xf32>
    %77 = vector.multi_reduction <add>, %76, %cst_64 [0] : vector<8x32xf32> to vector<32xf32>
    %78 = vector.shape_cast %77 : vector<32xf32> to vector<1x32xf32>
    %79 = arith.addf %73, %78 : vector<1x32xf32>
    %80 = vector.broadcast %60 : vector<1x32xf32> to vector<8x32xf32>
    %81 = arith.subf %43, %80 : vector<8x32xf32>
    %82 = arith.mulf %81, %81 : vector<8x32xf32>
    %cst_65 = arith.constant dense<0.000000e+00> : vector<32xf32>
    %83 = vector.multi_reduction <add>, %82, %cst_65 [0] : vector<8x32xf32> to vector<32xf32>
    %84 = vector.shape_cast %83 : vector<32xf32> to vector<1x32xf32>
    %85 = arith.addf %79, %84 : vector<1x32xf32>
    %cst_66 = arith.constant 3.200000e+01 : f32
    %86 = vector.broadcast %cst_66 : f32 to vector<1x32xf32>
    %87 = arith.divf %85, %86 : vector<1x32xf32>
    %cst_67 = arith.constant 9.99999974E-6 : f32
    %88 = vector.broadcast %cst_67 : f32 to vector<1x32xf32>
    %89 = arith.addf %87, %88 : vector<1x32xf32>
    %90 = math.rsqrt %89 : vector<1x32xf32>
    %91 = arith.mulf %44, %90 : vector<1x32xf32>
    %92 = arith.mulf %60, %91 : vector<1x32xf32>
    %93 = arith.subf %45, %92 : vector<1x32xf32>
    %94 = vector.broadcast %91 : vector<1x32xf32> to vector<8x32xf32>
    %95 = arith.mulf %10, %94 : vector<8x32xf32>
    %96 = vector.broadcast %93 : vector<1x32xf32> to vector<8x32xf32>
    %97 = arith.addf %95, %96 : vector<8x32xf32>
    %98 = vector.broadcast %91 : vector<1x32xf32> to vector<8x32xf32>
    %99 = arith.mulf %21, %98 : vector<8x32xf32>
    %100 = vector.broadcast %93 : vector<1x32xf32> to vector<8x32xf32>
    %101 = arith.addf %99, %100 : vector<8x32xf32>
    %102 = vector.broadcast %91 : vector<1x32xf32> to vector<8x32xf32>
    %103 = arith.mulf %32, %102 : vector<8x32xf32>
    %104 = vector.broadcast %93 : vector<1x32xf32> to vector<8x32xf32>
    %105 = arith.addf %103, %104 : vector<8x32xf32>
    %106 = vector.broadcast %91 : vector<1x32xf32> to vector<8x32xf32>
    %107 = arith.mulf %43, %106 : vector<8x32xf32>
    %108 = vector.broadcast %93 : vector<1x32xf32> to vector<8x32xf32>
    %109 = arith.addf %107, %108 : vector<8x32xf32>
    %cst_68 = arith.constant 0.000000e+00 : f32
    %110 = vector.broadcast %cst_68 : f32 to vector<8x32xf32>
    %111 = arith.maximumf %97, %110 : vector<8x32xf32>
    %cst_69 = arith.constant 0.000000e+00 : f32
    %112 = vector.broadcast %cst_69 : f32 to vector<8x32xf32>
    %113 = arith.maximumf %101, %112 : vector<8x32xf32>
    %cst_70 = arith.constant 0.000000e+00 : f32
    %114 = vector.broadcast %cst_70 : f32 to vector<8x32xf32>
    %115 = arith.maximumf %105, %114 : vector<8x32xf32>
    %cst_71 = arith.constant 0.000000e+00 : f32
    %116 = vector.broadcast %cst_71 : f32 to vector<8x32xf32>
    %117 = arith.maximumf %109, %116 : vector<8x32xf32>
    %118 = tpu.concatenate %111, %113, %115, %117 in 1 : vector<8x32xf32>, vector<8x32xf32>, vector<8x32xf32>, vector<8x32xf32> -> vector<8x128xf32>
    %c0_72 = arith.constant 0 : index
    %c0_73 = arith.constant 0 : index
    %119 = vector.load %arg7[%c0_72, %c0_73] : memref<8x128xf32, #tpu.memory_space<vmem>>, vector<8x128xf32>
    tpu.vector_store %arg7[%c0_72, %c0_73], %118 {strides = array<i32>} : memref<8x128xf32, #tpu.memory_space<vmem>>, vector<8x128xf32>,
    return
  }
  func.func @transform_0(%arg0: i32) -> (i32, i32, i32) {
    %c0_i32 = arith.constant 0 : i32
    %c0_i32_0 = arith.constant 0 : i32
    %c0_i32_1 = arith.constant 0 : i32
    %c0_i32_2 = arith.constant 0 : i32
    return %c0_i32, %c0_i32_0, %c0_i32_1 : i32, i32, i32
  }
  func.func @transform_1(%arg0: i32) -> (i32, i32, i32) {
    %c0_i32 = arith.constant 0 : i32
    %c0_i32_0 = arith.constant 0 : i32
    %c0_i32_1 = arith.constant 0 : i32
    %c0_i32_2 = arith.constant 0 : i32
    return %c0_i32, %c0_i32_0, %c0_i32_1 : i32, i32, i32
  }
  func.func @transform_2(%arg0: i32) -> (i32, i32, i32) {
    %c0_i32 = arith.constant 0 : i32
    %c0_i32_0 = arith.constant 0 : i32
    %c0_i32_1 = arith.constant 0 : i32
    %c0_i32_2 = arith.constant 0 : i32
    return %c0_i32, %c0_i32_0, %c0_i32_1 : i32, i32, i32
  }
  func.func @transform_3(%arg0: i32) -> (i32, i32, i32) {
    %c0_i32 = arith.constant 0 : i32
    %c0_i32_0 = arith.constant 0 : i32
    %c0_i32_1 = arith.constant 0 : i32
    %c0_i32_2 = arith.constant 0 : i32
    return %c0_i32, %c0_i32_0, %c0_i32_1 : i32, i32, i32
  }
  func.func @transform_4(%arg0: i32) -> (i32, i32) {
    %c0_i32 = arith.constant 0 : i32
    %c0_i32_0 = arith.constant 0 : i32
    %c0_i32_1 = arith.constant 0 : i32
    return %c0_i32, %c0_i32_0 : i32, i32
  }
  func.func @transform_5(%arg0: i32) -> (i32, i32) {
    %c0_i32 = arith.constant 0 : i32
    %c0_i32_0 = arith.constant 0 : i32
    %c0_i32_1 = arith.constant 0 : i32
    return %c0_i32, %c0_i32_0 : i32, i32
  }
  func.func @transform_6(%arg0: i32) -> (i32, i32) {
    %c0_i32 = arith.constant 0 : i32
    %c0_i32_0 = arith.constant 0 : i32
    %c0_i32_1 = arith.constant 0 : i32
    return %c0_i32, %c0_i32_0 : i32, i32
  }
}

module attributes {stable_mosaic.version = 11 : i64} {
  func.func @_up_bn_act_kernel(%arg0: i32, %arg1: memref<4x32x128xbf16, #tpu.memory_space<vmem>>, %arg2: memref<4x32x128xbf16, #tpu.memory_space<vmem>>, %arg3: memref<4x128x16xbf16, #tpu.memory_space<vmem>>, %arg4: memref<4x128x16xbf16, #tpu.memory_space<vmem>>, %arg5: memref<1x16xf32, #tpu.memory_space<vmem>>, %arg6: memref<1x16xf32, #tpu.memory_space<vmem>>, %arg7: memref<32x64xf32, #tpu.memory_space<vmem>>) attributes {dimension_semantics = [#tpu.dimension_semantics<arbitrary>], iteration_bounds = array<i64: 1>, scalar_prefetch = 0 : i64, scratch_operands = 0 : i64, tpu.core_type = #tpu.core_type<tc>, window_params = [{pipeline_mode = #tpu.pipeline_mode<synchronous>, transform_indices = @transform_0, window_bounds = array<i64: 4, 32, 128>}, {pipeline_mode = #tpu.pipeline_mode<synchronous>, transform_indices = @transform_1, window_bounds = array<i64: 4, 32, 128>}, {pipeline_mode = #tpu.pipeline_mode<synchronous>, transform_indices = @transform_2, window_bounds = array<i64: 4, 128, 16>}, {pipeline_mode = #tpu.pipeline_mode<synchronous>, transform_indices = @transform_3, window_bounds = array<i64: 4, 128, 16>}, {pipeline_mode = #tpu.pipeline_mode<synchronous>, transform_indices = @transform_4, window_bounds = array<i64: 1, 16>}, {pipeline_mode = #tpu.pipeline_mode<synchronous>, transform_indices = @transform_5, window_bounds = array<i64: 1, 16>}, {pipeline_mode = #tpu.pipeline_mode<synchronous>, transform_indices = @transform_6, window_bounds = array<i64: 32, 64>}]} {
    %c0 = arith.constant 0 : index
    %c0_0 = arith.constant 0 : index
    %c0_1 = arith.constant 0 : index
    %0 = vector.load %arg1[%c0, %c0_0, %c0_1] : memref<4x32x128xbf16, #tpu.memory_space<vmem>>, vector<1x32x128xbf16>
    %1 = vector.shape_cast %0 : vector<1x32x128xbf16> to vector<32x128xbf16>
    %c0_2 = arith.constant 0 : index
    %c0_3 = arith.constant 0 : index
    %c0_4 = arith.constant 0 : index
    %2 = vector.load %arg3[%c0_2, %c0_3, %c0_4] : memref<4x128x16xbf16, #tpu.memory_space<vmem>>, vector<1x128x16xbf16>
    %3 = vector.shape_cast %2 : vector<1x128x16xbf16> to vector<128x16xbf16>
    %cst = arith.constant dense<0.000000e+00> : vector<32x16xf32>
    %4 = tpu.matmul %1, %3, %cst {dimension_numbers = #tpu.dot_dimension_numbers<[1], [0], [0], [1], [0, 0, 1, 1], [], []>} : vector<32x128xbf16>, vector<128x16xbf16>, vector<32x16xf32> -> vector<32x16xf32>
    %c0_5 = arith.constant 0 : index
    %c0_6 = arith.constant 0 : index
    %c0_7 = arith.constant 0 : index
    %5 = vector.load %arg2[%c0_5, %c0_6, %c0_7] : memref<4x32x128xbf16, #tpu.memory_space<vmem>>, vector<1x32x128xbf16>
    %6 = vector.shape_cast %5 : vector<1x32x128xbf16> to vector<32x128xbf16>
    %c0_8 = arith.constant 0 : index
    %c0_9 = arith.constant 0 : index
    %c0_10 = arith.constant 0 : index
    %7 = vector.load %arg4[%c0_8, %c0_9, %c0_10] : memref<4x128x16xbf16, #tpu.memory_space<vmem>>, vector<1x128x16xbf16>
    %8 = vector.shape_cast %7 : vector<1x128x16xbf16> to vector<128x16xbf16>
    %cst_11 = arith.constant dense<0.000000e+00> : vector<32x16xf32>
    %9 = tpu.matmul %6, %8, %cst_11 {dimension_numbers = #tpu.dot_dimension_numbers<[1], [0], [0], [1], [0, 0, 1, 1], [], []>} : vector<32x128xbf16>, vector<128x16xbf16>, vector<32x16xf32> -> vector<32x16xf32>
    %10 = arith.addf %4, %9 : vector<32x16xf32>
    %c1 = arith.constant 1 : index
    %c0_12 = arith.constant 0 : index
    %c0_13 = arith.constant 0 : index
    %11 = vector.load %arg1[%c1, %c0_12, %c0_13] : memref<4x32x128xbf16, #tpu.memory_space<vmem>>, vector<1x32x128xbf16>
    %12 = vector.shape_cast %11 : vector<1x32x128xbf16> to vector<32x128xbf16>
    %c1_14 = arith.constant 1 : index
    %c0_15 = arith.constant 0 : index
    %c0_16 = arith.constant 0 : index
    %13 = vector.load %arg3[%c1_14, %c0_15, %c0_16] : memref<4x128x16xbf16, #tpu.memory_space<vmem>>, vector<1x128x16xbf16>
    %14 = vector.shape_cast %13 : vector<1x128x16xbf16> to vector<128x16xbf16>
    %cst_17 = arith.constant dense<0.000000e+00> : vector<32x16xf32>
    %15 = tpu.matmul %12, %14, %cst_17 {dimension_numbers = #tpu.dot_dimension_numbers<[1], [0], [0], [1], [0, 0, 1, 1], [], []>} : vector<32x128xbf16>, vector<128x16xbf16>, vector<32x16xf32> -> vector<32x16xf32>
    %c1_18 = arith.constant 1 : index
    %c0_19 = arith.constant 0 : index
    %c0_20 = arith.constant 0 : index
    %16 = vector.load %arg2[%c1_18, %c0_19, %c0_20] : memref<4x32x128xbf16, #tpu.memory_space<vmem>>, vector<1x32x128xbf16>
    %17 = vector.shape_cast %16 : vector<1x32x128xbf16> to vector<32x128xbf16>
    %c1_21 = arith.constant 1 : index
    %c0_22 = arith.constant 0 : index
    %c0_23 = arith.constant 0 : index
    %18 = vector.load %arg4[%c1_21, %c0_22, %c0_23] : memref<4x128x16xbf16, #tpu.memory_space<vmem>>, vector<1x128x16xbf16>
    %19 = vector.shape_cast %18 : vector<1x128x16xbf16> to vector<128x16xbf16>
    %cst_24 = arith.constant dense<0.000000e+00> : vector<32x16xf32>
    %20 = tpu.matmul %17, %19, %cst_24 {dimension_numbers = #tpu.dot_dimension_numbers<[1], [0], [0], [1], [0, 0, 1, 1], [], []>} : vector<32x128xbf16>, vector<128x16xbf16>, vector<32x16xf32> -> vector<32x16xf32>
    %21 = arith.addf %15, %20 : vector<32x16xf32>
    %c2 = arith.constant 2 : index
    %c0_25 = arith.constant 0 : index
    %c0_26 = arith.constant 0 : index
    %22 = vector.load %arg1[%c2, %c0_25, %c0_26] : memref<4x32x128xbf16, #tpu.memory_space<vmem>>, vector<1x32x128xbf16>
    %23 = vector.shape_cast %22 : vector<1x32x128xbf16> to vector<32x128xbf16>
    %c2_27 = arith.constant 2 : index
    %c0_28 = arith.constant 0 : index
    %c0_29 = arith.constant 0 : index
    %24 = vector.load %arg3[%c2_27, %c0_28, %c0_29] : memref<4x128x16xbf16, #tpu.memory_space<vmem>>, vector<1x128x16xbf16>
    %25 = vector.shape_cast %24 : vector<1x128x16xbf16> to vector<128x16xbf16>
    %cst_30 = arith.constant dense<0.000000e+00> : vector<32x16xf32>
    %26 = tpu.matmul %23, %25, %cst_30 {dimension_numbers = #tpu.dot_dimension_numbers<[1], [0], [0], [1], [0, 0, 1, 1], [], []>} : vector<32x128xbf16>, vector<128x16xbf16>, vector<32x16xf32> -> vector<32x16xf32>
    %c2_31 = arith.constant 2 : index
    %c0_32 = arith.constant 0 : index
    %c0_33 = arith.constant 0 : index
    %27 = vector.load %arg2[%c2_31, %c0_32, %c0_33] : memref<4x32x128xbf16, #tpu.memory_space<vmem>>, vector<1x32x128xbf16>
    %28 = vector.shape_cast %27 : vector<1x32x128xbf16> to vector<32x128xbf16>
    %c2_34 = arith.constant 2 : index
    %c0_35 = arith.constant 0 : index
    %c0_36 = arith.constant 0 : index
    %29 = vector.load %arg4[%c2_34, %c0_35, %c0_36] : memref<4x128x16xbf16, #tpu.memory_space<vmem>>, vector<1x128x16xbf16>
    %30 = vector.shape_cast %29 : vector<1x128x16xbf16> to vector<128x16xbf16>
    %cst_37 = arith.constant dense<0.000000e+00> : vector<32x16xf32>
    %31 = tpu.matmul %28, %30, %cst_37 {dimension_numbers = #tpu.dot_dimension_numbers<[1], [0], [0], [1], [0, 0, 1, 1], [], []>} : vector<32x128xbf16>, vector<128x16xbf16>, vector<32x16xf32> -> vector<32x16xf32>
    %32 = arith.addf %26, %31 : vector<32x16xf32>
    %c3 = arith.constant 3 : index
    %c0_38 = arith.constant 0 : index
    %c0_39 = arith.constant 0 : index
    %33 = vector.load %arg1[%c3, %c0_38, %c0_39] : memref<4x32x128xbf16, #tpu.memory_space<vmem>>, vector<1x32x128xbf16>
    %34 = vector.shape_cast %33 : vector<1x32x128xbf16> to vector<32x128xbf16>
    %c3_40 = arith.constant 3 : index
    %c0_41 = arith.constant 0 : index
    %c0_42 = arith.constant 0 : index
    %35 = vector.load %arg3[%c3_40, %c0_41, %c0_42] : memref<4x128x16xbf16, #tpu.memory_space<vmem>>, vector<1x128x16xbf16>
    %36 = vector.shape_cast %35 : vector<1x128x16xbf16> to vector<128x16xbf16>
    %cst_43 = arith.constant dense<0.000000e+00> : vector<32x16xf32>
    %37 = tpu.matmul %34, %36, %cst_43 {dimension_numbers = #tpu.dot_dimension_numbers<[1], [0], [0], [1], [0, 0, 1, 1], [], []>} : vector<32x128xbf16>, vector<128x16xbf16>, vector<32x16xf32> -> vector<32x16xf32>
    %c3_44 = arith.constant 3 : index
    %c0_45 = arith.constant 0 : index
    %c0_46 = arith.constant 0 : index
    %38 = vector.load %arg2[%c3_44, %c0_45, %c0_46] : memref<4x32x128xbf16, #tpu.memory_space<vmem>>, vector<1x32x128xbf16>
    %39 = vector.shape_cast %38 : vector<1x32x128xbf16> to vector<32x128xbf16>
    %c3_47 = arith.constant 3 : index
    %c0_48 = arith.constant 0 : index
    %c0_49 = arith.constant 0 : index
    %40 = vector.load %arg4[%c3_47, %c0_48, %c0_49] : memref<4x128x16xbf16, #tpu.memory_space<vmem>>, vector<1x128x16xbf16>
    %41 = vector.shape_cast %40 : vector<1x128x16xbf16> to vector<128x16xbf16>
    %cst_50 = arith.constant dense<0.000000e+00> : vector<32x16xf32>
    %42 = tpu.matmul %39, %41, %cst_50 {dimension_numbers = #tpu.dot_dimension_numbers<[1], [0], [0], [1], [0, 0, 1, 1], [], []>} : vector<32x128xbf16>, vector<128x16xbf16>, vector<32x16xf32> -> vector<32x16xf32>
    %43 = arith.addf %37, %42 : vector<32x16xf32>
    %c0_51 = arith.constant 0 : index
    %c0_52 = arith.constant 0 : index
    %44 = vector.load %arg5[%c0_51, %c0_52] : memref<1x16xf32, #tpu.memory_space<vmem>>, vector<1x16xf32>
    %c0_53 = arith.constant 0 : index
    %c0_54 = arith.constant 0 : index
    %45 = vector.load %arg6[%c0_53, %c0_54] : memref<1x16xf32, #tpu.memory_space<vmem>>, vector<1x16xf32>
    %cst_55 = arith.constant dense<0.000000e+00> : vector<16xf32>
    %46 = vector.multi_reduction <add>, %10, %cst_55 [0] : vector<32x16xf32> to vector<16xf32>
    %47 = vector.shape_cast %46 : vector<16xf32> to vector<1x16xf32>
    %cst_56 = arith.constant 0.000000e+00 : f32
    %48 = vector.broadcast %cst_56 : f32 to vector<1x16xf32>
    %49 = arith.addf %48, %47 : vector<1x16xf32>
    %cst_57 = arith.constant dense<0.000000e+00> : vector<16xf32>
    %50 = vector.multi_reduction <add>, %21, %cst_57 [0] : vector<32x16xf32> to vector<16xf32>
    %51 = vector.shape_cast %50 : vector<16xf32> to vector<1x16xf32>
    %52 = arith.addf %49, %51 : vector<1x16xf32>
    %cst_58 = arith.constant dense<0.000000e+00> : vector<16xf32>
    %53 = vector.multi_reduction <add>, %32, %cst_58 [0] : vector<32x16xf32> to vector<16xf32>
    %54 = vector.shape_cast %53 : vector<16xf32> to vector<1x16xf32>
    %55 = arith.addf %52, %54 : vector<1x16xf32>
    %cst_59 = arith.constant dense<0.000000e+00> : vector<16xf32>
    %56 = vector.multi_reduction <add>, %43, %cst_59 [0] : vector<32x16xf32> to vector<16xf32>
    %57 = vector.shape_cast %56 : vector<16xf32> to vector<1x16xf32>
    %58 = arith.addf %55, %57 : vector<1x16xf32>
    %cst_60 = arith.constant 1.280000e+02 : f32
    %59 = vector.broadcast %cst_60 : f32 to vector<1x16xf32>
    %60 = arith.divf %58, %59 : vector<1x16xf32>
    %61 = vector.broadcast %60 : vector<1x16xf32> to vector<32x16xf32>
    %62 = arith.subf %10, %61 : vector<32x16xf32>
    %63 = arith.mulf %62, %62 : vector<32x16xf32>
    %cst_61 = arith.constant dense<0.000000e+00> : vector<16xf32>
    %64 = vector.multi_reduction <add>, %63, %cst_61 [0] : vector<32x16xf32> to vector<16xf32>
    %65 = vector.shape_cast %64 : vector<16xf32> to vector<1x16xf32>
    %cst_62 = arith.constant 0.000000e+00 : f32
    %66 = vector.broadcast %cst_62 : f32 to vector<1x16xf32>
    %67 = arith.addf %66, %65 : vector<1x16xf32>
    %68 = vector.broadcast %60 : vector<1x16xf32> to vector<32x16xf32>
    %69 = arith.subf %21, %68 : vector<32x16xf32>
    %70 = arith.mulf %69, %69 : vector<32x16xf32>
    %cst_63 = arith.constant dense<0.000000e+00> : vector<16xf32>
    %71 = vector.multi_reduction <add>, %70, %cst_63 [0] : vector<32x16xf32> to vector<16xf32>
    %72 = vector.shape_cast %71 : vector<16xf32> to vector<1x16xf32>
    %73 = arith.addf %67, %72 : vector<1x16xf32>
    %74 = vector.broadcast %60 : vector<1x16xf32> to vector<32x16xf32>
    %75 = arith.subf %32, %74 : vector<32x16xf32>
    %76 = arith.mulf %75, %75 : vector<32x16xf32>
    %cst_64 = arith.constant dense<0.000000e+00> : vector<16xf32>
    %77 = vector.multi_reduction <add>, %76, %cst_64 [0] : vector<32x16xf32> to vector<16xf32>
    %78 = vector.shape_cast %77 : vector<16xf32> to vector<1x16xf32>
    %79 = arith.addf %73, %78 : vector<1x16xf32>
    %80 = vector.broadcast %60 : vector<1x16xf32> to vector<32x16xf32>
    %81 = arith.subf %43, %80 : vector<32x16xf32>
    %82 = arith.mulf %81, %81 : vector<32x16xf32>
    %cst_65 = arith.constant dense<0.000000e+00> : vector<16xf32>
    %83 = vector.multi_reduction <add>, %82, %cst_65 [0] : vector<32x16xf32> to vector<16xf32>
    %84 = vector.shape_cast %83 : vector<16xf32> to vector<1x16xf32>
    %85 = arith.addf %79, %84 : vector<1x16xf32>
    %cst_66 = arith.constant 1.280000e+02 : f32
    %86 = vector.broadcast %cst_66 : f32 to vector<1x16xf32>
    %87 = arith.divf %85, %86 : vector<1x16xf32>
    %cst_67 = arith.constant 9.99999974E-6 : f32
    %88 = vector.broadcast %cst_67 : f32 to vector<1x16xf32>
    %89 = arith.addf %87, %88 : vector<1x16xf32>
    %90 = math.rsqrt %89 : vector<1x16xf32>
    %91 = arith.mulf %44, %90 : vector<1x16xf32>
    %92 = arith.mulf %60, %91 : vector<1x16xf32>
    %93 = arith.subf %45, %92 : vector<1x16xf32>
    %94 = vector.broadcast %91 : vector<1x16xf32> to vector<32x16xf32>
    %95 = arith.mulf %10, %94 : vector<32x16xf32>
    %96 = vector.broadcast %93 : vector<1x16xf32> to vector<32x16xf32>
    %97 = arith.addf %95, %96 : vector<32x16xf32>
    %98 = vector.broadcast %91 : vector<1x16xf32> to vector<32x16xf32>
    %99 = arith.mulf %21, %98 : vector<32x16xf32>
    %100 = vector.broadcast %93 : vector<1x16xf32> to vector<32x16xf32>
    %101 = arith.addf %99, %100 : vector<32x16xf32>
    %102 = vector.broadcast %91 : vector<1x16xf32> to vector<32x16xf32>
    %103 = arith.mulf %32, %102 : vector<32x16xf32>
    %104 = vector.broadcast %93 : vector<1x16xf32> to vector<32x16xf32>
    %105 = arith.addf %103, %104 : vector<32x16xf32>
    %106 = vector.broadcast %91 : vector<1x16xf32> to vector<32x16xf32>
    %107 = arith.mulf %43, %106 : vector<32x16xf32>
    %108 = vector.broadcast %93 : vector<1x16xf32> to vector<32x16xf32>
    %109 = arith.addf %107, %108 : vector<32x16xf32>
    %cst_68 = arith.constant 0.000000e+00 : f32
    %110 = vector.broadcast %cst_68 : f32 to vector<32x16xf32>
    %111 = arith.maximumf %97, %110 : vector<32x16xf32>
    %cst_69 = arith.constant 0.000000e+00 : f32
    %112 = vector.broadcast %cst_69 : f32 to vector<32x16xf32>
    %113 = arith.maximumf %101, %112 : vector<32x16xf32>
    %cst_70 = arith.constant 0.000000e+00 : f32
    %114 = vector.broadcast %cst_70 : f32 to vector<32x16xf32>
    %115 = arith.maximumf %105, %114 : vector<32x16xf32>
    %cst_71 = arith.constant 0.000000e+00 : f32
    %116 = vector.broadcast %cst_71 : f32 to vector<32x16xf32>
    %117 = arith.maximumf %109, %116 : vector<32x16xf32>
    %118 = tpu.concatenate %111, %113, %115, %117 in 1 : vector<32x16xf32>, vector<32x16xf32>, vector<32x16xf32>, vector<32x16xf32> -> vector<32x64xf32>
    %c0_72 = arith.constant 0 : index
    %c0_73 = arith.constant 0 : index
    %119 = vector.load %arg7[%c0_72, %c0_73] : memref<32x64xf32, #tpu.memory_space<vmem>>, vector<32x64xf32>
    tpu.vector_store %arg7[%c0_72, %c0_73], %118 {strides = array<i32>} : memref<32x64xf32, #tpu.memory_space<vmem>>, vector<32x64xf32>,
    return
  }
  func.func @transform_0(%arg0: i32) -> (i32, i32, i32) {
    %c0_i32 = arith.constant 0 : i32
    %c0_i32_0 = arith.constant 0 : i32
    %c0_i32_1 = arith.constant 0 : i32
    %c0_i32_2 = arith.constant 0 : i32
    return %c0_i32, %c0_i32_0, %c0_i32_1 : i32, i32, i32
  }
  func.func @transform_1(%arg0: i32) -> (i32, i32, i32) {
    %c0_i32 = arith.constant 0 : i32
    %c0_i32_0 = arith.constant 0 : i32
    %c0_i32_1 = arith.constant 0 : i32
    %c0_i32_2 = arith.constant 0 : i32
    return %c0_i32, %c0_i32_0, %c0_i32_1 : i32, i32, i32
  }
  func.func @transform_2(%arg0: i32) -> (i32, i32, i32) {
    %c0_i32 = arith.constant 0 : i32
    %c0_i32_0 = arith.constant 0 : i32
    %c0_i32_1 = arith.constant 0 : i32
    %c0_i32_2 = arith.constant 0 : i32
    return %c0_i32, %c0_i32_0, %c0_i32_1 : i32, i32, i32
  }
  func.func @transform_3(%arg0: i32) -> (i32, i32, i32) {
    %c0_i32 = arith.constant 0 : i32
    %c0_i32_0 = arith.constant 0 : i32
    %c0_i32_1 = arith.constant 0 : i32
    %c0_i32_2 = arith.constant 0 : i32
    return %c0_i32, %c0_i32_0, %c0_i32_1 : i32, i32, i32
  }
  func.func @transform_4(%arg0: i32) -> (i32, i32) {
    %c0_i32 = arith.constant 0 : i32
    %c0_i32_0 = arith.constant 0 : i32
    %c0_i32_1 = arith.constant 0 : i32
    return %c0_i32, %c0_i32_0 : i32, i32
  }
  func.func @transform_5(%arg0: i32) -> (i32, i32) {
    %c0_i32 = arith.constant 0 : i32
    %c0_i32_0 = arith.constant 0 : i32
    %c0_i32_1 = arith.constant 0 : i32
    return %c0_i32, %c0_i32_0 : i32, i32
  }
  func.func @transform_6(%arg0: i32) -> (i32, i32) {
    %c0_i32 = arith.constant 0 : i32
    %c0_i32_0 = arith.constant 0 : i32
    %c0_i32_1 = arith.constant 0 : i32
    return %c0_i32, %c0_i32_0 : i32, i32
  }
}

module attributes {stable_mosaic.version = 11 : i64} {
  func.func @_up_bn_act_kernel(%arg0: i32, %arg1: memref<4x128x64xbf16, #tpu.memory_space<vmem>>, %arg2: memref<4x128x64xbf16, #tpu.memory_space<vmem>>, %arg3: memref<4x64x8xbf16, #tpu.memory_space<vmem>>, %arg4: memref<4x64x8xbf16, #tpu.memory_space<vmem>>, %arg5: memref<1x8xf32, #tpu.memory_space<vmem>>, %arg6: memref<1x8xf32, #tpu.memory_space<vmem>>, %arg7: memref<128x32xf32, #tpu.memory_space<vmem>>) attributes {dimension_semantics = [#tpu.dimension_semantics<arbitrary>], iteration_bounds = array<i64: 1>, scalar_prefetch = 0 : i64, scratch_operands = 0 : i64, tpu.core_type = #tpu.core_type<tc>, window_params = [{pipeline_mode = #tpu.pipeline_mode<synchronous>, transform_indices = @transform_0, window_bounds = array<i64: 4, 128, 64>}, {pipeline_mode = #tpu.pipeline_mode<synchronous>, transform_indices = @transform_1, window_bounds = array<i64: 4, 128, 64>}, {pipeline_mode = #tpu.pipeline_mode<synchronous>, transform_indices = @transform_2, window_bounds = array<i64: 4, 64, 8>}, {pipeline_mode = #tpu.pipeline_mode<synchronous>, transform_indices = @transform_3, window_bounds = array<i64: 4, 64, 8>}, {pipeline_mode = #tpu.pipeline_mode<synchronous>, transform_indices = @transform_4, window_bounds = array<i64: 1, 8>}, {pipeline_mode = #tpu.pipeline_mode<synchronous>, transform_indices = @transform_5, window_bounds = array<i64: 1, 8>}, {pipeline_mode = #tpu.pipeline_mode<synchronous>, transform_indices = @transform_6, window_bounds = array<i64: 128, 32>}]} {
    %c0 = arith.constant 0 : index
    %c0_0 = arith.constant 0 : index
    %c0_1 = arith.constant 0 : index
    %0 = vector.load %arg1[%c0, %c0_0, %c0_1] : memref<4x128x64xbf16, #tpu.memory_space<vmem>>, vector<1x128x64xbf16>
    %1 = vector.shape_cast %0 : vector<1x128x64xbf16> to vector<128x64xbf16>
    %c0_2 = arith.constant 0 : index
    %c0_3 = arith.constant 0 : index
    %c0_4 = arith.constant 0 : index
    %2 = vector.load %arg3[%c0_2, %c0_3, %c0_4] : memref<4x64x8xbf16, #tpu.memory_space<vmem>>, vector<1x64x8xbf16>
    %3 = vector.shape_cast %2 : vector<1x64x8xbf16> to vector<64x8xbf16>
    %cst = arith.constant dense<0.000000e+00> : vector<128x8xf32>
    %4 = tpu.matmul %1, %3, %cst {dimension_numbers = #tpu.dot_dimension_numbers<[1], [0], [0], [1], [0, 0, 1, 1], [], []>} : vector<128x64xbf16>, vector<64x8xbf16>, vector<128x8xf32> -> vector<128x8xf32>
    %c0_5 = arith.constant 0 : index
    %c0_6 = arith.constant 0 : index
    %c0_7 = arith.constant 0 : index
    %5 = vector.load %arg2[%c0_5, %c0_6, %c0_7] : memref<4x128x64xbf16, #tpu.memory_space<vmem>>, vector<1x128x64xbf16>
    %6 = vector.shape_cast %5 : vector<1x128x64xbf16> to vector<128x64xbf16>
    %c0_8 = arith.constant 0 : index
    %c0_9 = arith.constant 0 : index
    %c0_10 = arith.constant 0 : index
    %7 = vector.load %arg4[%c0_8, %c0_9, %c0_10] : memref<4x64x8xbf16, #tpu.memory_space<vmem>>, vector<1x64x8xbf16>
    %8 = vector.shape_cast %7 : vector<1x64x8xbf16> to vector<64x8xbf16>
    %cst_11 = arith.constant dense<0.000000e+00> : vector<128x8xf32>
    %9 = tpu.matmul %6, %8, %cst_11 {dimension_numbers = #tpu.dot_dimension_numbers<[1], [0], [0], [1], [0, 0, 1, 1], [], []>} : vector<128x64xbf16>, vector<64x8xbf16>, vector<128x8xf32> -> vector<128x8xf32>
    %10 = arith.addf %4, %9 : vector<128x8xf32>
    %c1 = arith.constant 1 : index
    %c0_12 = arith.constant 0 : index
    %c0_13 = arith.constant 0 : index
    %11 = vector.load %arg1[%c1, %c0_12, %c0_13] : memref<4x128x64xbf16, #tpu.memory_space<vmem>>, vector<1x128x64xbf16>
    %12 = vector.shape_cast %11 : vector<1x128x64xbf16> to vector<128x64xbf16>
    %c1_14 = arith.constant 1 : index
    %c0_15 = arith.constant 0 : index
    %c0_16 = arith.constant 0 : index
    %13 = vector.load %arg3[%c1_14, %c0_15, %c0_16] : memref<4x64x8xbf16, #tpu.memory_space<vmem>>, vector<1x64x8xbf16>
    %14 = vector.shape_cast %13 : vector<1x64x8xbf16> to vector<64x8xbf16>
    %cst_17 = arith.constant dense<0.000000e+00> : vector<128x8xf32>
    %15 = tpu.matmul %12, %14, %cst_17 {dimension_numbers = #tpu.dot_dimension_numbers<[1], [0], [0], [1], [0, 0, 1, 1], [], []>} : vector<128x64xbf16>, vector<64x8xbf16>, vector<128x8xf32> -> vector<128x8xf32>
    %c1_18 = arith.constant 1 : index
    %c0_19 = arith.constant 0 : index
    %c0_20 = arith.constant 0 : index
    %16 = vector.load %arg2[%c1_18, %c0_19, %c0_20] : memref<4x128x64xbf16, #tpu.memory_space<vmem>>, vector<1x128x64xbf16>
    %17 = vector.shape_cast %16 : vector<1x128x64xbf16> to vector<128x64xbf16>
    %c1_21 = arith.constant 1 : index
    %c0_22 = arith.constant 0 : index
    %c0_23 = arith.constant 0 : index
    %18 = vector.load %arg4[%c1_21, %c0_22, %c0_23] : memref<4x64x8xbf16, #tpu.memory_space<vmem>>, vector<1x64x8xbf16>
    %19 = vector.shape_cast %18 : vector<1x64x8xbf16> to vector<64x8xbf16>
    %cst_24 = arith.constant dense<0.000000e+00> : vector<128x8xf32>
    %20 = tpu.matmul %17, %19, %cst_24 {dimension_numbers = #tpu.dot_dimension_numbers<[1], [0], [0], [1], [0, 0, 1, 1], [], []>} : vector<128x64xbf16>, vector<64x8xbf16>, vector<128x8xf32> -> vector<128x8xf32>
    %21 = arith.addf %15, %20 : vector<128x8xf32>
    %c2 = arith.constant 2 : index
    %c0_25 = arith.constant 0 : index
    %c0_26 = arith.constant 0 : index
    %22 = vector.load %arg1[%c2, %c0_25, %c0_26] : memref<4x128x64xbf16, #tpu.memory_space<vmem>>, vector<1x128x64xbf16>
    %23 = vector.shape_cast %22 : vector<1x128x64xbf16> to vector<128x64xbf16>
    %c2_27 = arith.constant 2 : index
    %c0_28 = arith.constant 0 : index
    %c0_29 = arith.constant 0 : index
    %24 = vector.load %arg3[%c2_27, %c0_28, %c0_29] : memref<4x64x8xbf16, #tpu.memory_space<vmem>>, vector<1x64x8xbf16>
    %25 = vector.shape_cast %24 : vector<1x64x8xbf16> to vector<64x8xbf16>
    %cst_30 = arith.constant dense<0.000000e+00> : vector<128x8xf32>
    %26 = tpu.matmul %23, %25, %cst_30 {dimension_numbers = #tpu.dot_dimension_numbers<[1], [0], [0], [1], [0, 0, 1, 1], [], []>} : vector<128x64xbf16>, vector<64x8xbf16>, vector<128x8xf32> -> vector<128x8xf32>
    %c2_31 = arith.constant 2 : index
    %c0_32 = arith.constant 0 : index
    %c0_33 = arith.constant 0 : index
    %27 = vector.load %arg2[%c2_31, %c0_32, %c0_33] : memref<4x128x64xbf16, #tpu.memory_space<vmem>>, vector<1x128x64xbf16>
    %28 = vector.shape_cast %27 : vector<1x128x64xbf16> to vector<128x64xbf16>
    %c2_34 = arith.constant 2 : index
    %c0_35 = arith.constant 0 : index
    %c0_36 = arith.constant 0 : index
    %29 = vector.load %arg4[%c2_34, %c0_35, %c0_36] : memref<4x64x8xbf16, #tpu.memory_space<vmem>>, vector<1x64x8xbf16>
    %30 = vector.shape_cast %29 : vector<1x64x8xbf16> to vector<64x8xbf16>
    %cst_37 = arith.constant dense<0.000000e+00> : vector<128x8xf32>
    %31 = tpu.matmul %28, %30, %cst_37 {dimension_numbers = #tpu.dot_dimension_numbers<[1], [0], [0], [1], [0, 0, 1, 1], [], []>} : vector<128x64xbf16>, vector<64x8xbf16>, vector<128x8xf32> -> vector<128x8xf32>
    %32 = arith.addf %26, %31 : vector<128x8xf32>
    %c3 = arith.constant 3 : index
    %c0_38 = arith.constant 0 : index
    %c0_39 = arith.constant 0 : index
    %33 = vector.load %arg1[%c3, %c0_38, %c0_39] : memref<4x128x64xbf16, #tpu.memory_space<vmem>>, vector<1x128x64xbf16>
    %34 = vector.shape_cast %33 : vector<1x128x64xbf16> to vector<128x64xbf16>
    %c3_40 = arith.constant 3 : index
    %c0_41 = arith.constant 0 : index
    %c0_42 = arith.constant 0 : index
    %35 = vector.load %arg3[%c3_40, %c0_41, %c0_42] : memref<4x64x8xbf16, #tpu.memory_space<vmem>>, vector<1x64x8xbf16>
    %36 = vector.shape_cast %35 : vector<1x64x8xbf16> to vector<64x8xbf16>
    %cst_43 = arith.constant dense<0.000000e+00> : vector<128x8xf32>
    %37 = tpu.matmul %34, %36, %cst_43 {dimension_numbers = #tpu.dot_dimension_numbers<[1], [0], [0], [1], [0, 0, 1, 1], [], []>} : vector<128x64xbf16>, vector<64x8xbf16>, vector<128x8xf32> -> vector<128x8xf32>
    %c3_44 = arith.constant 3 : index
    %c0_45 = arith.constant 0 : index
    %c0_46 = arith.constant 0 : index
    %38 = vector.load %arg2[%c3_44, %c0_45, %c0_46] : memref<4x128x64xbf16, #tpu.memory_space<vmem>>, vector<1x128x64xbf16>
    %39 = vector.shape_cast %38 : vector<1x128x64xbf16> to vector<128x64xbf16>
    %c3_47 = arith.constant 3 : index
    %c0_48 = arith.constant 0 : index
    %c0_49 = arith.constant 0 : index
    %40 = vector.load %arg4[%c3_47, %c0_48, %c0_49] : memref<4x64x8xbf16, #tpu.memory_space<vmem>>, vector<1x64x8xbf16>
    %41 = vector.shape_cast %40 : vector<1x64x8xbf16> to vector<64x8xbf16>
    %cst_50 = arith.constant dense<0.000000e+00> : vector<128x8xf32>
    %42 = tpu.matmul %39, %41, %cst_50 {dimension_numbers = #tpu.dot_dimension_numbers<[1], [0], [0], [1], [0, 0, 1, 1], [], []>} : vector<128x64xbf16>, vector<64x8xbf16>, vector<128x8xf32> -> vector<128x8xf32>
    %43 = arith.addf %37, %42 : vector<128x8xf32>
    %c0_51 = arith.constant 0 : index
    %c0_52 = arith.constant 0 : index
    %44 = vector.load %arg5[%c0_51, %c0_52] : memref<1x8xf32, #tpu.memory_space<vmem>>, vector<1x8xf32>
    %c0_53 = arith.constant 0 : index
    %c0_54 = arith.constant 0 : index
    %45 = vector.load %arg6[%c0_53, %c0_54] : memref<1x8xf32, #tpu.memory_space<vmem>>, vector<1x8xf32>
    %cst_55 = arith.constant dense<0.000000e+00> : vector<8xf32>
    %46 = vector.multi_reduction <add>, %10, %cst_55 [0] : vector<128x8xf32> to vector<8xf32>
    %47 = vector.shape_cast %46 : vector<8xf32> to vector<1x8xf32>
    %cst_56 = arith.constant 0.000000e+00 : f32
    %48 = vector.broadcast %cst_56 : f32 to vector<1x8xf32>
    %49 = arith.addf %48, %47 : vector<1x8xf32>
    %cst_57 = arith.constant dense<0.000000e+00> : vector<8xf32>
    %50 = vector.multi_reduction <add>, %21, %cst_57 [0] : vector<128x8xf32> to vector<8xf32>
    %51 = vector.shape_cast %50 : vector<8xf32> to vector<1x8xf32>
    %52 = arith.addf %49, %51 : vector<1x8xf32>
    %cst_58 = arith.constant dense<0.000000e+00> : vector<8xf32>
    %53 = vector.multi_reduction <add>, %32, %cst_58 [0] : vector<128x8xf32> to vector<8xf32>
    %54 = vector.shape_cast %53 : vector<8xf32> to vector<1x8xf32>
    %55 = arith.addf %52, %54 : vector<1x8xf32>
    %cst_59 = arith.constant dense<0.000000e+00> : vector<8xf32>
    %56 = vector.multi_reduction <add>, %43, %cst_59 [0] : vector<128x8xf32> to vector<8xf32>
    %57 = vector.shape_cast %56 : vector<8xf32> to vector<1x8xf32>
    %58 = arith.addf %55, %57 : vector<1x8xf32>
    %cst_60 = arith.constant 5.120000e+02 : f32
    %59 = vector.broadcast %cst_60 : f32 to vector<1x8xf32>
    %60 = arith.divf %58, %59 : vector<1x8xf32>
    %61 = vector.broadcast %60 : vector<1x8xf32> to vector<128x8xf32>
    %62 = arith.subf %10, %61 : vector<128x8xf32>
    %63 = arith.mulf %62, %62 : vector<128x8xf32>
    %cst_61 = arith.constant dense<0.000000e+00> : vector<8xf32>
    %64 = vector.multi_reduction <add>, %63, %cst_61 [0] : vector<128x8xf32> to vector<8xf32>
    %65 = vector.shape_cast %64 : vector<8xf32> to vector<1x8xf32>
    %cst_62 = arith.constant 0.000000e+00 : f32
    %66 = vector.broadcast %cst_62 : f32 to vector<1x8xf32>
    %67 = arith.addf %66, %65 : vector<1x8xf32>
    %68 = vector.broadcast %60 : vector<1x8xf32> to vector<128x8xf32>
    %69 = arith.subf %21, %68 : vector<128x8xf32>
    %70 = arith.mulf %69, %69 : vector<128x8xf32>
    %cst_63 = arith.constant dense<0.000000e+00> : vector<8xf32>
    %71 = vector.multi_reduction <add>, %70, %cst_63 [0] : vector<128x8xf32> to vector<8xf32>
    %72 = vector.shape_cast %71 : vector<8xf32> to vector<1x8xf32>
    %73 = arith.addf %67, %72 : vector<1x8xf32>
    %74 = vector.broadcast %60 : vector<1x8xf32> to vector<128x8xf32>
    %75 = arith.subf %32, %74 : vector<128x8xf32>
    %76 = arith.mulf %75, %75 : vector<128x8xf32>
    %cst_64 = arith.constant dense<0.000000e+00> : vector<8xf32>
    %77 = vector.multi_reduction <add>, %76, %cst_64 [0] : vector<128x8xf32> to vector<8xf32>
    %78 = vector.shape_cast %77 : vector<8xf32> to vector<1x8xf32>
    %79 = arith.addf %73, %78 : vector<1x8xf32>
    %80 = vector.broadcast %60 : vector<1x8xf32> to vector<128x8xf32>
    %81 = arith.subf %43, %80 : vector<128x8xf32>
    %82 = arith.mulf %81, %81 : vector<128x8xf32>
    %cst_65 = arith.constant dense<0.000000e+00> : vector<8xf32>
    %83 = vector.multi_reduction <add>, %82, %cst_65 [0] : vector<128x8xf32> to vector<8xf32>
    %84 = vector.shape_cast %83 : vector<8xf32> to vector<1x8xf32>
    %85 = arith.addf %79, %84 : vector<1x8xf32>
    %cst_66 = arith.constant 5.120000e+02 : f32
    %86 = vector.broadcast %cst_66 : f32 to vector<1x8xf32>
    %87 = arith.divf %85, %86 : vector<1x8xf32>
    %cst_67 = arith.constant 9.99999974E-6 : f32
    %88 = vector.broadcast %cst_67 : f32 to vector<1x8xf32>
    %89 = arith.addf %87, %88 : vector<1x8xf32>
    %90 = math.rsqrt %89 : vector<1x8xf32>
    %91 = arith.mulf %44, %90 : vector<1x8xf32>
    %92 = arith.mulf %60, %91 : vector<1x8xf32>
    %93 = arith.subf %45, %92 : vector<1x8xf32>
    %94 = vector.broadcast %91 : vector<1x8xf32> to vector<128x8xf32>
    %95 = arith.mulf %10, %94 : vector<128x8xf32>
    %96 = vector.broadcast %93 : vector<1x8xf32> to vector<128x8xf32>
    %97 = arith.addf %95, %96 : vector<128x8xf32>
    %98 = vector.broadcast %91 : vector<1x8xf32> to vector<128x8xf32>
    %99 = arith.mulf %21, %98 : vector<128x8xf32>
    %100 = vector.broadcast %93 : vector<1x8xf32> to vector<128x8xf32>
    %101 = arith.addf %99, %100 : vector<128x8xf32>
    %102 = vector.broadcast %91 : vector<1x8xf32> to vector<128x8xf32>
    %103 = arith.mulf %32, %102 : vector<128x8xf32>
    %104 = vector.broadcast %93 : vector<1x8xf32> to vector<128x8xf32>
    %105 = arith.addf %103, %104 : vector<128x8xf32>
    %106 = vector.broadcast %91 : vector<1x8xf32> to vector<128x8xf32>
    %107 = arith.mulf %43, %106 : vector<128x8xf32>
    %108 = vector.broadcast %93 : vector<1x8xf32> to vector<128x8xf32>
    %109 = arith.addf %107, %108 : vector<128x8xf32>
    %cst_68 = arith.constant 0.000000e+00 : f32
    %110 = vector.broadcast %cst_68 : f32 to vector<128x8xf32>
    %111 = arith.maximumf %97, %110 : vector<128x8xf32>
    %cst_69 = arith.constant 0.000000e+00 : f32
    %112 = vector.broadcast %cst_69 : f32 to vector<128x8xf32>
    %113 = arith.maximumf %101, %112 : vector<128x8xf32>
    %cst_70 = arith.constant 0.000000e+00 : f32
    %114 = vector.broadcast %cst_70 : f32 to vector<128x8xf32>
    %115 = arith.maximumf %105, %114 : vector<128x8xf32>
    %cst_71 = arith.constant 0.000000e+00 : f32
    %116 = vector.broadcast %cst_71 : f32 to vector<128x8xf32>
    %117 = arith.maximumf %109, %116 : vector<128x8xf32>
    %118 = tpu.concatenate %111, %113, %115, %117 in 1 : vector<128x8xf32>, vector<128x8xf32>, vector<128x8xf32>, vector<128x8xf32> -> vector<128x32xf32>
    %c0_72 = arith.constant 0 : index
    %c0_73 = arith.constant 0 : index
    %119 = vector.load %arg7[%c0_72, %c0_73] : memref<128x32xf32, #tpu.memory_space<vmem>>, vector<128x32xf32>
    tpu.vector_store %arg7[%c0_72, %c0_73], %118 {strides = array<i32>} : memref<128x32xf32, #tpu.memory_space<vmem>>, vector<128x32xf32>,
    return
  }
  func.func @transform_0(%arg0: i32) -> (i32, i32, i32) {
    %c0_i32 = arith.constant 0 : i32
    %c0_i32_0 = arith.constant 0 : i32
    %c0_i32_1 = arith.constant 0 : i32
    %c0_i32_2 = arith.constant 0 : i32
    return %c0_i32, %c0_i32_0, %c0_i32_1 : i32, i32, i32
  }
  func.func @transform_1(%arg0: i32) -> (i32, i32, i32) {
    %c0_i32 = arith.constant 0 : i32
    %c0_i32_0 = arith.constant 0 : i32
    %c0_i32_1 = arith.constant 0 : i32
    %c0_i32_2 = arith.constant 0 : i32
    return %c0_i32, %c0_i32_0, %c0_i32_1 : i32, i32, i32
  }
  func.func @transform_2(%arg0: i32) -> (i32, i32, i32) {
    %c0_i32 = arith.constant 0 : i32
    %c0_i32_0 = arith.constant 0 : i32
    %c0_i32_1 = arith.constant 0 : i32
    %c0_i32_2 = arith.constant 0 : i32
    return %c0_i32, %c0_i32_0, %c0_i32_1 : i32, i32, i32
  }
  func.func @transform_3(%arg0: i32) -> (i32, i32, i32) {
    %c0_i32 = arith.constant 0 : i32
    %c0_i32_0 = arith.constant 0 : i32
    %c0_i32_1 = arith.constant 0 : i32
    %c0_i32_2 = arith.constant 0 : i32
    return %c0_i32, %c0_i32_0, %c0_i32_1 : i32, i32, i32
  }
  func.func @transform_4(%arg0: i32) -> (i32, i32) {
    %c0_i32 = arith.constant 0 : i32
    %c0_i32_0 = arith.constant 0 : i32
    %c0_i32_1 = arith.constant 0 : i32
    return %c0_i32, %c0_i32_0 : i32, i32
  }
  func.func @transform_5(%arg0: i32) -> (i32, i32) {
    %c0_i32 = arith.constant 0 : i32
    %c0_i32_0 = arith.constant 0 : i32
    %c0_i32_1 = arith.constant 0 : i32
    return %c0_i32, %c0_i32_0 : i32, i32
  }
  func.func @transform_6(%arg0: i32) -> (i32, i32) {
    %c0_i32 = arith.constant 0 : i32
    %c0_i32_0 = arith.constant 0 : i32
    %c0_i32_1 = arith.constant 0 : i32
    return %c0_i32, %c0_i32_0 : i32, i32
  }
}

module attributes {stable_mosaic.version = 11 : i64} {
  func.func @_up_bias_act_kernel(%arg0: i32, %arg1: memref<4x512x32xbf16, #tpu.memory_space<vmem>>, %arg2: memref<4x512x32xbf16, #tpu.memory_space<vmem>>, %arg3: memref<4x32x3xbf16, #tpu.memory_space<vmem>>, %arg4: memref<4x32x3xbf16, #tpu.memory_space<vmem>>, %arg5: memref<1x3xf32, #tpu.memory_space<vmem>>, %arg6: memref<512x12xf32, #tpu.memory_space<vmem>>) attributes {dimension_semantics = [#tpu.dimension_semantics<arbitrary>], iteration_bounds = array<i64: 1>, scalar_prefetch = 0 : i64, scratch_operands = 0 : i64, tpu.core_type = #tpu.core_type<tc>, window_params = [{pipeline_mode = #tpu.pipeline_mode<synchronous>, transform_indices = @transform_0, window_bounds = array<i64: 4, 512, 32>}, {pipeline_mode = #tpu.pipeline_mode<synchronous>, transform_indices = @transform_1, window_bounds = array<i64: 4, 512, 32>}, {pipeline_mode = #tpu.pipeline_mode<synchronous>, transform_indices = @transform_2, window_bounds = array<i64: 4, 32, 3>}, {pipeline_mode = #tpu.pipeline_mode<synchronous>, transform_indices = @transform_3, window_bounds = array<i64: 4, 32, 3>}, {pipeline_mode = #tpu.pipeline_mode<synchronous>, transform_indices = @transform_4, window_bounds = array<i64: 1, 3>}, {pipeline_mode = #tpu.pipeline_mode<synchronous>, transform_indices = @transform_5, window_bounds = array<i64: 512, 12>}]} {
    %c0 = arith.constant 0 : index
    %c0_0 = arith.constant 0 : index
    %c0_1 = arith.constant 0 : index
    %0 = vector.load %arg1[%c0, %c0_0, %c0_1] : memref<4x512x32xbf16, #tpu.memory_space<vmem>>, vector<1x512x32xbf16>
    %1 = vector.shape_cast %0 : vector<1x512x32xbf16> to vector<512x32xbf16>
    %c0_2 = arith.constant 0 : index
    %c0_3 = arith.constant 0 : index
    %c0_4 = arith.constant 0 : index
    %2 = vector.load %arg3[%c0_2, %c0_3, %c0_4] : memref<4x32x3xbf16, #tpu.memory_space<vmem>>, vector<1x32x3xbf16>
    %3 = vector.shape_cast %2 : vector<1x32x3xbf16> to vector<32x3xbf16>
    %cst = arith.constant dense<0.000000e+00> : vector<512x3xf32>
    %4 = tpu.matmul %1, %3, %cst {dimension_numbers = #tpu.dot_dimension_numbers<[1], [0], [0], [1], [0, 0, 1, 1], [], []>} : vector<512x32xbf16>, vector<32x3xbf16>, vector<512x3xf32> -> vector<512x3xf32>
    %c0_5 = arith.constant 0 : index
    %c0_6 = arith.constant 0 : index
    %c0_7 = arith.constant 0 : index
    %5 = vector.load %arg2[%c0_5, %c0_6, %c0_7] : memref<4x512x32xbf16, #tpu.memory_space<vmem>>, vector<1x512x32xbf16>
    %6 = vector.shape_cast %5 : vector<1x512x32xbf16> to vector<512x32xbf16>
    %c0_8 = arith.constant 0 : index
    %c0_9 = arith.constant 0 : index
    %c0_10 = arith.constant 0 : index
    %7 = vector.load %arg4[%c0_8, %c0_9, %c0_10] : memref<4x32x3xbf16, #tpu.memory_space<vmem>>, vector<1x32x3xbf16>
    %8 = vector.shape_cast %7 : vector<1x32x3xbf16> to vector<32x3xbf16>
    %cst_11 = arith.constant dense<0.000000e+00> : vector<512x3xf32>
    %9 = tpu.matmul %6, %8, %cst_11 {dimension_numbers = #tpu.dot_dimension_numbers<[1], [0], [0], [1], [0, 0, 1, 1], [], []>} : vector<512x32xbf16>, vector<32x3xbf16>, vector<512x3xf32> -> vector<512x3xf32>
    %10 = arith.addf %4, %9 : vector<512x3xf32>
    %c0_12 = arith.constant 0 : index
    %c0_13 = arith.constant 0 : index
    %11 = vector.load %arg5[%c0_12, %c0_13] : memref<1x3xf32, #tpu.memory_space<vmem>>, vector<1x3xf32>
    %12 = vector.broadcast %11 : vector<1x3xf32> to vector<512x3xf32>
    %13 = arith.addf %10, %12 : vector<512x3xf32>
    %14 = math.tanh %13 : vector<512x3xf32>
    %c1 = arith.constant 1 : index
    %c0_14 = arith.constant 0 : index
    %c0_15 = arith.constant 0 : index
    %15 = vector.load %arg1[%c1, %c0_14, %c0_15] : memref<4x512x32xbf16, #tpu.memory_space<vmem>>, vector<1x512x32xbf16>
    %16 = vector.shape_cast %15 : vector<1x512x32xbf16> to vector<512x32xbf16>
    %c1_16 = arith.constant 1 : index
    %c0_17 = arith.constant 0 : index
    %c0_18 = arith.constant 0 : index
    %17 = vector.load %arg3[%c1_16, %c0_17, %c0_18] : memref<4x32x3xbf16, #tpu.memory_space<vmem>>, vector<1x32x3xbf16>
    %18 = vector.shape_cast %17 : vector<1x32x3xbf16> to vector<32x3xbf16>
    %cst_19 = arith.constant dense<0.000000e+00> : vector<512x3xf32>
    %19 = tpu.matmul %16, %18, %cst_19 {dimension_numbers = #tpu.dot_dimension_numbers<[1], [0], [0], [1], [0, 0, 1, 1], [], []>} : vector<512x32xbf16>, vector<32x3xbf16>, vector<512x3xf32> -> vector<512x3xf32>
    %c1_20 = arith.constant 1 : index
    %c0_21 = arith.constant 0 : index
    %c0_22 = arith.constant 0 : index
    %20 = vector.load %arg2[%c1_20, %c0_21, %c0_22] : memref<4x512x32xbf16, #tpu.memory_space<vmem>>, vector<1x512x32xbf16>
    %21 = vector.shape_cast %20 : vector<1x512x32xbf16> to vector<512x32xbf16>
    %c1_23 = arith.constant 1 : index
    %c0_24 = arith.constant 0 : index
    %c0_25 = arith.constant 0 : index
    %22 = vector.load %arg4[%c1_23, %c0_24, %c0_25] : memref<4x32x3xbf16, #tpu.memory_space<vmem>>, vector<1x32x3xbf16>
    %23 = vector.shape_cast %22 : vector<1x32x3xbf16> to vector<32x3xbf16>
    %cst_26 = arith.constant dense<0.000000e+00> : vector<512x3xf32>
    %24 = tpu.matmul %21, %23, %cst_26 {dimension_numbers = #tpu.dot_dimension_numbers<[1], [0], [0], [1], [0, 0, 1, 1], [], []>} : vector<512x32xbf16>, vector<32x3xbf16>, vector<512x3xf32> -> vector<512x3xf32>
    %25 = arith.addf %19, %24 : vector<512x3xf32>
    %c0_27 = arith.constant 0 : index
    %c0_28 = arith.constant 0 : index
    %26 = vector.load %arg5[%c0_27, %c0_28] : memref<1x3xf32, #tpu.memory_space<vmem>>, vector<1x3xf32>
    %27 = vector.broadcast %26 : vector<1x3xf32> to vector<512x3xf32>
    %28 = arith.addf %25, %27 : vector<512x3xf32>
    %29 = math.tanh %28 : vector<512x3xf32>
    %c2 = arith.constant 2 : index
    %c0_29 = arith.constant 0 : index
    %c0_30 = arith.constant 0 : index
    %30 = vector.load %arg1[%c2, %c0_29, %c0_30] : memref<4x512x32xbf16, #tpu.memory_space<vmem>>, vector<1x512x32xbf16>
    %31 = vector.shape_cast %30 : vector<1x512x32xbf16> to vector<512x32xbf16>
    %c2_31 = arith.constant 2 : index
    %c0_32 = arith.constant 0 : index
    %c0_33 = arith.constant 0 : index
    %32 = vector.load %arg3[%c2_31, %c0_32, %c0_33] : memref<4x32x3xbf16, #tpu.memory_space<vmem>>, vector<1x32x3xbf16>
    %33 = vector.shape_cast %32 : vector<1x32x3xbf16> to vector<32x3xbf16>
    %cst_34 = arith.constant dense<0.000000e+00> : vector<512x3xf32>
    %34 = tpu.matmul %31, %33, %cst_34 {dimension_numbers = #tpu.dot_dimension_numbers<[1], [0], [0], [1], [0, 0, 1, 1], [], []>} : vector<512x32xbf16>, vector<32x3xbf16>, vector<512x3xf32> -> vector<512x3xf32>
    %c2_35 = arith.constant 2 : index
    %c0_36 = arith.constant 0 : index
    %c0_37 = arith.constant 0 : index
    %35 = vector.load %arg2[%c2_35, %c0_36, %c0_37] : memref<4x512x32xbf16, #tpu.memory_space<vmem>>, vector<1x512x32xbf16>
    %36 = vector.shape_cast %35 : vector<1x512x32xbf16> to vector<512x32xbf16>
    %c2_38 = arith.constant 2 : index
    %c0_39 = arith.constant 0 : index
    %c0_40 = arith.constant 0 : index
    %37 = vector.load %arg4[%c2_38, %c0_39, %c0_40] : memref<4x32x3xbf16, #tpu.memory_space<vmem>>, vector<1x32x3xbf16>
    %38 = vector.shape_cast %37 : vector<1x32x3xbf16> to vector<32x3xbf16>
    %cst_41 = arith.constant dense<0.000000e+00> : vector<512x3xf32>
    %39 = tpu.matmul %36, %38, %cst_41 {dimension_numbers = #tpu.dot_dimension_numbers<[1], [0], [0], [1], [0, 0, 1, 1], [], []>} : vector<512x32xbf16>, vector<32x3xbf16>, vector<512x3xf32> -> vector<512x3xf32>
    %40 = arith.addf %34, %39 : vector<512x3xf32>
    %c0_42 = arith.constant 0 : index
    %c0_43 = arith.constant 0 : index
    %41 = vector.load %arg5[%c0_42, %c0_43] : memref<1x3xf32, #tpu.memory_space<vmem>>, vector<1x3xf32>
    %42 = vector.broadcast %41 : vector<1x3xf32> to vector<512x3xf32>
    %43 = arith.addf %40, %42 : vector<512x3xf32>
    %44 = math.tanh %43 : vector<512x3xf32>
    %c3 = arith.constant 3 : index
    %c0_44 = arith.constant 0 : index
    %c0_45 = arith.constant 0 : index
    %45 = vector.load %arg1[%c3, %c0_44, %c0_45] : memref<4x512x32xbf16, #tpu.memory_space<vmem>>, vector<1x512x32xbf16>
    %46 = vector.shape_cast %45 : vector<1x512x32xbf16> to vector<512x32xbf16>
    %c3_46 = arith.constant 3 : index
    %c0_47 = arith.constant 0 : index
    %c0_48 = arith.constant 0 : index
    %47 = vector.load %arg3[%c3_46, %c0_47, %c0_48] : memref<4x32x3xbf16, #tpu.memory_space<vmem>>, vector<1x32x3xbf16>
    %48 = vector.shape_cast %47 : vector<1x32x3xbf16> to vector<32x3xbf16>
    %cst_49 = arith.constant dense<0.000000e+00> : vector<512x3xf32>
    %49 = tpu.matmul %46, %48, %cst_49 {dimension_numbers = #tpu.dot_dimension_numbers<[1], [0], [0], [1], [0, 0, 1, 1], [], []>} : vector<512x32xbf16>, vector<32x3xbf16>, vector<512x3xf32> -> vector<512x3xf32>
    %c3_50 = arith.constant 3 : index
    %c0_51 = arith.constant 0 : index
    %c0_52 = arith.constant 0 : index
    %50 = vector.load %arg2[%c3_50, %c0_51, %c0_52] : memref<4x512x32xbf16, #tpu.memory_space<vmem>>, vector<1x512x32xbf16>
    %51 = vector.shape_cast %50 : vector<1x512x32xbf16> to vector<512x32xbf16>
    %c3_53 = arith.constant 3 : index
    %c0_54 = arith.constant 0 : index
    %c0_55 = arith.constant 0 : index
    %52 = vector.load %arg4[%c3_53, %c0_54, %c0_55] : memref<4x32x3xbf16, #tpu.memory_space<vmem>>, vector<1x32x3xbf16>
    %53 = vector.shape_cast %52 : vector<1x32x3xbf16> to vector<32x3xbf16>
    %cst_56 = arith.constant dense<0.000000e+00> : vector<512x3xf32>
    %54 = tpu.matmul %51, %53, %cst_56 {dimension_numbers = #tpu.dot_dimension_numbers<[1], [0], [0], [1], [0, 0, 1, 1], [], []>} : vector<512x32xbf16>, vector<32x3xbf16>, vector<512x3xf32> -> vector<512x3xf32>
    %55 = arith.addf %49, %54 : vector<512x3xf32>
    %c0_57 = arith.constant 0 : index
    %c0_58 = arith.constant 0 : index
    %56 = vector.load %arg5[%c0_57, %c0_58] : memref<1x3xf32, #tpu.memory_space<vmem>>, vector<1x3xf32>
    %57 = vector.broadcast %56 : vector<1x3xf32> to vector<512x3xf32>
    %58 = arith.addf %55, %57 : vector<512x3xf32>
    %59 = math.tanh %58 : vector<512x3xf32>
    %60 = tpu.concatenate %14, %29, %44, %59 in 1 : vector<512x3xf32>, vector<512x3xf32>, vector<512x3xf32>, vector<512x3xf32> -> vector<512x12xf32>
    %c0_59 = arith.constant 0 : index
    %c0_60 = arith.constant 0 : index
    %61 = vector.load %arg6[%c0_59, %c0_60] : memref<512x12xf32, #tpu.memory_space<vmem>>, vector<512x12xf32>
    tpu.vector_store %arg6[%c0_59, %c0_60], %60 {strides = array<i32>} : memref<512x12xf32, #tpu.memory_space<vmem>>, vector<512x12xf32>,
    return
  }
  func.func @transform_0(%arg0: i32) -> (i32, i32, i32) {
    %c0_i32 = arith.constant 0 : i32
    %c0_i32_0 = arith.constant 0 : i32
    %c0_i32_1 = arith.constant 0 : i32
    %c0_i32_2 = arith.constant 0 : i32
    return %c0_i32, %c0_i32_0, %c0_i32_1 : i32, i32, i32
  }
  func.func @transform_1(%arg0: i32) -> (i32, i32, i32) {
    %c0_i32 = arith.constant 0 : i32
    %c0_i32_0 = arith.constant 0 : i32
    %c0_i32_1 = arith.constant 0 : i32
    %c0_i32_2 = arith.constant 0 : i32
    return %c0_i32, %c0_i32_0, %c0_i32_1 : i32, i32, i32
  }
  func.func @transform_2(%arg0: i32) -> (i32, i32, i32) {
    %c0_i32 = arith.constant 0 : i32
    %c0_i32_0 = arith.constant 0 : i32
    %c0_i32_1 = arith.constant 0 : i32
    %c0_i32_2 = arith.constant 0 : i32
    return %c0_i32, %c0_i32_0, %c0_i32_1 : i32, i32, i32
  }
  func.func @transform_3(%arg0: i32) -> (i32, i32, i32) {
    %c0_i32 = arith.constant 0 : i32
    %c0_i32_0 = arith.constant 0 : i32
    %c0_i32_1 = arith.constant 0 : i32
    %c0_i32_2 = arith.constant 0 : i32
    return %c0_i32, %c0_i32_0, %c0_i32_1 : i32, i32, i32
  }
  func.func @transform_4(%arg0: i32) -> (i32, i32) {
    %c0_i32 = arith.constant 0 : i32
    %c0_i32_0 = arith.constant 0 : i32
    %c0_i32_1 = arith.constant 0 : i32
    return %c0_i32, %c0_i32_0 : i32, i32
  }
  func.func @transform_5(%arg0: i32) -> (i32, i32) {
    %c0_i32 = arith.constant 0 : i32
    %c0_i32_0 = arith.constant 0 : i32
    %c0_i32_1 = arith.constant 0 : i32
    return %c0_i32, %c0_i32_0 : i32, i32
  }
}

</mosaic_0001>

<llo_original>
// kernel: unet_forward.8
$region0: #{unet_forward.8}
  #allocation0 [shape = 'u32[]', space=smem, size = 0x4, offset = 0x4, fixed_abs, tag = 'smem constant byte address 0x4 - core index']
  #allocation1 [shape = 'u32[72,128]{1,0:T(1,128)}', space=vmem, size = 0x9000, scoped, tag = 'internal scratch']
  %s0 = inlined_call_operand.vmem [shape: bf16[512,48], index: 0, kind: input, shape index: {}]
  %s1 = inlined_call_operand.vmem [shape: bf16[48,8], index: 1, kind: input, shape index: {}]
  %s2 = inlined_call_operand.vmem [shape: f32[1,8], index: 2, kind: input, shape index: {}]
  %s3 = inlined_call_operand.vmem [shape: f32[512,8], index: 3, kind: output, shape index: {}]
  %s4 = sld [smem:[#allocation0]]
  $region22: #{unet_forward.8} parent=0
    _
  %s6 = ssub.s32 1, %s4
  %s7 = scalar_select 0, %s6, %s4
  // Predicated region
  $region2: #{unet_forward.8} parent=0 // pred_check
    _
  $region3: #{unet_forward.8} parent=0 // pred_check_branch
    %9 = sbr.rel (0) target = $region5
  $region4: #{unet_forward.8} parent=0 // pred_region
    _
  $region5: #{unet_forward.8} parent=0 // pred_fallthru
    _
  // Predicated region
  $region6: #{unet_forward.8} parent=0 // pred_check
    _
  $region7: #{unet_forward.8} parent=0 // pred_check_branch
    %11 = sbr.rel (0) target = $region9
  $region8: #{unet_forward.8} parent=0 // pred_region
    _
  $region9: #{unet_forward.8} parent=0 // pred_fallthru
    _
  // Predicated region
  $region10: #{unet_forward.8} parent=0 // pred_check
    _
  $region11: #{unet_forward.8} parent=0 // pred_check_branch
    %13 = sbr.rel (0) target = $region13
  $region12: #{unet_forward.8} parent=0 // pred_region
    _
  $region13: #{unet_forward.8} parent=0 // pred_fallthru
    _
  %v15 = vld [vmem:[%s0] sm:$0xf]
  %v16 = vld [vmem:[%s0 + $0x4] sm:$0xf]
  %v17 = vld [vmem:[%s0 + $0x8] sm:$0xf]
  %v18 = vld [vmem:[%s0 + $0xc] sm:$0xf]
  %v19 = vld [vmem:[%s0 + $0x10] sm:$0xf]
  %v20 = vld [vmem:[%s0 + $0x14] sm:$0xf]
  %v21 = vld [vmem:[%s0 + $0x18] sm:$0xf]
  %v22 = vld [vmem:[%s0 + $0x1c] sm:$0xf]
  %v23 = vld [vmem:[%s0 + $0x20] sm:$0xf]
  %v24 = vld [vmem:[%s0 + $0x24] sm:$0xf]
  %v25 = vld [vmem:[%s0 + $0x28] sm:$0xf]
  %v26 = vld [vmem:[%s0 + $0x2c] sm:$0xf]
  %v27 = vld [vmem:[%s0 + $0x30] sm:$0xf]
  %v28 = vld [vmem:[%s0 + $0x34] sm:$0xf]
  %v29 = vld [vmem:[%s0 + $0x38] sm:$0xf]
  %v30 = vld [vmem:[%s0 + $0x3c] sm:$0xf]
  %v31 = vld [vmem:[%s0 + $0x40] sm:$0xf]
  %v32 = vld [vmem:[%s0 + $0x44] sm:$0xf]
  %v33 = vld [vmem:[%s0 + $0x48] sm:$0xf]
  %v34 = vld [vmem:[%s0 + $0x4c] sm:$0xf]
  %v35 = vld [vmem:[%s0 + $0x50] sm:$0xf]
  %v36 = vld [vmem:[%s0 + $0x54] sm:$0xf]
  %v37 = vld [vmem:[%s0 + $0x58] sm:$0xf]
  %v38 = vld [vmem:[%s0 + $0x5c] sm:$0xf]
  %v39 = vld [vmem:[%s0 + $0x60] sm:$0xf]
  %v40 = vld [vmem:[%s0 + $0x64] sm:$0xf]
  %v41 = vld [vmem:[%s0 + $0x68] sm:$0xf]
  %v42 = vld [vmem:[%s0 + $0x6c] sm:$0xf]
  %v43 = vld [vmem:[%s0 + $0x70] sm:$0xf]
  %v44 = vld [vmem:[%s0 + $0x74] sm:$0xf]
  %v45 = vld [vmem:[%s0 + $0x78] sm:$0xf]
  %v46 = vld [vmem:[%s0 + $0x7c] sm:$0xf]
  %v47 = vld [vmem:[%s0 + $0x80] sm:$0xf]
  %v48 = vld [vmem:[%s0 + $0x84] sm:$0xf]
  %v49 = vld [vmem:[%s0 + $0x88] sm:$0xf]
  %v50 = vld [vmem:[%s0 + $0x8c] sm:$0xf]
  %v51 = vld [vmem:[%s0 + $0x90] sm:$0xf]
  %v52 = vld [vmem:[%s0 + $0x94] sm:$0xf]
  %v53 = vld [vmem:[%s0 + $0x98] sm:$0xf]
  %v54 = vld [vmem:[%s0 + $0x9c] sm:$0xf]
  %v55 = vld [vmem:[%s0 + $0xa0] sm:$0xf]
  %v56 = vld [vmem:[%s0 + $0xa4] sm:$0xf]
  %v57 = vld [vmem:[%s0 + $0xa8] sm:$0xf]
  %v58 = vld [vmem:[%s0 + $0xac] sm:$0xf]
  %v59 = vld [vmem:[%s0 + $0xb0] sm:$0xf]
  %v60 = vld [vmem:[%s0 + $0xb4] sm:$0xf]
  %v61 = vld [vmem:[%s0 + $0xb8] sm:$0xf]
  %v62 = vld [vmem:[%s0 + $0xbc] sm:$0xf]
  %v63 = vld [vmem:[%s0 + $0xc0] sm:$0xf]
  %v64 = vld [vmem:[%s0 + $0xc4] sm:$0xf]
  %v65 = vld [vmem:[%s0 + $0xc8] sm:$0xf]
  %v66 = vld [vmem:[%s0 + $0xcc] sm:$0xf]
  %v67 = vld [vmem:[%s0 + $0xd0] sm:$0xf]
  %v68 = vld [vmem:[%s0 + $0xd4] sm:$0xf]
  %v69 = vld [vmem:[%s0 + $0xd8] sm:$0xf]
  %v70 = vld [vmem:[%s0 + $0xdc] sm:$0xf]
  %v71 = vld [vmem:[%s0 + $0xe0] sm:$0xf]
  %v72 = vld [vmem:[%s0 + $0xe4] sm:$0xf]
  %v73 = vld [vmem:[%s0 + $0xe8] sm:$0xf]
  %v74 = vld [vmem:[%s0 + $0xec] sm:$0xf]
  %v75 = vld [vmem:[%s0 + $0xf0] sm:$0xf]
  %v76 = vld [vmem:[%s0 + $0xf4] sm:$0xf]
  %v77 = vld [vmem:[%s0 + $0xf8] sm:$0xf]
  %v78 = vld [vmem:[%s0 + $0xfc] sm:$0xf]
  %v79 = vld [vmem:[%s1] sm:$0xf]
  %v80 = vld [vmem:[%s1 + $0x4] sm:$0xf]
  %v81 = vld [vmem:[%s1 + $0x8] sm:$0xf]
  %v82 = vld [vmem:[%s1 + $0xc] sm:$0xf]
  %v83 = vld [vmem:[%s1 + $0x10] sm:$0xf]
  %v84 = vld [vmem:[%s1 + $0x14] sm:$0xf]
  %v85 = vld [vmem:[%s2] sm:$0x1]
  %v87 = vperm.slane %v85, 0
  %v153 = vunpack.c.l.b16 %v15
  %v154 = vunpack.c.l.b16 %v16
  %v155 = vunpack.c.l.b16 %v17
  %v156 = vunpack.c.l.b16 %v18
  %v157 = vunpack.c.l.b16 %v19
  %v158 = vunpack.c.l.b16 %v20
  %v159 = vunpack.c.l.b16 %v21
  %v160 = vunpack.c.l.b16 %v22
  %v161 = vunpack.c.l.b16 %v23
  %v162 = vunpack.c.l.b16 %v24
  %v163 = vunpack.c.l.b16 %v25
  %v164 = vunpack.c.l.b16 %v26
  %v165 = vunpack.c.l.b16 %v27
  %v166 = vunpack.c.l.b16 %v28
  %v167 = vunpack.c.l.b16 %v29
  %v168 = vunpack.c.l.b16 %v30
  %v169 = vunpack.c.l.b16 %v31
  %v170 = vunpack.c.l.b16 %v32
  %v171 = vunpack.c.l.b16 %v33
  %v172 = vunpack.c.l.b16 %v34
  %v173 = vunpack.c.l.b16 %v35
  %v174 = vunpack.c.l.b16 %v36
  %v175 = vunpack.c.l.b16 %v37
  %v176 = vunpack.c.l.b16 %v38
  %v177 = vunpack.c.l.b16 %v39
  %v178 = vunpack.c.l.b16 %v40
  %v179 = vunpack.c.l.b16 %v41
  %v180 = vunpack.c.l.b16 %v42
  %v181 = vunpack.c.l.b16 %v43
  %v182 = vunpack.c.l.b16 %v44
  %v183 = vunpack.c.l.b16 %v45
  %v184 = vunpack.c.l.b16 %v46
  %v185 = vunpack.c.l.b16 %v47
  %v186 = vunpack.c.l.b16 %v48
  %v187 = vunpack.c.l.b16 %v49
  %v188 = vunpack.c.l.b16 %v50
  %v189 = vunpack.c.l.b16 %v51
  %v190 = vunpack.c.l.b16 %v52
  %v191 = vunpack.c.l.b16 %v53
  %v192 = vunpack.c.l.b16 %v54
  %v193 = vunpack.c.l.b16 %v55
  %v194 = vunpack.c.l.b16 %v56
  %v195 = vunpack.c.l.b16 %v57
  %v196 = vunpack.c.l.b16 %v58
  %v197 = vunpack.c.l.b16 %v59
  %v198 = vunpack.c.l.b16 %v60
  %v199 = vunpack.c.l.b16 %v61
  %v200 = vunpack.c.l.b16 %v62
  %v201 = vunpack.c.l.b16 %v63
  %v202 = vunpack.c.l.b16 %v64
  %v203 = vunpack.c.l.b16 %v65
  %v204 = vunpack.c.l.b16 %v66
  %v205 = vunpack.c.l.b16 %v67
  %v206 = vunpack.c.l.b16 %v68
  %v207 = vunpack.c.l.b16 %v69
  %v208 = vunpack.c.l.b16 %v70
  %v209 = vunpack.c.l.b16 %v71
  %v210 = vunpack.c.l.b16 %v72
  %v211 = vunpack.c.l.b16 %v73
  %v212 = vunpack.c.l.b16 %v74
  %v213 = vunpack.c.l.b16 %v75
  %v214 = vunpack.c.l.b16 %v76
  %v215 = vunpack.c.l.b16 %v77
  %v216 = vunpack.c.l.b16 %v78
  %v217 = vpack.c.b16 %v154, %v153
  %v218 = vpack.c.b16 %v156, %v155
  %v219 = vpack.c.b16 %v158, %v157
  %v220 = vpack.c.b16 %v160, %v159
  %v221 = vpack.c.b16 %v162, %v161
  %v222 = vpack.c.b16 %v164, %v163
  %v223 = vpack.c.b16 %v166, %v165
  %v224 = vpack.c.b16 %v168, %v167
  %v225 = vpack.c.b16 %v170, %v169
  %v226 = vpack.c.b16 %v172, %v171
  %v227 = vpack.c.b16 %v174, %v173
  %v228 = vpack.c.b16 %v176, %v175
  %v229 = vpack.c.b16 %v178, %v177
  %v230 = vpack.c.b16 %v180, %v179
  %v231 = vpack.c.b16 %v182, %v181
  %v232 = vpack.c.b16 %v184, %v183
  %v233 = vpack.c.b16 %v186, %v185
  %v234 = vpack.c.b16 %v188, %v187
  %v235 = vpack.c.b16 %v190, %v189
  %v236 = vpack.c.b16 %v192, %v191
  %v237 = vpack.c.b16 %v194, %v193
  %v238 = vpack.c.b16 %v196, %v195
  %v239 = vpack.c.b16 %v198, %v197
  %v240 = vpack.c.b16 %v200, %v199
  %v241 = vpack.c.b16 %v202, %v201
  %v242 = vpack.c.b16 %v204, %v203
  %v243 = vpack.c.b16 %v206, %v205
  %v244 = vpack.c.b16 %v208, %v207
  %v245 = vpack.c.b16 %v210, %v209
  %v246 = vpack.c.b16 %v212, %v211
  %v247 = vpack.c.b16 %v214, %v213
  %v248 = vpack.c.b16 %v216, %v215
  %v255 = vunpack.c.l.b16 %v79
  %v256 = vunpack.c.l.b16 %v80
  %v257 = vunpack.c.l.b16 %v81
  %v258 = vunpack.c.l.b16 %v82
  %v259 = vunpack.c.l.b16 %v83
  %v260 = vunpack.c.l.b16 %v84
  %v261 = vpack.c.b16 %v256, %v255
  %v262 = vpack.c.b16 %v258, %v257
  %v263 = vpack.c.b16 %v260, %v259
  %vm267 = vcmask 392192
  %v269 = vsel %vm267, %v217, 0
  %v272 = vsel %vm267, %v218, 0
  %v275 = vsel %vm267, %v219, 0
  %v278 = vsel %vm267, %v220, 0
  %v281 = vsel %vm267, %v221, 0
  %v284 = vsel %vm267, %v222, 0
  %v287 = vsel %vm267, %v223, 0
  %v290 = vsel %vm267, %v224, 0
  %v293 = vsel %vm267, %v225, 0
  %v296 = vsel %vm267, %v226, 0
  %v299 = vsel %vm267, %v227, 0
  %v302 = vsel %vm267, %v228, 0
  %v305 = vsel %vm267, %v229, 0
  %v308 = vsel %vm267, %v230, 0
  %v311 = vsel %vm267, %v231, 0
  %v314 = vsel %vm267, %v232, 0
  %v317 = vsel %vm267, %v233, 0
  %v320 = vsel %vm267, %v234, 0
  %v323 = vsel %vm267, %v235, 0
  %v326 = vsel %vm267, %v236, 0
  %v329 = vsel %vm267, %v237, 0
  %v332 = vsel %vm267, %v238, 0
  %v335 = vsel %vm267, %v239, 0
  %v338 = vsel %vm267, %v240, 0
  %v341 = vsel %vm267, %v241, 0
  %v344 = vsel %vm267, %v242, 0
  %v347 = vsel %vm267, %v243, 0
  %v350 = vsel %vm267, %v244, 0
  %v353 = vsel %vm267, %v245, 0
  %v356 = vsel %vm267, %v246, 0
  %v359 = vsel %vm267, %v247, 0
  %v362 = vsel %vm267, %v248, 0
  %364 = vmatpush.bf16.msra.mxu0 0
  %365 = vmatpush.bf16.msra.mxu0 0
  %366 = vmatpush.bf16.msra.mxu0 0
  %367 = vmatpush.bf16.msra.mxu0 0
  %368 = vmatpush.bf16.msra.mxu0 0
  %369 = vmatpush.bf16.msra.mxu0 %v263
  %370 = vmatpush.bf16.msra.mxu0 %v262
  %371 = vmatpush.bf16.msra.mxu0 %v261
  %372 = vmatmul.bf16.gmra.mxu0 %v269
  %v373 = vpop.f32.mrf.mxu0
  %v374 = vadd.f32 %v87, %v373
  %v375 = vpop.f32.mrf.mxu0
  %v376 = vadd.f32 %v87, %v375
  %377 = vmatmul.bf16.gmra.mxu0 %v272
  %v378 = vpop.f32.mrf.mxu0
  %v379 = vadd.f32 %v87, %v378
  %v380 = vpop.f32.mrf.mxu0
  %v381 = vadd.f32 %v87, %v380
  %382 = vmatmul.bf16.gmra.mxu0 %v275
  %v383 = vpop.f32.mrf.mxu0
  %v384 = vadd.f32 %v87, %v383
  %v385 = vpop.f32.mrf.mxu0
  %v386 = vadd.f32 %v87, %v385
  %387 = vmatmul.bf16.gmra.mxu0 %v278
  %v388 = vpop.f32.mrf.mxu0
  %v389 = vadd.f32 %v87, %v388
  %v390 = vpop.f32.mrf.mxu0
  %v391 = vadd.f32 %v87, %v390
  %392 = vmatmul.bf16.gmra.mxu0 %v281
  %v393 = vpop.f32.mrf.mxu0
  %v394 = vadd.f32 %v87, %v393
  %v395 = vpop.f32.mrf.mxu0
  %v396 = vadd.f32 %v87, %v395
  %397 = vmatmul.bf16.gmra.mxu0 %v284
  %v398 = vpop.f32.mrf.mxu0
  %v399 = vadd.f32 %v87, %v398
  %v400 = vpop.f32.mrf.mxu0
  %v401 = vadd.f32 %v87, %v400
  %402 = vmatmul.bf16.gmra.mxu0 %v287
  %v403 = vpop.f32.mrf.mxu0
  %v404 = vadd.f32 %v87, %v403
  %v405 = vpop.f32.mrf.mxu0
  %v406 = vadd.f32 %v87, %v405
  %407 = vmatmul.bf16.gmra.mxu0 %v290
  %v408 = vpop.f32.mrf.mxu0
  %v409 = vadd.f32 %v87, %v408
  %v410 = vpop.f32.mrf.mxu0
  %v411 = vadd.f32 %v87, %v410
  %412 = vmatmul.bf16.gmra.mxu0 %v293
  %v413 = vpop.f32.mrf.mxu0
  %v414 = vadd.f32 %v87, %v413
  %v415 = vpop.f32.mrf.mxu0
  %v416 = vadd.f32 %v87, %v415
  %417 = vmatmul.bf16.gmra.mxu0 %v296
  %v418 = vpop.f32.mrf.mxu0
  %v419 = vadd.f32 %v87, %v418
  %v420 = vpop.f32.mrf.mxu0
  %v421 = vadd.f32 %v87, %v420
  %422 = vmatmul.bf16.gmra.mxu0 %v299
  %v423 = vpop.f32.mrf.mxu0
  %v424 = vadd.f32 %v87, %v423
  %v425 = vpop.f32.mrf.mxu0
  %v426 = vadd.f32 %v87, %v425
  %427 = vmatmul.bf16.gmra.mxu0 %v302
  %v428 = vpop.f32.mrf.mxu0
  %v429 = vadd.f32 %v87, %v428
  %v430 = vpop.f32.mrf.mxu0
  %v431 = vadd.f32 %v87, %v430
  %432 = vmatmul.bf16.gmra.mxu0 %v305
  %v433 = vpop.f32.mrf.mxu0
  %v434 = vadd.f32 %v87, %v433
  %v435 = vpop.f32.mrf.mxu0
  %v436 = vadd.f32 %v87, %v435
  %437 = vmatmul.bf16.gmra.mxu0 %v308
  %v438 = vpop.f32.mrf.mxu0
  %v439 = vadd.f32 %v87, %v438
  %v440 = vpop.f32.mrf.mxu0
  %v441 = vadd.f32 %v87, %v440
  %442 = vmatmul.bf16.gmra.mxu0 %v311
  %v443 = vpop.f32.mrf.mxu0
  %v444 = vadd.f32 %v87, %v443
  %v445 = vpop.f32.mrf.mxu0
  %v446 = vadd.f32 %v87, %v445
  %447 = vmatmul.bf16.gmra.mxu0 %v314
  %v448 = vpop.f32.mrf.mxu0
  %v449 = vadd.f32 %v87, %v448
  %v450 = vpop.f32.mrf.mxu0
  %v451 = vadd.f32 %v87, %v450
  %452 = vmatmul.bf16.gmra.mxu0 %v317
  %v453 = vpop.f32.mrf.mxu0
  %v454 = vadd.f32 %v87, %v453
  %v455 = vpop.f32.mrf.mxu0
  %v456 = vadd.f32 %v87, %v455
  %457 = vmatmul.bf16.gmra.mxu0 %v320
  %v458 = vpop.f32.mrf.mxu0
  %v459 = vadd.f32 %v87, %v458
  %v460 = vpop.f32.mrf.mxu0
  %v461 = vadd.f32 %v87, %v460
  %462 = vmatmul.bf16.gmra.mxu0 %v323
  %v463 = vpop.f32.mrf.mxu0
  %v464 = vadd.f32 %v87, %v463
  %v465 = vpop.f32.mrf.mxu0
  %v466 = vadd.f32 %v87, %v465
  %467 = vmatmul.bf16.gmra.mxu0 %v326
  %v468 = vpop.f32.mrf.mxu0
  %v469 = vadd.f32 %v87, %v468
  %v470 = vpop.f32.mrf.mxu0
  %v471 = vadd.f32 %v87, %v470
  %472 = vmatmul.bf16.gmra.mxu0 %v329
  %v473 = vpop.f32.mrf.mxu0
  %v474 = vadd.f32 %v87, %v473
  %v475 = vpop.f32.mrf.mxu0
  %v476 = vadd.f32 %v87, %v475
  %477 = vmatmul.bf16.gmra.mxu0 %v332
  %v478 = vpop.f32.mrf.mxu0
  %v479 = vadd.f32 %v87, %v478
  %v480 = vpop.f32.mrf.mxu0
  %v481 = vadd.f32 %v87, %v480
  %482 = vmatmul.bf16.gmra.mxu0 %v335
  %v483 = vpop.f32.mrf.mxu0
  %v484 = vadd.f32 %v87, %v483
  %v485 = vpop.f32.mrf.mxu0
  %v486 = vadd.f32 %v87, %v485
  %487 = vmatmul.bf16.gmra.mxu0 %v338
  %v488 = vpop.f32.mrf.mxu0
  %v489 = vadd.f32 %v87, %v488
  %v490 = vpop.f32.mrf.mxu0
  %v491 = vadd.f32 %v87, %v490
  %492 = vmatmul.bf16.gmra.mxu0 %v341
  %v493 = vpop.f32.mrf.mxu0
  %v494 = vadd.f32 %v87, %v493
  %v495 = vpop.f32.mrf.mxu0
  %v496 = vadd.f32 %v87, %v495
  %497 = vmatmul.bf16.gmra.mxu0 %v344
  %v498 = vpop.f32.mrf.mxu0
  %v499 = vadd.f32 %v87, %v498
  %v500 = vpop.f32.mrf.mxu0
  %v501 = vadd.f32 %v87, %v500
  %502 = vmatmul.bf16.gmra.mxu0 %v347
  %v503 = vpop.f32.mrf.mxu0
  %v504 = vadd.f32 %v87, %v503
  %v505 = vpop.f32.mrf.mxu0
  %v506 = vadd.f32 %v87, %v505
  %507 = vmatmul.bf16.gmra.mxu0 %v350
  %v508 = vpop.f32.mrf.mxu0
  %v509 = vadd.f32 %v87, %v508
  %v510 = vpop.f32.mrf.mxu0
  %v511 = vadd.f32 %v87, %v510
  %512 = vmatmul.bf16.gmra.mxu0 %v353
  %v513 = vpop.f32.mrf.mxu0
  %v514 = vadd.f32 %v87, %v513
  %v515 = vpop.f32.mrf.mxu0
  %v516 = vadd.f32 %v87, %v515
  %517 = vmatmul.bf16.gmra.mxu0 %v356
  %v518 = vpop.f32.mrf.mxu0
  %v519 = vadd.f32 %v87, %v518
  %v520 = vpop.f32.mrf.mxu0
  %v521 = vadd.f32 %v87, %v520
  %522 = vmatmul.bf16.gmra.mxu0 %v359
  %v523 = vpop.f32.mrf.mxu0
  %v524 = vadd.f32 %v87, %v523
  %v525 = vpop.f32.mrf.mxu0
  %v526 = vadd.f32 %v87, %v525
  %527 = vmatmul.bf16.gmra.mxu0 %v362
  %v528 = vpop.f32.mrf.mxu0
  %v529 = vadd.f32 %v87, %v528
  %v530 = vpop.f32.mrf.mxu0
  %v531 = vadd.f32 %v87, %v530
  %532 = vdwg.mxu0
  %vm533 = vcmp.gt.f32.partialorder %v374, 0.0
  %vm534 = vcmp.gt.f32.partialorder %v376, 0.0
  %vm535 = vcmp.gt.f32.partialorder %v379, 0.0
  %vm536 = vcmp.gt.f32.partialorder %v381, 0.0
  %vm537 = vcmp.gt.f32.partialorder %v384, 0.0
  %vm538 = vcmp.gt.f32.partialorder %v386, 0.0
  %vm539 = vcmp.gt.f32.partialorder %v389, 0.0
  %vm540 = vcmp.gt.f32.partialorder %v391, 0.0
  %vm541 = vcmp.gt.f32.partialorder %v394, 0.0
  %vm542 = vcmp.gt.f32.partialorder %v396, 0.0
  %vm543 = vcmp.gt.f32.partialorder %v399, 0.0
  %vm544 = vcmp.gt.f32.partialorder %v401, 0.0
  %vm545 = vcmp.gt.f32.partialorder %v404, 0.0
  %vm546 = vcmp.gt.f32.partialorder %v406, 0.0
  %vm547 = vcmp.gt.f32.partialorder %v409, 0.0
  %vm548 = vcmp.gt.f32.partialorder %v411, 0.0
  %vm549 = vcmp.gt.f32.partialorder %v414, 0.0
  %vm550 = vcmp.gt.f32.partialorder %v416, 0.0
  %vm551 = vcmp.gt.f32.partialorder %v419, 0.0
  %vm552 = vcmp.gt.f32.partialorder %v421, 0.0
  %vm553 = vcmp.gt.f32.partialorder %v424, 0.0
  %vm554 = vcmp.gt.f32.partialorder %v426, 0.0
  %vm555 = vcmp.gt.f32.partialorder %v429, 0.0
  %vm556 = vcmp.gt.f32.partialorder %v431, 0.0
  %vm557 = vcmp.gt.f32.partialorder %v434, 0.0
  %vm558 = vcmp.gt.f32.partialorder %v436, 0.0
  %vm559 = vcmp.gt.f32.partialorder %v439, 0.0
  %vm560 = vcmp.gt.f32.partialorder %v441, 0.0
  %vm561 = vcmp.gt.f32.partialorder %v444, 0.0
  %vm562 = vcmp.gt.f32.partialorder %v446, 0.0
  %vm563 = vcmp.gt.f32.partialorder %v449, 0.0
  %vm564 = vcmp.gt.f32.partialorder %v451, 0.0
  %vm565 = vcmp.gt.f32.partialorder %v454, 0.0
  %vm566 = vcmp.gt.f32.partialorder %v456, 0.0
  %vm567 = vcmp.gt.f32.partialorder %v459, 0.0
  %vm568 = vcmp.gt.f32.partialorder %v461, 0.0
  %vm569 = vcmp.gt.f32.partialorder %v464, 0.0
  %vm570 = vcmp.gt.f32.partialorder %v466, 0.0
  %vm571 = vcmp.gt.f32.partialorder %v469, 0.0
  %vm572 = vcmp.gt.f32.partialorder %v471, 0.0
  %vm573 = vcmp.gt.f32.partialorder %v474, 0.0
  %vm574 = vcmp.gt.f32.partialorder %v476, 0.0
  %vm575 = vcmp.gt.f32.partialorder %v479, 0.0
  %vm576 = vcmp.gt.f32.partialorder %v481, 0.0
  %vm577 = vcmp.gt.f32.partialorder %v484, 0.0
  %vm578 = vcmp.gt.f32.partialorder %v486, 0.0
  %vm579 = vcmp.gt.f32.partialorder %v489, 0.0
  %vm580 = vcmp.gt.f32.partialorder %v491, 0.0
  %vm581 = vcmp.gt.f32.partialorder %v494, 0.0
  %vm582 = vcmp.gt.f32.partialorder %v496, 0.0
  %vm583 = vcmp.gt.f32.partialorder %v499, 0.0
  %vm584 = vcmp.gt.f32.partialorder %v501, 0.0
  %vm585 = vcmp.gt.f32.partialorder %v504, 0.0
  %vm586 = vcmp.gt.f32.partialorder %v506, 0.0
  %vm587 = vcmp.gt.f32.partialorder %v509, 0.0
  %vm588 = vcmp.gt.f32.partialorder %v511, 0.0
  %vm589 = vcmp.gt.f32.partialorder %v514, 0.0
  %vm590 = vcmp.gt.f32.partialorder %v516, 0.0
  %vm591 = vcmp.gt.f32.partialorder %v519, 0.0
  %vm592 = vcmp.gt.f32.partialorder %v521, 0.0
  %vm593 = vcmp.gt.f32.partialorder %v524, 0.0
  %vm594 = vcmp.gt.f32.partialorder %v526, 0.0
  %vm595 = vcmp.gt.f32.partialorder %v529, 0.0
  %vm596 = vcmp.gt.f32.partialorder %v531, 0.0
  %v597 = vmul.f32 %v374, 0.2
  %v598 = vmul.f32 %v376, 0.2
  %v599 = vmul.f32 %v379, 0.2
  %v600 = vmul.f32 %v381, 0.2
  %v601 = vmul.f32 %v384, 0.2
  %v602 = vmul.f32 %v386, 0.2
  %v603 = vmul.f32 %v389, 0.2
  %v604 = vmul.f32 %v391, 0.2
  %v605 = vmul.f32 %v394, 0.2
  %v606 = vmul.f32 %v396, 0.2
  %v607 = vmul.f32 %v399, 0.2
  %v608 = vmul.f32 %v401, 0.2
  %v609 = vmul.f32 %v404, 0.2
  %v610 = vmul.f32 %v406, 0.2
  %v611 = vmul.f32 %v409, 0.2
  %v612 = vmul.f32 %v411, 0.2
  %v613 = vmul.f32 %v414, 0.2
  %v614 = vmul.f32 %v416, 0.2
  %v615 = vmul.f32 %v419, 0.2
  %v616 = vmul.f32 %v421, 0.2
  %v617 = vmul.f32 %v424, 0.2
  %v618 = vmul.f32 %v426, 0.2
  %v619 = vmul.f32 %v429, 0.2
  %v620 = vmul.f32 %v431, 0.2
  %v621 = vmul.f32 %v434, 0.2
  %v622 = vmul.f32 %v436, 0.2
  %v623 = vmul.f32 %v439, 0.2
  %v624 = vmul.f32 %v441, 0.2
  %v625 = vmul.f32 %v444, 0.2
  %v626 = vmul.f32 %v446, 0.2
  %v627 = vmul.f32 %v449, 0.2
  %v628 = vmul.f32 %v451, 0.2
  %v629 = vmul.f32 %v454, 0.2
  %v630 = vmul.f32 %v456, 0.2
  %v631 = vmul.f32 %v459, 0.2
  %v632 = vmul.f32 %v461, 0.2
  %v633 = vmul.f32 %v464, 0.2
  %v634 = vmul.f32 %v466, 0.2
  %v635 = vmul.f32 %v469, 0.2
  %v636 = vmul.f32 %v471, 0.2
  %v637 = vmul.f32 %v474, 0.2
  %v638 = vmul.f32 %v476, 0.2
  %v639 = vmul.f32 %v479, 0.2
  %v640 = vmul.f32 %v481, 0.2
  %v641 = vmul.f32 %v484, 0.2
  %v642 = vmul.f32 %v486, 0.2
  %v643 = vmul.f32 %v489, 0.2
  %v644 = vmul.f32 %v491, 0.2
  %v645 = vmul.f32 %v494, 0.2
  %v646 = vmul.f32 %v496, 0.2
  %v647 = vmul.f32 %v499, 0.2
  %v648 = vmul.f32 %v501, 0.2
  %v649 = vmul.f32 %v504, 0.2
  %v650 = vmul.f32 %v506, 0.2
  %v651 = vmul.f32 %v509, 0.2
  %v652 = vmul.f32 %v511, 0.2
  %v653 = vmul.f32 %v514, 0.2
  %v654 = vmul.f32 %v516, 0.2
  %v655 = vmul.f32 %v519, 0.2
  %v656 = vmul.f32 %v521, 0.2
  %v657 = vmul.f32 %v524, 0.2
  %v658 = vmul.f32 %v526, 0.2
  %v659 = vmul.f32 %v529, 0.2
  %v660 = vmul.f32 %v531, 0.2
  %v661 = vsel %vm533, %v374, %v597
  %v662 = vsel %vm534, %v376, %v598
  %v663 = vsel %vm535, %v379, %v599
  %v664 = vsel %vm536, %v381, %v600
  %v665 = vsel %vm537, %v384, %v601
  %v666 = vsel %vm538, %v386, %v602
  %v667 = vsel %vm539, %v389, %v603
  %v668 = vsel %vm540, %v391, %v604
  %v669 = vsel %vm541, %v394, %v605
  %v670 = vsel %vm542, %v396, %v606
  %v671 = vsel %vm543, %v399, %v607
  %v672 = vsel %vm544, %v401, %v608
  %v673 = vsel %vm545, %v404, %v609
  %v674 = vsel %vm546, %v406, %v610
  %v675 = vsel %vm547, %v409, %v611
  %v676 = vsel %vm548, %v411, %v612
  %v677 = vsel %vm549, %v414, %v613
  %v678 = vsel %vm550, %v416, %v614
  %v679 = vsel %vm551, %v419, %v615
  %v680 = vsel %vm552, %v421, %v616
  %v681 = vsel %vm553, %v424, %v617
  %v682 = vsel %vm554, %v426, %v618
  %v683 = vsel %vm555, %v429, %v619
  %v684 = vsel %vm556, %v431, %v620
  %v685 = vsel %vm557, %v434, %v621
  %v686 = vsel %vm558, %v436, %v622
  %v687 = vsel %vm559, %v439, %v623
  %v688 = vsel %vm560, %v441, %v624
  %v689 = vsel %vm561, %v444, %v625
  %v690 = vsel %vm562, %v446, %v626
  %v691 = vsel %vm563, %v449, %v627
  %v692 = vsel %vm564, %v451, %v628
  %v693 = vsel %vm565, %v454, %v629
  %v694 = vsel %vm566, %v456, %v630
  %v695 = vsel %vm567, %v459, %v631
  %v696 = vsel %vm568, %v461, %v632
  %v697 = vsel %vm569, %v464, %v633
  %v698 = vsel %vm570, %v466, %v634
  %v699 = vsel %vm571, %v469, %v635
  %v700 = vsel %vm572, %v471, %v636
  %v701 = vsel %vm573, %v474, %v637
  %v702 = vsel %vm574, %v476, %v638
  %v703 = vsel %vm575, %v479, %v639
  %v704 = vsel %vm576, %v481, %v640
  %v705 = vsel %vm577, %v484, %v641
  %v706 = vsel %vm578, %v486, %v642
  %v707 = vsel %vm579, %v489, %v643
  %v708 = vsel %vm580, %v491, %v644
  %v709 = vsel %vm581, %v494, %v645
  %v710 = vsel %vm582, %v496, %v646
  %v711 = vsel %vm583, %v499, %v647
  %v712 = vsel %vm584, %v501, %v648
  %v713 = vsel %vm585, %v504, %v649
  %v714 = vsel %vm586, %v506, %v650
  %v715 = vsel %vm587, %v509, %v651
  %v716 = vsel %vm588, %v511, %v652
  %v717 = vsel %vm589, %v514, %v653
  %v718 = vsel %vm590, %v516, %v654
  %v719 = vsel %vm591, %v519, %v655
  %v720 = vsel %vm592, %v521, %v656
  %v721 = vsel %vm593, %v524, %v657
  %v722 = vsel %vm594, %v526, %v658
  %v723 = vsel %vm595, %v529, %v659
  %v724 = vsel %vm596, %v531, %v660
  %vm725 = vcmask 64512
  %726 = vst.msk [vmem:[%s3] sm:$0xff] %vm725, %v661
  %727 = vst.msk [vmem:[%s3 + $0x8] sm:$0xff] %vm725, %v662
  %728 = vst.msk [vmem:[%s3 + $0x10] sm:$0xff] %vm725, %v663
  %729 = vst.msk [vmem:[%s3 + $0x18] sm:$0xff] %vm725, %v664
  %730 = vst.msk [vmem:[%s3 + $0x20] sm:$0xff] %vm725, %v665
  %731 = vst.msk [vmem:[%s3 + $0x28] sm:$0xff] %vm725, %v666
  %732 = vst.msk [vmem:[%s3 + $0x30] sm:$0xff] %vm725, %v667
  %733 = vst.msk [vmem:[%s3 + $0x38] sm:$0xff] %vm725, %v668
  %734 = vst.msk [vmem:[%s3 + $0x40] sm:$0xff] %vm725, %v669
  %735 = vst.msk [vmem:[%s3 + $0x48] sm:$0xff] %vm725, %v670
  %736 = vst.msk [vmem:[%s3 + $0x50] sm:$0xff] %vm725, %v671
  %737 = vst.msk [vmem:[%s3 + $0x58] sm:$0xff] %vm725, %v672
  %738 = vst.msk [vmem:[%s3 + $0x60] sm:$0xff] %vm725, %v673
  %739 = vst.msk [vmem:[%s3 + $0x68] sm:$0xff] %vm725, %v674
  %740 = vst.msk [vmem:[%s3 + $0x70] sm:$0xff] %vm725, %v675
  %741 = vst.msk [vmem:[%s3 + $0x78] sm:$0xff] %vm725, %v676
  %742 = vst.msk [vmem:[%s3 + $0x80] sm:$0xff] %vm725, %v677
  %743 = vst.msk [vmem:[%s3 + $0x88] sm:$0xff] %vm725, %v678
  %744 = vst.msk [vmem:[%s3 + $0x90] sm:$0xff] %vm725, %v679
  %745 = vst.msk [vmem:[%s3 + $0x98] sm:$0xff] %vm725, %v680
  %746 = vst.msk [vmem:[%s3 + $0xa0] sm:$0xff] %vm725, %v681
  %747 = vst.msk [vmem:[%s3 + $0xa8] sm:$0xff] %vm725, %v682
  %748 = vst.msk [vmem:[%s3 + $0xb0] sm:$0xff] %vm725, %v683
  %749 = vst.msk [vmem:[%s3 + $0xb8] sm:$0xff] %vm725, %v684
  %750 = vst.msk [vmem:[%s3 + $0xc0] sm:$0xff] %vm725, %v685
  %751 = vst.msk [vmem:[%s3 + $0xc8] sm:$0xff] %vm725, %v686
  %752 = vst.msk [vmem:[%s3 + $0xd0] sm:$0xff] %vm725, %v687
  %753 = vst.msk [vmem:[%s3 + $0xd8] sm:$0xff] %vm725, %v688
  %754 = vst.msk [vmem:[%s3 + $0xe0] sm:$0xff] %vm725, %v689
  %755 = vst.msk [vmem:[%s3 + $0xe8] sm:$0xff] %vm725, %v690
  %756 = vst.msk [vmem:[%s3 + $0xf0] sm:$0xff] %vm725, %v691
  %757 = vst.msk [vmem:[%s3 + $0xf8] sm:$0xff] %vm725, %v692
  %758 = vst.msk [vmem:[%s3 + $0x100] sm:$0xff] %vm725, %v693
  %759 = vst.msk [vmem:[%s3 + $0x108] sm:$0xff] %vm725, %v694
  %760 = vst.msk [vmem:[%s3 + $0x110] sm:$0xff] %vm725, %v695
  %761 = vst.msk [vmem:[%s3 + $0x118] sm:$0xff] %vm725, %v696
  %762 = vst.msk [vmem:[%s3 + $0x120] sm:$0xff] %vm725, %v697
  %763 = vst.msk [vmem:[%s3 + $0x128] sm:$0xff] %vm725, %v698
  %764 = vst.msk [vmem:[%s3 + $0x130] sm:$0xff] %vm725, %v699
  %765 = vst.msk [vmem:[%s3 + $0x138] sm:$0xff] %vm725, %v700
  %766 = vst.msk [vmem:[%s3 + $0x140] sm:$0xff] %vm725, %v701
  %767 = vst.msk [vmem:[%s3 + $0x148] sm:$0xff] %vm725, %v702
  %768 = vst.msk [vmem:[%s3 + $0x150] sm:$0xff] %vm725, %v703
  %769 = vst.msk [vmem:[%s3 + $0x158] sm:$0xff] %vm725, %v704
  %770 = vst.msk [vmem:[%s3 + $0x160] sm:$0xff] %vm725, %v705
  %771 = vst.msk [vmem:[%s3 + $0x168] sm:$0xff] %vm725, %v706
  %772 = vst.msk [vmem:[%s3 + $0x170] sm:$0xff] %vm725, %v707
  %773 = vst.msk [vmem:[%s3 + $0x178] sm:$0xff] %vm725, %v708
  %774 = vst.msk [vmem:[%s3 + $0x180] sm:$0xff] %vm725, %v709
  %775 = vst.msk [vmem:[%s3 + $0x188] sm:$0xff] %vm725, %v710
  %776 = vst.msk [vmem:[%s3 + $0x190] sm:$0xff] %vm725, %v711
  %777 = vst.msk [vmem:[%s3 + $0x198] sm:$0xff] %vm725, %v712
  %778 = vst.msk [vmem:[%s3 + $0x1a0] sm:$0xff] %vm725, %v713
  %779 = vst.msk [vmem:[%s3 + $0x1a8] sm:$0xff] %vm725, %v714
  %780 = vst.msk [vmem:[%s3 + $0x1b0] sm:$0xff] %vm725, %v715
  %781 = vst.msk [vmem:[%s3 + $0x1b8] sm:$0xff] %vm725, %v716
  %782 = vst.msk [vmem:[%s3 + $0x1c0] sm:$0xff] %vm725, %v717
  %783 = vst.msk [vmem:[%s3 + $0x1c8] sm:$0xff] %vm725, %v718
  %784 = vst.msk [vmem:[%s3 + $0x1d0] sm:$0xff] %vm725, %v719
  %785 = vst.msk [vmem:[%s3 + $0x1d8] sm:$0xff] %vm725, %v720
  %786 = vst.msk [vmem:[%s3 + $0x1e0] sm:$0xff] %vm725, %v721
  %787 = vst.msk [vmem:[%s3 + $0x1e8] sm:$0xff] %vm725, %v722
  %788 = vst.msk [vmem:[%s3 + $0x1f0] sm:$0xff] %vm725, %v723
  %789 = vst.msk [vmem:[%s3 + $0x1f8] sm:$0xff] %vm725, %v724
  // Predicated region
  $region14: #{unet_forward.8} parent=0 // pred_check
    _
  $region15: #{unet_forward.8} parent=0 // pred_check_branch
    %791 = sbr.rel (0) target = $region17
  $region16: #{unet_forward.8} parent=0 // pred_region
    _
  $region17: #{unet_forward.8} parent=0 // pred_fallthru
    _
  // Predicated region
  $region18: #{unet_forward.8} parent=0 // pred_check
    _
  $region19: #{unet_forward.8} parent=0 // pred_check_branch
    %793 = sbr.rel (0) target = $region21
  $region20: #{unet_forward.8} parent=0 // pred_region
    _
  $region21: #{unet_forward.8} parent=0 // pred_fallthru
    _

// kernel: unet_forward.9
$region0: #{unet_forward.9}
  #allocation0 [shape = 'u32[]', space=smem, size = 0x4, offset = 0x4, fixed_abs, tag = 'smem constant byte address 0x4 - core index']
  #allocation1 [shape = 'u32[72,128]{1,0:T(1,128)}', space=vmem, size = 0x9000, scoped, tag = 'internal scratch']
  %s0 = inlined_call_operand.vmem [shape: bf16[128,128], index: 0, kind: input, shape index: {}]
  %s1 = inlined_call_operand.vmem [shape: bf16[128,16], index: 1, kind: input, shape index: {}]
  %s2 = inlined_call_operand.vmem [shape: f32[1,16], index: 2, kind: input, shape index: {}]
  %s3 = inlined_call_operand.vmem [shape: f32[1,16], index: 3, kind: input, shape index: {}]
  %s4 = inlined_call_operand.vmem [shape: f32[128,16], index: 4, kind: output, shape index: {}]
  %s5 = sld [smem:[#allocation0]]
  $region26: #{unet_forward.9} parent=0
    _
  %s7 = ssub.s32 1, %s5
  %s8 = scalar_select 0, %s7, %s5
  // Predicated region
  $region2: #{unet_forward.9} parent=0 // pred_check
    _
  $region3: #{unet_forward.9} parent=0 // pred_check_branch
    %10 = sbr.rel (0) target = $region5
  $region4: #{unet_forward.9} parent=0 // pred_region
    _
  $region5: #{unet_forward.9} parent=0 // pred_fallthru
    _
  // Predicated region
  $region6: #{unet_forward.9} parent=0 // pred_check
    _
  $region7: #{unet_forward.9} parent=0 // pred_check_branch
    %12 = sbr.rel (0) target = $region9
  $region8: #{unet_forward.9} parent=0 // pred_region
    _
  $region9: #{unet_forward.9} parent=0 // pred_fallthru
    _
  // Predicated region
  $region10: #{unet_forward.9} parent=0 // pred_check
    _
  $region11: #{unet_forward.9} parent=0 // pred_check_branch
    %14 = sbr.rel (0) target = $region13
  $region12: #{unet_forward.9} parent=0 // pred_region
    _
  $region13: #{unet_forward.9} parent=0 // pred_fallthru
    _
  // Predicated region
  $region14: #{unet_forward.9} parent=0 // pred_check
    _
  $region15: #{unet_forward.9} parent=0 // pred_check_branch
    %16 = sbr.rel (0) target = $region17
  $region16: #{unet_forward.9} parent=0 // pred_region
    _
  $region17: #{unet_forward.9} parent=0 // pred_fallthru
    _
  %v17 = vld [vmem:[%s0] sm:$0xf]
  %v18 = vld [vmem:[%s0 + $0x4] sm:$0xf]
  %v19 = vld [vmem:[%s0 + $0x8] sm:$0xf]
  %v20 = vld [vmem:[%s0 + $0xc] sm:$0xf]
  %v21 = vld [vmem:[%s0 + $0x10] sm:$0xf]
  %v22 = vld [vmem:[%s0 + $0x14] sm:$0xf]
  %v23 = vld [vmem:[%s0 + $0x18] sm:$0xf]
  %v24 = vld [vmem:[%s0 + $0x1c] sm:$0xf]
  %v25 = vld [vmem:[%s0 + $0x20] sm:$0xf]
  %v26 = vld [vmem:[%s0 + $0x24] sm:$0xf]
  %v27 = vld [vmem:[%s0 + $0x28] sm:$0xf]
  %v28 = vld [vmem:[%s0 + $0x2c] sm:$0xf]
  %v29 = vld [vmem:[%s0 + $0x30] sm:$0xf]
  %v30 = vld [vmem:[%s0 + $0x34] sm:$0xf]
  %v31 = vld [vmem:[%s0 + $0x38] sm:$0xf]
  %v32 = vld [vmem:[%s0 + $0x3c] sm:$0xf]
  %v33 = vld [vmem:[%s1] sm:$0xf]
  %v34 = vld [vmem:[%s1 + $0x4] sm:$0xf]
  %v35 = vld [vmem:[%s1 + $0x8] sm:$0xf]
  %v36 = vld [vmem:[%s1 + $0xc] sm:$0xf]
  %v37 = vld [vmem:[%s1 + $0x10] sm:$0xf]
  %v38 = vld [vmem:[%s1 + $0x14] sm:$0xf]
  %v39 = vld [vmem:[%s1 + $0x18] sm:$0xf]
  %v40 = vld [vmem:[%s1 + $0x1c] sm:$0xf]
  %v41 = vld [vmem:[%s1 + $0x20] sm:$0xf]
  %v42 = vld [vmem:[%s1 + $0x24] sm:$0xf]
  %v43 = vld [vmem:[%s1 + $0x28] sm:$0xf]
  %v44 = vld [vmem:[%s1 + $0x2c] sm:$0xf]
  %v45 = vld [vmem:[%s1 + $0x30] sm:$0xf]
  %v46 = vld [vmem:[%s1 + $0x34] sm:$0xf]
  %v47 = vld [vmem:[%s1 + $0x38] sm:$0xf]
  %v48 = vld [vmem:[%s1 + $0x3c] sm:$0xf]
  %v65 = vunpack.c.l.b16 %v17
  %v66 = vunpack.c.l.b16 %v18
  %v67 = vunpack.c.l.b16 %v19
  %v68 = vunpack.c.l.b16 %v20
  %v69 = vunpack.c.l.b16 %v21
  %v70 = vunpack.c.l.b16 %v22
  %v71 = vunpack.c.l.b16 %v23
  %v72 = vunpack.c.l.b16 %v24
  %v73 = vunpack.c.l.b16 %v25
  %v74 = vunpack.c.l.b16 %v26
  %v75 = vunpack.c.l.b16 %v27
  %v76 = vunpack.c.l.b16 %v28
  %v77 = vunpack.c.l.b16 %v29
  %v78 = vunpack.c.l.b16 %v30
  %v79 = vunpack.c.l.b16 %v31
  %v80 = vunpack.c.l.b16 %v32
  %v81 = vpack.c.b16 %v66, %v65
  %v82 = vpack.c.b16 %v68, %v67
  %v83 = vpack.c.b16 %v70, %v69
  %v84 = vpack.c.b16 %v72, %v71
  %v85 = vpack.c.b16 %v74, %v73
  %v86 = vpack.c.b16 %v76, %v75
  %v87 = vpack.c.b16 %v78, %v77
  %v88 = vpack.c.b16 %v80, %v79
  %v113 = vunpack.c.l.b16 %v33
  %v114 = vunpack.c.l.b16 %v34
  %v115 = vunpack.c.l.b16 %v35
  %v116 = vunpack.c.l.b16 %v36
  %v117 = vunpack.c.l.b16 %v37
  %v118 = vunpack.c.l.b16 %v38
  %v119 = vunpack.c.l.b16 %v39
  %v120 = vunpack.c.l.b16 %v40
  %v121 = vunpack.c.l.b16 %v41
  %v122 = vunpack.c.l.b16 %v42
  %v123 = vunpack.c.l.b16 %v43
  %v124 = vunpack.c.l.b16 %v44
  %v125 = vunpack.c.l.b16 %v45
  %v126 = vunpack.c.l.b16 %v46
  %v127 = vunpack.c.l.b16 %v47
  %v128 = vunpack.c.l.b16 %v48
  %v129 = vpack.c.b16 %v114, %v113
  %v130 = vpack.c.b16 %v116, %v115
  %v131 = vpack.c.b16 %v118, %v117
  %v132 = vpack.c.b16 %v120, %v119
  %v133 = vpack.c.b16 %v122, %v121
  %v134 = vpack.c.b16 %v124, %v123
  %v135 = vpack.c.b16 %v126, %v125
  %v136 = vpack.c.b16 %v128, %v127
  %145 = vmatpush.bf16.msra.mxu0 %v136
  %146 = vmatpush.bf16.msra.mxu0 %v135
  %147 = vmatpush.bf16.msra.mxu0 %v134
  %148 = vmatpush.bf16.msra.mxu0 %v133
  %149 = vmatpush.bf16.msra.mxu0 %v132
  %150 = vmatpush.bf16.msra.mxu0 %v131
  %151 = vmatpush.bf16.msra.mxu0 %v130
  %152 = vmatpush.bf16.msra.mxu0 %v129
  %153 = vmatmul.bf16.gmra.mxu0 %v81
  %v154 = vpop.f32.mrf.mxu0
  %v155 = vadd.f32 0.0, %v154
  %v156 = vpop.f32.mrf.mxu0
  %v157 = vadd.f32 0.0, %v156
  %158 = vmatmul.bf16.gmra.mxu0 %v82
  %v159 = vpop.f32.mrf.mxu0
  %v160 = vadd.f32 0.0, %v159
  %v161 = vpop.f32.mrf.mxu0
  %v162 = vadd.f32 0.0, %v161
  %163 = vmatmul.bf16.gmra.mxu0 %v83
  %v164 = vpop.f32.mrf.mxu0
  %v165 = vadd.f32 0.0, %v164
  %v166 = vpop.f32.mrf.mxu0
  %v167 = vadd.f32 0.0, %v166
  %168 = vmatmul.bf16.gmra.mxu0 %v84
  %v169 = vpop.f32.mrf.mxu0
  %v170 = vadd.f32 0.0, %v169
  %v171 = vpop.f32.mrf.mxu0
  %v172 = vadd.f32 0.0, %v171
  %173 = vmatmul.bf16.gmra.mxu0 %v85
  %v174 = vpop.f32.mrf.mxu0
  %v175 = vadd.f32 0.0, %v174
  %v176 = vpop.f32.mrf.mxu0
  %v177 = vadd.f32 0.0, %v176
  %178 = vmatmul.bf16.gmra.mxu0 %v86
  %v179 = vpop.f32.mrf.mxu0
  %v180 = vadd.f32 0.0, %v179
  %v181 = vpop.f32.mrf.mxu0
  %v182 = vadd.f32 0.0, %v181
  %183 = vmatmul.bf16.gmra.mxu0 %v87
  %v184 = vpop.f32.mrf.mxu0
  %v185 = vadd.f32 0.0, %v184
  %v186 = vpop.f32.mrf.mxu0
  %v187 = vadd.f32 0.0, %v186
  %188 = vmatmul.bf16.gmra.mxu0 %v88
  %v189 = vpop.f32.mrf.mxu0
  %v190 = vadd.f32 0.0, %v189
  %v191 = vpop.f32.mrf.mxu0
  %v192 = vadd.f32 0.0, %v191
  %193 = vdwg.mxu0
  %v194 = vld [vmem:[%s2] sm:$0x1]
  %v195 = vld [vmem:[%s3] sm:$0x1]
  %vm196 = vcmask 130048
  %v197 = vsel %vm196, %v155, 0.0
  %v198 = vsel %vm196, %v157, 0.0
  %v199 = vadd.f32 %v197, %v198
  %v200 = vsel %vm196, %v160, 0.0
  %v201 = vadd.f32 %v199, %v200
  %v202 = vsel %vm196, %v162, 0.0
  %v203 = vadd.f32 %v201, %v202
  %v204 = vsel %vm196, %v165, 0.0
  %v205 = vadd.f32 %v203, %v204
  %v206 = vsel %vm196, %v167, 0.0
  %v207 = vadd.f32 %v205, %v206
  %v208 = vsel %vm196, %v170, 0.0
  %v209 = vadd.f32 %v207, %v208
  %v210 = vsel %vm196, %v172, 0.0
  %v211 = vadd.f32 %v209, %v210
  %v212 = vsel %vm196, %v175, 0.0
  %v213 = vadd.f32 %v211, %v212
  %v214 = vsel %vm196, %v177, 0.0
  %v215 = vadd.f32 %v213, %v214
  %v216 = vsel %vm196, %v180, 0.0
  %v217 = vadd.f32 %v215, %v216
  %v218 = vsel %vm196, %v182, 0.0
  %v219 = vadd.f32 %v217, %v218
  %v220 = vsel %vm196, %v185, 0.0
  %v221 = vadd.f32 %v219, %v220
  %v222 = vsel %vm196, %v187, 0.0
  %v223 = vadd.f32 %v221, %v222
  %v224 = vsel %vm196, %v190, 0.0
  %v225 = vadd.f32 %v223, %v224
  %v226 = vsel %vm196, %v192, 0.0
  %v227 = vadd.f32 %v225, %v226
  %v228 = vrot.slane %v227, 4
  %v229 = vadd.f32 %v227, %v228
  %v230 = vrot.slane %v229, 2
  %v231 = vadd.f32 %v229, %v230
  %v232 = vrot.slane %v231, 1
  %v233 = vadd.f32 %v231, %v232
  %v234 = vadd.f32 %v233, 0.0
  %v235 = vrcp.pop 128.0
  %v236 = vmul.f32 128.0, %v235
  %v237 = vsub.f32 1.0, %v236
  %v238 = vmul.f32 %v235, %v237
  %v239 = vadd.f32 %v235, %v238
  %vm240 = vweird.f32 %v235
  %v241 = vsel %vm240, %v235, %v239
  %v242 = vmul.f32 %v234, %v241
  %v243 = vsub.f32 %v155, %v242
  %v244 = vsub.f32 %v157, %v242
  %v245 = vsub.f32 %v160, %v242
  %v246 = vsub.f32 %v162, %v242
  %v247 = vsub.f32 %v165, %v242
  %v248 = vsub.f32 %v167, %v242
  %v249 = vsub.f32 %v170, %v242
  %v250 = vsub.f32 %v172, %v242
  %v251 = vsub.f32 %v175, %v242
  %v252 = vsub.f32 %v177, %v242
  %v253 = vsub.f32 %v180, %v242
  %v254 = vsub.f32 %v182, %v242
  %v255 = vsub.f32 %v185, %v242
  %v256 = vsub.f32 %v187, %v242
  %v257 = vsub.f32 %v190, %v242
  %v258 = vsub.f32 %v192, %v242
  %v259 = vmul.f32 %v243, %v243
  %v260 = vmul.f32 %v244, %v244
  %v261 = vmul.f32 %v245, %v245
  %v262 = vmul.f32 %v246, %v246
  %v263 = vmul.f32 %v247, %v247
  %v264 = vmul.f32 %v248, %v248
  %v265 = vmul.f32 %v249, %v249
  %v266 = vmul.f32 %v250, %v250
  %v267 = vmul.f32 %v251, %v251
  %v268 = vmul.f32 %v252, %v252
  %v269 = vmul.f32 %v253, %v253
  %v270 = vmul.f32 %v254, %v254
  %v271 = vmul.f32 %v255, %v255
  %v272 = vmul.f32 %v256, %v256
  %v273 = vmul.f32 %v257, %v257
  %v274 = vmul.f32 %v258, %v258
  %v275 = vsel %vm196, %v259, 0.0
  %v276 = vsel %vm196, %v260, 0.0
  %v277 = vadd.f32 %v275, %v276
  %v278 = vsel %vm196, %v261, 0.0
  %v279 = vadd.f32 %v277, %v278
  %v280 = vsel %vm196, %v262, 0.0
  %v281 = vadd.f32 %v279, %v280
  %v282 = vsel %vm196, %v263, 0.0
  %v283 = vadd.f32 %v281, %v282
  %v284 = vsel %vm196, %v264, 0.0
  %v285 = vadd.f32 %v283, %v284
  %v286 = vsel %vm196, %v265, 0.0
  %v287 = vadd.f32 %v285, %v286
  %v288 = vsel %vm196, %v266, 0.0
  %v289 = vadd.f32 %v287, %v288
  %v290 = vsel %vm196, %v267, 0.0
  %v291 = vadd.f32 %v289, %v290
  %v292 = vsel %vm196, %v268, 0.0
  %v293 = vadd.f32 %v291, %v292
  %v294 = vsel %vm196, %v269, 0.0
  %v295 = vadd.f32 %v293, %v294
  %v296 = vsel %vm196, %v270, 0.0
  %v297 = vadd.f32 %v295, %v296
  %v298 = vsel %vm196, %v271, 0.0
  %v299 = vadd.f32 %v297, %v298
  %v300 = vsel %vm196, %v272, 0.0
  %v301 = vadd.f32 %v299, %v300
  %v302 = vsel %vm196, %v273, 0.0
  %v303 = vadd.f32 %v301, %v302
  %v304 = vsel %vm196, %v274, 0.0
  %v305 = vadd.f32 %v303, %v304
  %v306 = vrot.slane %v305, 4
  %v307 = vadd.f32 %v305, %v306
  %v308 = vrot.slane %v307, 2
  %v309 = vadd.f32 %v307, %v308
  %v310 = vrot.slane %v309, 1
  %v311 = vadd.f32 %v309, %v310
  %v312 = vadd.f32 %v311, 0.0
  %v313 = vmul.f32 %v312, %v241
  %v314 = vadd.f32 %v313, 1e-05
  %v315 = vrsqrt.pop %v314
  %v316 = vmul.f32 %v315, %v314
  %v317 = vmul.f32 %v316, %v315
  %v318 = vmul.f32 0.5, %v317
  %v319 = vsub.f32 1.5, %v318
  %v320 = vmul.f32 %v315, %v319
  %vm321 = vweird.f32 %v314
  %vm322 = vweird.f32 %v315
  %vm323 = vmor %vm321, %vm322
  %v324 = vsel %vm323, %v315, %v320
  %v325 = vmul.f32 %v194, %v324
  %v326 = vmul.f32 %v242, %v325
  %v327 = vsub.f32 %v195, %v326
  %v329 = vperm.slane %v325, 0
  %v331 = vmul.f32 %v155, %v329
  %v332 = vmul.f32 %v157, %v329
  %v333 = vmul.f32 %v160, %v329
  %v334 = vmul.f32 %v162, %v329
  %v335 = vmul.f32 %v165, %v329
  %v336 = vmul.f32 %v167, %v329
  %v337 = vmul.f32 %v170, %v329
  %v338 = vmul.f32 %v172, %v329
  %v339 = vmul.f32 %v175, %v329
  %v340 = vmul.f32 %v177, %v329
  %v341 = vmul.f32 %v180, %v329
  %v342 = vmul.f32 %v182, %v329
  %v343 = vmul.f32 %v185, %v329
  %v344 = vmul.f32 %v187, %v329
  %v345 = vmul.f32 %v190, %v329
  %v346 = vmul.f32 %v192, %v329
  %v348 = vperm.slane %v327, 0
  %v350 = vadd.f32 %v331, %v348
  %v351 = vadd.f32 %v332, %v348
  %v352 = vadd.f32 %v333, %v348
  %v353 = vadd.f32 %v334, %v348
  %v354 = vadd.f32 %v335, %v348
  %v355 = vadd.f32 %v336, %v348
  %v356 = vadd.f32 %v337, %v348
  %v357 = vadd.f32 %v338, %v348
  %v358 = vadd.f32 %v339, %v348
  %v359 = vadd.f32 %v340, %v348
  %v360 = vadd.f32 %v341, %v348
  %v361 = vadd.f32 %v342, %v348
  %v362 = vadd.f32 %v343, %v348
  %v363 = vadd.f32 %v344, %v348
  %v364 = vadd.f32 %v345, %v348
  %v365 = vadd.f32 %v346, %v348
  %vm366 = vcmp.gt.f32.partialorder %v350, 0.0
  %vm367 = vcmp.gt.f32.partialorder %v351, 0.0
  %vm368 = vcmp.gt.f32.partialorder %v352, 0.0
  %vm369 = vcmp.gt.f32.partialorder %v353, 0.0
  %vm370 = vcmp.gt.f32.partialorder %v354, 0.0
  %vm371 = vcmp.gt.f32.partialorder %v355, 0.0
  %vm372 = vcmp.gt.f32.partialorder %v356, 0.0
  %vm373 = vcmp.gt.f32.partialorder %v357, 0.0
  %vm374 = vcmp.gt.f32.partialorder %v358, 0.0
  %vm375 = vcmp.gt.f32.partialorder %v359, 0.0
  %vm376 = vcmp.gt.f32.partialorder %v360, 0.0
  %vm377 = vcmp.gt.f32.partialorder %v361, 0.0
  %vm378 = vcmp.gt.f32.partialorder %v362, 0.0
  %vm379 = vcmp.gt.f32.partialorder %v363, 0.0
  %vm380 = vcmp.gt.f32.partialorder %v364, 0.0
  %vm381 = vcmp.gt.f32.partialorder %v365, 0.0
  %v382 = vmul.f32 %v350, 0.2
  %v383 = vmul.f32 %v351, 0.2
  %v384 = vmul.f32 %v352, 0.2
  %v385 = vmul.f32 %v353, 0.2
  %v386 = vmul.f32 %v354, 0.2
  %v387 = vmul.f32 %v355, 0.2
  %v388 = vmul.f32 %v356, 0.2
  %v389 = vmul.f32 %v357, 0.2
  %v390 = vmul.f32 %v358, 0.2
  %v391 = vmul.f32 %v359, 0.2
  %v392 = vmul.f32 %v360, 0.2
  %v393 = vmul.f32 %v361, 0.2
  %v394 = vmul.f32 %v362, 0.2
  %v395 = vmul.f32 %v363, 0.2
  %v396 = vmul.f32 %v364, 0.2
  %v397 = vmul.f32 %v365, 0.2
  %v398 = vsel %vm366, %v350, %v382
  %v399 = vsel %vm367, %v351, %v383
  %v400 = vsel %vm368, %v352, %v384
  %v401 = vsel %vm369, %v353, %v385
  %v402 = vsel %vm370, %v354, %v386
  %v403 = vsel %vm371, %v355, %v387
  %v404 = vsel %vm372, %v356, %v388
  %v405 = vsel %vm373, %v357, %v389
  %v406 = vsel %vm374, %v358, %v390
  %v407 = vsel %vm375, %v359, %v391
  %v408 = vsel %vm376, %v360, %v392
  %v409 = vsel %vm377, %v361, %v393
  %v410 = vsel %vm378, %v362, %v394
  %v411 = vsel %vm379, %v363, %v395
  %v412 = vsel %vm380, %v364, %v396
  %v413 = vsel %vm381, %v365, %v397
  %414 = vst.msk [vmem:[%s4] sm:$0xff] %vm196, %v398
  %415 = vst.msk [vmem:[%s4 + $0x8] sm:$0xff] %vm196, %v399
  %416 = vst.msk [vmem:[%s4 + $0x10] sm:$0xff] %vm196, %v400
  %417 = vst.msk [vmem:[%s4 + $0x18] sm:$0xff] %vm196, %v401
  %418 = vst.msk [vmem:[%s4 + $0x20] sm:$0xff] %vm196, %v402
  %419 = vst.msk [vmem:[%s4 + $0x28] sm:$0xff] %vm196, %v403
  %420 = vst.msk [vmem:[%s4 + $0x30] sm:$0xff] %vm196, %v404
  %421 = vst.msk [vmem:[%s4 + $0x38] sm:$0xff] %vm196, %v405
  %422 = vst.msk [vmem:[%s4 + $0x40] sm:$0xff] %vm196, %v406
  %423 = vst.msk [vmem:[%s4 + $0x48] sm:$0xff] %vm196, %v407
  %424 = vst.msk [vmem:[%s4 + $0x50] sm:$0xff] %vm196, %v408
  %425 = vst.msk [vmem:[%s4 + $0x58] sm:$0xff] %vm196, %v409
  %426 = vst.msk [vmem:[%s4 + $0x60] sm:$0xff] %vm196, %v410
  %427 = vst.msk [vmem:[%s4 + $0x68] sm:$0xff] %vm196, %v411
  %428 = vst.msk [vmem:[%s4 + $0x70] sm:$0xff] %vm196, %v412
  %429 = vst.msk [vmem:[%s4 + $0x78] sm:$0xff] %vm196, %v413
  // Predicated region
  $region18: #{unet_forward.9} parent=0 // pred_check
    _
  $region19: #{unet_forward.9} parent=0 // pred_check_branch
    %431 = sbr.rel (0) target = $region21
  $region20: #{unet_forward.9} parent=0 // pred_region
    _
  $region21: #{unet_forward.9} parent=0 // pred_fallthru
    _
  // Predicated region
  $region22: #{unet_forward.9} parent=0 // pred_check
    _
  $region23: #{unet_forward.9} parent=0 // pred_check_branch
    %433 = sbr.rel (0) target = $region25
  $region24: #{unet_forward.9} parent=0 // pred_region
    _
  $region25: #{unet_forward.9} parent=0 // pred_fallthru
    _

// kernel: unet_forward.10
$region0: #{unet_forward.10}
  #allocation0 [shape = 'u32[]', space=smem, size = 0x4, offset = 0x4, fixed_abs, tag = 'smem constant byte address 0x4 - core index']
  #allocation1 [shape = 'u32[72,128]{1,0:T(1,128)}', space=vmem, size = 0x9000, scoped, tag = 'internal scratch']
  %s0 = inlined_call_operand.vmem [shape: bf16[32,256], index: 0, kind: input, shape index: {}]
  %s1 = inlined_call_operand.vmem [shape: bf16[256,32], index: 1, kind: input, shape index: {}]
  %s2 = inlined_call_operand.vmem [shape: f32[1,32], index: 2, kind: input, shape index: {}]
  %s3 = inlined_call_operand.vmem [shape: f32[1,32], index: 3, kind: input, shape index: {}]
  %s4 = inlined_call_operand.vmem [shape: f32[32,32], index: 4, kind: output, shape index: {}]
  %s5 = sld [smem:[#allocation0]]
  $region26: #{unet_forward.10} parent=0
    _
  %s7 = ssub.s32 1, %s5
  %s8 = scalar_select 0, %s7, %s5
  // Predicated region
  $region2: #{unet_forward.10} parent=0 // pred_check
    _
  $region3: #{unet_forward.10} parent=0 // pred_check_branch
    %10 = sbr.rel (0) target = $region5
  $region4: #{unet_forward.10} parent=0 // pred_region
    _
  $region5: #{unet_forward.10} parent=0 // pred_fallthru
    _
  // Predicated region
  $region6: #{unet_forward.10} parent=0 // pred_check
    _
  $region7: #{unet_forward.10} parent=0 // pred_check_branch
    %12 = sbr.rel (0) target = $region9
  $region8: #{unet_forward.10} parent=0 // pred_region
    _
  $region9: #{unet_forward.10} parent=0 // pred_fallthru
    _
  // Predicated region
  $region10: #{unet_forward.10} parent=0 // pred_check
    _
  $region11: #{unet_forward.10} parent=0 // pred_check_branch
    %14 = sbr.rel (0) target = $region13
  $region12: #{unet_forward.10} parent=0 // pred_region
    _
  $region13: #{unet_forward.10} parent=0 // pred_fallthru
    _
  // Predicated region
  $region14: #{unet_forward.10} parent=0 // pred_check
    _
  $region15: #{unet_forward.10} parent=0 // pred_check_branch
    %16 = sbr.rel (0) target = $region17
  $region16: #{unet_forward.10} parent=0 // pred_region
    _
  $region17: #{unet_forward.10} parent=0 // pred_fallthru
    _
  %v17 = vld [vmem:[%s0] sm:$0xff]
  %v18 = vld [vmem:[%s0 + $0x8] sm:$0xff]
  %v19 = vld [vmem:[%s0 + $0x10] sm:$0xff]
  %v20 = vld [vmem:[%s0 + $0x18] sm:$0xff]
  %v21 = vld [vmem:[%s1] sm:$0xf]
  %v22 = vld [vmem:[%s1 + $0x4] sm:$0xf]
  %v23 = vld [vmem:[%s1 + $0x8] sm:$0xf]
  %v24 = vld [vmem:[%s1 + $0xc] sm:$0xf]
  %v25 = vld [vmem:[%s1 + $0x10] sm:$0xf]
  %v26 = vld [vmem:[%s1 + $0x14] sm:$0xf]
  %v27 = vld [vmem:[%s1 + $0x18] sm:$0xf]
  %v28 = vld [vmem:[%s1 + $0x1c] sm:$0xf]
  %v29 = vld [vmem:[%s1 + $0x20] sm:$0xf]
  %v30 = vld [vmem:[%s1 + $0x24] sm:$0xf]
  %v31 = vld [vmem:[%s1 + $0x28] sm:$0xf]
  %v32 = vld [vmem:[%s1 + $0x2c] sm:$0xf]
  %v33 = vld [vmem:[%s1 + $0x30] sm:$0xf]
  %v34 = vld [vmem:[%s1 + $0x34] sm:$0xf]
  %v35 = vld [vmem:[%s1 + $0x38] sm:$0xf]
  %v36 = vld [vmem:[%s1 + $0x3c] sm:$0xf]
  %v37 = vld [vmem:[%s1 + $0x40] sm:$0xf]
  %v38 = vld [vmem:[%s1 + $0x44] sm:$0xf]
  %v39 = vld [vmem:[%s1 + $0x48] sm:$0xf]
  %v40 = vld [vmem:[%s1 + $0x4c] sm:$0xf]
  %v41 = vld [vmem:[%s1 + $0x50] sm:$0xf]
  %v42 = vld [vmem:[%s1 + $0x54] sm:$0xf]
  %v43 = vld [vmem:[%s1 + $0x58] sm:$0xf]
  %v44 = vld [vmem:[%s1 + $0x5c] sm:$0xf]
  %v45 = vld [vmem:[%s1 + $0x60] sm:$0xf]
  %v46 = vld [vmem:[%s1 + $0x64] sm:$0xf]
  %v47 = vld [vmem:[%s1 + $0x68] sm:$0xf]
  %v48 = vld [vmem:[%s1 + $0x6c] sm:$0xf]
  %v49 = vld [vmem:[%s1 + $0x70] sm:$0xf]
  %v50 = vld [vmem:[%s1 + $0x74] sm:$0xf]
  %v51 = vld [vmem:[%s1 + $0x78] sm:$0xf]
  %v52 = vld [vmem:[%s1 + $0x7c] sm:$0xf]
  %v57 = vunpack.c.l.b16 %v17
  %v58 = vunpack.c.h.b16 %v17
  %v59 = vunpack.c.l.b16 %v18
  %v60 = vunpack.c.h.b16 %v18
  %v61 = vunpack.c.l.b16 %v19
  %v62 = vunpack.c.h.b16 %v19
  %v63 = vunpack.c.l.b16 %v20
  %v64 = vunpack.c.h.b16 %v20
  %v65 = vpack.c.b16 %v59, %v57
  %v66 = vpack.c.b16 %v60, %v58
  %v67 = vpack.c.b16 %v63, %v61
  %v68 = vpack.c.b16 %v64, %v62
  %v105 = vunpack.c.l.b16 %v21
  %v106 = vunpack.c.l.b16 %v22
  %v107 = vunpack.c.l.b16 %v23
  %v108 = vunpack.c.l.b16 %v24
  %v109 = vunpack.c.l.b16 %v25
  %v110 = vunpack.c.l.b16 %v26
  %v111 = vunpack.c.l.b16 %v27
  %v112 = vunpack.c.l.b16 %v28
  %v113 = vunpack.c.l.b16 %v29
  %v114 = vunpack.c.l.b16 %v30
  %v115 = vunpack.c.l.b16 %v31
  %v116 = vunpack.c.l.b16 %v32
  %v117 = vunpack.c.l.b16 %v33
  %v118 = vunpack.c.l.b16 %v34
  %v119 = vunpack.c.l.b16 %v35
  %v120 = vunpack.c.l.b16 %v36
  %v121 = vunpack.c.l.b16 %v37
  %v122 = vunpack.c.l.b16 %v38
  %v123 = vunpack.c.l.b16 %v39
  %v124 = vunpack.c.l.b16 %v40
  %v125 = vunpack.c.l.b16 %v41
  %v126 = vunpack.c.l.b16 %v42
  %v127 = vunpack.c.l.b16 %v43
  %v128 = vunpack.c.l.b16 %v44
  %v129 = vunpack.c.l.b16 %v45
  %v130 = vunpack.c.l.b16 %v46
  %v131 = vunpack.c.l.b16 %v47
  %v132 = vunpack.c.l.b16 %v48
  %v133 = vunpack.c.l.b16 %v49
  %v134 = vunpack.c.l.b16 %v50
  %v135 = vunpack.c.l.b16 %v51
  %v136 = vunpack.c.l.b16 %v52
  %v137 = vpack.c.b16 %v106, %v105
  %v138 = vpack.c.b16 %v108, %v107
  %v139 = vpack.c.b16 %v110, %v109
  %v140 = vpack.c.b16 %v112, %v111
  %v141 = vpack.c.b16 %v114, %v113
  %v142 = vpack.c.b16 %v116, %v115
  %v143 = vpack.c.b16 %v118, %v117
  %v144 = vpack.c.b16 %v120, %v119
  %v145 = vpack.c.b16 %v122, %v121
  %v146 = vpack.c.b16 %v124, %v123
  %v147 = vpack.c.b16 %v126, %v125
  %v148 = vpack.c.b16 %v128, %v127
  %v149 = vpack.c.b16 %v130, %v129
  %v150 = vpack.c.b16 %v132, %v131
  %v151 = vpack.c.b16 %v134, %v133
  %v152 = vpack.c.b16 %v136, %v135
  %169 = vmatpush.bf16.msra.mxu0 %v144
  %170 = vmatpush.bf16.msra.mxu0 %v143
  %171 = vmatpush.bf16.msra.mxu0 %v142
  %172 = vmatpush.bf16.msra.mxu0 %v141
  %173 = vmatpush.bf16.msra.mxu0 %v140
  %174 = vmatpush.bf16.msra.mxu0 %v139
  %175 = vmatpush.bf16.msra.mxu0 %v138
  %176 = vmatpush.bf16.msra.mxu0 %v137
  %177 = vmatmul.bf16.gmra.mxu0 %v65
  %v178 = vpop.f32.mrf.mxu0
  %v179 = vadd.f32 0.0, %v178
  %v180 = vpop.f32.mrf.mxu0
  %v181 = vadd.f32 0.0, %v180
  %182 = vmatmul.bf16.gmra.mxu0 %v67
  %v183 = vpop.f32.mrf.mxu0
  %v184 = vadd.f32 0.0, %v183
  %v185 = vpop.f32.mrf.mxu0
  %v186 = vadd.f32 0.0, %v185
  %187 = vdwg.mxu0
  %188 = vmatpush.bf16.msra.mxu0 %v152
  %189 = vmatpush.bf16.msra.mxu0 %v151
  %190 = vmatpush.bf16.msra.mxu0 %v150
  %191 = vmatpush.bf16.msra.mxu0 %v149
  %192 = vmatpush.bf16.msra.mxu0 %v148
  %193 = vmatpush.bf16.msra.mxu0 %v147
  %194 = vmatpush.bf16.msra.mxu0 %v146
  %195 = vmatpush.bf16.msra.mxu0 %v145
  %196 = vmatmul.bf16.gmra.mxu0 %v66
  %v197 = vpop.f32.mrf.mxu0
  %v198 = vadd.f32 %v179, %v197
  %v199 = vpop.f32.mrf.mxu0
  %v200 = vadd.f32 %v181, %v199
  %201 = vmatmul.bf16.gmra.mxu0 %v68
  %v202 = vpop.f32.mrf.mxu0
  %v203 = vadd.f32 %v184, %v202
  %v204 = vpop.f32.mrf.mxu0
  %v205 = vadd.f32 %v186, %v204
  %206 = vdwg.mxu0
  %v207 = vld [vmem:[%s2] sm:$0x1]
  %v208 = vld [vmem:[%s3] sm:$0x1]
  %vm209 = vcmask 261120
  %v210 = vsel %vm209, %v198, 0.0
  %v211 = vsel %vm209, %v200, 0.0
  %v212 = vadd.f32 %v210, %v211
  %v213 = vsel %vm209, %v203, 0.0
  %v214 = vadd.f32 %v212, %v213
  %v215 = vsel %vm209, %v205, 0.0
  %v216 = vadd.f32 %v214, %v215
  %v217 = vrot.slane %v216, 4
  %v218 = vadd.f32 %v216, %v217
  %v219 = vrot.slane %v218, 2
  %v220 = vadd.f32 %v218, %v219
  %v221 = vrot.slane %v220, 1
  %v222 = vadd.f32 %v220, %v221
  %v223 = vadd.f32 %v222, 0.0
  %v224 = vrcp.pop 32.0
  %v225 = vmul.f32 32.0, %v224
  %v226 = vsub.f32 1.0, %v225
  %v227 = vmul.f32 %v224, %v226
  %v228 = vadd.f32 %v224, %v227
  %vm229 = vweird.f32 %v224
  %v230 = vsel %vm229, %v224, %v228
  %v231 = vmul.f32 %v223, %v230
  %v232 = vsub.f32 %v198, %v231
  %v233 = vsub.f32 %v200, %v231
  %v234 = vsub.f32 %v203, %v231
  %v235 = vsub.f32 %v205, %v231
  %v236 = vmul.f32 %v232, %v232
  %v237 = vmul.f32 %v233, %v233
  %v238 = vmul.f32 %v234, %v234
  %v239 = vmul.f32 %v235, %v235
  %v240 = vsel %vm209, %v236, 0.0
  %v241 = vsel %vm209, %v237, 0.0
  %v242 = vadd.f32 %v240, %v241
  %v243 = vsel %vm209, %v238, 0.0
  %v244 = vadd.f32 %v242, %v243
  %v245 = vsel %vm209, %v239, 0.0
  %v246 = vadd.f32 %v244, %v245
  %v247 = vrot.slane %v246, 4
  %v248 = vadd.f32 %v246, %v247
  %v249 = vrot.slane %v248, 2
  %v250 = vadd.f32 %v248, %v249
  %v251 = vrot.slane %v250, 1
  %v252 = vadd.f32 %v250, %v251
  %v253 = vadd.f32 %v252, 0.0
  %v254 = vmul.f32 %v253, %v230
  %v255 = vadd.f32 %v254, 1e-05
  %v256 = vrsqrt.pop %v255
  %v257 = vmul.f32 %v256, %v255
  %v258 = vmul.f32 %v257, %v256
  %v259 = vmul.f32 0.5, %v258
  %v260 = vsub.f32 1.5, %v259
  %v261 = vmul.f32 %v256, %v260
  %vm262 = vweird.f32 %v255
  %vm263 = vweird.f32 %v256
  %vm264 = vmor %vm262, %vm263
  %v265 = vsel %vm264, %v256, %v261
  %v266 = vmul.f32 %v207, %v265
  %v267 = vmul.f32 %v231, %v266
  %v268 = vsub.f32 %v208, %v267
  %v270 = vperm.slane %v266, 0
  %v272 = vmul.f32 %v198, %v270
  %v273 = vmul.f32 %v200, %v270
  %v274 = vmul.f32 %v203, %v270
  %v275 = vmul.f32 %v205, %v270
  %v277 = vperm.slane %v268, 0
  %v279 = vadd.f32 %v272, %v277
  %v280 = vadd.f32 %v273, %v277
  %v281 = vadd.f32 %v274, %v277
  %v282 = vadd.f32 %v275, %v277
  %vm283 = vcmp.gt.f32.partialorder %v279, 0.0
  %vm284 = vcmp.gt.f32.partialorder %v280, 0.0
  %vm285 = vcmp.gt.f32.partialorder %v281, 0.0
  %vm286 = vcmp.gt.f32.partialorder %v282, 0.0
  %v287 = vmul.f32 %v279, 0.2
  %v288 = vmul.f32 %v280, 0.2
  %v289 = vmul.f32 %v281, 0.2
  %v290 = vmul.f32 %v282, 0.2
  %v291 = vsel %vm283, %v279, %v287
  %v292 = vsel %vm284, %v280, %v288
  %v293 = vsel %vm285, %v281, %v289
  %v294 = vsel %vm286, %v282, %v290
  %295 = vst.msk [vmem:[%s4] sm:$0xff] %vm209, %v291
  %296 = vst.msk [vmem:[%s4 + $0x8] sm:$0xff] %vm209, %v292
  %297 = vst.msk [vmem:[%s4 + $0x10] sm:$0xff] %vm209, %v293
  %298 = vst.msk [vmem:[%s4 + $0x18] sm:$0xff] %vm209, %v294
  // Predicated region
  $region18: #{unet_forward.10} parent=0 // pred_check
    _
  $region19: #{unet_forward.10} parent=0 // pred_check_branch
    %300 = sbr.rel (0) target = $region21
  $region20: #{unet_forward.10} parent=0 // pred_region
    _
  $region21: #{unet_forward.10} parent=0 // pred_fallthru
    _
  // Predicated region
  $region22: #{unet_forward.10} parent=0 // pred_check
    _
  $region23: #{unet_forward.10} parent=0 // pred_check_branch
    %302 = sbr.rel (0) target = $region25
  $region24: #{unet_forward.10} parent=0 // pred_region
    _
  $region25: #{unet_forward.10} parent=0 // pred_fallthru
    _

// kernel: unet_forward.11
$region0: #{unet_forward.11}
  #allocation0 [shape = 'u32[]', space=smem, size = 0x4, offset = 0x4, fixed_abs, tag = 'smem constant byte address 0x4 - core index']
  #allocation1 [shape = 'u32[72,128]{1,0:T(1,128)}', space=vmem, size = 0x9000, scoped, tag = 'internal scratch']
  %s0 = inlined_call_operand.vmem [shape: bf16[8,512], index: 0, kind: input, shape index: {}]
  %s1 = inlined_call_operand.vmem [shape: bf16[512,64], index: 1, kind: input, shape index: {}]
  %s2 = inlined_call_operand.vmem [shape: f32[1,64], index: 2, kind: input, shape index: {}]
  %s3 = inlined_call_operand.vmem [shape: f32[1,64], index: 3, kind: input, shape index: {}]
  %s4 = inlined_call_operand.vmem [shape: bf16[4,64,64], index: 4, kind: input, shape index: {}]
  %s5 = inlined_call_operand.vmem [shape: f32[1,64], index: 5, kind: input, shape index: {}]
  %s6 = inlined_call_operand.vmem [shape: bf16[4,64,64], index: 6, kind: input, shape index: {}]
  %s7 = inlined_call_operand.vmem [shape: f32[1,64], index: 7, kind: input, shape index: {}]
  %s8 = inlined_call_operand.vmem [shape: f32[1,64], index: 8, kind: input, shape index: {}]
  %s9 = inlined_call_operand.vmem [shape: f32[8,64], index: 9, kind: output, shape index: {0}]
  %s10 = inlined_call_operand.vmem [shape: f32[2,256], index: 10, kind: output, shape index: {1}]
  %11 = xla_tuple %s9, %s10
  %s12 = sld [smem:[#allocation0]]
  $region54: #{unet_forward.11} parent=0
    _
  %s14 = ssub.s32 1, %s12
  %s15 = scalar_select 0, %s14, %s12
  // Predicated region
  $region2: #{unet_forward.11} parent=0 // pred_check
    _
  $region3: #{unet_forward.11} parent=0 // pred_check_branch
    %17 = sbr.rel (0) target = $region5
  $region4: #{unet_forward.11} parent=0 // pred_region
    _
  $region5: #{unet_forward.11} parent=0 // pred_fallthru
    _
  // Predicated region
  $region6: #{unet_forward.11} parent=0 // pred_check
    _
  $region7: #{unet_forward.11} parent=0 // pred_check_branch
    %19 = sbr.rel (0) target = $region9
  $region8: #{unet_forward.11} parent=0 // pred_region
    _
  $region9: #{unet_forward.11} parent=0 // pred_fallthru
    _
  // Predicated region
  $region10: #{unet_forward.11} parent=0 // pred_check
    _
  $region11: #{unet_forward.11} parent=0 // pred_check_branch
    %21 = sbr.rel (0) target = $region13
  $region12: #{unet_forward.11} parent=0 // pred_region
    _
  $region13: #{unet_forward.11} parent=0 // pred_fallthru
    _
  // Predicated region
  $region14: #{unet_forward.11} parent=0 // pred_check
    _
  $region15: #{unet_forward.11} parent=0 // pred_check_branch
    %23 = sbr.rel (0) target = $region17
  $region16: #{unet_forward.11} parent=0 // pred_region
    _
  $region17: #{unet_forward.11} parent=0 // pred_fallthru
    _
  // Predicated region
  $region18: #{unet_forward.11} parent=0 // pred_check
    _
  $region19: #{unet_forward.11} parent=0 // pred_check_branch
    %25 = sbr.rel (0) target = $region21
  $region20: #{unet_forward.11} parent=0 // pred_region
    _
  $region21: #{unet_forward.11} parent=0 // pred_fallthru
    _
  // Predicated region
  $region22: #{unet_forward.11} parent=0 // pred_check
    _
  $region23: #{unet_forward.11} parent=0 // pred_check_branch
    %27 = sbr.rel (0) target = $region25
  $region24: #{unet_forward.11} parent=0 // pred_region
    _
  $region25: #{unet_forward.11} parent=0 // pred_fallthru
    _
  // Predicated region
  $region26: #{unet_forward.11} parent=0 // pred_check
    _
  $region27: #{unet_forward.11} parent=0 // pred_check_branch
    %29 = sbr.rel (0) target = $region29
  $region28: #{unet_forward.11} parent=0 // pred_region
    _
  $region29: #{unet_forward.11} parent=0 // pred_fallthru
    _
  // Predicated region
  $region30: #{unet_forward.11} parent=0 // pred_check
    _
  $region31: #{unet_forward.11} parent=0 // pred_check_branch
    %31 = sbr.rel (0) target = $region33
  $region32: #{unet_forward.11} parent=0 // pred_region
    _
  $region33: #{unet_forward.11} parent=0 // pred_fallthru
    _
  // Predicated region
  $region34: #{unet_forward.11} parent=0 // pred_check
    _
  $region35: #{unet_forward.11} parent=0 // pred_check_branch
    %33 = sbr.rel (0) target = $region37
  $region36: #{unet_forward.11} parent=0 // pred_region
    _
  $region37: #{unet_forward.11} parent=0 // pred_fallthru
    _
  %v35 = vld [vmem:[%s0] sm:$0xff]
  %v36 = vld [vmem:[%s0 + $0x8] sm:$0xff]
  %v37 = vld [vmem:[%s1] sm:$0xf]
  %v38 = vld [vmem:[%s1 + $0x4] sm:$0xf]
  %v39 = vld [vmem:[%s1 + $0x8] sm:$0xf]
  %v40 = vld [vmem:[%s1 + $0xc] sm:$0xf]
  %v41 = vld [vmem:[%s1 + $0x10] sm:$0xf]
  %v42 = vld [vmem:[%s1 + $0x14] sm:$0xf]
  %v43 = vld [vmem:[%s1 + $0x18] sm:$0xf]
  %v44 = vld [vmem:[%s1 + $0x1c] sm:$0xf]
  %v45 = vld [vmem:[%s1 + $0x20] sm:$0xf]
  %v46 = vld [vmem:[%s1 + $0x24] sm:$0xf]
  %v47 = vld [vmem:[%s1 + $0x28] sm:$0xf]
  %v48 = vld [vmem:[%s1 + $0x2c] sm:$0xf]
  %v49 = vld [vmem:[%s1 + $0x30] sm:$0xf]
  %v50 = vld [vmem:[%s1 + $0x34] sm:$0xf]
  %v51 = vld [vmem:[%s1 + $0x38] sm:$0xf]
  %v52 = vld [vmem:[%s1 + $0x3c] sm:$0xf]
  %v53 = vld [vmem:[%s1 + $0x40] sm:$0xf]
  %v54 = vld [vmem:[%s1 + $0x44] sm:$0xf]
  %v55 = vld [vmem:[%s1 + $0x48] sm:$0xf]
  %v56 = vld [vmem:[%s1 + $0x4c] sm:$0xf]
  %v57 = vld [vmem:[%s1 + $0x50] sm:$0xf]
  %v58 = vld [vmem:[%s1 + $0x54] sm:$0xf]
  %v59 = vld [vmem:[%s1 + $0x58] sm:$0xf]
  %v60 = vld [vmem:[%s1 + $0x5c] sm:$0xf]
  %v61 = vld [vmem:[%s1 + $0x60] sm:$0xf]
  %v62 = vld [vmem:[%s1 + $0x64] sm:$0xf]
  %v63 = vld [vmem:[%s1 + $0x68] sm:$0xf]
  %v64 = vld [vmem:[%s1 + $0x6c] sm:$0xf]
  %v65 = vld [vmem:[%s1 + $0x70] sm:$0xf]
  %v66 = vld [vmem:[%s1 + $0x74] sm:$0xf]
  %v67 = vld [vmem:[%s1 + $0x78] sm:$0xf]
  %v68 = vld [vmem:[%s1 + $0x7c] sm:$0xf]
  %v69 = vld [vmem:[%s1 + $0x80] sm:$0xf]
  %v70 = vld [vmem:[%s1 + $0x84] sm:$0xf]
  %v71 = vld [vmem:[%s1 + $0x88] sm:$0xf]
  %v72 = vld [vmem:[%s1 + $0x8c] sm:$0xf]
  %v73 = vld [vmem:[%s1 + $0x90] sm:$0xf]
  %v74 = vld [vmem:[%s1 + $0x94] sm:$0xf]
  %v75 = vld [vmem:[%s1 + $0x98] sm:$0xf]
  %v76 = vld [vmem:[%s1 + $0x9c] sm:$0xf]
  %v77 = vld [vmem:[%s1 + $0xa0] sm:$0xf]
  %v78 = vld [vmem:[%s1 + $0xa4] sm:$0xf]
  %v79 = vld [vmem:[%s1 + $0xa8] sm:$0xf]
  %v80 = vld [vmem:[%s1 + $0xac] sm:$0xf]
  %v81 = vld [vmem:[%s1 + $0xb0] sm:$0xf]
  %v82 = vld [vmem:[%s1 + $0xb4] sm:$0xf]
  %v83 = vld [vmem:[%s1 + $0xb8] sm:$0xf]
  %v84 = vld [vmem:[%s1 + $0xbc] sm:$0xf]
  %v85 = vld [vmem:[%s1 + $0xc0] sm:$0xf]
  %v86 = vld [vmem:[%s1 + $0xc4] sm:$0xf]
  %v87 = vld [vmem:[%s1 + $0xc8] sm:$0xf]
  %v88 = vld [vmem:[%s1 + $0xcc] sm:$0xf]
  %v89 = vld [vmem:[%s1 + $0xd0] sm:$0xf]
  %v90 = vld [vmem:[%s1 + $0xd4] sm:$0xf]
  %v91 = vld [vmem:[%s1 + $0xd8] sm:$0xf]
  %v92 = vld [vmem:[%s1 + $0xdc] sm:$0xf]
  %v93 = vld [vmem:[%s1 + $0xe0] sm:$0xf]
  %v94 = vld [vmem:[%s1 + $0xe4] sm:$0xf]
  %v95 = vld [vmem:[%s1 + $0xe8] sm:$0xf]
  %v96 = vld [vmem:[%s1 + $0xec] sm:$0xf]
  %v97 = vld [vmem:[%s1 + $0xf0] sm:$0xf]
  %v98 = vld [vmem:[%s1 + $0xf4] sm:$0xf]
  %v99 = vld [vmem:[%s1 + $0xf8] sm:$0xf]
  %v100 = vld [vmem:[%s1 + $0xfc] sm:$0xf]
  %v103 = vunpack.c.l.b16 %v35
  %v104 = vunpack.c.h.b16 %v35
  %v105 = vunpack.c.l.b16 %v36
  %v106 = vunpack.c.h.b16 %v36
  %v107 = vpack.c.b16 %v103, %v103
  %v108 = vpack.c.b16 %v104, %v104
  %v109 = vpack.c.b16 %v105, %v105
  %v110 = vpack.c.b16 %v106, %v106
  %v179 = vunpack.c.l.b16 %v37
  %v180 = vunpack.c.l.b16 %v38
  %v181 = vunpack.c.l.b16 %v39
  %v182 = vunpack.c.l.b16 %v40
  %v183 = vunpack.c.l.b16 %v41
  %v184 = vunpack.c.l.b16 %v42
  %v185 = vunpack.c.l.b16 %v43
  %v186 = vunpack.c.l.b16 %v44
  %v187 = vunpack.c.l.b16 %v45
  %v188 = vunpack.c.l.b16 %v46
  %v189 = vunpack.c.l.b16 %v47
  %v190 = vunpack.c.l.b16 %v48
  %v191 = vunpack.c.l.b16 %v49
  %v192 = vunpack.c.l.b16 %v50
  %v193 = vunpack.c.l.b16 %v51
  %v194 = vunpack.c.l.b16 %v52
  %v195 = vunpack.c.l.b16 %v53
  %v196 = vunpack.c.l.b16 %v54
  %v197 = vunpack.c.l.b16 %v55
  %v198 = vunpack.c.l.b16 %v56
  %v199 = vunpack.c.l.b16 %v57
  %v200 = vunpack.c.l.b16 %v58
  %v201 = vunpack.c.l.b16 %v59
  %v202 = vunpack.c.l.b16 %v60
  %v203 = vunpack.c.l.b16 %v61
  %v204 = vunpack.c.l.b16 %v62
  %v205 = vunpack.c.l.b16 %v63
  %v206 = vunpack.c.l.b16 %v64
  %v207 = vunpack.c.l.b16 %v65
  %v208 = vunpack.c.l.b16 %v66
  %v209 = vunpack.c.l.b16 %v67
  %v210 = vunpack.c.l.b16 %v68
  %v211 = vunpack.c.l.b16 %v69
  %v212 = vunpack.c.l.b16 %v70
  %v213 = vunpack.c.l.b16 %v71
  %v214 = vunpack.c.l.b16 %v72
  %v215 = vunpack.c.l.b16 %v73
  %v216 = vunpack.c.l.b16 %v74
  %v217 = vunpack.c.l.b16 %v75
  %v218 = vunpack.c.l.b16 %v76
  %v219 = vunpack.c.l.b16 %v77
  %v220 = vunpack.c.l.b16 %v78
  %v221 = vunpack.c.l.b16 %v79
  %v222 = vunpack.c.l.b16 %v80
  %v223 = vunpack.c.l.b16 %v81
  %v224 = vunpack.c.l.b16 %v82
  %v225 = vunpack.c.l.b16 %v83
  %v226 = vunpack.c.l.b16 %v84
  %v227 = vunpack.c.l.b16 %v85
  %v228 = vunpack.c.l.b16 %v86
  %v229 = vunpack.c.l.b16 %v87
  %v230 = vunpack.c.l.b16 %v88
  %v231 = vunpack.c.l.b16 %v89
  %v232 = vunpack.c.l.b16 %v90
  %v233 = vunpack.c.l.b16 %v91
  %v234 = vunpack.c.l.b16 %v92
  %v235 = vunpack.c.l.b16 %v93
  %v236 = vunpack.c.l.b16 %v94
  %v237 = vunpack.c.l.b16 %v95
  %v238 = vunpack.c.l.b16 %v96
  %v239 = vunpack.c.l.b16 %v97
  %v240 = vunpack.c.l.b16 %v98
  %v241 = vunpack.c.l.b16 %v99
  %v242 = vunpack.c.l.b16 %v100
  %v243 = vpack.c.b16 %v180, %v179
  %v244 = vpack.c.b16 %v182, %v181
  %v245 = vpack.c.b16 %v184, %v183
  %v246 = vpack.c.b16 %v186, %v185
  %v247 = vpack.c.b16 %v188, %v187
  %v248 = vpack.c.b16 %v190, %v189
  %v249 = vpack.c.b16 %v192, %v191
  %v250 = vpack.c.b16 %v194, %v193
  %v251 = vpack.c.b16 %v196, %v195
  %v252 = vpack.c.b16 %v198, %v197
  %v253 = vpack.c.b16 %v200, %v199
  %v254 = vpack.c.b16 %v202, %v201
  %v255 = vpack.c.b16 %v204, %v203
  %v256 = vpack.c.b16 %v206, %v205
  %v257 = vpack.c.b16 %v208, %v207
  %v258 = vpack.c.b16 %v210, %v209
  %v259 = vpack.c.b16 %v212, %v211
  %v260 = vpack.c.b16 %v214, %v213
  %v261 = vpack.c.b16 %v216, %v215
  %v262 = vpack.c.b16 %v218, %v217
  %v263 = vpack.c.b16 %v220, %v219
  %v264 = vpack.c.b16 %v222, %v221
  %v265 = vpack.c.b16 %v224, %v223
  %v266 = vpack.c.b16 %v226, %v225
  %v267 = vpack.c.b16 %v228, %v227
  %v268 = vpack.c.b16 %v230, %v229
  %v269 = vpack.c.b16 %v232, %v231
  %v270 = vpack.c.b16 %v234, %v233
  %v271 = vpack.c.b16 %v236, %v235
  %v272 = vpack.c.b16 %v238, %v237
  %v273 = vpack.c.b16 %v240, %v239
  %v274 = vpack.c.b16 %v242, %v241
  %307 = vmatpush.bf16.msra.mxu0 %v250
  %308 = vmatpush.bf16.msra.mxu0 %v249
  %309 = vmatpush.bf16.msra.mxu0 %v248
  %310 = vmatpush.bf16.msra.mxu0 %v247
  %311 = vmatpush.bf16.msra.mxu0 %v246
  %312 = vmatpush.bf16.msra.mxu0 %v245
  %313 = vmatpush.bf16.msra.mxu0 %v244
  %314 = vmatpush.bf16.msra.mxu0 %v243
  %315 = vmatmul.bf16.gmra.mxu0 %v107
  %v316 = vpop.f32.mrf.mxu0
  %v317 = vadd.f32 0.0, %v316
  %v318 = vpop.f32.mrf.mxu0
  %319 = vdwg.mxu0
  %320 = vmatpush.bf16.msra.mxu0 %v258
  %321 = vmatpush.bf16.msra.mxu0 %v257
  %322 = vmatpush.bf16.msra.mxu0 %v256
  %323 = vmatpush.bf16.msra.mxu0 %v255
  %324 = vmatpush.bf16.msra.mxu0 %v254
  %325 = vmatpush.bf16.msra.mxu0 %v253
  %326 = vmatpush.bf16.msra.mxu0 %v252
  %327 = vmatpush.bf16.msra.mxu0 %v251
  %328 = vmatmul.bf16.gmra.mxu0 %v108
  %v329 = vpop.f32.mrf.mxu0
  %v330 = vadd.f32 %v317, %v329
  %v331 = vpop.f32.mrf.mxu0
  %332 = vdwg.mxu0
  %333 = vmatpush.bf16.msra.mxu0 %v266
  %334 = vmatpush.bf16.msra.mxu0 %v265
  %335 = vmatpush.bf16.msra.mxu0 %v264
  %336 = vmatpush.bf16.msra.mxu0 %v263
  %337 = vmatpush.bf16.msra.mxu0 %v262
  %338 = vmatpush.bf16.msra.mxu0 %v261
  %339 = vmatpush.bf16.msra.mxu0 %v260
  %340 = vmatpush.bf16.msra.mxu0 %v259
  %341 = vmatmul.bf16.gmra.mxu0 %v109
  %v342 = vpop.f32.mrf.mxu0
  %v343 = vadd.f32 %v330, %v342
  %v344 = vpop.f32.mrf.mxu0
  %345 = vdwg.mxu0
  %346 = vmatpush.bf16.msra.mxu0 %v274
  %347 = vmatpush.bf16.msra.mxu0 %v273
  %348 = vmatpush.bf16.msra.mxu0 %v272
  %349 = vmatpush.bf16.msra.mxu0 %v271
  %350 = vmatpush.bf16.msra.mxu0 %v270
  %351 = vmatpush.bf16.msra.mxu0 %v269
  %352 = vmatpush.bf16.msra.mxu0 %v268
  %353 = vmatpush.bf16.msra.mxu0 %v267
  %354 = vmatmul.bf16.gmra.mxu0 %v110
  %v355 = vpop.f32.mrf.mxu0
  %v356 = vadd.f32 %v343, %v355
  %v357 = vpop.f32.mrf.mxu0
  %358 = vdwg.mxu0
  %v359 = vld [vmem:[%s2] sm:$0x1]
  %v360 = vld [vmem:[%s3] sm:$0x1]
  %vm361 = vcmask 523264
  %v362 = vsel %vm361, %v356, 0.0
  %v363 = vrot.slane %v362, 4
  %v364 = vadd.f32 %v362, %v363
  %v365 = vrot.slane %v364, 2
  %v366 = vadd.f32 %v364, %v365
  %v367 = vrot.slane %v366, 1
  %v368 = vadd.f32 %v366, %v367
  %v369 = vadd.f32 %v368, 0.0
  %v370 = vrcp.pop 8.0
  %v371 = vmul.f32 8.0, %v370
  %v372 = vsub.f32 1.0, %v371
  %v373 = vmul.f32 %v370, %v372
  %v374 = vadd.f32 %v370, %v373
  %vm375 = vweird.f32 %v370
  %v376 = vsel %vm375, %v370, %v374
  %v377 = vmul.f32 %v369, %v376
  %v378 = vsub.f32 %v356, %v377
  %v379 = vmul.f32 %v378, %v378
  %v380 = vsel %vm361, %v379, 0.0
  %v381 = vrot.slane %v380, 4
  %v382 = vadd.f32 %v380, %v381
  %v383 = vrot.slane %v382, 2
  %v384 = vadd.f32 %v382, %v383
  %v385 = vrot.slane %v384, 1
  %v386 = vadd.f32 %v384, %v385
  %v387 = vadd.f32 %v386, 0.0
  %v388 = vmul.f32 %v387, %v376
  %v389 = vadd.f32 %v388, 1e-05
  %v390 = vrsqrt.pop %v389
  %v391 = vmul.f32 %v390, %v389
  %v392 = vmul.f32 %v391, %v390
  %v393 = vmul.f32 0.5, %v392
  %v394 = vsub.f32 1.5, %v393
  %v395 = vmul.f32 %v390, %v394
  %vm396 = vweird.f32 %v389
  %vm397 = vweird.f32 %v390
  %vm398 = vmor %vm396, %vm397
  %v399 = vsel %vm398, %v390, %v395
  %v400 = vmul.f32 %v359, %v399
  %v401 = vmul.f32 %v377, %v400
  %v402 = vsub.f32 %v360, %v401
  %v404 = vperm.slane %v400, 0
  %v406 = vmul.f32 %v356, %v404
  %v408 = vperm.slane %v402, 0
  %v410 = vadd.f32 %v406, %v408
  %vm411 = vcmp.gt.f32.partialorder %v410, 0.0
  %v412 = vmul.f32 %v410, 0.2
  %v413 = vsel %vm411, %v410, %v412
  %414 = vst.msk [vmem:[%s9] sm:$0xff] %vm361, %v413
  %v415 = vpack.c.bf16 %v413, %v413
  %v416 = vld [vmem:[%s4] sm:$0xf]
  %v417 = vld [vmem:[%s4 + $0x4] sm:$0xf]
  %v418 = vld [vmem:[%s4 + $0x8] sm:$0xf]
  %v419 = vld [vmem:[%s4 + $0xc] sm:$0xf]
  %v420 = vld [vmem:[%s4 + $0x10] sm:$0xf]
  %v421 = vld [vmem:[%s4 + $0x14] sm:$0xf]
  %v422 = vld [vmem:[%s4 + $0x18] sm:$0xf]
  %v423 = vld [vmem:[%s4 + $0x1c] sm:$0xf]
  %s424 = scalar_lea.vmem %s4, 32
  %v425 = vld [vmem:[%s424] sm:$0xf]
  %v426 = vld [vmem:[%s424 + $0x4] sm:$0xf]
  %v427 = vld [vmem:[%s424 + $0x8] sm:$0xf]
  %v428 = vld [vmem:[%s424 + $0xc] sm:$0xf]
  %v429 = vld [vmem:[%s424 + $0x10] sm:$0xf]
  %v430 = vld [vmem:[%s424 + $0x14] sm:$0xf]
  %v431 = vld [vmem:[%s424 + $0x18] sm:$0xf]
  %v432 = vld [vmem:[%s424 + $0x1c] sm:$0xf]
  %v434 = vunpack.c.l.b16 %v415
  %v435 = vpack.c.b16 %v434, %v434
  %v436 = vrot.slane %v435, 1
  %v445 = vunpack.c.l.b16 %v425
  %v446 = vunpack.c.l.b16 %v426
  %v447 = vunpack.c.l.b16 %v427
  %v448 = vunpack.c.l.b16 %v428
  %v449 = vunpack.c.l.b16 %v429
  %v450 = vunpack.c.l.b16 %v430
  %v451 = vunpack.c.l.b16 %v431
  %v452 = vunpack.c.l.b16 %v432
  %v453 = vpack.c.b16 %v446, %v445
  %v454 = vpack.c.b16 %v448, %v447
  %v455 = vpack.c.b16 %v450, %v449
  %v456 = vpack.c.b16 %v452, %v451
  %v462 = vsel %vm361, %v436, 0
  %464 = vmatpush.bf16.msra.mxu0 0
  %465 = vmatpush.bf16.msra.mxu0 0
  %466 = vmatpush.bf16.msra.mxu0 0
  %467 = vmatpush.bf16.msra.mxu0 0
  %468 = vmatpush.bf16.msra.mxu0 %v456
  %469 = vmatpush.bf16.msra.mxu0 %v455
  %470 = vmatpush.bf16.msra.mxu0 %v454
  %471 = vmatpush.bf16.msra.mxu0 %v453
  %472 = vmatmul.bf16.gmra.mxu0 %v462
  %v473 = vpop.f32.mrf.mxu0
  %v474 = vadd.f32 0.0, %v473
  %v475 = vpop.f32.mrf.mxu0
  %476 = vdwg.mxu0
  %v485 = vunpack.c.l.b16 %v416
  %v486 = vunpack.c.l.b16 %v417
  %v487 = vunpack.c.l.b16 %v418
  %v488 = vunpack.c.l.b16 %v419
  %v489 = vunpack.c.l.b16 %v420
  %v490 = vunpack.c.l.b16 %v421
  %v491 = vunpack.c.l.b16 %v422
  %v492 = vunpack.c.l.b16 %v423
  %v493 = vpack.c.b16 %v486, %v485
  %v494 = vpack.c.b16 %v488, %v487
  %v495 = vpack.c.b16 %v490, %v489
  %v496 = vpack.c.b16 %v492, %v491
  %v502 = vsel %vm361, %v415, 0
  %504 = vmatpush.bf16.msra.mxu0 0
  %505 = vmatpush.bf16.msra.mxu0 0
  %506 = vmatpush.bf16.msra.mxu0 0
  %507 = vmatpush.bf16.msra.mxu0 0
  %508 = vmatpush.bf16.msra.mxu0 %v496
  %509 = vmatpush.bf16.msra.mxu0 %v495
  %510 = vmatpush.bf16.msra.mxu0 %v494
  %511 = vmatpush.bf16.msra.mxu0 %v493
  %512 = vmatmul.bf16.gmra.mxu0 %v502
  %v513 = vpop.f32.mrf.mxu0
  %v514 = vadd.f32 %v474, %v513
  %v515 = vpop.f32.mrf.mxu0
  %516 = vdwg.mxu0
  %s517 = scalar_lea.vmem %s4, 64
  %v518 = vld [vmem:[%s517] sm:$0xf]
  %v519 = vld [vmem:[%s517 + $0x4] sm:$0xf]
  %v520 = vld [vmem:[%s517 + $0x8] sm:$0xf]
  %v521 = vld [vmem:[%s517 + $0xc] sm:$0xf]
  %v522 = vld [vmem:[%s517 + $0x10] sm:$0xf]
  %v523 = vld [vmem:[%s517 + $0x14] sm:$0xf]
  %v524 = vld [vmem:[%s517 + $0x18] sm:$0xf]
  %v525 = vld [vmem:[%s517 + $0x1c] sm:$0xf]
  %v526 = vrot.slane %v435, 2
  %v535 = vunpack.c.l.b16 %v518
  %v536 = vunpack.c.l.b16 %v519
  %v537 = vunpack.c.l.b16 %v520
  %v538 = vunpack.c.l.b16 %v521
  %v539 = vunpack.c.l.b16 %v522
  %v540 = vunpack.c.l.b16 %v523
  %v541 = vunpack.c.l.b16 %v524
  %v542 = vunpack.c.l.b16 %v525
  %v543 = vpack.c.b16 %v536, %v535
  %v544 = vpack.c.b16 %v538, %v537
  %v545 = vpack.c.b16 %v540, %v539
  %v546 = vpack.c.b16 %v542, %v541
  %v552 = vsel %vm361, %v526, 0
  %554 = vmatpush.bf16.msra.mxu0 0
  %555 = vmatpush.bf16.msra.mxu0 0
  %556 = vmatpush.bf16.msra.mxu0 0
  %557 = vmatpush.bf16.msra.mxu0 0
  %558 = vmatpush.bf16.msra.mxu0 %v546
  %559 = vmatpush.bf16.msra.mxu0 %v545
  %560 = vmatpush.bf16.msra.mxu0 %v544
  %561 = vmatpush.bf16.msra.mxu0 %v543
  %562 = vmatmul.bf16.gmra.mxu0 %v552
  %v563 = vpop.f32.mrf.mxu0
  %v564 = vadd.f32 0.0, %v563
  %v565 = vpop.f32.mrf.mxu0
  %566 = vdwg.mxu0
  %v567 = vadd.f32 %v514, %v564
  %s568 = scalar_lea.vmem %s4, 96
  %v569 = vld [vmem:[%s568] sm:$0xf]
  %v570 = vld [vmem:[%s568 + $0x4] sm:$0xf]
  %v571 = vld [vmem:[%s568 + $0x8] sm:$0xf]
  %v572 = vld [vmem:[%s568 + $0xc] sm:$0xf]
  %v573 = vld [vmem:[%s568 + $0x10] sm:$0xf]
  %v574 = vld [vmem:[%s568 + $0x14] sm:$0xf]
  %v575 = vld [vmem:[%s568 + $0x18] sm:$0xf]
  %v576 = vld [vmem:[%s568 + $0x1c] sm:$0xf]
  %v577 = vrot.slane %v435, 3
  %v586 = vunpack.c.l.b16 %v569
  %v587 = vunpack.c.l.b16 %v570
  %v588 = vunpack.c.l.b16 %v571
  %v589 = vunpack.c.l.b16 %v572
  %v590 = vunpack.c.l.b16 %v573
  %v591 = vunpack.c.l.b16 %v574
  %v592 = vunpack.c.l.b16 %v575
  %v593 = vunpack.c.l.b16 %v576
  %v594 = vpack.c.b16 %v587, %v586
  %v595 = vpack.c.b16 %v589, %v588
  %v596 = vpack.c.b16 %v591, %v590
  %v597 = vpack.c.b16 %v593, %v592
  %v603 = vsel %vm361, %v577, 0
  %605 = vmatpush.bf16.msra.mxu0 0
  %606 = vmatpush.bf16.msra.mxu0 0
  %607 = vmatpush.bf16.msra.mxu0 0
  %608 = vmatpush.bf16.msra.mxu0 0
  %609 = vmatpush.bf16.msra.mxu0 %v597
  %610 = vmatpush.bf16.msra.mxu0 %v596
  %611 = vmatpush.bf16.msra.mxu0 %v595
  %612 = vmatpush.bf16.msra.mxu0 %v594
  %613 = vmatmul.bf16.gmra.mxu0 %v603
  %v614 = vpop.f32.mrf.mxu0
  %v615 = vadd.f32 0.0, %v614
  %v616 = vpop.f32.mrf.mxu0
  %617 = vdwg.mxu0
  %v618 = vadd.f32 %v567, %v615
  %v619 = vld [vmem:[%s5] sm:$0x1]
  %v621 = vperm.slane %v619, 0
  %v623 = vadd.f32 %v618, %v621
  %v624 = vmax.f32 %v623, 0.0
  %v625 = vpack.c.bf16 %v624, %v624
  %v626 = vld [vmem:[%s6] sm:$0xf]
  %v627 = vld [vmem:[%s6 + $0x4] sm:$0xf]
  %v628 = vld [vmem:[%s6 + $0x8] sm:$0xf]
  %v629 = vld [vmem:[%s6 + $0xc] sm:$0xf]
  %v630 = vld [vmem:[%s6 + $0x10] sm:$0xf]
  %v631 = vld [vmem:[%s6 + $0x14] sm:$0xf]
  %v632 = vld [vmem:[%s6 + $0x18] sm:$0xf]
  %v633 = vld [vmem:[%s6 + $0x1c] sm:$0xf]
  %v642 = vunpack.c.l.b16 %v626
  %v643 = vunpack.c.l.b16 %v627
  %v644 = vunpack.c.l.b16 %v628
  %v645 = vunpack.c.l.b16 %v629
  %v646 = vunpack.c.l.b16 %v630
  %v647 = vunpack.c.l.b16 %v631
  %v648 = vunpack.c.l.b16 %v632
  %v649 = vunpack.c.l.b16 %v633
  %v650 = vpack.c.b16 %v643, %v642
  %v651 = vpack.c.b16 %v645, %v644
  %v652 = vpack.c.b16 %v647, %v646
  %v653 = vpack.c.b16 %v649, %v648
  %v659 = vsel %vm361, %v625, 0
  %661 = vmatpush.bf16.msra.mxu0 0
  %662 = vmatpush.bf16.msra.mxu0 0
  %663 = vmatpush.bf16.msra.mxu0 0
  %664 = vmatpush.bf16.msra.mxu0 0
  %665 = vmatpush.bf16.msra.mxu0 %v653
  %666 = vmatpush.bf16.msra.mxu0 %v652
  %667 = vmatpush.bf16.msra.mxu0 %v651
  %668 = vmatpush.bf16.msra.mxu0 %v650
  %669 = vmatmul.bf16.gmra.mxu0 %v659
  %v670 = vpop.f32.mrf.mxu0
  %v671 = vadd.f32 0.0, %v670
  %v672 = vpop.f32.mrf.mxu0
  %673 = vdwg.mxu0
  %s674 = scalar_lea.vmem %s6, 32
  %v675 = vld [vmem:[%s674] sm:$0xf]
  %v676 = vld [vmem:[%s674 + $0x4] sm:$0xf]
  %v677 = vld [vmem:[%s674 + $0x8] sm:$0xf]
  %v678 = vld [vmem:[%s674 + $0xc] sm:$0xf]
  %v679 = vld [vmem:[%s674 + $0x10] sm:$0xf]
  %v680 = vld [vmem:[%s674 + $0x14] sm:$0xf]
  %v681 = vld [vmem:[%s674 + $0x18] sm:$0xf]
  %v682 = vld [vmem:[%s674 + $0x1c] sm:$0xf]
  %v691 = vunpack.c.l.b16 %v675
  %v692 = vunpack.c.l.b16 %v676
  %v693 = vunpack.c.l.b16 %v677
  %v694 = vunpack.c.l.b16 %v678
  %v695 = vunpack.c.l.b16 %v679
  %v696 = vunpack.c.l.b16 %v680
  %v697 = vunpack.c.l.b16 %v681
  %v698 = vunpack.c.l.b16 %v682
  %v699 = vpack.c.b16 %v692, %v691
  %v700 = vpack.c.b16 %v694, %v693
  %v701 = vpack.c.b16 %v696, %v695
  %v702 = vpack.c.b16 %v698, %v697
  %707 = vmatpush.bf16.msra.mxu0 0
  %708 = vmatpush.bf16.msra.mxu0 0
  %709 = vmatpush.bf16.msra.mxu0 0
  %710 = vmatpush.bf16.msra.mxu0 0
  %711 = vmatpush.bf16.msra.mxu0 %v702
  %712 = vmatpush.bf16.msra.mxu0 %v701
  %713 = vmatpush.bf16.msra.mxu0 %v700
  %714 = vmatpush.bf16.msra.mxu0 %v699
  %715 = vmatmul.bf16.gmra.mxu0 %v659
  %v716 = vpop.f32.mrf.mxu0
  %v717 = vadd.f32 0.0, %v716
  %v718 = vpop.f32.mrf.mxu0
  %719 = vdwg.mxu0
  %s720 = scalar_lea.vmem %s6, 64
  %v721 = vld [vmem:[%s720] sm:$0xf]
  %v722 = vld [vmem:[%s720 + $0x4] sm:$0xf]
  %v723 = vld [vmem:[%s720 + $0x8] sm:$0xf]
  %v724 = vld [vmem:[%s720 + $0xc] sm:$0xf]
  %v725 = vld [vmem:[%s720 + $0x10] sm:$0xf]
  %v726 = vld [vmem:[%s720 + $0x14] sm:$0xf]
  %v727 = vld [vmem:[%s720 + $0x18] sm:$0xf]
  %v728 = vld [vmem:[%s720 + $0x1c] sm:$0xf]
  %v737 = vunpack.c.l.b16 %v721
  %v738 = vunpack.c.l.b16 %v722
  %v739 = vunpack.c.l.b16 %v723
  %v740 = vunpack.c.l.b16 %v724
  %v741 = vunpack.c.l.b16 %v725
  %v742 = vunpack.c.l.b16 %v726
  %v743 = vunpack.c.l.b16 %v727
  %v744 = vunpack.c.l.b16 %v728
  %v745 = vpack.c.b16 %v738, %v737
  %v746 = vpack.c.b16 %v740, %v739
  %v747 = vpack.c.b16 %v742, %v741
  %v748 = vpack.c.b16 %v744, %v743
  %753 = vmatpush.bf16.msra.mxu0 0
  %754 = vmatpush.bf16.msra.mxu0 0
  %755 = vmatpush.bf16.msra.mxu0 0
  %756 = vmatpush.bf16.msra.mxu0 0
  %757 = vmatpush.bf16.msra.mxu0 %v748
  %758 = vmatpush.bf16.msra.mxu0 %v747
  %759 = vmatpush.bf16.msra.mxu0 %v746
  %760 = vmatpush.bf16.msra.mxu0 %v745
  %761 = vmatmul.bf16.gmra.mxu0 %v659
  %v762 = vpop.f32.mrf.mxu0
  %v763 = vadd.f32 0.0, %v762
  %v764 = vpop.f32.mrf.mxu0
  %765 = vdwg.mxu0
  %s766 = scalar_lea.vmem %s6, 96
  %v767 = vld [vmem:[%s766] sm:$0xf]
  %v768 = vld [vmem:[%s766 + $0x4] sm:$0xf]
  %v769 = vld [vmem:[%s766 + $0x8] sm:$0xf]
  %v770 = vld [vmem:[%s766 + $0xc] sm:$0xf]
  %v771 = vld [vmem:[%s766 + $0x10] sm:$0xf]
  %v772 = vld [vmem:[%s766 + $0x14] sm:$0xf]
  %v773 = vld [vmem:[%s766 + $0x18] sm:$0xf]
  %v774 = vld [vmem:[%s766 + $0x1c] sm:$0xf]
  %v783 = vunpack.c.l.b16 %v767
  %v784 = vunpack.c.l.b16 %v768
  %v785 = vunpack.c.l.b16 %v769
  %v786 = vunpack.c.l.b16 %v770
  %v787 = vunpack.c.l.b16 %v771
  %v788 = vunpack.c.l.b16 %v772
  %v789 = vunpack.c.l.b16 %v773
  %v790 = vunpack.c.l.b16 %v774
  %v791 = vpack.c.b16 %v784, %v783
  %v792 = vpack.c.b16 %v786, %v785
  %v793 = vpack.c.b16 %v788, %v787
  %v794 = vpack.c.b16 %v790, %v789
  %799 = vmatpush.bf16.msra.mxu0 0
  %800 = vmatpush.bf16.msra.mxu0 0
  %801 = vmatpush.bf16.msra.mxu0 0
  %802 = vmatpush.bf16.msra.mxu0 0
  %803 = vmatpush.bf16.msra.mxu0 %v794
  %804 = vmatpush.bf16.msra.mxu0 %v793
  %805 = vmatpush.bf16.msra.mxu0 %v792
  %806 = vmatpush.bf16.msra.mxu0 %v791
  %807 = vmatmul.bf16.gmra.mxu0 %v659
  %v808 = vpop.f32.mrf.mxu0
  %v809 = vadd.f32 0.0, %v808
  %v810 = vpop.f32.mrf.mxu0
  %811 = vdwg.mxu0
  %v812 = vld [vmem:[%s7] sm:$0x1]
  %v813 = vld [vmem:[%s8] sm:$0x1]
  %vm814 = vcmask 517120
  %v815 = vsel %vm814, %v671, 0.0
  %v816 = vrot.slane %v815, 4
  %v817 = vadd.f32 %v815, %v816
  %v818 = vrot.slane %v817, 2
  %v819 = vadd.f32 %v817, %v818
  %v820 = vrot.slane %v819, 1
  %v821 = vadd.f32 %v819, %v820
  %v822 = vadd.f32 %v821, 0.0
  %v823 = vsel %vm814, %v717, 0.0
  %v824 = vrot.slane %v823, 4
  %v825 = vadd.f32 %v823, %v824
  %v826 = vrot.slane %v825, 2
  %v827 = vadd.f32 %v825, %v826
  %v828 = vrot.slane %v827, 1
  %v829 = vadd.f32 %v827, %v828
  %v830 = vadd.f32 %v822, %v829
  %v831 = vsel %vm814, %v763, 0.0
  %v832 = vrot.slane %v831, 4
  %v833 = vadd.f32 %v831, %v832
  %v834 = vrot.slane %v833, 2
  %v835 = vadd.f32 %v833, %v834
  %v836 = vrot.slane %v835, 1
  %v837 = vadd.f32 %v835, %v836
  %v838 = vadd.f32 %v830, %v837
  %v839 = vsel %vm814, %v809, 0.0
  %v840 = vrot.slane %v839, 4
  %v841 = vadd.f32 %v839, %v840
  %v842 = vrot.slane %v841, 2
  %v843 = vadd.f32 %v841, %v842
  %v844 = vrot.slane %v843, 1
  %v845 = vadd.f32 %v843, %v844
  %v846 = vadd.f32 %v838, %v845
  %v847 = vmul.f32 %v846, %v376
  %v848 = vsub.f32 %v671, %v847
  %v849 = vmul.f32 %v848, %v848
  %v850 = vsel %vm814, %v849, 0.0
  %v851 = vrot.slane %v850, 4
  %v852 = vadd.f32 %v850, %v851
  %v853 = vrot.slane %v852, 2
  %v854 = vadd.f32 %v852, %v853
  %v855 = vrot.slane %v854, 1
  %v856 = vadd.f32 %v854, %v855
  %v857 = vadd.f32 %v856, 0.0
  %v858 = vsub.f32 %v717, %v847
  %v859 = vmul.f32 %v858, %v858
  %v860 = vsel %vm814, %v859, 0.0
  %v861 = vrot.slane %v860, 4
  %v862 = vadd.f32 %v860, %v861
  %v863 = vrot.slane %v862, 2
  %v864 = vadd.f32 %v862, %v863
  %v865 = vrot.slane %v864, 1
  %v866 = vadd.f32 %v864, %v865
  %v867 = vadd.f32 %v857, %v866
  %v868 = vsub.f32 %v763, %v847
  %v869 = vmul.f32 %v868, %v868
  %v870 = vsel %vm814, %v869, 0.0
  %v871 = vrot.slane %v870, 4
  %v872 = vadd.f32 %v870, %v871
  %v873 = vrot.slane %v872, 2
  %v874 = vadd.f32 %v872, %v873
  %v875 = vrot.slane %v874, 1
  %v876 = vadd.f32 %v874, %v875
  %v877 = vadd.f32 %v867, %v876
  %v878 = vsub.f32 %v809, %v847
  %v879 = vmul.f32 %v878, %v878
  %v880 = vsel %vm814, %v879, 0.0
  %v881 = vrot.slane %v880, 4
  %v882 = vadd.f32 %v880, %v881
  %v883 = vrot.slane %v882, 2
  %v884 = vadd.f32 %v882, %v883
  %v885 = vrot.slane %v884, 1
  %v886 = vadd.f32 %v884, %v885
  %v887 = vadd.f32 %v877, %v886
  %v888 = vmul.f32 %v887, %v376
  %v889 = vadd.f32 %v888, 1e-05
  %v890 = vrsqrt.pop %v889
  %v891 = vmul.f32 %v890, %v889
  %v892 = vmul.f32 %v891, %v890
  %v893 = vmul.f32 0.5, %v892
  %v894 = vsub.f32 1.5, %v893
  %v895 = vmul.f32 %v890, %v894
  %vm896 = vweird.f32 %v889
  %vm897 = vweird.f32 %v890
  %vm898 = vmor %vm896, %vm897
  %v899 = vsel %vm898, %v890, %v895
  %v900 = vmul.f32 %v812, %v899
  %v901 = vmul.f32 %v847, %v900
  %v902 = vsub.f32 %v813, %v901
  %v904 = vperm.slane %v900, 0
  %v906 = vmul.f32 %v671, %v904
  %v908 = vperm.slane %v902, 0
  %v910 = vadd.f32 %v906, %v908
  %v911 = vmul.f32 %v717, %v904
  %v912 = vadd.f32 %v911, %v908
  %v913 = vmul.f32 %v763, %v904
  %v914 = vadd.f32 %v913, %v908
  %v915 = vmul.f32 %v809, %v904
  %v916 = vadd.f32 %v915, %v908
  %v917 = vmax.f32 %v910, 0.0
  %v918 = vmax.f32 %v912, 0.0
  %v919 = vmax.f32 %v914, 0.0
  %v920 = vmax.f32 %v916, 0.0
  %922 = vrot.lane.b32.xlu0 %v918, 64
  %v923 = vpop.permute.xlu0 %922
  %926 = vrot.lane.b32.xlu0 %v920, 64
  %v927 = vpop.permute.xlu0 %926
  %v929 = vsel %vm361, %v917, %v923
  %v930 = vsel %vm361, %v919, %v927
  %v933 = vrot.slane %v930, 6
  %vm934 = vcmask 1041408
  %v935 = vsel %vm934, %v929, %v933
  %937 = vst [vmem:[%s10] sm:$0xf] %v935
  // Predicated region
  $region38: #{unet_forward.11} parent=0 // pred_check
    _
  $region39: #{unet_forward.11} parent=0 // pred_check_branch
    %939 = sbr.rel (0) target = $region41
  $region40: #{unet_forward.11} parent=0 // pred_region
    _
  $region41: #{unet_forward.11} parent=0 // pred_fallthru
    _
  // Predicated region
  $region42: #{unet_forward.11} parent=0 // pred_check
    _
  $region43: #{unet_forward.11} parent=0 // pred_check_branch
    %941 = sbr.rel (0) target = $region45
  $region44: #{unet_forward.11} parent=0 // pred_region
    _
  $region45: #{unet_forward.11} parent=0 // pred_fallthru
    _
  // Predicated region
  $region46: #{unet_forward.11} parent=0 // pred_check
    _
  $region47: #{unet_forward.11} parent=0 // pred_check_branch
    %943 = sbr.rel (0) target = $region49
  $region48: #{unet_forward.11} parent=0 // pred_region
    _
  $region49: #{unet_forward.11} parent=0 // pred_fallthru
    _
  // Predicated region
  $region50: #{unet_forward.11} parent=0 // pred_check
    _
  $region51: #{unet_forward.11} parent=0 // pred_check_branch
    %945 = sbr.rel (0) target = $region53
  $region52: #{unet_forward.11} parent=0 // pred_region
    _
  $region53: #{unet_forward.11} parent=0 // pred_fallthru
    _

// kernel: unet_forward.12
$region0: #{unet_forward.12}
  #allocation0 [shape = 'u32[]', space=smem, size = 0x4, offset = 0x4, fixed_abs, tag = 'smem constant byte address 0x4 - core index']
  #allocation1 [shape = 'u32[72,128]{1,0:T(1,128)}', space=vmem, size = 0x9000, scoped, tag = 'internal scratch']
  %s0 = inlined_call_operand.vmem [shape: bf16[4,8,256], index: 0, kind: input, shape index: {}]
  %s1 = inlined_call_operand.vmem [shape: bf16[4,8,256], index: 1, kind: input, shape index: {}]
  %s2 = inlined_call_operand.vmem [shape: bf16[4,256,32], index: 2, kind: input, shape index: {}]
  %s3 = inlined_call_operand.vmem [shape: bf16[4,256,32], index: 3, kind: input, shape index: {}]
  %s4 = inlined_call_operand.vmem [shape: f32[1,32], index: 4, kind: input, shape index: {}]
  %s5 = inlined_call_operand.vmem [shape: f32[1,32], index: 5, kind: input, shape index: {}]
  %s6 = inlined_call_operand.vmem [shape: f32[8,128], index: 6, kind: output, shape index: {}]
  %s7 = sld [smem:[#allocation0]]
  $region34: #{unet_forward.12} parent=0
    _
  %s9 = ssub.s32 1, %s7
  %s10 = scalar_select 0, %s9, %s7
  // Predicated region
  $region2: #{unet_forward.12} parent=0 // pred_check
    _
  $region3: #{unet_forward.12} parent=0 // pred_check_branch
    %12 = sbr.rel (0) target = $region5
  $region4: #{unet_forward.12} parent=0 // pred_region
    _
  $region5: #{unet_forward.12} parent=0 // pred_fallthru
    _
  // Predicated region
  $region6: #{unet_forward.12} parent=0 // pred_check
    _
  $region7: #{unet_forward.12} parent=0 // pred_check_branch
    %14 = sbr.rel (0) target = $region9
  $region8: #{unet_forward.12} parent=0 // pred_region
    _
  $region9: #{unet_forward.12} parent=0 // pred_fallthru
    _
  // Predicated region
  $region10: #{unet_forward.12} parent=0 // pred_check
    _
  $region11: #{unet_forward.12} parent=0 // pred_check_branch
    %16 = sbr.rel (0) target = $region13
  $region12: #{unet_forward.12} parent=0 // pred_region
    _
  $region13: #{unet_forward.12} parent=0 // pred_fallthru
    _
  // Predicated region
  $region14: #{unet_forward.12} parent=0 // pred_check
    _
  $region15: #{unet_forward.12} parent=0 // pred_check_branch
    %18 = sbr.rel (0) target = $region17
  $region16: #{unet_forward.12} parent=0 // pred_region
    _
  $region17: #{unet_forward.12} parent=0 // pred_fallthru
    _
  // Predicated region
  $region18: #{unet_forward.12} parent=0 // pred_check
    _
  $region19: #{unet_forward.12} parent=0 // pred_check_branch
    %20 = sbr.rel (0) target = $region21
  $region20: #{unet_forward.12} parent=0 // pred_region
    _
  $region21: #{unet_forward.12} parent=0 // pred_fallthru
    _
  // Predicated region
  $region22: #{unet_forward.12} parent=0 // pred_check
    _
  $region23: #{unet_forward.12} parent=0 // pred_check_branch
    %22 = sbr.rel (0) target = $region25
  $region24: #{unet_forward.12} parent=0 // pred_region
    _
  $region25: #{unet_forward.12} parent=0 // pred_fallthru
    _
  %v23 = vld [vmem:[%s0] sm:$0xff]
  %v24 = vld [vmem:[%s2] sm:$0xf]
  %v25 = vld [vmem:[%s2 + $0x4] sm:$0xf]
  %v26 = vld [vmem:[%s2 + $0x8] sm:$0xf]
  %v27 = vld [vmem:[%s2 + $0xc] sm:$0xf]
  %v28 = vld [vmem:[%s2 + $0x10] sm:$0xf]
  %v29 = vld [vmem:[%s2 + $0x14] sm:$0xf]
  %v30 = vld [vmem:[%s2 + $0x18] sm:$0xf]
  %v31 = vld [vmem:[%s2 + $0x1c] sm:$0xf]
  %v32 = vld [vmem:[%s2 + $0x20] sm:$0xf]
  %v33 = vld [vmem:[%s2 + $0x24] sm:$0xf]
  %v34 = vld [vmem:[%s2 + $0x28] sm:$0xf]
  %v35 = vld [vmem:[%s2 + $0x2c] sm:$0xf]
  %v36 = vld [vmem:[%s2 + $0x30] sm:$0xf]
  %v37 = vld [vmem:[%s2 + $0x34] sm:$0xf]
  %v38 = vld [vmem:[%s2 + $0x38] sm:$0xf]
  %v39 = vld [vmem:[%s2 + $0x3c] sm:$0xf]
  %v40 = vld [vmem:[%s2 + $0x40] sm:$0xf]
  %v41 = vld [vmem:[%s2 + $0x44] sm:$0xf]
  %v42 = vld [vmem:[%s2 + $0x48] sm:$0xf]
  %v43 = vld [vmem:[%s2 + $0x4c] sm:$0xf]
  %v44 = vld [vmem:[%s2 + $0x50] sm:$0xf]
  %v45 = vld [vmem:[%s2 + $0x54] sm:$0xf]
  %v46 = vld [vmem:[%s2 + $0x58] sm:$0xf]
  %v47 = vld [vmem:[%s2 + $0x5c] sm:$0xf]
  %v48 = vld [vmem:[%s2 + $0x60] sm:$0xf]
  %v49 = vld [vmem:[%s2 + $0x64] sm:$0xf]
  %v50 = vld [vmem:[%s2 + $0x68] sm:$0xf]
  %v51 = vld [vmem:[%s2 + $0x6c] sm:$0xf]
  %v52 = vld [vmem:[%s2 + $0x70] sm:$0xf]
  %v53 = vld [vmem:[%s2 + $0x74] sm:$0xf]
  %v54 = vld [vmem:[%s2 + $0x78] sm:$0xf]
  %v55 = vld [vmem:[%s2 + $0x7c] sm:$0xf]
  %v56 = vld [vmem:[%s1] sm:$0xff]
  %v57 = vld [vmem:[%s3] sm:$0xf]
  %v58 = vld [vmem:[%s3 + $0x4] sm:$0xf]
  %v59 = vld [vmem:[%s3 + $0x8] sm:$0xf]
  %v60 = vld [vmem:[%s3 + $0xc] sm:$0xf]
  %v61 = vld [vmem:[%s3 + $0x10] sm:$0xf]
  %v62 = vld [vmem:[%s3 + $0x14] sm:$0xf]
  %v63 = vld [vmem:[%s3 + $0x18] sm:$0xf]
  %v64 = vld [vmem:[%s3 + $0x1c] sm:$0xf]
  %v65 = vld [vmem:[%s3 + $0x20] sm:$0xf]
  %v66 = vld [vmem:[%s3 + $0x24] sm:$0xf]
  %v67 = vld [vmem:[%s3 + $0x28] sm:$0xf]
  %v68 = vld [vmem:[%s3 + $0x2c] sm:$0xf]
  %v69 = vld [vmem:[%s3 + $0x30] sm:$0xf]
  %v70 = vld [vmem:[%s3 + $0x34] sm:$0xf]
  %v71 = vld [vmem:[%s3 + $0x38] sm:$0xf]
  %v72 = vld [vmem:[%s3 + $0x3c] sm:$0xf]
  %v73 = vld [vmem:[%s3 + $0x40] sm:$0xf]
  %v74 = vld [vmem:[%s3 + $0x44] sm:$0xf]
  %v75 = vld [vmem:[%s3 + $0x48] sm:$0xf]
  %v76 = vld [vmem:[%s3 + $0x4c] sm:$0xf]
  %v77 = vld [vmem:[%s3 + $0x50] sm:$0xf]
  %v78 = vld [vmem:[%s3 + $0x54] sm:$0xf]
  %v79 = vld [vmem:[%s3 + $0x58] sm:$0xf]
  %v80 = vld [vmem:[%s3 + $0x5c] sm:$0xf]
  %v81 = vld [vmem:[%s3 + $0x60] sm:$0xf]
  %v82 = vld [vmem:[%s3 + $0x64] sm:$0xf]
  %v83 = vld [vmem:[%s3 + $0x68] sm:$0xf]
  %v84 = vld [vmem:[%s3 + $0x6c] sm:$0xf]
  %v85 = vld [vmem:[%s3 + $0x70] sm:$0xf]
  %v86 = vld [vmem:[%s3 + $0x74] sm:$0xf]
  %v87 = vld [vmem:[%s3 + $0x78] sm:$0xf]
  %v88 = vld [vmem:[%s3 + $0x7c] sm:$0xf]
  %v90 = vunpack.c.l.b16 %v56
  %v91 = vunpack.c.h.b16 %v56
  %v92 = vpack.c.b16 %v90, %v90
  %v93 = vpack.c.b16 %v91, %v91
  %v128 = vunpack.c.l.b16 %v57
  %v129 = vunpack.c.l.b16 %v58
  %v130 = vunpack.c.l.b16 %v59
  %v131 = vunpack.c.l.b16 %v60
  %v132 = vunpack.c.l.b16 %v61
  %v133 = vunpack.c.l.b16 %v62
  %v134 = vunpack.c.l.b16 %v63
  %v135 = vunpack.c.l.b16 %v64
  %v136 = vunpack.c.l.b16 %v65
  %v137 = vunpack.c.l.b16 %v66
  %v138 = vunpack.c.l.b16 %v67
  %v139 = vunpack.c.l.b16 %v68
  %v140 = vunpack.c.l.b16 %v69
  %v141 = vunpack.c.l.b16 %v70
  %v142 = vunpack.c.l.b16 %v71
  %v143 = vunpack.c.l.b16 %v72
  %v144 = vunpack.c.l.b16 %v73
  %v145 = vunpack.c.l.b16 %v74
  %v146 = vunpack.c.l.b16 %v75
  %v147 = vunpack.c.l.b16 %v76
  %v148 = vunpack.c.l.b16 %v77
  %v149 = vunpack.c.l.b16 %v78
  %v150 = vunpack.c.l.b16 %v79
  %v151 = vunpack.c.l.b16 %v80
  %v152 = vunpack.c.l.b16 %v81
  %v153 = vunpack.c.l.b16 %v82
  %v154 = vunpack.c.l.b16 %v83
  %v155 = vunpack.c.l.b16 %v84
  %v156 = vunpack.c.l.b16 %v85
  %v157 = vunpack.c.l.b16 %v86
  %v158 = vunpack.c.l.b16 %v87
  %v159 = vunpack.c.l.b16 %v88
  %v160 = vpack.c.b16 %v129, %v128
  %v161 = vpack.c.b16 %v131, %v130
  %v162 = vpack.c.b16 %v133, %v132
  %v163 = vpack.c.b16 %v135, %v134
  %v164 = vpack.c.b16 %v137, %v136
  %v165 = vpack.c.b16 %v139, %v138
  %v166 = vpack.c.b16 %v141, %v140
  %v167 = vpack.c.b16 %v143, %v142
  %v168 = vpack.c.b16 %v145, %v144
  %v169 = vpack.c.b16 %v147, %v146
  %v170 = vpack.c.b16 %v149, %v148
  %v171 = vpack.c.b16 %v151, %v150
  %v172 = vpack.c.b16 %v153, %v152
  %v173 = vpack.c.b16 %v155, %v154
  %v174 = vpack.c.b16 %v157, %v156
  %v175 = vpack.c.b16 %v159, %v158
  %192 = vmatpush.bf16.msra.mxu0 %v167
  %193 = vmatpush.bf16.msra.mxu0 %v166
  %194 = vmatpush.bf16.msra.mxu0 %v165
  %195 = vmatpush.bf16.msra.mxu0 %v164
  %196 = vmatpush.bf16.msra.mxu0 %v163
  %197 = vmatpush.bf16.msra.mxu0 %v162
  %198 = vmatpush.bf16.msra.mxu0 %v161
  %199 = vmatpush.bf16.msra.mxu0 %v160
  %200 = vmatmul.bf16.gmra.mxu0 %v92
  %v201 = vpop.f32.mrf.mxu0
  %v202 = vadd.f32 0.0, %v201
  %v203 = vpop.f32.mrf.mxu0
  %204 = vdwg.mxu0
  %205 = vmatpush.bf16.msra.mxu0 %v175
  %206 = vmatpush.bf16.msra.mxu0 %v174
  %207 = vmatpush.bf16.msra.mxu0 %v173
  %208 = vmatpush.bf16.msra.mxu0 %v172
  %209 = vmatpush.bf16.msra.mxu0 %v171
  %210 = vmatpush.bf16.msra.mxu0 %v170
  %211 = vmatpush.bf16.msra.mxu0 %v169
  %212 = vmatpush.bf16.msra.mxu0 %v168
  %213 = vmatmul.bf16.gmra.mxu0 %v93
  %v214 = vpop.f32.mrf.mxu0
  %v215 = vadd.f32 %v202, %v214
  %v216 = vpop.f32.mrf.mxu0
  %217 = vdwg.mxu0
  %v219 = vunpack.c.l.b16 %v23
  %v220 = vunpack.c.h.b16 %v23
  %v221 = vpack.c.b16 %v219, %v219
  %v222 = vpack.c.b16 %v220, %v220
  %v257 = vunpack.c.l.b16 %v24
  %v258 = vunpack.c.l.b16 %v25
  %v259 = vunpack.c.l.b16 %v26
  %v260 = vunpack.c.l.b16 %v27
  %v261 = vunpack.c.l.b16 %v28
  %v262 = vunpack.c.l.b16 %v29
  %v263 = vunpack.c.l.b16 %v30
  %v264 = vunpack.c.l.b16 %v31
  %v265 = vunpack.c.l.b16 %v32
  %v266 = vunpack.c.l.b16 %v33
  %v267 = vunpack.c.l.b16 %v34
  %v268 = vunpack.c.l.b16 %v35
  %v269 = vunpack.c.l.b16 %v36
  %v270 = vunpack.c.l.b16 %v37
  %v271 = vunpack.c.l.b16 %v38
  %v272 = vunpack.c.l.b16 %v39
  %v273 = vunpack.c.l.b16 %v40
  %v274 = vunpack.c.l.b16 %v41
  %v275 = vunpack.c.l.b16 %v42
  %v276 = vunpack.c.l.b16 %v43
  %v277 = vunpack.c.l.b16 %v44
  %v278 = vunpack.c.l.b16 %v45
  %v279 = vunpack.c.l.b16 %v46
  %v280 = vunpack.c.l.b16 %v47
  %v281 = vunpack.c.l.b16 %v48
  %v282 = vunpack.c.l.b16 %v49
  %v283 = vunpack.c.l.b16 %v50
  %v284 = vunpack.c.l.b16 %v51
  %v285 = vunpack.c.l.b16 %v52
  %v286 = vunpack.c.l.b16 %v53
  %v287 = vunpack.c.l.b16 %v54
  %v288 = vunpack.c.l.b16 %v55
  %v289 = vpack.c.b16 %v258, %v257
  %v290 = vpack.c.b16 %v260, %v259
  %v291 = vpack.c.b16 %v262, %v261
  %v292 = vpack.c.b16 %v264, %v263
  %v293 = vpack.c.b16 %v266, %v265
  %v294 = vpack.c.b16 %v268, %v267
  %v295 = vpack.c.b16 %v270, %v269
  %v296 = vpack.c.b16 %v272, %v271
  %v297 = vpack.c.b16 %v274, %v273
  %v298 = vpack.c.b16 %v276, %v275
  %v299 = vpack.c.b16 %v278, %v277
  %v300 = vpack.c.b16 %v280, %v279
  %v301 = vpack.c.b16 %v282, %v281
  %v302 = vpack.c.b16 %v284, %v283
  %v303 = vpack.c.b16 %v286, %v285
  %v304 = vpack.c.b16 %v288, %v287
  %321 = vmatpush.bf16.msra.mxu0 %v296
  %322 = vmatpush.bf16.msra.mxu0 %v295
  %323 = vmatpush.bf16.msra.mxu0 %v294
  %324 = vmatpush.bf16.msra.mxu0 %v293
  %325 = vmatpush.bf16.msra.mxu0 %v292
  %326 = vmatpush.bf16.msra.mxu0 %v291
  %327 = vmatpush.bf16.msra.mxu0 %v290
  %328 = vmatpush.bf16.msra.mxu0 %v289
  %329 = vmatmul.bf16.gmra.mxu0 %v221
  %v330 = vpop.f32.mrf.mxu0
  %v331 = vadd.f32 %v215, %v330
  %v332 = vpop.f32.mrf.mxu0
  %333 = vdwg.mxu0
  %334 = vmatpush.bf16.msra.mxu0 %v304
  %335 = vmatpush.bf16.msra.mxu0 %v303
  %336 = vmatpush.bf16.msra.mxu0 %v302
  %337 = vmatpush.bf16.msra.mxu0 %v301
  %338 = vmatpush.bf16.msra.mxu0 %v300
  %339 = vmatpush.bf16.msra.mxu0 %v299
  %340 = vmatpush.bf16.msra.mxu0 %v298
  %341 = vmatpush.bf16.msra.mxu0 %v297
  %342 = vmatmul.bf16.gmra.mxu0 %v222
  %v343 = vpop.f32.mrf.mxu0
  %v344 = vadd.f32 %v331, %v343
  %v345 = vpop.f32.mrf.mxu0
  %346 = vdwg.mxu0
  %s347 = scalar_lea.vmem %s0, 8
  %v348 = vld [vmem:[%s347] sm:$0xff]
  %s349 = scalar_lea.vmem %s2, 128
  %v350 = vld [vmem:[%s349] sm:$0xf]
  %v351 = vld [vmem:[%s349 + $0x4] sm:$0xf]
  %v352 = vld [vmem:[%s349 + $0x8] sm:$0xf]
  %v353 = vld [vmem:[%s349 + $0xc] sm:$0xf]
  %v354 = vld [vmem:[%s349 + $0x10] sm:$0xf]
  %v355 = vld [vmem:[%s349 + $0x14] sm:$0xf]
  %v356 = vld [vmem:[%s349 + $0x18] sm:$0xf]
  %v357 = vld [vmem:[%s349 + $0x1c] sm:$0xf]
  %v358 = vld [vmem:[%s349 + $0x20] sm:$0xf]
  %v359 = vld [vmem:[%s349 + $0x24] sm:$0xf]
  %v360 = vld [vmem:[%s349 + $0x28] sm:$0xf]
  %v361 = vld [vmem:[%s349 + $0x2c] sm:$0xf]
  %v362 = vld [vmem:[%s349 + $0x30] sm:$0xf]
  %v363 = vld [vmem:[%s349 + $0x34] sm:$0xf]
  %v364 = vld [vmem:[%s349 + $0x38] sm:$0xf]
  %v365 = vld [vmem:[%s349 + $0x3c] sm:$0xf]
  %v366 = vld [vmem:[%s349 + $0x40] sm:$0xf]
  %v367 = vld [vmem:[%s349 + $0x44] sm:$0xf]
  %v368 = vld [vmem:[%s349 + $0x48] sm:$0xf]
  %v369 = vld [vmem:[%s349 + $0x4c] sm:$0xf]
  %v370 = vld [vmem:[%s349 + $0x50] sm:$0xf]
  %v371 = vld [vmem:[%s349 + $0x54] sm:$0xf]
  %v372 = vld [vmem:[%s349 + $0x58] sm:$0xf]
  %v373 = vld [vmem:[%s349 + $0x5c] sm:$0xf]
  %v374 = vld [vmem:[%s349 + $0x60] sm:$0xf]
  %v375 = vld [vmem:[%s349 + $0x64] sm:$0xf]
  %v376 = vld [vmem:[%s349 + $0x68] sm:$0xf]
  %v377 = vld [vmem:[%s349 + $0x6c] sm:$0xf]
  %v378 = vld [vmem:[%s349 + $0x70] sm:$0xf]
  %v379 = vld [vmem:[%s349 + $0x74] sm:$0xf]
  %v380 = vld [vmem:[%s349 + $0x78] sm:$0xf]
  %v381 = vld [vmem:[%s349 + $0x7c] sm:$0xf]
  %s382 = scalar_lea.vmem %s1, 8
  %v383 = vld [vmem:[%s382] sm:$0xff]
  %s384 = scalar_lea.vmem %s3, 128
  %v385 = vld [vmem:[%s384] sm:$0xf]
  %v386 = vld [vmem:[%s384 + $0x4] sm:$0xf]
  %v387 = vld [vmem:[%s384 + $0x8] sm:$0xf]
  %v388 = vld [vmem:[%s384 + $0xc] sm:$0xf]
  %v389 = vld [vmem:[%s384 + $0x10] sm:$0xf]
  %v390 = vld [vmem:[%s384 + $0x14] sm:$0xf]
  %v391 = vld [vmem:[%s384 + $0x18] sm:$0xf]
  %v392 = vld [vmem:[%s384 + $0x1c] sm:$0xf]
  %v393 = vld [vmem:[%s384 + $0x20] sm:$0xf]
  %v394 = vld [vmem:[%s384 + $0x24] sm:$0xf]
  %v395 = vld [vmem:[%s384 + $0x28] sm:$0xf]
  %v396 = vld [vmem:[%s384 + $0x2c] sm:$0xf]
  %v397 = vld [vmem:[%s384 + $0x30] sm:$0xf]
  %v398 = vld [vmem:[%s384 + $0x34] sm:$0xf]
  %v399 = vld [vmem:[%s384 + $0x38] sm:$0xf]
  %v400 = vld [vmem:[%s384 + $0x3c] sm:$0xf]
  %v401 = vld [vmem:[%s384 + $0x40] sm:$0xf]
  %v402 = vld [vmem:[%s384 + $0x44] sm:$0xf]
  %v403 = vld [vmem:[%s384 + $0x48] sm:$0xf]
  %v404 = vld [vmem:[%s384 + $0x4c] sm:$0xf]
  %v405 = vld [vmem:[%s384 + $0x50] sm:$0xf]
  %v406 = vld [vmem:[%s384 + $0x54] sm:$0xf]
  %v407 = vld [vmem:[%s384 + $0x58] sm:$0xf]
  %v408 = vld [vmem:[%s384 + $0x5c] sm:$0xf]
  %v409 = vld [vmem:[%s384 + $0x60] sm:$0xf]
  %v410 = vld [vmem:[%s384 + $0x64] sm:$0xf]
  %v411 = vld [vmem:[%s384 + $0x68] sm:$0xf]
  %v412 = vld [vmem:[%s384 + $0x6c] sm:$0xf]
  %v413 = vld [vmem:[%s384 + $0x70] sm:$0xf]
  %v414 = vld [vmem:[%s384 + $0x74] sm:$0xf]
  %v415 = vld [vmem:[%s384 + $0x78] sm:$0xf]
  %v416 = vld [vmem:[%s384 + $0x7c] sm:$0xf]
  %v418 = vunpack.c.l.b16 %v383
  %v419 = vunpack.c.h.b16 %v383
  %v420 = vpack.c.b16 %v418, %v418
  %v421 = vpack.c.b16 %v419, %v419
  %v456 = vunpack.c.l.b16 %v385
  %v457 = vunpack.c.l.b16 %v386
  %v458 = vunpack.c.l.b16 %v387
  %v459 = vunpack.c.l.b16 %v388
  %v460 = vunpack.c.l.b16 %v389
  %v461 = vunpack.c.l.b16 %v390
  %v462 = vunpack.c.l.b16 %v391
  %v463 = vunpack.c.l.b16 %v392
  %v464 = vunpack.c.l.b16 %v393
  %v465 = vunpack.c.l.b16 %v394
  %v466 = vunpack.c.l.b16 %v395
  %v467 = vunpack.c.l.b16 %v396
  %v468 = vunpack.c.l.b16 %v397
  %v469 = vunpack.c.l.b16 %v398
  %v470 = vunpack.c.l.b16 %v399
  %v471 = vunpack.c.l.b16 %v400
  %v472 = vunpack.c.l.b16 %v401
  %v473 = vunpack.c.l.b16 %v402
  %v474 = vunpack.c.l.b16 %v403
  %v475 = vunpack.c.l.b16 %v404
  %v476 = vunpack.c.l.b16 %v405
  %v477 = vunpack.c.l.b16 %v406
  %v478 = vunpack.c.l.b16 %v407
  %v479 = vunpack.c.l.b16 %v408
  %v480 = vunpack.c.l.b16 %v409
  %v481 = vunpack.c.l.b16 %v410
  %v482 = vunpack.c.l.b16 %v411
  %v483 = vunpack.c.l.b16 %v412
  %v484 = vunpack.c.l.b16 %v413
  %v485 = vunpack.c.l.b16 %v414
  %v486 = vunpack.c.l.b16 %v415
  %v487 = vunpack.c.l.b16 %v416
  %v488 = vpack.c.b16 %v457, %v456
  %v489 = vpack.c.b16 %v459, %v458
  %v490 = vpack.c.b16 %v461, %v460
  %v491 = vpack.c.b16 %v463, %v462
  %v492 = vpack.c.b16 %v465, %v464
  %v493 = vpack.c.b16 %v467, %v466
  %v494 = vpack.c.b16 %v469, %v468
  %v495 = vpack.c.b16 %v471, %v470
  %v496 = vpack.c.b16 %v473, %v472
  %v497 = vpack.c.b16 %v475, %v474
  %v498 = vpack.c.b16 %v477, %v476
  %v499 = vpack.c.b16 %v479, %v478
  %v500 = vpack.c.b16 %v481, %v480
  %v501 = vpack.c.b16 %v483, %v482
  %v502 = vpack.c.b16 %v485, %v484
  %v503 = vpack.c.b16 %v487, %v486
  %520 = vmatpush.bf16.msra.mxu0 %v495
  %521 = vmatpush.bf16.msra.mxu0 %v494
  %522 = vmatpush.bf16.msra.mxu0 %v493
  %523 = vmatpush.bf16.msra.mxu0 %v492
  %524 = vmatpush.bf16.msra.mxu0 %v491
  %525 = vmatpush.bf16.msra.mxu0 %v490
  %526 = vmatpush.bf16.msra.mxu0 %v489
  %527 = vmatpush.bf16.msra.mxu0 %v488
  %528 = vmatmul.bf16.gmra.mxu0 %v420
  %v529 = vpop.f32.mrf.mxu0
  %v530 = vadd.f32 0.0, %v529
  %v531 = vpop.f32.mrf.mxu0
  %532 = vdwg.mxu0
  %533 = vmatpush.bf16.msra.mxu0 %v503
  %534 = vmatpush.bf16.msra.mxu0 %v502
  %535 = vmatpush.bf16.msra.mxu0 %v501
  %536 = vmatpush.bf16.msra.mxu0 %v500
  %537 = vmatpush.bf16.msra.mxu0 %v499
  %538 = vmatpush.bf16.msra.mxu0 %v498
  %539 = vmatpush.bf16.msra.mxu0 %v497
  %540 = vmatpush.bf16.msra.mxu0 %v496
  %541 = vmatmul.bf16.gmra.mxu0 %v421
  %v542 = vpop.f32.mrf.mxu0
  %v543 = vadd.f32 %v530, %v542
  %v544 = vpop.f32.mrf.mxu0
  %545 = vdwg.mxu0
  %v547 = vunpack.c.l.b16 %v348
  %v548 = vunpack.c.h.b16 %v348
  %v549 = vpack.c.b16 %v547, %v547
  %v550 = vpack.c.b16 %v548, %v548
  %v585 = vunpack.c.l.b16 %v350
  %v586 = vunpack.c.l.b16 %v351
  %v587 = vunpack.c.l.b16 %v352
  %v588 = vunpack.c.l.b16 %v353
  %v589 = vunpack.c.l.b16 %v354
  %v590 = vunpack.c.l.b16 %v355
  %v591 = vunpack.c.l.b16 %v356
  %v592 = vunpack.c.l.b16 %v357
  %v593 = vunpack.c.l.b16 %v358
  %v594 = vunpack.c.l.b16 %v359
  %v595 = vunpack.c.l.b16 %v360
  %v596 = vunpack.c.l.b16 %v361
  %v597 = vunpack.c.l.b16 %v362
  %v598 = vunpack.c.l.b16 %v363
  %v599 = vunpack.c.l.b16 %v364
  %v600 = vunpack.c.l.b16 %v365
  %v601 = vunpack.c.l.b16 %v366
  %v602 = vunpack.c.l.b16 %v367
  %v603 = vunpack.c.l.b16 %v368
  %v604 = vunpack.c.l.b16 %v369
  %v605 = vunpack.c.l.b16 %v370
  %v606 = vunpack.c.l.b16 %v371
  %v607 = vunpack.c.l.b16 %v372
  %v608 = vunpack.c.l.b16 %v373
  %v609 = vunpack.c.l.b16 %v374
  %v610 = vunpack.c.l.b16 %v375
  %v611 = vunpack.c.l.b16 %v376
  %v612 = vunpack.c.l.b16 %v377
  %v613 = vunpack.c.l.b16 %v378
  %v614 = vunpack.c.l.b16 %v379
  %v615 = vunpack.c.l.b16 %v380
  %v616 = vunpack.c.l.b16 %v381
  %v617 = vpack.c.b16 %v586, %v585
  %v618 = vpack.c.b16 %v588, %v587
  %v619 = vpack.c.b16 %v590, %v589
  %v620 = vpack.c.b16 %v592, %v591
  %v621 = vpack.c.b16 %v594, %v593
  %v622 = vpack.c.b16 %v596, %v595
  %v623 = vpack.c.b16 %v598, %v597
  %v624 = vpack.c.b16 %v600, %v599
  %v625 = vpack.c.b16 %v602, %v601
  %v626 = vpack.c.b16 %v604, %v603
  %v627 = vpack.c.b16 %v606, %v605
  %v628 = vpack.c.b16 %v608, %v607
  %v629 = vpack.c.b16 %v610, %v609
  %v630 = vpack.c.b16 %v612, %v611
  %v631 = vpack.c.b16 %v614, %v613
  %v632 = vpack.c.b16 %v616, %v615
  %649 = vmatpush.bf16.msra.mxu0 %v624
  %650 = vmatpush.bf16.msra.mxu0 %v623
  %651 = vmatpush.bf16.msra.mxu0 %v622
  %652 = vmatpush.bf16.msra.mxu0 %v621
  %653 = vmatpush.bf16.msra.mxu0 %v620
  %654 = vmatpush.bf16.msra.mxu0 %v619
  %655 = vmatpush.bf16.msra.mxu0 %v618
  %656 = vmatpush.bf16.msra.mxu0 %v617
  %657 = vmatmul.bf16.gmra.mxu0 %v549
  %v658 = vpop.f32.mrf.mxu0
  %v659 = vadd.f32 %v543, %v658
  %v660 = vpop.f32.mrf.mxu0
  %661 = vdwg.mxu0
  %662 = vmatpush.bf16.msra.mxu0 %v632
  %663 = vmatpush.bf16.msra.mxu0 %v631
  %664 = vmatpush.bf16.msra.mxu0 %v630
  %665 = vmatpush.bf16.msra.mxu0 %v629
  %666 = vmatpush.bf16.msra.mxu0 %v628
  %667 = vmatpush.bf16.msra.mxu0 %v627
  %668 = vmatpush.bf16.msra.mxu0 %v626
  %669 = vmatpush.bf16.msra.mxu0 %v625
  %670 = vmatmul.bf16.gmra.mxu0 %v550
  %v671 = vpop.f32.mrf.mxu0
  %v672 = vadd.f32 %v659, %v671
  %v673 = vpop.f32.mrf.mxu0
  %674 = vdwg.mxu0
  %s675 = scalar_lea.vmem %s0, 16
  %v676 = vld [vmem:[%s675] sm:$0xff]
  %s677 = scalar_lea.vmem %s2, 256
  %v678 = vld [vmem:[%s677] sm:$0xf]
  %v679 = vld [vmem:[%s677 + $0x4] sm:$0xf]
  %v680 = vld [vmem:[%s677 + $0x8] sm:$0xf]
  %v681 = vld [vmem:[%s677 + $0xc] sm:$0xf]
  %v682 = vld [vmem:[%s677 + $0x10] sm:$0xf]
  %v683 = vld [vmem:[%s677 + $0x14] sm:$0xf]
  %v684 = vld [vmem:[%s677 + $0x18] sm:$0xf]
  %v685 = vld [vmem:[%s677 + $0x1c] sm:$0xf]
  %v686 = vld [vmem:[%s677 + $0x20] sm:$0xf]
  %v687 = vld [vmem:[%s677 + $0x24] sm:$0xf]
  %v688 = vld [vmem:[%s677 + $0x28] sm:$0xf]
  %v689 = vld [vmem:[%s677 + $0x2c] sm:$0xf]
  %v690 = vld [vmem:[%s677 + $0x30] sm:$0xf]
  %v691 = vld [vmem:[%s677 + $0x34] sm:$0xf]
  %v692 = vld [vmem:[%s677 + $0x38] sm:$0xf]
  %v693 = vld [vmem:[%s677 + $0x3c] sm:$0xf]
  %v694 = vld [vmem:[%s677 + $0x40] sm:$0xf]
  %v695 = vld [vmem:[%s677 + $0x44] sm:$0xf]
  %v696 = vld [vmem:[%s677 + $0x48] sm:$0xf]
  %v697 = vld [vmem:[%s677 + $0x4c] sm:$0xf]
  %v698 = vld [vmem:[%s677 + $0x50] sm:$0xf]
  %v699 = vld [vmem:[%s677 + $0x54] sm:$0xf]
  %v700 = vld [vmem:[%s677 + $0x58] sm:$0xf]
  %v701 = vld [vmem:[%s677 + $0x5c] sm:$0xf]
  %v702 = vld [vmem:[%s677 + $0x60] sm:$0xf]
  %v703 = vld [vmem:[%s677 + $0x64] sm:$0xf]
  %v704 = vld [vmem:[%s677 + $0x68] sm:$0xf]
  %v705 = vld [vmem:[%s677 + $0x6c] sm:$0xf]
  %v706 = vld [vmem:[%s677 + $0x70] sm:$0xf]
  %v707 = vld [vmem:[%s677 + $0x74] sm:$0xf]
  %v708 = vld [vmem:[%s677 + $0x78] sm:$0xf]
  %v709 = vld [vmem:[%s677 + $0x7c] sm:$0xf]
  %s710 = scalar_lea.vmem %s1, 16
  %v711 = vld [vmem:[%s710] sm:$0xff]
  %s712 = scalar_lea.vmem %s3, 256
  %v713 = vld [vmem:[%s712] sm:$0xf]
  %v714 = vld [vmem:[%s712 + $0x4] sm:$0xf]
  %v715 = vld [vmem:[%s712 + $0x8] sm:$0xf]
  %v716 = vld [vmem:[%s712 + $0xc] sm:$0xf]
  %v717 = vld [vmem:[%s712 + $0x10] sm:$0xf]
  %v718 = vld [vmem:[%s712 + $0x14] sm:$0xf]
  %v719 = vld [vmem:[%s712 + $0x18] sm:$0xf]
  %v720 = vld [vmem:[%s712 + $0x1c] sm:$0xf]
  %v721 = vld [vmem:[%s712 + $0x20] sm:$0xf]
  %v722 = vld [vmem:[%s712 + $0x24] sm:$0xf]
  %v723 = vld [vmem:[%s712 + $0x28] sm:$0xf]
  %v724 = vld [vmem:[%s712 + $0x2c] sm:$0xf]
  %v725 = vld [vmem:[%s712 + $0x30] sm:$0xf]
  %v726 = vld [vmem:[%s712 + $0x34] sm:$0xf]
  %v727 = vld [vmem:[%s712 + $0x38] sm:$0xf]
  %v728 = vld [vmem:[%s712 + $0x3c] sm:$0xf]
  %v729 = vld [vmem:[%s712 + $0x40] sm:$0xf]
  %v730 = vld [vmem:[%s712 + $0x44] sm:$0xf]
  %v731 = vld [vmem:[%s712 + $0x48] sm:$0xf]
  %v732 = vld [vmem:[%s712 + $0x4c] sm:$0xf]
  %v733 = vld [vmem:[%s712 + $0x50] sm:$0xf]
  %v734 = vld [vmem:[%s712 + $0x54] sm:$0xf]
  %v735 = vld [vmem:[%s712 + $0x58] sm:$0xf]
  %v736 = vld [vmem:[%s712 + $0x5c] sm:$0xf]
  %v737 = vld [vmem:[%s712 + $0x60] sm:$0xf]
  %v738 = vld [vmem:[%s712 + $0x64] sm:$0xf]
  %v739 = vld [vmem:[%s712 + $0x68] sm:$0xf]
  %v740 = vld [vmem:[%s712 + $0x6c] sm:$0xf]
  %v741 = vld [vmem:[%s712 + $0x70] sm:$0xf]
  %v742 = vld [vmem:[%s712 + $0x74] sm:$0xf]
  %v743 = vld [vmem:[%s712 + $0x78] sm:$0xf]
  %v744 = vld [vmem:[%s712 + $0x7c] sm:$0xf]
  %v746 = vunpack.c.l.b16 %v711
  %v747 = vunpack.c.h.b16 %v711
  %v748 = vpack.c.b16 %v746, %v746
  %v749 = vpack.c.b16 %v747, %v747
  %v784 = vunpack.c.l.b16 %v713
  %v785 = vunpack.c.l.b16 %v714
  %v786 = vunpack.c.l.b16 %v715
  %v787 = vunpack.c.l.b16 %v716
  %v788 = vunpack.c.l.b16 %v717
  %v789 = vunpack.c.l.b16 %v718
  %v790 = vunpack.c.l.b16 %v719
  %v791 = vunpack.c.l.b16 %v720
  %v792 = vunpack.c.l.b16 %v721
  %v793 = vunpack.c.l.b16 %v722
  %v794 = vunpack.c.l.b16 %v723
  %v795 = vunpack.c.l.b16 %v724
  %v796 = vunpack.c.l.b16 %v725
  %v797 = vunpack.c.l.b16 %v726
  %v798 = vunpack.c.l.b16 %v727
  %v799 = vunpack.c.l.b16 %v728
  %v800 = vunpack.c.l.b16 %v729
  %v801 = vunpack.c.l.b16 %v730
  %v802 = vunpack.c.l.b16 %v731
  %v803 = vunpack.c.l.b16 %v732
  %v804 = vunpack.c.l.b16 %v733
  %v805 = vunpack.c.l.b16 %v734
  %v806 = vunpack.c.l.b16 %v735
  %v807 = vunpack.c.l.b16 %v736
  %v808 = vunpack.c.l.b16 %v737
  %v809 = vunpack.c.l.b16 %v738
  %v810 = vunpack.c.l.b16 %v739
  %v811 = vunpack.c.l.b16 %v740
  %v812 = vunpack.c.l.b16 %v741
  %v813 = vunpack.c.l.b16 %v742
  %v814 = vunpack.c.l.b16 %v743
  %v815 = vunpack.c.l.b16 %v744
  %v816 = vpack.c.b16 %v785, %v784
  %v817 = vpack.c.b16 %v787, %v786
  %v818 = vpack.c.b16 %v789, %v788
  %v819 = vpack.c.b16 %v791, %v790
  %v820 = vpack.c.b16 %v793, %v792
  %v821 = vpack.c.b16 %v795, %v794
  %v822 = vpack.c.b16 %v797, %v796
  %v823 = vpack.c.b16 %v799, %v798
  %v824 = vpack.c.b16 %v801, %v800
  %v825 = vpack.c.b16 %v803, %v802
  %v826 = vpack.c.b16 %v805, %v804
  %v827 = vpack.c.b16 %v807, %v806
  %v828 = vpack.c.b16 %v809, %v808
  %v829 = vpack.c.b16 %v811, %v810
  %v830 = vpack.c.b16 %v813, %v812
  %v831 = vpack.c.b16 %v815, %v814
  %848 = vmatpush.bf16.msra.mxu0 %v823
  %849 = vmatpush.bf16.msra.mxu0 %v822
  %850 = vmatpush.bf16.msra.mxu0 %v821
  %851 = vmatpush.bf16.msra.mxu0 %v820
  %852 = vmatpush.bf16.msra.mxu0 %v819
  %853 = vmatpush.bf16.msra.mxu0 %v818
  %854 = vmatpush.bf16.msra.mxu0 %v817
  %855 = vmatpush.bf16.msra.mxu0 %v816
  %856 = vmatmul.bf16.gmra.mxu0 %v748
  %v857 = vpop.f32.mrf.mxu0
  %v858 = vadd.f32 0.0, %v857
  %v859 = vpop.f32.mrf.mxu0
  %860 = vdwg.mxu0
  %861 = vmatpush.bf16.msra.mxu0 %v831
  %862 = vmatpush.bf16.msra.mxu0 %v830
  %863 = vmatpush.bf16.msra.mxu0 %v829
  %864 = vmatpush.bf16.msra.mxu0 %v828
  %865 = vmatpush.bf16.msra.mxu0 %v827
  %866 = vmatpush.bf16.msra.mxu0 %v826
  %867 = vmatpush.bf16.msra.mxu0 %v825
  %868 = vmatpush.bf16.msra.mxu0 %v824
  %869 = vmatmul.bf16.gmra.mxu0 %v749
  %v870 = vpop.f32.mrf.mxu0
  %v871 = vadd.f32 %v858, %v870
  %v872 = vpop.f32.mrf.mxu0
  %873 = vdwg.mxu0
  %v875 = vunpack.c.l.b16 %v676
  %v876 = vunpack.c.h.b16 %v676
  %v877 = vpack.c.b16 %v875, %v875
  %v878 = vpack.c.b16 %v876, %v876
  %v913 = vunpack.c.l.b16 %v678
  %v914 = vunpack.c.l.b16 %v679
  %v915 = vunpack.c.l.b16 %v680
  %v916 = vunpack.c.l.b16 %v681
  %v917 = vunpack.c.l.b16 %v682
  %v918 = vunpack.c.l.b16 %v683
  %v919 = vunpack.c.l.b16 %v684
  %v920 = vunpack.c.l.b16 %v685
  %v921 = vunpack.c.l.b16 %v686
  %v922 = vunpack.c.l.b16 %v687
  %v923 = vunpack.c.l.b16 %v688
  %v924 = vunpack.c.l.b16 %v689
  %v925 = vunpack.c.l.b16 %v690
  %v926 = vunpack.c.l.b16 %v691
  %v927 = vunpack.c.l.b16 %v692
  %v928 = vunpack.c.l.b16 %v693
  %v929 = vunpack.c.l.b16 %v694
  %v930 = vunpack.c.l.b16 %v695
  %v931 = vunpack.c.l.b16 %v696
  %v932 = vunpack.c.l.b16 %v697
  %v933 = vunpack.c.l.b16 %v698
  %v934 = vunpack.c.l.b16 %v699
  %v935 = vunpack.c.l.b16 %v700
  %v936 = vunpack.c.l.b16 %v701
  %v937 = vunpack.c.l.b16 %v702
  %v938 = vunpack.c.l.b16 %v703
  %v939 = vunpack.c.l.b16 %v704
  %v940 = vunpack.c.l.b16 %v705
  %v941 = vunpack.c.l.b16 %v706
  %v942 = vunpack.c.l.b16 %v707
  %v943 = vunpack.c.l.b16 %v708
  %v944 = vunpack.c.l.b16 %v709
  %v945 = vpack.c.b16 %v914, %v913
  %v946 = vpack.c.b16 %v916, %v915
  %v947 = vpack.c.b16 %v918, %v917
  %v948 = vpack.c.b16 %v920, %v919
  %v949 = vpack.c.b16 %v922, %v921
  %v950 = vpack.c.b16 %v924, %v923
  %v951 = vpack.c.b16 %v926, %v925
  %v952 = vpack.c.b16 %v928, %v927
  %v953 = vpack.c.b16 %v930, %v929
  %v954 = vpack.c.b16 %v932, %v931
  %v955 = vpack.c.b16 %v934, %v933
  %v956 = vpack.c.b16 %v936, %v935
  %v957 = vpack.c.b16 %v938, %v937
  %v958 = vpack.c.b16 %v940, %v939
  %v959 = vpack.c.b16 %v942, %v941
  %v960 = vpack.c.b16 %v944, %v943
  %977 = vmatpush.bf16.msra.mxu0 %v952
  %978 = vmatpush.bf16.msra.mxu0 %v951
  %979 = vmatpush.bf16.msra.mxu0 %v950
  %980 = vmatpush.bf16.msra.mxu0 %v949
  %981 = vmatpush.bf16.msra.mxu0 %v948
  %982 = vmatpush.bf16.msra.mxu0 %v947
  %983 = vmatpush.bf16.msra.mxu0 %v946
  %984 = vmatpush.bf16.msra.mxu0 %v945
  %985 = vmatmul.bf16.gmra.mxu0 %v877
  %v986 = vpop.f32.mrf.mxu0
  %v987 = vadd.f32 %v871, %v986
  %v988 = vpop.f32.mrf.mxu0
  %989 = vdwg.mxu0
  %990 = vmatpush.bf16.msra.mxu0 %v960
  %991 = vmatpush.bf16.msra.mxu0 %v959
  %992 = vmatpush.bf16.msra.mxu0 %v958
  %993 = vmatpush.bf16.msra.mxu0 %v957
  %994 = vmatpush.bf16.msra.mxu0 %v956
  %995 = vmatpush.bf16.msra.mxu0 %v955
  %996 = vmatpush.bf16.msra.mxu0 %v954
  %997 = vmatpush.bf16.msra.mxu0 %v953
  %998 = vmatmul.bf16.gmra.mxu0 %v878
  %v999 = vpop.f32.mrf.mxu0
  %v1000 = vadd.f32 %v987, %v999
  %v1001 = vpop.f32.mrf.mxu0
  %1002 = vdwg.mxu0
  %s1003 = scalar_lea.vmem %s0, 24
  %v1004 = vld [vmem:[%s1003] sm:$0xff]
  %s1005 = scalar_lea.vmem %s2, 384
  %v1006 = vld [vmem:[%s1005] sm:$0xf]
  %v1007 = vld [vmem:[%s1005 + $0x4] sm:$0xf]
  %v1008 = vld [vmem:[%s1005 + $0x8] sm:$0xf]
  %v1009 = vld [vmem:[%s1005 + $0xc] sm:$0xf]
  %v1010 = vld [vmem:[%s1005 + $0x10] sm:$0xf]
  %v1011 = vld [vmem:[%s1005 + $0x14] sm:$0xf]
  %v1012 = vld [vmem:[%s1005 + $0x18] sm:$0xf]
  %v1013 = vld [vmem:[%s1005 + $0x1c] sm:$0xf]
  %v1014 = vld [vmem:[%s1005 + $0x20] sm:$0xf]
  %v1015 = vld [vmem:[%s1005 + $0x24] sm:$0xf]
  %v1016 = vld [vmem:[%s1005 + $0x28] sm:$0xf]
  %v1017 = vld [vmem:[%s1005 + $0x2c] sm:$0xf]
  %v1018 = vld [vmem:[%s1005 + $0x30] sm:$0xf]
  %v1019 = vld [vmem:[%s1005 + $0x34] sm:$0xf]
  %v1020 = vld [vmem:[%s1005 + $0x38] sm:$0xf]
  %v1021 = vld [vmem:[%s1005 + $0x3c] sm:$0xf]
  %v1022 = vld [vmem:[%s1005 + $0x40] sm:$0xf]
  %v1023 = vld [vmem:[%s1005 + $0x44] sm:$0xf]
  %v1024 = vld [vmem:[%s1005 + $0x48] sm:$0xf]
  %v1025 = vld [vmem:[%s1005 + $0x4c] sm:$0xf]
  %v1026 = vld [vmem:[%s1005 + $0x50] sm:$0xf]
  %v1027 = vld [vmem:[%s1005 + $0x54] sm:$0xf]
  %v1028 = vld [vmem:[%s1005 + $0x58] sm:$0xf]
  %v1029 = vld [vmem:[%s1005 + $0x5c] sm:$0xf]
  %v1030 = vld [vmem:[%s1005 + $0x60] sm:$0xf]
  %v1031 = vld [vmem:[%s1005 + $0x64] sm:$0xf]
  %v1032 = vld [vmem:[%s1005 + $0x68] sm:$0xf]
  %v1033 = vld [vmem:[%s1005 + $0x6c] sm:$0xf]
  %v1034 = vld [vmem:[%s1005 + $0x70] sm:$0xf]
  %v1035 = vld [vmem:[%s1005 + $0x74] sm:$0xf]
  %v1036 = vld [vmem:[%s1005 + $0x78] sm:$0xf]
  %v1037 = vld [vmem:[%s1005 + $0x7c] sm:$0xf]
  %s1038 = scalar_lea.vmem %s1, 24
  %v1039 = vld [vmem:[%s1038] sm:$0xff]
  %s1040 = scalar_lea.vmem %s3, 384
  %v1041 = vld [vmem:[%s1040] sm:$0xf]
  %v1042 = vld [vmem:[%s1040 + $0x4] sm:$0xf]
  %v1043 = vld [vmem:[%s1040 + $0x8] sm:$0xf]
  %v1044 = vld [vmem:[%s1040 + $0xc] sm:$0xf]
  %v1045 = vld [vmem:[%s1040 + $0x10] sm:$0xf]
  %v1046 = vld [vmem:[%s1040 + $0x14] sm:$0xf]
  %v1047 = vld [vmem:[%s1040 + $0x18] sm:$0xf]
  %v1048 = vld [vmem:[%s1040 + $0x1c] sm:$0xf]
  %v1049 = vld [vmem:[%s1040 + $0x20] sm:$0xf]
  %v1050 = vld [vmem:[%s1040 + $0x24] sm:$0xf]
  %v1051 = vld [vmem:[%s1040 + $0x28] sm:$0xf]
  %v1052 = vld [vmem:[%s1040 + $0x2c] sm:$0xf]
  %v1053 = vld [vmem:[%s1040 + $0x30] sm:$0xf]
  %v1054 = vld [vmem:[%s1040 + $0x34] sm:$0xf]
  %v1055 = vld [vmem:[%s1040 + $0x38] sm:$0xf]
  %v1056 = vld [vmem:[%s1040 + $0x3c] sm:$0xf]
  %v1057 = vld [vmem:[%s1040 + $0x40] sm:$0xf]
  %v1058 = vld [vmem:[%s1040 + $0x44] sm:$0xf]
  %v1059 = vld [vmem:[%s1040 + $0x48] sm:$0xf]
  %v1060 = vld [vmem:[%s1040 + $0x4c] sm:$0xf]
  %v1061 = vld [vmem:[%s1040 + $0x50] sm:$0xf]
  %v1062 = vld [vmem:[%s1040 + $0x54] sm:$0xf]
  %v1063 = vld [vmem:[%s1040 + $0x58] sm:$0xf]
  %v1064 = vld [vmem:[%s1040 + $0x5c] sm:$0xf]
  %v1065 = vld [vmem:[%s1040 + $0x60] sm:$0xf]
  %v1066 = vld [vmem:[%s1040 + $0x64] sm:$0xf]
  %v1067 = vld [vmem:[%s1040 + $0x68] sm:$0xf]
  %v1068 = vld [vmem:[%s1040 + $0x6c] sm:$0xf]
  %v1069 = vld [vmem:[%s1040 + $0x70] sm:$0xf]
  %v1070 = vld [vmem:[%s1040 + $0x74] sm:$0xf]
  %v1071 = vld [vmem:[%s1040 + $0x78] sm:$0xf]
  %v1072 = vld [vmem:[%s1040 + $0x7c] sm:$0xf]
  %v1074 = vunpack.c.l.b16 %v1039
  %v1075 = vunpack.c.h.b16 %v1039
  %v1076 = vpack.c.b16 %v1074, %v1074
  %v1077 = vpack.c.b16 %v1075, %v1075
  %v1112 = vunpack.c.l.b16 %v1041
  %v1113 = vunpack.c.l.b16 %v1042
  %v1114 = vunpack.c.l.b16 %v1043
  %v1115 = vunpack.c.l.b16 %v1044
  %v1116 = vunpack.c.l.b16 %v1045
  %v1117 = vunpack.c.l.b16 %v1046
  %v1118 = vunpack.c.l.b16 %v1047
  %v1119 = vunpack.c.l.b16 %v1048
  %v1120 = vunpack.c.l.b16 %v1049
  %v1121 = vunpack.c.l.b16 %v1050
  %v1122 = vunpack.c.l.b16 %v1051
  %v1123 = vunpack.c.l.b16 %v1052
  %v1124 = vunpack.c.l.b16 %v1053
  %v1125 = vunpack.c.l.b16 %v1054
  %v1126 = vunpack.c.l.b16 %v1055
  %v1127 = vunpack.c.l.b16 %v1056
  %v1128 = vunpack.c.l.b16 %v1057
  %v1129 = vunpack.c.l.b16 %v1058
  %v1130 = vunpack.c.l.b16 %v1059
  %v1131 = vunpack.c.l.b16 %v1060
  %v1132 = vunpack.c.l.b16 %v1061
  %v1133 = vunpack.c.l.b16 %v1062
  %v1134 = vunpack.c.l.b16 %v1063
  %v1135 = vunpack.c.l.b16 %v1064
  %v1136 = vunpack.c.l.b16 %v1065
  %v1137 = vunpack.c.l.b16 %v1066
  %v1138 = vunpack.c.l.b16 %v1067
  %v1139 = vunpack.c.l.b16 %v1068
  %v1140 = vunpack.c.l.b16 %v1069
  %v1141 = vunpack.c.l.b16 %v1070
  %v1142 = vunpack.c.l.b16 %v1071
  %v1143 = vunpack.c.l.b16 %v1072
  %v1144 = vpack.c.b16 %v1113, %v1112
  %v1145 = vpack.c.b16 %v1115, %v1114
  %v1146 = vpack.c.b16 %v1117, %v1116
  %v1147 = vpack.c.b16 %v1119, %v1118
  %v1148 = vpack.c.b16 %v1121, %v1120
  %v1149 = vpack.c.b16 %v1123, %v1122
  %v1150 = vpack.c.b16 %v1125, %v1124
  %v1151 = vpack.c.b16 %v1127, %v1126
  %v1152 = vpack.c.b16 %v1129, %v1128
  %v1153 = vpack.c.b16 %v1131, %v1130
  %v1154 = vpack.c.b16 %v1133, %v1132
  %v1155 = vpack.c.b16 %v1135, %v1134
  %v1156 = vpack.c.b16 %v1137, %v1136
  %v1157 = vpack.c.b16 %v1139, %v1138
  %v1158 = vpack.c.b16 %v1141, %v1140
  %v1159 = vpack.c.b16 %v1143, %v1142
  %1176 = vmatpush.bf16.msra.mxu0 %v1151
  %1177 = vmatpush.bf16.msra.mxu0 %v1150
  %1178 = vmatpush.bf16.msra.mxu0 %v1149
  %1179 = vmatpush.bf16.msra.mxu0 %v1148
  %1180 = vmatpush.bf16.msra.mxu0 %v1147
  %1181 = vmatpush.bf16.msra.mxu0 %v1146
  %1182 = vmatpush.bf16.msra.mxu0 %v1145
  %1183 = vmatpush.bf16.msra.mxu0 %v1144
  %1184 = vmatmul.bf16.gmra.mxu0 %v1076
  %v1185 = vpop.f32.mrf.mxu0
  %v1186 = vadd.f32 0.0, %v1185
  %v1187 = vpop.f32.mrf.mxu0
  %1188 = vdwg.mxu0
  %1189 = vmatpush.bf16.msra.mxu0 %v1159
  %1190 = vmatpush.bf16.msra.mxu0 %v1158
  %1191 = vmatpush.bf16.msra.mxu0 %v1157
  %1192 = vmatpush.bf16.msra.mxu0 %v1156
  %1193 = vmatpush.bf16.msra.mxu0 %v1155
  %1194 = vmatpush.bf16.msra.mxu0 %v1154
  %1195 = vmatpush.bf16.msra.mxu0 %v1153
  %1196 = vmatpush.bf16.msra.mxu0 %v1152
  %1197 = vmatmul.bf16.gmra.mxu0 %v1077
  %v1198 = vpop.f32.mrf.mxu0
  %v1199 = vadd.f32 %v1186, %v1198
  %v1200 = vpop.f32.mrf.mxu0
  %1201 = vdwg.mxu0
  %v1203 = vunpack.c.l.b16 %v1004
  %v1204 = vunpack.c.h.b16 %v1004
  %v1205 = vpack.c.b16 %v1203, %v1203
  %v1206 = vpack.c.b16 %v1204, %v1204
  %v1241 = vunpack.c.l.b16 %v1006
  %v1242 = vunpack.c.l.b16 %v1007
  %v1243 = vunpack.c.l.b16 %v1008
  %v1244 = vunpack.c.l.b16 %v1009
  %v1245 = vunpack.c.l.b16 %v1010
  %v1246 = vunpack.c.l.b16 %v1011
  %v1247 = vunpack.c.l.b16 %v1012
  %v1248 = vunpack.c.l.b16 %v1013
  %v1249 = vunpack.c.l.b16 %v1014
  %v1250 = vunpack.c.l.b16 %v1015
  %v1251 = vunpack.c.l.b16 %v1016
  %v1252 = vunpack.c.l.b16 %v1017
  %v1253 = vunpack.c.l.b16 %v1018
  %v1254 = vunpack.c.l.b16 %v1019
  %v1255 = vunpack.c.l.b16 %v1020
  %v1256 = vunpack.c.l.b16 %v1021
  %v1257 = vunpack.c.l.b16 %v1022
  %v1258 = vunpack.c.l.b16 %v1023
  %v1259 = vunpack.c.l.b16 %v1024
  %v1260 = vunpack.c.l.b16 %v1025
  %v1261 = vunpack.c.l.b16 %v1026
  %v1262 = vunpack.c.l.b16 %v1027
  %v1263 = vunpack.c.l.b16 %v1028
  %v1264 = vunpack.c.l.b16 %v1029
  %v1265 = vunpack.c.l.b16 %v1030
  %v1266 = vunpack.c.l.b16 %v1031
  %v1267 = vunpack.c.l.b16 %v1032
  %v1268 = vunpack.c.l.b16 %v1033
  %v1269 = vunpack.c.l.b16 %v1034
  %v1270 = vunpack.c.l.b16 %v1035
  %v1271 = vunpack.c.l.b16 %v1036
  %v1272 = vunpack.c.l.b16 %v1037
  %v1273 = vpack.c.b16 %v1242, %v1241
  %v1274 = vpack.c.b16 %v1244, %v1243
  %v1275 = vpack.c.b16 %v1246, %v1245
  %v1276 = vpack.c.b16 %v1248, %v1247
  %v1277 = vpack.c.b16 %v1250, %v1249
  %v1278 = vpack.c.b16 %v1252, %v1251
  %v1279 = vpack.c.b16 %v1254, %v1253
  %v1280 = vpack.c.b16 %v1256, %v1255
  %v1281 = vpack.c.b16 %v1258, %v1257
  %v1282 = vpack.c.b16 %v1260, %v1259
  %v1283 = vpack.c.b16 %v1262, %v1261
  %v1284 = vpack.c.b16 %v1264, %v1263
  %v1285 = vpack.c.b16 %v1266, %v1265
  %v1286 = vpack.c.b16 %v1268, %v1267
  %v1287 = vpack.c.b16 %v1270, %v1269
  %v1288 = vpack.c.b16 %v1272, %v1271
  %1305 = vmatpush.bf16.msra.mxu0 %v1280
  %1306 = vmatpush.bf16.msra.mxu0 %v1279
  %1307 = vmatpush.bf16.msra.mxu0 %v1278
  %1308 = vmatpush.bf16.msra.mxu0 %v1277
  %1309 = vmatpush.bf16.msra.mxu0 %v1276
  %1310 = vmatpush.bf16.msra.mxu0 %v1275
  %1311 = vmatpush.bf16.msra.mxu0 %v1274
  %1312 = vmatpush.bf16.msra.mxu0 %v1273
  %1313 = vmatmul.bf16.gmra.mxu0 %v1205
  %v1314 = vpop.f32.mrf.mxu0
  %v1315 = vadd.f32 %v1199, %v1314
  %v1316 = vpop.f32.mrf.mxu0
  %1317 = vdwg.mxu0
  %1318 = vmatpush.bf16.msra.mxu0 %v1288
  %1319 = vmatpush.bf16.msra.mxu0 %v1287
  %1320 = vmatpush.bf16.msra.mxu0 %v1286
  %1321 = vmatpush.bf16.msra.mxu0 %v1285
  %1322 = vmatpush.bf16.msra.mxu0 %v1284
  %1323 = vmatpush.bf16.msra.mxu0 %v1283
  %1324 = vmatpush.bf16.msra.mxu0 %v1282
  %1325 = vmatpush.bf16.msra.mxu0 %v1281
  %1326 = vmatmul.bf16.gmra.mxu0 %v1206
  %v1327 = vpop.f32.mrf.mxu0
  %v1328 = vadd.f32 %v1315, %v1327
  %v1329 = vpop.f32.mrf.mxu0
  %1330 = vdwg.mxu0
  %v1331 = vld [vmem:[%s4] sm:$0x1]
  %v1332 = vld [vmem:[%s5] sm:$0x1]
  %vm1333 = vcmask 261120
  %v1334 = vsel %vm1333, %v344, 0.0
  %v1335 = vrot.slane %v1334, 4
  %v1336 = vadd.f32 %v1334, %v1335
  %v1337 = vrot.slane %v1336, 2
  %v1338 = vadd.f32 %v1336, %v1337
  %v1339 = vrot.slane %v1338, 1
  %v1340 = vadd.f32 %v1338, %v1339
  %v1341 = vadd.f32 %v1340, 0.0
  %v1342 = vsel %vm1333, %v672, 0.0
  %v1343 = vrot.slane %v1342, 4
  %v1344 = vadd.f32 %v1342, %v1343
  %v1345 = vrot.slane %v1344, 2
  %v1346 = vadd.f32 %v1344, %v1345
  %v1347 = vrot.slane %v1346, 1
  %v1348 = vadd.f32 %v1346, %v1347
  %v1349 = vadd.f32 %v1341, %v1348
  %v1350 = vsel %vm1333, %v1000, 0.0
  %v1351 = vrot.slane %v1350, 4
  %v1352 = vadd.f32 %v1350, %v1351
  %v1353 = vrot.slane %v1352, 2
  %v1354 = vadd.f32 %v1352, %v1353
  %v1355 = vrot.slane %v1354, 1
  %v1356 = vadd.f32 %v1354, %v1355
  %v1357 = vadd.f32 %v1349, %v1356
  %v1358 = vsel %vm1333, %v1328, 0.0
  %v1359 = vrot.slane %v1358, 4
  %v1360 = vadd.f32 %v1358, %v1359
  %v1361 = vrot.slane %v1360, 2
  %v1362 = vadd.f32 %v1360, %v1361
  %v1363 = vrot.slane %v1362, 1
  %v1364 = vadd.f32 %v1362, %v1363
  %v1365 = vadd.f32 %v1357, %v1364
  %v1366 = vrcp.pop 32.0
  %v1367 = vmul.f32 32.0, %v1366
  %v1368 = vsub.f32 1.0, %v1367
  %v1369 = vmul.f32 %v1366, %v1368
  %v1370 = vadd.f32 %v1366, %v1369
  %vm1371 = vweird.f32 %v1366
  %v1372 = vsel %vm1371, %v1366, %v1370
  %v1373 = vmul.f32 %v1365, %v1372
  %v1374 = vsub.f32 %v344, %v1373
  %v1375 = vmul.f32 %v1374, %v1374
  %v1376 = vsel %vm1333, %v1375, 0.0
  %v1377 = vrot.slane %v1376, 4
  %v1378 = vadd.f32 %v1376, %v1377
  %v1379 = vrot.slane %v1378, 2
  %v1380 = vadd.f32 %v1378, %v1379
  %v1381 = vrot.slane %v1380, 1
  %v1382 = vadd.f32 %v1380, %v1381
  %v1383 = vadd.f32 %v1382, 0.0
  %v1384 = vsub.f32 %v672, %v1373
  %v1385 = vmul.f32 %v1384, %v1384
  %v1386 = vsel %vm1333, %v1385, 0.0
  %v1387 = vrot.slane %v1386, 4
  %v1388 = vadd.f32 %v1386, %v1387
  %v1389 = vrot.slane %v1388, 2
  %v1390 = vadd.f32 %v1388, %v1389
  %v1391 = vrot.slane %v1390, 1
  %v1392 = vadd.f32 %v1390, %v1391
  %v1393 = vadd.f32 %v1383, %v1392
  %v1394 = vsub.f32 %v1000, %v1373
  %v1395 = vmul.f32 %v1394, %v1394
  %v1396 = vsel %vm1333, %v1395, 0.0
  %v1397 = vrot.slane %v1396, 4
  %v1398 = vadd.f32 %v1396, %v1397
  %v1399 = vrot.slane %v1398, 2
  %v1400 = vadd.f32 %v1398, %v1399
  %v1401 = vrot.slane %v1400, 1
  %v1402 = vadd.f32 %v1400, %v1401
  %v1403 = vadd.f32 %v1393, %v1402
  %v1404 = vsub.f32 %v1328, %v1373
  %v1405 = vmul.f32 %v1404, %v1404
  %v1406 = vsel %vm1333, %v1405, 0.0
  %v1407 = vrot.slane %v1406, 4
  %v1408 = vadd.f32 %v1406, %v1407
  %v1409 = vrot.slane %v1408, 2
  %v1410 = vadd.f32 %v1408, %v1409
  %v1411 = vrot.slane %v1410, 1
  %v1412 = vadd.f32 %v1410, %v1411
  %v1413 = vadd.f32 %v1403, %v1412
  %v1414 = vmul.f32 %v1413, %v1372
  %v1415 = vadd.f32 %v1414, 1e-05
  %v1416 = vrsqrt.pop %v1415
  %v1417 = vmul.f32 %v1416, %v1415
  %v1418 = vmul.f32 %v1417, %v1416
  %v1419 = vmul.f32 0.5, %v1418
  %v1420 = vsub.f32 1.5, %v1419
  %v1421 = vmul.f32 %v1416, %v1420
  %vm1422 = vweird.f32 %v1415
  %vm1423 = vweird.f32 %v1416
  %vm1424 = vmor %vm1422, %vm1423
  %v1425 = vsel %vm1424, %v1416, %v1421
  %v1426 = vmul.f32 %v1331, %v1425
  %v1427 = vmul.f32 %v1373, %v1426
  %v1428 = vsub.f32 %v1332, %v1427
  %v1430 = vperm.slane %v1426, 0
  %v1432 = vmul.f32 %v344, %v1430
  %v1434 = vperm.slane %v1428, 0
  %v1436 = vadd.f32 %v1432, %v1434
  %v1437 = vmul.f32 %v672, %v1430
  %v1438 = vadd.f32 %v1437, %v1434
  %v1439 = vmul.f32 %v1000, %v1430
  %v1440 = vadd.f32 %v1439, %v1434
  %v1441 = vmul.f32 %v1328, %v1430
  %v1442 = vadd.f32 %v1441, %v1434
  %v1443 = vmax.f32 %v1436, 0.0
  %v1444 = vmax.f32 %v1438, 0.0
  %v1445 = vmax.f32 %v1440, 0.0
  %v1446 = vmax.f32 %v1442, 0.0
  %1448 = vrot.lane.b32.xlu0 %v1444, 32
  %v1449 = vpop.permute.xlu0 %1448
  %1452 = vrot.lane.b32.xlu0 %v1445, 64
  %v1453 = vpop.permute.xlu0 %1452
  %1456 = vrot.lane.b32.xlu0 %v1446, 96
  %v1457 = vpop.permute.xlu0 %1456
  %v1459 = vsel %vm1333, %v1443, %v1449
  %vm1460 = vcmask 523264
  %v1461 = vsel %vm1460, %v1459, %v1453
  %vm1462 = vcmask 785408
  %v1463 = vsel %vm1462, %v1461, %v1457
  %1464 = vst [vmem:[%s6] sm:$0xff] %v1463
  // Predicated region
  $region26: #{unet_forward.12} parent=0 // pred_check
    _
  $region27: #{unet_forward.12} parent=0 // pred_check_branch
    %1466 = sbr.rel (0) target = $region29
  $region28: #{unet_forward.12} parent=0 // pred_region
    _
  $region29: #{unet_forward.12} parent=0 // pred_fallthru
    _
  // Predicated region
  $region30: #{unet_forward.12} parent=0 // pred_check
    _
  $region31: #{unet_forward.12} parent=0 // pred_check_branch
    %1468 = sbr.rel (0) target = $region33
  $region32: #{unet_forward.12} parent=0 // pred_region
    _
  $region33: #{unet_forward.12} parent=0 // pred_fallthru
    _

// kernel: unet_forward.13
$region0: #{unet_forward.13}
  #allocation0 [shape = 'u32[]', space=smem, size = 0x4, offset = 0x4, fixed_abs, tag = 'smem constant byte address 0x4 - core index']
  #allocation1 [shape = 'u32[72,128]{1,0:T(1,128)}', space=vmem, size = 0x9000, scoped, tag = 'internal scratch']
  %s0 = inlined_call_operand.vmem [shape: bf16[4,32,128], index: 0, kind: input, shape index: {}]
  %s1 = inlined_call_operand.vmem [shape: bf16[4,32,128], index: 1, kind: input, shape index: {}]
  %s2 = inlined_call_operand.vmem [shape: bf16[4,128,16], index: 2, kind: input, shape index: {}]
  %s3 = inlined_call_operand.vmem [shape: bf16[4,128,16], index: 3, kind: input, shape index: {}]
  %s4 = inlined_call_operand.vmem [shape: f32[1,16], index: 4, kind: input, shape index: {}]
  %s5 = inlined_call_operand.vmem [shape: f32[1,16], index: 5, kind: input, shape index: {}]
  %s6 = inlined_call_operand.vmem [shape: f32[32,64], index: 6, kind: output, shape index: {}]
  %s7 = sld [smem:[#allocation0]]
  $region34: #{unet_forward.13} parent=0
    _
  %s9 = ssub.s32 1, %s7
  %s10 = scalar_select 0, %s9, %s7
  // Predicated region
  $region2: #{unet_forward.13} parent=0 // pred_check
    _
  $region3: #{unet_forward.13} parent=0 // pred_check_branch
    %12 = sbr.rel (0) target = $region5
  $region4: #{unet_forward.13} parent=0 // pred_region
    _
  $region5: #{unet_forward.13} parent=0 // pred_fallthru
    _
  // Predicated region
  $region6: #{unet_forward.13} parent=0 // pred_check
    _
  $region7: #{unet_forward.13} parent=0 // pred_check_branch
    %14 = sbr.rel (0) target = $region9
  $region8: #{unet_forward.13} parent=0 // pred_region
    _
  $region9: #{unet_forward.13} parent=0 // pred_fallthru
    _
  // Predicated region
  $region10: #{unet_forward.13} parent=0 // pred_check
    _
  $region11: #{unet_forward.13} parent=0 // pred_check_branch
    %16 = sbr.rel (0) target = $region13
  $region12: #{unet_forward.13} parent=0 // pred_region
    _
  $region13: #{unet_forward.13} parent=0 // pred_fallthru
    _
  // Predicated region
  $region14: #{unet_forward.13} parent=0 // pred_check
    _
  $region15: #{unet_forward.13} parent=0 // pred_check_branch
    %18 = sbr.rel (0) target = $region17
  $region16: #{unet_forward.13} parent=0 // pred_region
    _
  $region17: #{unet_forward.13} parent=0 // pred_fallthru
    _
  // Predicated region
  $region18: #{unet_forward.13} parent=0 // pred_check
    _
  $region19: #{unet_forward.13} parent=0 // pred_check_branch
    %20 = sbr.rel (0) target = $region21
  $region20: #{unet_forward.13} parent=0 // pred_region
    _
  $region21: #{unet_forward.13} parent=0 // pred_fallthru
    _
  // Predicated region
  $region22: #{unet_forward.13} parent=0 // pred_check
    _
  $region23: #{unet_forward.13} parent=0 // pred_check_branch
    %22 = sbr.rel (0) target = $region25
  $region24: #{unet_forward.13} parent=0 // pred_region
    _
  $region25: #{unet_forward.13} parent=0 // pred_fallthru
    _
  %v23 = vld [vmem:[%s0] sm:$0xf]
  %v24 = vld [vmem:[%s0 + $0x4] sm:$0xf]
  %v25 = vld [vmem:[%s0 + $0x8] sm:$0xf]
  %v26 = vld [vmem:[%s0 + $0xc] sm:$0xf]
  %v27 = vld [vmem:[%s2] sm:$0xf]
  %v28 = vld [vmem:[%s2 + $0x4] sm:$0xf]
  %v29 = vld [vmem:[%s2 + $0x8] sm:$0xf]
  %v30 = vld [vmem:[%s2 + $0xc] sm:$0xf]
  %v31 = vld [vmem:[%s2 + $0x10] sm:$0xf]
  %v32 = vld [vmem:[%s2 + $0x14] sm:$0xf]
  %v33 = vld [vmem:[%s2 + $0x18] sm:$0xf]
  %v34 = vld [vmem:[%s2 + $0x1c] sm:$0xf]
  %v35 = vld [vmem:[%s2 + $0x20] sm:$0xf]
  %v36 = vld [vmem:[%s2 + $0x24] sm:$0xf]
  %v37 = vld [vmem:[%s2 + $0x28] sm:$0xf]
  %v38 = vld [vmem:[%s2 + $0x2c] sm:$0xf]
  %v39 = vld [vmem:[%s2 + $0x30] sm:$0xf]
  %v40 = vld [vmem:[%s2 + $0x34] sm:$0xf]
  %v41 = vld [vmem:[%s2 + $0x38] sm:$0xf]
  %v42 = vld [vmem:[%s2 + $0x3c] sm:$0xf]
  %v43 = vld [vmem:[%s1] sm:$0xf]
  %v44 = vld [vmem:[%s1 + $0x4] sm:$0xf]
  %v45 = vld [vmem:[%s1 + $0x8] sm:$0xf]
  %v46 = vld [vmem:[%s1 + $0xc] sm:$0xf]
  %v47 = vld [vmem:[%s3] sm:$0xf]
  %v48 = vld [vmem:[%s3 + $0x4] sm:$0xf]
  %v49 = vld [vmem:[%s3 + $0x8] sm:$0xf]
  %v50 = vld [vmem:[%s3 + $0xc] sm:$0xf]
  %v51 = vld [vmem:[%s3 + $0x10] sm:$0xf]
  %v52 = vld [vmem:[%s3 + $0x14] sm:$0xf]
  %v53 = vld [vmem:[%s3 + $0x18] sm:$0xf]
  %v54 = vld [vmem:[%s3 + $0x1c] sm:$0xf]
  %v55 = vld [vmem:[%s3 + $0x20] sm:$0xf]
  %v56 = vld [vmem:[%s3 + $0x24] sm:$0xf]
  %v57 = vld [vmem:[%s3 + $0x28] sm:$0xf]
  %v58 = vld [vmem:[%s3 + $0x2c] sm:$0xf]
  %v59 = vld [vmem:[%s3 + $0x30] sm:$0xf]
  %v60 = vld [vmem:[%s3 + $0x34] sm:$0xf]
  %v61 = vld [vmem:[%s3 + $0x38] sm:$0xf]
  %v62 = vld [vmem:[%s3 + $0x3c] sm:$0xf]
  %v67 = vunpack.c.l.b16 %v43
  %v68 = vunpack.c.l.b16 %v44
  %v69 = vunpack.c.l.b16 %v45
  %v70 = vunpack.c.l.b16 %v46
  %v71 = vpack.c.b16 %v68, %v67
  %v72 = vpack.c.b16 %v70, %v69
  %v91 = vunpack.c.l.b16 %v47
  %v92 = vunpack.c.l.b16 %v48
  %v93 = vunpack.c.l.b16 %v49
  %v94 = vunpack.c.l.b16 %v50
  %v95 = vunpack.c.l.b16 %v51
  %v96 = vunpack.c.l.b16 %v52
  %v97 = vunpack.c.l.b16 %v53
  %v98 = vunpack.c.l.b16 %v54
  %v99 = vunpack.c.l.b16 %v55
  %v100 = vunpack.c.l.b16 %v56
  %v101 = vunpack.c.l.b16 %v57
  %v102 = vunpack.c.l.b16 %v58
  %v103 = vunpack.c.l.b16 %v59
  %v104 = vunpack.c.l.b16 %v60
  %v105 = vunpack.c.l.b16 %v61
  %v106 = vunpack.c.l.b16 %v62
  %v107 = vpack.c.b16 %v92, %v91
  %v108 = vpack.c.b16 %v94, %v93
  %v109 = vpack.c.b16 %v96, %v95
  %v110 = vpack.c.b16 %v98, %v97
  %v111 = vpack.c.b16 %v100, %v99
  %v112 = vpack.c.b16 %v102, %v101
  %v113 = vpack.c.b16 %v104, %v103
  %v114 = vpack.c.b16 %v106, %v105
  %123 = vmatpush.bf16.msra.mxu0 %v114
  %124 = vmatpush.bf16.msra.mxu0 %v113
  %125 = vmatpush.bf16.msra.mxu0 %v112
  %126 = vmatpush.bf16.msra.mxu0 %v111
  %127 = vmatpush.bf16.msra.mxu0 %v110
  %128 = vmatpush.bf16.msra.mxu0 %v109
  %129 = vmatpush.bf16.msra.mxu0 %v108
  %130 = vmatpush.bf16.msra.mxu0 %v107
  %131 = vmatmul.bf16.gmra.mxu0 %v71
  %v132 = vpop.f32.mrf.mxu0
  %v133 = vadd.f32 0.0, %v132
  %v134 = vpop.f32.mrf.mxu0
  %v135 = vadd.f32 0.0, %v134
  %136 = vmatmul.bf16.gmra.mxu0 %v72
  %v137 = vpop.f32.mrf.mxu0
  %v138 = vadd.f32 0.0, %v137
  %v139 = vpop.f32.mrf.mxu0
  %v140 = vadd.f32 0.0, %v139
  %141 = vdwg.mxu0
  %v146 = vunpack.c.l.b16 %v23
  %v147 = vunpack.c.l.b16 %v24
  %v148 = vunpack.c.l.b16 %v25
  %v149 = vunpack.c.l.b16 %v26
  %v150 = vpack.c.b16 %v147, %v146
  %v151 = vpack.c.b16 %v149, %v148
  %v170 = vunpack.c.l.b16 %v27
  %v171 = vunpack.c.l.b16 %v28
  %v172 = vunpack.c.l.b16 %v29
  %v173 = vunpack.c.l.b16 %v30
  %v174 = vunpack.c.l.b16 %v31
  %v175 = vunpack.c.l.b16 %v32
  %v176 = vunpack.c.l.b16 %v33
  %v177 = vunpack.c.l.b16 %v34
  %v178 = vunpack.c.l.b16 %v35
  %v179 = vunpack.c.l.b16 %v36
  %v180 = vunpack.c.l.b16 %v37
  %v181 = vunpack.c.l.b16 %v38
  %v182 = vunpack.c.l.b16 %v39
  %v183 = vunpack.c.l.b16 %v40
  %v184 = vunpack.c.l.b16 %v41
  %v185 = vunpack.c.l.b16 %v42
  %v186 = vpack.c.b16 %v171, %v170
  %v187 = vpack.c.b16 %v173, %v172
  %v188 = vpack.c.b16 %v175, %v174
  %v189 = vpack.c.b16 %v177, %v176
  %v190 = vpack.c.b16 %v179, %v178
  %v191 = vpack.c.b16 %v181, %v180
  %v192 = vpack.c.b16 %v183, %v182
  %v193 = vpack.c.b16 %v185, %v184
  %202 = vmatpush.bf16.msra.mxu0 %v193
  %203 = vmatpush.bf16.msra.mxu0 %v192
  %204 = vmatpush.bf16.msra.mxu0 %v191
  %205 = vmatpush.bf16.msra.mxu0 %v190
  %206 = vmatpush.bf16.msra.mxu0 %v189
  %207 = vmatpush.bf16.msra.mxu0 %v188
  %208 = vmatpush.bf16.msra.mxu0 %v187
  %209 = vmatpush.bf16.msra.mxu0 %v186
  %210 = vmatmul.bf16.gmra.mxu0 %v150
  %v211 = vpop.f32.mrf.mxu0
  %v212 = vadd.f32 %v133, %v211
  %v213 = vpop.f32.mrf.mxu0
  %v214 = vadd.f32 %v135, %v213
  %215 = vmatmul.bf16.gmra.mxu0 %v151
  %v216 = vpop.f32.mrf.mxu0
  %v217 = vadd.f32 %v138, %v216
  %v218 = vpop.f32.mrf.mxu0
  %v219 = vadd.f32 %v140, %v218
  %220 = vdwg.mxu0
  %s221 = scalar_lea.vmem %s0, 16
  %v222 = vld [vmem:[%s221] sm:$0xf]
  %v223 = vld [vmem:[%s221 + $0x4] sm:$0xf]
  %v224 = vld [vmem:[%s221 + $0x8] sm:$0xf]
  %v225 = vld [vmem:[%s221 + $0xc] sm:$0xf]
  %s226 = scalar_lea.vmem %s2, 64
  %v227 = vld [vmem:[%s226] sm:$0xf]
  %v228 = vld [vmem:[%s226 + $0x4] sm:$0xf]
  %v229 = vld [vmem:[%s226 + $0x8] sm:$0xf]
  %v230 = vld [vmem:[%s226 + $0xc] sm:$0xf]
  %v231 = vld [vmem:[%s226 + $0x10] sm:$0xf]
  %v232 = vld [vmem:[%s226 + $0x14] sm:$0xf]
  %v233 = vld [vmem:[%s226 + $0x18] sm:$0xf]
  %v234 = vld [vmem:[%s226 + $0x1c] sm:$0xf]
  %v235 = vld [vmem:[%s226 + $0x20] sm:$0xf]
  %v236 = vld [vmem:[%s226 + $0x24] sm:$0xf]
  %v237 = vld [vmem:[%s226 + $0x28] sm:$0xf]
  %v238 = vld [vmem:[%s226 + $0x2c] sm:$0xf]
  %v239 = vld [vmem:[%s226 + $0x30] sm:$0xf]
  %v240 = vld [vmem:[%s226 + $0x34] sm:$0xf]
  %v241 = vld [vmem:[%s226 + $0x38] sm:$0xf]
  %v242 = vld [vmem:[%s226 + $0x3c] sm:$0xf]
  %s243 = scalar_lea.vmem %s1, 16
  %v244 = vld [vmem:[%s243] sm:$0xf]
  %v245 = vld [vmem:[%s243 + $0x4] sm:$0xf]
  %v246 = vld [vmem:[%s243 + $0x8] sm:$0xf]
  %v247 = vld [vmem:[%s243 + $0xc] sm:$0xf]
  %s248 = scalar_lea.vmem %s3, 64
  %v249 = vld [vmem:[%s248] sm:$0xf]
  %v250 = vld [vmem:[%s248 + $0x4] sm:$0xf]
  %v251 = vld [vmem:[%s248 + $0x8] sm:$0xf]
  %v252 = vld [vmem:[%s248 + $0xc] sm:$0xf]
  %v253 = vld [vmem:[%s248 + $0x10] sm:$0xf]
  %v254 = vld [vmem:[%s248 + $0x14] sm:$0xf]
  %v255 = vld [vmem:[%s248 + $0x18] sm:$0xf]
  %v256 = vld [vmem:[%s248 + $0x1c] sm:$0xf]
  %v257 = vld [vmem:[%s248 + $0x20] sm:$0xf]
  %v258 = vld [vmem:[%s248 + $0x24] sm:$0xf]
  %v259 = vld [vmem:[%s248 + $0x28] sm:$0xf]
  %v260 = vld [vmem:[%s248 + $0x2c] sm:$0xf]
  %v261 = vld [vmem:[%s248 + $0x30] sm:$0xf]
  %v262 = vld [vmem:[%s248 + $0x34] sm:$0xf]
  %v263 = vld [vmem:[%s248 + $0x38] sm:$0xf]
  %v264 = vld [vmem:[%s248 + $0x3c] sm:$0xf]
  %v269 = vunpack.c.l.b16 %v244
  %v270 = vunpack.c.l.b16 %v245
  %v271 = vunpack.c.l.b16 %v246
  %v272 = vunpack.c.l.b16 %v247
  %v273 = vpack.c.b16 %v270, %v269
  %v274 = vpack.c.b16 %v272, %v271
  %v293 = vunpack.c.l.b16 %v249
  %v294 = vunpack.c.l.b16 %v250
  %v295 = vunpack.c.l.b16 %v251
  %v296 = vunpack.c.l.b16 %v252
  %v297 = vunpack.c.l.b16 %v253
  %v298 = vunpack.c.l.b16 %v254
  %v299 = vunpack.c.l.b16 %v255
  %v300 = vunpack.c.l.b16 %v256
  %v301 = vunpack.c.l.b16 %v257
  %v302 = vunpack.c.l.b16 %v258
  %v303 = vunpack.c.l.b16 %v259
  %v304 = vunpack.c.l.b16 %v260
  %v305 = vunpack.c.l.b16 %v261
  %v306 = vunpack.c.l.b16 %v262
  %v307 = vunpack.c.l.b16 %v263
  %v308 = vunpack.c.l.b16 %v264
  %v309 = vpack.c.b16 %v294, %v293
  %v310 = vpack.c.b16 %v296, %v295
  %v311 = vpack.c.b16 %v298, %v297
  %v312 = vpack.c.b16 %v300, %v299
  %v313 = vpack.c.b16 %v302, %v301
  %v314 = vpack.c.b16 %v304, %v303
  %v315 = vpack.c.b16 %v306, %v305
  %v316 = vpack.c.b16 %v308, %v307
  %325 = vmatpush.bf16.msra.mxu0 %v316
  %326 = vmatpush.bf16.msra.mxu0 %v315
  %327 = vmatpush.bf16.msra.mxu0 %v314
  %328 = vmatpush.bf16.msra.mxu0 %v313
  %329 = vmatpush.bf16.msra.mxu0 %v312
  %330 = vmatpush.bf16.msra.mxu0 %v311
  %331 = vmatpush.bf16.msra.mxu0 %v310
  %332 = vmatpush.bf16.msra.mxu0 %v309
  %333 = vmatmul.bf16.gmra.mxu0 %v273
  %v334 = vpop.f32.mrf.mxu0
  %v335 = vadd.f32 0.0, %v334
  %v336 = vpop.f32.mrf.mxu0
  %v337 = vadd.f32 0.0, %v336
  %338 = vmatmul.bf16.gmra.mxu0 %v274
  %v339 = vpop.f32.mrf.mxu0
  %v340 = vadd.f32 0.0, %v339
  %v341 = vpop.f32.mrf.mxu0
  %v342 = vadd.f32 0.0, %v341
  %343 = vdwg.mxu0
  %v348 = vunpack.c.l.b16 %v222
  %v349 = vunpack.c.l.b16 %v223
  %v350 = vunpack.c.l.b16 %v224
  %v351 = vunpack.c.l.b16 %v225
  %v352 = vpack.c.b16 %v349, %v348
  %v353 = vpack.c.b16 %v351, %v350
  %v372 = vunpack.c.l.b16 %v227
  %v373 = vunpack.c.l.b16 %v228
  %v374 = vunpack.c.l.b16 %v229
  %v375 = vunpack.c.l.b16 %v230
  %v376 = vunpack.c.l.b16 %v231
  %v377 = vunpack.c.l.b16 %v232
  %v378 = vunpack.c.l.b16 %v233
  %v379 = vunpack.c.l.b16 %v234
  %v380 = vunpack.c.l.b16 %v235
  %v381 = vunpack.c.l.b16 %v236
  %v382 = vunpack.c.l.b16 %v237
  %v383 = vunpack.c.l.b16 %v238
  %v384 = vunpack.c.l.b16 %v239
  %v385 = vunpack.c.l.b16 %v240
  %v386 = vunpack.c.l.b16 %v241
  %v387 = vunpack.c.l.b16 %v242
  %v388 = vpack.c.b16 %v373, %v372
  %v389 = vpack.c.b16 %v375, %v374
  %v390 = vpack.c.b16 %v377, %v376
  %v391 = vpack.c.b16 %v379, %v378
  %v392 = vpack.c.b16 %v381, %v380
  %v393 = vpack.c.b16 %v383, %v382
  %v394 = vpack.c.b16 %v385, %v384
  %v395 = vpack.c.b16 %v387, %v386
  %404 = vmatpush.bf16.msra.mxu0 %v395
  %405 = vmatpush.bf16.msra.mxu0 %v394
  %406 = vmatpush.bf16.msra.mxu0 %v393
  %407 = vmatpush.bf16.msra.mxu0 %v392
  %408 = vmatpush.bf16.msra.mxu0 %v391
  %409 = vmatpush.bf16.msra.mxu0 %v390
  %410 = vmatpush.bf16.msra.mxu0 %v389
  %411 = vmatpush.bf16.msra.mxu0 %v388
  %412 = vmatmul.bf16.gmra.mxu0 %v352
  %v413 = vpop.f32.mrf.mxu0
  %v414 = vadd.f32 %v335, %v413
  %v415 = vpop.f32.mrf.mxu0
  %v416 = vadd.f32 %v337, %v415
  %417 = vmatmul.bf16.gmra.mxu0 %v353
  %v418 = vpop.f32.mrf.mxu0
  %v419 = vadd.f32 %v340, %v418
  %v420 = vpop.f32.mrf.mxu0
  %v421 = vadd.f32 %v342, %v420
  %422 = vdwg.mxu0
  %s423 = scalar_lea.vmem %s0, 32
  %v424 = vld [vmem:[%s423] sm:$0xf]
  %v425 = vld [vmem:[%s423 + $0x4] sm:$0xf]
  %v426 = vld [vmem:[%s423 + $0x8] sm:$0xf]
  %v427 = vld [vmem:[%s423 + $0xc] sm:$0xf]
  %s428 = scalar_lea.vmem %s2, 128
  %v429 = vld [vmem:[%s428] sm:$0xf]
  %v430 = vld [vmem:[%s428 + $0x4] sm:$0xf]
  %v431 = vld [vmem:[%s428 + $0x8] sm:$0xf]
  %v432 = vld [vmem:[%s428 + $0xc] sm:$0xf]
  %v433 = vld [vmem:[%s428 + $0x10] sm:$0xf]
  %v434 = vld [vmem:[%s428 + $0x14] sm:$0xf]
  %v435 = vld [vmem:[%s428 + $0x18] sm:$0xf]
  %v436 = vld [vmem:[%s428 + $0x1c] sm:$0xf]
  %v437 = vld [vmem:[%s428 + $0x20] sm:$0xf]
  %v438 = vld [vmem:[%s428 + $0x24] sm:$0xf]
  %v439 = vld [vmem:[%s428 + $0x28] sm:$0xf]
  %v440 = vld [vmem:[%s428 + $0x2c] sm:$0xf]
  %v441 = vld [vmem:[%s428 + $0x30] sm:$0xf]
  %v442 = vld [vmem:[%s428 + $0x34] sm:$0xf]
  %v443 = vld [vmem:[%s428 + $0x38] sm:$0xf]
  %v444 = vld [vmem:[%s428 + $0x3c] sm:$0xf]
  %s445 = scalar_lea.vmem %s1, 32
  %v446 = vld [vmem:[%s445] sm:$0xf]
  %v447 = vld [vmem:[%s445 + $0x4] sm:$0xf]
  %v448 = vld [vmem:[%s445 + $0x8] sm:$0xf]
  %v449 = vld [vmem:[%s445 + $0xc] sm:$0xf]
  %s450 = scalar_lea.vmem %s3, 128
  %v451 = vld [vmem:[%s450] sm:$0xf]
  %v452 = vld [vmem:[%s450 + $0x4] sm:$0xf]
  %v453 = vld [vmem:[%s450 + $0x8] sm:$0xf]
  %v454 = vld [vmem:[%s450 + $0xc] sm:$0xf]
  %v455 = vld [vmem:[%s450 + $0x10] sm:$0xf]
  %v456 = vld [vmem:[%s450 + $0x14] sm:$0xf]
  %v457 = vld [vmem:[%s450 + $0x18] sm:$0xf]
  %v458 = vld [vmem:[%s450 + $0x1c] sm:$0xf]
  %v459 = vld [vmem:[%s450 + $0x20] sm:$0xf]
  %v460 = vld [vmem:[%s450 + $0x24] sm:$0xf]
  %v461 = vld [vmem:[%s450 + $0x28] sm:$0xf]
  %v462 = vld [vmem:[%s450 + $0x2c] sm:$0xf]
  %v463 = vld [vmem:[%s450 + $0x30] sm:$0xf]
  %v464 = vld [vmem:[%s450 + $0x34] sm:$0xf]
  %v465 = vld [vmem:[%s450 + $0x38] sm:$0xf]
  %v466 = vld [vmem:[%s450 + $0x3c] sm:$0xf]
  %v471 = vunpack.c.l.b16 %v446
  %v472 = vunpack.c.l.b16 %v447
  %v473 = vunpack.c.l.b16 %v448
  %v474 = vunpack.c.l.b16 %v449
  %v475 = vpack.c.b16 %v472, %v471
  %v476 = vpack.c.b16 %v474, %v473
  %v495 = vunpack.c.l.b16 %v451
  %v496 = vunpack.c.l.b16 %v452
  %v497 = vunpack.c.l.b16 %v453
  %v498 = vunpack.c.l.b16 %v454
  %v499 = vunpack.c.l.b16 %v455
  %v500 = vunpack.c.l.b16 %v456
  %v501 = vunpack.c.l.b16 %v457
  %v502 = vunpack.c.l.b16 %v458
  %v503 = vunpack.c.l.b16 %v459
  %v504 = vunpack.c.l.b16 %v460
  %v505 = vunpack.c.l.b16 %v461
  %v506 = vunpack.c.l.b16 %v462
  %v507 = vunpack.c.l.b16 %v463
  %v508 = vunpack.c.l.b16 %v464
  %v509 = vunpack.c.l.b16 %v465
  %v510 = vunpack.c.l.b16 %v466
  %v511 = vpack.c.b16 %v496, %v495
  %v512 = vpack.c.b16 %v498, %v497
  %v513 = vpack.c.b16 %v500, %v499
  %v514 = vpack.c.b16 %v502, %v501
  %v515 = vpack.c.b16 %v504, %v503
  %v516 = vpack.c.b16 %v506, %v505
  %v517 = vpack.c.b16 %v508, %v507
  %v518 = vpack.c.b16 %v510, %v509
  %527 = vmatpush.bf16.msra.mxu0 %v518
  %528 = vmatpush.bf16.msra.mxu0 %v517
  %529 = vmatpush.bf16.msra.mxu0 %v516
  %530 = vmatpush.bf16.msra.mxu0 %v515
  %531 = vmatpush.bf16.msra.mxu0 %v514
  %532 = vmatpush.bf16.msra.mxu0 %v513
  %533 = vmatpush.bf16.msra.mxu0 %v512
  %534 = vmatpush.bf16.msra.mxu0 %v511
  %535 = vmatmul.bf16.gmra.mxu0 %v475
  %v536 = vpop.f32.mrf.mxu0
  %v537 = vadd.f32 0.0, %v536
  %v538 = vpop.f32.mrf.mxu0
  %v539 = vadd.f32 0.0, %v538
  %540 = vmatmul.bf16.gmra.mxu0 %v476
  %v541 = vpop.f32.mrf.mxu0
  %v542 = vadd.f32 0.0, %v541
  %v543 = vpop.f32.mrf.mxu0
  %v544 = vadd.f32 0.0, %v543
  %545 = vdwg.mxu0
  %v550 = vunpack.c.l.b16 %v424
  %v551 = vunpack.c.l.b16 %v425
  %v552 = vunpack.c.l.b16 %v426
  %v553 = vunpack.c.l.b16 %v427
  %v554 = vpack.c.b16 %v551, %v550
  %v555 = vpack.c.b16 %v553, %v552
  %v574 = vunpack.c.l.b16 %v429
  %v575 = vunpack.c.l.b16 %v430
  %v576 = vunpack.c.l.b16 %v431
  %v577 = vunpack.c.l.b16 %v432
  %v578 = vunpack.c.l.b16 %v433
  %v579 = vunpack.c.l.b16 %v434
  %v580 = vunpack.c.l.b16 %v435
  %v581 = vunpack.c.l.b16 %v436
  %v582 = vunpack.c.l.b16 %v437
  %v583 = vunpack.c.l.b16 %v438
  %v584 = vunpack.c.l.b16 %v439
  %v585 = vunpack.c.l.b16 %v440
  %v586 = vunpack.c.l.b16 %v441
  %v587 = vunpack.c.l.b16 %v442
  %v588 = vunpack.c.l.b16 %v443
  %v589 = vunpack.c.l.b16 %v444
  %v590 = vpack.c.b16 %v575, %v574
  %v591 = vpack.c.b16 %v577, %v576
  %v592 = vpack.c.b16 %v579, %v578
  %v593 = vpack.c.b16 %v581, %v580
  %v594 = vpack.c.b16 %v583, %v582
  %v595 = vpack.c.b16 %v585, %v584
  %v596 = vpack.c.b16 %v587, %v586
  %v597 = vpack.c.b16 %v589, %v588
  %606 = vmatpush.bf16.msra.mxu0 %v597
  %607 = vmatpush.bf16.msra.mxu0 %v596
  %608 = vmatpush.bf16.msra.mxu0 %v595
  %609 = vmatpush.bf16.msra.mxu0 %v594
  %610 = vmatpush.bf16.msra.mxu0 %v593
  %611 = vmatpush.bf16.msra.mxu0 %v592
  %612 = vmatpush.bf16.msra.mxu0 %v591
  %613 = vmatpush.bf16.msra.mxu0 %v590
  %614 = vmatmul.bf16.gmra.mxu0 %v554
  %v615 = vpop.f32.mrf.mxu0
  %v616 = vadd.f32 %v537, %v615
  %v617 = vpop.f32.mrf.mxu0
  %v618 = vadd.f32 %v539, %v617
  %619 = vmatmul.bf16.gmra.mxu0 %v555
  %v620 = vpop.f32.mrf.mxu0
  %v621 = vadd.f32 %v542, %v620
  %v622 = vpop.f32.mrf.mxu0
  %v623 = vadd.f32 %v544, %v622
  %624 = vdwg.mxu0
  %s625 = scalar_lea.vmem %s0, 48
  %v626 = vld [vmem:[%s625] sm:$0xf]
  %v627 = vld [vmem:[%s625 + $0x4] sm:$0xf]
  %v628 = vld [vmem:[%s625 + $0x8] sm:$0xf]
  %v629 = vld [vmem:[%s625 + $0xc] sm:$0xf]
  %s630 = scalar_lea.vmem %s2, 192
  %v631 = vld [vmem:[%s630] sm:$0xf]
  %v632 = vld [vmem:[%s630 + $0x4] sm:$0xf]
  %v633 = vld [vmem:[%s630 + $0x8] sm:$0xf]
  %v634 = vld [vmem:[%s630 + $0xc] sm:$0xf]
  %v635 = vld [vmem:[%s630 + $0x10] sm:$0xf]
  %v636 = vld [vmem:[%s630 + $0x14] sm:$0xf]
  %v637 = vld [vmem:[%s630 + $0x18] sm:$0xf]
  %v638 = vld [vmem:[%s630 + $0x1c] sm:$0xf]
  %v639 = vld [vmem:[%s630 + $0x20] sm:$0xf]
  %v640 = vld [vmem:[%s630 + $0x24] sm:$0xf]
  %v641 = vld [vmem:[%s630 + $0x28] sm:$0xf]
  %v642 = vld [vmem:[%s630 + $0x2c] sm:$0xf]
  %v643 = vld [vmem:[%s630 + $0x30] sm:$0xf]
  %v644 = vld [vmem:[%s630 + $0x34] sm:$0xf]
  %v645 = vld [vmem:[%s630 + $0x38] sm:$0xf]
  %v646 = vld [vmem:[%s630 + $0x3c] sm:$0xf]
  %s647 = scalar_lea.vmem %s1, 48
  %v648 = vld [vmem:[%s647] sm:$0xf]
  %v649 = vld [vmem:[%s647 + $0x4] sm:$0xf]
  %v650 = vld [vmem:[%s647 + $0x8] sm:$0xf]
  %v651 = vld [vmem:[%s647 + $0xc] sm:$0xf]
  %s652 = scalar_lea.vmem %s3, 192
  %v653 = vld [vmem:[%s652] sm:$0xf]
  %v654 = vld [vmem:[%s652 + $0x4] sm:$0xf]
  %v655 = vld [vmem:[%s652 + $0x8] sm:$0xf]
  %v656 = vld [vmem:[%s652 + $0xc] sm:$0xf]
  %v657 = vld [vmem:[%s652 + $0x10] sm:$0xf]
  %v658 = vld [vmem:[%s652 + $0x14] sm:$0xf]
  %v659 = vld [vmem:[%s652 + $0x18] sm:$0xf]
  %v660 = vld [vmem:[%s652 + $0x1c] sm:$0xf]
  %v661 = vld [vmem:[%s652 + $0x20] sm:$0xf]
  %v662 = vld [vmem:[%s652 + $0x24] sm:$0xf]
  %v663 = vld [vmem:[%s652 + $0x28] sm:$0xf]
  %v664 = vld [vmem:[%s652 + $0x2c] sm:$0xf]
  %v665 = vld [vmem:[%s652 + $0x30] sm:$0xf]
  %v666 = vld [vmem:[%s652 + $0x34] sm:$0xf]
  %v667 = vld [vmem:[%s652 + $0x38] sm:$0xf]
  %v668 = vld [vmem:[%s652 + $0x3c] sm:$0xf]
  %v673 = vunpack.c.l.b16 %v648
  %v674 = vunpack.c.l.b16 %v649
  %v675 = vunpack.c.l.b16 %v650
  %v676 = vunpack.c.l.b16 %v651
  %v677 = vpack.c.b16 %v674, %v673
  %v678 = vpack.c.b16 %v676, %v675
  %v697 = vunpack.c.l.b16 %v653
  %v698 = vunpack.c.l.b16 %v654
  %v699 = vunpack.c.l.b16 %v655
  %v700 = vunpack.c.l.b16 %v656
  %v701 = vunpack.c.l.b16 %v657
  %v702 = vunpack.c.l.b16 %v658
  %v703 = vunpack.c.l.b16 %v659
  %v704 = vunpack.c.l.b16 %v660
  %v705 = vunpack.c.l.b16 %v661
  %v706 = vunpack.c.l.b16 %v662
  %v707 = vunpack.c.l.b16 %v663
  %v708 = vunpack.c.l.b16 %v664
  %v709 = vunpack.c.l.b16 %v665
  %v710 = vunpack.c.l.b16 %v666
  %v711 = vunpack.c.l.b16 %v667
  %v712 = vunpack.c.l.b16 %v668
  %v713 = vpack.c.b16 %v698, %v697
  %v714 = vpack.c.b16 %v700, %v699
  %v715 = vpack.c.b16 %v702, %v701
  %v716 = vpack.c.b16 %v704, %v703
  %v717 = vpack.c.b16 %v706, %v705
  %v718 = vpack.c.b16 %v708, %v707
  %v719 = vpack.c.b16 %v710, %v709
  %v720 = vpack.c.b16 %v712, %v711
  %729 = vmatpush.bf16.msra.mxu0 %v720
  %730 = vmatpush.bf16.msra.mxu0 %v719
  %731 = vmatpush.bf16.msra.mxu0 %v718
  %732 = vmatpush.bf16.msra.mxu0 %v717
  %733 = vmatpush.bf16.msra.mxu0 %v716
  %734 = vmatpush.bf16.msra.mxu0 %v715
  %735 = vmatpush.bf16.msra.mxu0 %v714
  %736 = vmatpush.bf16.msra.mxu0 %v713
  %737 = vmatmul.bf16.gmra.mxu0 %v677
  %v738 = vpop.f32.mrf.mxu0
  %v739 = vadd.f32 0.0, %v738
  %v740 = vpop.f32.mrf.mxu0
  %v741 = vadd.f32 0.0, %v740
  %742 = vmatmul.bf16.gmra.mxu0 %v678
  %v743 = vpop.f32.mrf.mxu0
  %v744 = vadd.f32 0.0, %v743
  %v745 = vpop.f32.mrf.mxu0
  %v746 = vadd.f32 0.0, %v745
  %747 = vdwg.mxu0
  %v752 = vunpack.c.l.b16 %v626
  %v753 = vunpack.c.l.b16 %v627
  %v754 = vunpack.c.l.b16 %v628
  %v755 = vunpack.c.l.b16 %v629
  %v756 = vpack.c.b16 %v753, %v752
  %v757 = vpack.c.b16 %v755, %v754
  %v776 = vunpack.c.l.b16 %v631
  %v777 = vunpack.c.l.b16 %v632
  %v778 = vunpack.c.l.b16 %v633
  %v779 = vunpack.c.l.b16 %v634
  %v780 = vunpack.c.l.b16 %v635
  %v781 = vunpack.c.l.b16 %v636
  %v782 = vunpack.c.l.b16 %v637
  %v783 = vunpack.c.l.b16 %v638
  %v784 = vunpack.c.l.b16 %v639
  %v785 = vunpack.c.l.b16 %v640
  %v786 = vunpack.c.l.b16 %v641
  %v787 = vunpack.c.l.b16 %v642
  %v788 = vunpack.c.l.b16 %v643
  %v789 = vunpack.c.l.b16 %v644
  %v790 = vunpack.c.l.b16 %v645
  %v791 = vunpack.c.l.b16 %v646
  %v792 = vpack.c.b16 %v777, %v776
  %v793 = vpack.c.b16 %v779, %v778
  %v794 = vpack.c.b16 %v781, %v780
  %v795 = vpack.c.b16 %v783, %v782
  %v796 = vpack.c.b16 %v785, %v784
  %v797 = vpack.c.b16 %v787, %v786
  %v798 = vpack.c.b16 %v789, %v788
  %v799 = vpack.c.b16 %v791, %v790
  %808 = vmatpush.bf16.msra.mxu0 %v799
  %809 = vmatpush.bf16.msra.mxu0 %v798
  %810 = vmatpush.bf16.msra.mxu0 %v797
  %811 = vmatpush.bf16.msra.mxu0 %v796
  %812 = vmatpush.bf16.msra.mxu0 %v795
  %813 = vmatpush.bf16.msra.mxu0 %v794
  %814 = vmatpush.bf16.msra.mxu0 %v793
  %815 = vmatpush.bf16.msra.mxu0 %v792
  %816 = vmatmul.bf16.gmra.mxu0 %v756
  %v817 = vpop.f32.mrf.mxu0
  %v818 = vadd.f32 %v739, %v817
  %v819 = vpop.f32.mrf.mxu0
  %v820 = vadd.f32 %v741, %v819
  %821 = vmatmul.bf16.gmra.mxu0 %v757
  %v822 = vpop.f32.mrf.mxu0
  %v823 = vadd.f32 %v744, %v822
  %v824 = vpop.f32.mrf.mxu0
  %v825 = vadd.f32 %v746, %v824
  %826 = vdwg.mxu0
  %v827 = vld [vmem:[%s4] sm:$0x1]
  %v828 = vld [vmem:[%s5] sm:$0x1]
  %vm829 = vcmask 130048
  %v830 = vsel %vm829, %v212, 0.0
  %v831 = vsel %vm829, %v214, 0.0
  %v832 = vadd.f32 %v830, %v831
  %v833 = vsel %vm829, %v217, 0.0
  %v834 = vadd.f32 %v832, %v833
  %v835 = vsel %vm829, %v219, 0.0
  %v836 = vadd.f32 %v834, %v835
  %v837 = vrot.slane %v836, 4
  %v838 = vadd.f32 %v836, %v837
  %v839 = vrot.slane %v838, 2
  %v840 = vadd.f32 %v838, %v839
  %v841 = vrot.slane %v840, 1
  %v842 = vadd.f32 %v840, %v841
  %v843 = vadd.f32 %v842, 0.0
  %v844 = vsel %vm829, %v414, 0.0
  %v845 = vsel %vm829, %v416, 0.0
  %v846 = vadd.f32 %v844, %v845
  %v847 = vsel %vm829, %v419, 0.0
  %v848 = vadd.f32 %v846, %v847
  %v849 = vsel %vm829, %v421, 0.0
  %v850 = vadd.f32 %v848, %v849
  %v851 = vrot.slane %v850, 4
  %v852 = vadd.f32 %v850, %v851
  %v853 = vrot.slane %v852, 2
  %v854 = vadd.f32 %v852, %v853
  %v855 = vrot.slane %v854, 1
  %v856 = vadd.f32 %v854, %v855
  %v857 = vadd.f32 %v843, %v856
  %v858 = vsel %vm829, %v616, 0.0
  %v859 = vsel %vm829, %v618, 0.0
  %v860 = vadd.f32 %v858, %v859
  %v861 = vsel %vm829, %v621, 0.0
  %v862 = vadd.f32 %v860, %v861
  %v863 = vsel %vm829, %v623, 0.0
  %v864 = vadd.f32 %v862, %v863
  %v865 = vrot.slane %v864, 4
  %v866 = vadd.f32 %v864, %v865
  %v867 = vrot.slane %v866, 2
  %v868 = vadd.f32 %v866, %v867
  %v869 = vrot.slane %v868, 1
  %v870 = vadd.f32 %v868, %v869
  %v871 = vadd.f32 %v857, %v870
  %v872 = vsel %vm829, %v818, 0.0
  %v873 = vsel %vm829, %v820, 0.0
  %v874 = vadd.f32 %v872, %v873
  %v875 = vsel %vm829, %v823, 0.0
  %v876 = vadd.f32 %v874, %v875
  %v877 = vsel %vm829, %v825, 0.0
  %v878 = vadd.f32 %v876, %v877
  %v879 = vrot.slane %v878, 4
  %v880 = vadd.f32 %v878, %v879
  %v881 = vrot.slane %v880, 2
  %v882 = vadd.f32 %v880, %v881
  %v883 = vrot.slane %v882, 1
  %v884 = vadd.f32 %v882, %v883
  %v885 = vadd.f32 %v871, %v884
  %v886 = vrcp.pop 128.0
  %v887 = vmul.f32 128.0, %v886
  %v888 = vsub.f32 1.0, %v887
  %v889 = vmul.f32 %v886, %v888
  %v890 = vadd.f32 %v886, %v889
  %vm891 = vweird.f32 %v886
  %v892 = vsel %vm891, %v886, %v890
  %v893 = vmul.f32 %v885, %v892
  %v894 = vsub.f32 %v212, %v893
  %v895 = vsub.f32 %v214, %v893
  %v896 = vsub.f32 %v217, %v893
  %v897 = vsub.f32 %v219, %v893
  %v898 = vmul.f32 %v894, %v894
  %v899 = vmul.f32 %v895, %v895
  %v900 = vmul.f32 %v896, %v896
  %v901 = vmul.f32 %v897, %v897
  %v902 = vsel %vm829, %v898, 0.0
  %v903 = vsel %vm829, %v899, 0.0
  %v904 = vadd.f32 %v902, %v903
  %v905 = vsel %vm829, %v900, 0.0
  %v906 = vadd.f32 %v904, %v905
  %v907 = vsel %vm829, %v901, 0.0
  %v908 = vadd.f32 %v906, %v907
  %v909 = vrot.slane %v908, 4
  %v910 = vadd.f32 %v908, %v909
  %v911 = vrot.slane %v910, 2
  %v912 = vadd.f32 %v910, %v911
  %v913 = vrot.slane %v912, 1
  %v914 = vadd.f32 %v912, %v913
  %v915 = vadd.f32 %v914, 0.0
  %v916 = vsub.f32 %v414, %v893
  %v917 = vsub.f32 %v416, %v893
  %v918 = vsub.f32 %v419, %v893
  %v919 = vsub.f32 %v421, %v893
  %v920 = vmul.f32 %v916, %v916
  %v921 = vmul.f32 %v917, %v917
  %v922 = vmul.f32 %v918, %v918
  %v923 = vmul.f32 %v919, %v919
  %v924 = vsel %vm829, %v920, 0.0
  %v925 = vsel %vm829, %v921, 0.0
  %v926 = vadd.f32 %v924, %v925
  %v927 = vsel %vm829, %v922, 0.0
  %v928 = vadd.f32 %v926, %v927
  %v929 = vsel %vm829, %v923, 0.0
  %v930 = vadd.f32 %v928, %v929
  %v931 = vrot.slane %v930, 4
  %v932 = vadd.f32 %v930, %v931
  %v933 = vrot.slane %v932, 2
  %v934 = vadd.f32 %v932, %v933
  %v935 = vrot.slane %v934, 1
  %v936 = vadd.f32 %v934, %v935
  %v937 = vadd.f32 %v915, %v936
  %v938 = vsub.f32 %v616, %v893
  %v939 = vsub.f32 %v618, %v893
  %v940 = vsub.f32 %v621, %v893
  %v941 = vsub.f32 %v623, %v893
  %v942 = vmul.f32 %v938, %v938
  %v943 = vmul.f32 %v939, %v939
  %v944 = vmul.f32 %v940, %v940
  %v945 = vmul.f32 %v941, %v941
  %v946 = vsel %vm829, %v942, 0.0
  %v947 = vsel %vm829, %v943, 0.0
  %v948 = vadd.f32 %v946, %v947
  %v949 = vsel %vm829, %v944, 0.0
  %v950 = vadd.f32 %v948, %v949
  %v951 = vsel %vm829, %v945, 0.0
  %v952 = vadd.f32 %v950, %v951
  %v953 = vrot.slane %v952, 4
  %v954 = vadd.f32 %v952, %v953
  %v955 = vrot.slane %v954, 2
  %v956 = vadd.f32 %v954, %v955
  %v957 = vrot.slane %v956, 1
  %v958 = vadd.f32 %v956, %v957
  %v959 = vadd.f32 %v937, %v958
  %v960 = vsub.f32 %v818, %v893
  %v961 = vsub.f32 %v820, %v893
  %v962 = vsub.f32 %v823, %v893
  %v963 = vsub.f32 %v825, %v893
  %v964 = vmul.f32 %v960, %v960
  %v965 = vmul.f32 %v961, %v961
  %v966 = vmul.f32 %v962, %v962
  %v967 = vmul.f32 %v963, %v963
  %v968 = vsel %vm829, %v964, 0.0
  %v969 = vsel %vm829, %v965, 0.0
  %v970 = vadd.f32 %v968, %v969
  %v971 = vsel %vm829, %v966, 0.0
  %v972 = vadd.f32 %v970, %v971
  %v973 = vsel %vm829, %v967, 0.0
  %v974 = vadd.f32 %v972, %v973
  %v975 = vrot.slane %v974, 4
  %v976 = vadd.f32 %v974, %v975
  %v977 = vrot.slane %v976, 2
  %v978 = vadd.f32 %v976, %v977
  %v979 = vrot.slane %v978, 1
  %v980 = vadd.f32 %v978, %v979
  %v981 = vadd.f32 %v959, %v980
  %v982 = vmul.f32 %v981, %v892
  %v983 = vadd.f32 %v982, 1e-05
  %v984 = vrsqrt.pop %v983
  %v985 = vmul.f32 %v984, %v983
  %v986 = vmul.f32 %v985, %v984
  %v987 = vmul.f32 0.5, %v986
  %v988 = vsub.f32 1.5, %v987
  %v989 = vmul.f32 %v984, %v988
  %vm990 = vweird.f32 %v983
  %vm991 = vweird.f32 %v984
  %vm992 = vmor %vm990, %vm991
  %v993 = vsel %vm992, %v984, %v989
  %v994 = vmul.f32 %v827, %v993
  %v995 = vmul.f32 %v893, %v994
  %v996 = vsub.f32 %v828, %v995
  %v998 = vperm.slane %v994, 0
  %v1000 = vmul.f32 %v212, %v998
  %v1001 = vmul.f32 %v214, %v998
  %v1002 = vmul.f32 %v217, %v998
  %v1003 = vmul.f32 %v219, %v998
  %v1005 = vperm.slane %v996, 0
  %v1007 = vadd.f32 %v1000, %v1005
  %v1008 = vadd.f32 %v1001, %v1005
  %v1009 = vadd.f32 %v1002, %v1005
  %v1010 = vadd.f32 %v1003, %v1005
  %v1011 = vmul.f32 %v414, %v998
  %v1012 = vmul.f32 %v416, %v998
  %v1013 = vmul.f32 %v419, %v998
  %v1014 = vmul.f32 %v421, %v998
  %v1015 = vadd.f32 %v1011, %v1005
  %v1016 = vadd.f32 %v1012, %v1005
  %v1017 = vadd.f32 %v1013, %v1005
  %v1018 = vadd.f32 %v1014, %v1005
  %v1019 = vmul.f32 %v616, %v998
  %v1020 = vmul.f32 %v618, %v998
  %v1021 = vmul.f32 %v621, %v998
  %v1022 = vmul.f32 %v623, %v998
  %v1023 = vadd.f32 %v1019, %v1005
  %v1024 = vadd.f32 %v1020, %v1005
  %v1025 = vadd.f32 %v1021, %v1005
  %v1026 = vadd.f32 %v1022, %v1005
  %v1027 = vmul.f32 %v818, %v998
  %v1028 = vmul.f32 %v820, %v998
  %v1029 = vmul.f32 %v823, %v998
  %v1030 = vmul.f32 %v825, %v998
  %v1031 = vadd.f32 %v1027, %v1005
  %v1032 = vadd.f32 %v1028, %v1005
  %v1033 = vadd.f32 %v1029, %v1005
  %v1034 = vadd.f32 %v1030, %v1005
  %v1035 = vmax.f32 %v1007, 0.0
  %v1036 = vmax.f32 %v1008, 0.0
  %v1037 = vmax.f32 %v1009, 0.0
  %v1038 = vmax.f32 %v1010, 0.0
  %v1039 = vmax.f32 %v1015, 0.0
  %v1040 = vmax.f32 %v1016, 0.0
  %v1041 = vmax.f32 %v1017, 0.0
  %v1042 = vmax.f32 %v1018, 0.0
  %v1043 = vmax.f32 %v1023, 0.0
  %v1044 = vmax.f32 %v1024, 0.0
  %v1045 = vmax.f32 %v1025, 0.0
  %v1046 = vmax.f32 %v1026, 0.0
  %v1047 = vmax.f32 %v1031, 0.0
  %v1048 = vmax.f32 %v1032, 0.0
  %v1049 = vmax.f32 %v1033, 0.0
  %v1050 = vmax.f32 %v1034, 0.0
  %1055 = vrot.lane.b32.xlu0 %v1039, 16
  %v1056 = vpop.permute.xlu0 %1055
  %1057 = vrot.lane.b32.xlu0 %v1040, 16
  %v1058 = vpop.permute.xlu0 %1057
  %1059 = vrot.lane.b32.xlu0 %v1041, 16
  %v1060 = vpop.permute.xlu0 %1059
  %1061 = vrot.lane.b32.xlu0 %v1042, 16
  %v1062 = vpop.permute.xlu0 %1061
  %1071 = vrot.lane.b32.xlu0 %v1043, 32
  %v1072 = vpop.permute.xlu0 %1071
  %1073 = vrot.lane.b32.xlu0 %v1044, 32
  %v1074 = vpop.permute.xlu0 %1073
  %1075 = vrot.lane.b32.xlu0 %v1045, 32
  %v1076 = vpop.permute.xlu0 %1075
  %1077 = vrot.lane.b32.xlu0 %v1046, 32
  %v1078 = vpop.permute.xlu0 %1077
  %1087 = vrot.lane.b32.xlu0 %v1047, 48
  %v1088 = vpop.permute.xlu0 %1087
  %1089 = vrot.lane.b32.xlu0 %v1048, 48
  %v1090 = vpop.permute.xlu0 %1089
  %1091 = vrot.lane.b32.xlu0 %v1049, 48
  %v1092 = vpop.permute.xlu0 %1091
  %1093 = vrot.lane.b32.xlu0 %v1050, 48
  %v1094 = vpop.permute.xlu0 %1093
  %v1099 = vsel %vm829, %v1035, %v1056
  %v1100 = vsel %vm829, %v1036, %v1058
  %v1101 = vsel %vm829, %v1037, %v1060
  %v1102 = vsel %vm829, %v1038, %v1062
  %vm1103 = vcmask 261120
  %v1104 = vsel %vm1103, %v1099, %v1072
  %v1105 = vsel %vm1103, %v1100, %v1074
  %v1106 = vsel %vm1103, %v1101, %v1076
  %v1107 = vsel %vm1103, %v1102, %v1078
  %vm1108 = vcmask 392192
  %v1109 = vsel %vm1108, %v1104, %v1088
  %v1110 = vsel %vm1108, %v1105, %v1090
  %v1111 = vsel %vm1108, %v1106, %v1092
  %v1112 = vsel %vm1108, %v1107, %v1094
  %vm1113 = vcmask 523264
  %1114 = vst.msk [vmem:[%s6] sm:$0xff] %vm1113, %v1109
  %1115 = vst.msk [vmem:[%s6 + $0x8] sm:$0xff] %vm1113, %v1110
  %1116 = vst.msk [vmem:[%s6 + $0x10] sm:$0xff] %vm1113, %v1111
  %1117 = vst.msk [vmem:[%s6 + $0x18] sm:$0xff] %vm1113, %v1112
  // Predicated region
  $region26: #{unet_forward.13} parent=0 // pred_check
    _
  $region27: #{unet_forward.13} parent=0 // pred_check_branch
    %1119 = sbr.rel (0) target = $region29
  $region28: #{unet_forward.13} parent=0 // pred_region
    _
  $region29: #{unet_forward.13} parent=0 // pred_fallthru
    _
  // Predicated region
  $region30: #{unet_forward.13} parent=0 // pred_check
    _
  $region31: #{unet_forward.13} parent=0 // pred_check_branch
    %1121 = sbr.rel (0) target = $region33
  $region32: #{unet_forward.13} parent=0 // pred_region
    _
  $region33: #{unet_forward.13} parent=0 // pred_fallthru
    _

// kernel: unet_forward.14
$region0: #{unet_forward.14}
  #allocation0 [shape = 'u32[]', space=smem, size = 0x4, offset = 0x4, fixed_abs, tag = 'smem constant byte address 0x4 - core index']
  #allocation1 [shape = 'u32[72,128]{1,0:T(1,128)}', space=vmem, size = 0x9000, scoped, tag = 'internal scratch']
  %s0 = inlined_call_operand.vmem [shape: bf16[4,128,64], index: 0, kind: input, shape index: {}]
  %s1 = inlined_call_operand.vmem [shape: bf16[4,128,64], index: 1, kind: input, shape index: {}]
  %s2 = inlined_call_operand.vmem [shape: bf16[4,64,8], index: 2, kind: input, shape index: {}]
  %s3 = inlined_call_operand.vmem [shape: bf16[4,64,8], index: 3, kind: input, shape index: {}]
  %s4 = inlined_call_operand.vmem [shape: f32[1,8], index: 4, kind: input, shape index: {}]
  %s5 = inlined_call_operand.vmem [shape: f32[1,8], index: 5, kind: input, shape index: {}]
  %s6 = inlined_call_operand.vmem [shape: f32[128,32], index: 6, kind: output, shape index: {}]
  %s7 = sld [smem:[#allocation0]]
  $region34: #{unet_forward.14} parent=0
    _
  %s9 = ssub.s32 1, %s7
  %s10 = scalar_select 0, %s9, %s7
  // Predicated region
  $region2: #{unet_forward.14} parent=0 // pred_check
    _
  $region3: #{unet_forward.14} parent=0 // pred_check_branch
    %12 = sbr.rel (0) target = $region5
  $region4: #{unet_forward.14} parent=0 // pred_region
    _
  $region5: #{unet_forward.14} parent=0 // pred_fallthru
    _
  // Predicated region
  $region6: #{unet_forward.14} parent=0 // pred_check
    _
  $region7: #{unet_forward.14} parent=0 // pred_check_branch
    %14 = sbr.rel (0) target = $region9
  $region8: #{unet_forward.14} parent=0 // pred_region
    _
  $region9: #{unet_forward.14} parent=0 // pred_fallthru
    _
  // Predicated region
  $region10: #{unet_forward.14} parent=0 // pred_check
    _
  $region11: #{unet_forward.14} parent=0 // pred_check_branch
    %16 = sbr.rel (0) target = $region13
  $region12: #{unet_forward.14} parent=0 // pred_region
    _
  $region13: #{unet_forward.14} parent=0 // pred_fallthru
    _
  // Predicated region
  $region14: #{unet_forward.14} parent=0 // pred_check
    _
  $region15: #{unet_forward.14} parent=0 // pred_check_branch
    %18 = sbr.rel (0) target = $region17
  $region16: #{unet_forward.14} parent=0 // pred_region
    _
  $region17: #{unet_forward.14} parent=0 // pred_fallthru
    _
  // Predicated region
  $region18: #{unet_forward.14} parent=0 // pred_check
    _
  $region19: #{unet_forward.14} parent=0 // pred_check_branch
    %20 = sbr.rel (0) target = $region21
  $region20: #{unet_forward.14} parent=0 // pred_region
    _
  $region21: #{unet_forward.14} parent=0 // pred_fallthru
    _
  // Predicated region
  $region22: #{unet_forward.14} parent=0 // pred_check
    _
  $region23: #{unet_forward.14} parent=0 // pred_check_branch
    %22 = sbr.rel (0) target = $region25
  $region24: #{unet_forward.14} parent=0 // pred_region
    _
  $region25: #{unet_forward.14} parent=0 // pred_fallthru
    _
  %v24 = vld [vmem:[%s0] sm:$0xf]
  %v25 = vld [vmem:[%s0 + $0x4] sm:$0xf]
  %v26 = vld [vmem:[%s0 + $0x8] sm:$0xf]
  %v27 = vld [vmem:[%s0 + $0xc] sm:$0xf]
  %v28 = vld [vmem:[%s0 + $0x10] sm:$0xf]
  %v29 = vld [vmem:[%s0 + $0x14] sm:$0xf]
  %v30 = vld [vmem:[%s0 + $0x18] sm:$0xf]
  %v31 = vld [vmem:[%s0 + $0x1c] sm:$0xf]
  %v32 = vld [vmem:[%s0 + $0x20] sm:$0xf]
  %v33 = vld [vmem:[%s0 + $0x24] sm:$0xf]
  %v34 = vld [vmem:[%s0 + $0x28] sm:$0xf]
  %v35 = vld [vmem:[%s0 + $0x2c] sm:$0xf]
  %v36 = vld [vmem:[%s0 + $0x30] sm:$0xf]
  %v37 = vld [vmem:[%s0 + $0x34] sm:$0xf]
  %v38 = vld [vmem:[%s0 + $0x38] sm:$0xf]
  %v39 = vld [vmem:[%s0 + $0x3c] sm:$0xf]
  %v40 = vld [vmem:[%s2] sm:$0xf]
  %v41 = vld [vmem:[%s2 + $0x4] sm:$0xf]
  %v42 = vld [vmem:[%s2 + $0x8] sm:$0xf]
  %v43 = vld [vmem:[%s2 + $0xc] sm:$0xf]
  %v44 = vld [vmem:[%s2 + $0x10] sm:$0xf]
  %v45 = vld [vmem:[%s2 + $0x14] sm:$0xf]
  %v46 = vld [vmem:[%s2 + $0x18] sm:$0xf]
  %v47 = vld [vmem:[%s2 + $0x1c] sm:$0xf]
  %v48 = vld [vmem:[%s1] sm:$0xf]
  %v49 = vld [vmem:[%s1 + $0x4] sm:$0xf]
  %v50 = vld [vmem:[%s1 + $0x8] sm:$0xf]
  %v51 = vld [vmem:[%s1 + $0xc] sm:$0xf]
  %v52 = vld [vmem:[%s1 + $0x10] sm:$0xf]
  %v53 = vld [vmem:[%s1 + $0x14] sm:$0xf]
  %v54 = vld [vmem:[%s1 + $0x18] sm:$0xf]
  %v55 = vld [vmem:[%s1 + $0x1c] sm:$0xf]
  %v56 = vld [vmem:[%s1 + $0x20] sm:$0xf]
  %v57 = vld [vmem:[%s1 + $0x24] sm:$0xf]
  %v58 = vld [vmem:[%s1 + $0x28] sm:$0xf]
  %v59 = vld [vmem:[%s1 + $0x2c] sm:$0xf]
  %v60 = vld [vmem:[%s1 + $0x30] sm:$0xf]
  %v61 = vld [vmem:[%s1 + $0x34] sm:$0xf]
  %v62 = vld [vmem:[%s1 + $0x38] sm:$0xf]
  %v63 = vld [vmem:[%s1 + $0x3c] sm:$0xf]
  %v64 = vld [vmem:[%s3] sm:$0xf]
  %v65 = vld [vmem:[%s3 + $0x4] sm:$0xf]
  %v66 = vld [vmem:[%s3 + $0x8] sm:$0xf]
  %v67 = vld [vmem:[%s3 + $0xc] sm:$0xf]
  %v68 = vld [vmem:[%s3 + $0x10] sm:$0xf]
  %v69 = vld [vmem:[%s3 + $0x14] sm:$0xf]
  %v70 = vld [vmem:[%s3 + $0x18] sm:$0xf]
  %v71 = vld [vmem:[%s3 + $0x1c] sm:$0xf]
  %v88 = vunpack.c.l.b16 %v48
  %v89 = vunpack.c.l.b16 %v49
  %v90 = vunpack.c.l.b16 %v50
  %v91 = vunpack.c.l.b16 %v51
  %v92 = vunpack.c.l.b16 %v52
  %v93 = vunpack.c.l.b16 %v53
  %v94 = vunpack.c.l.b16 %v54
  %v95 = vunpack.c.l.b16 %v55
  %v96 = vunpack.c.l.b16 %v56
  %v97 = vunpack.c.l.b16 %v57
  %v98 = vunpack.c.l.b16 %v58
  %v99 = vunpack.c.l.b16 %v59
  %v100 = vunpack.c.l.b16 %v60
  %v101 = vunpack.c.l.b16 %v61
  %v102 = vunpack.c.l.b16 %v62
  %v103 = vunpack.c.l.b16 %v63
  %v104 = vpack.c.b16 %v89, %v88
  %v105 = vpack.c.b16 %v91, %v90
  %v106 = vpack.c.b16 %v93, %v92
  %v107 = vpack.c.b16 %v95, %v94
  %v108 = vpack.c.b16 %v97, %v96
  %v109 = vpack.c.b16 %v99, %v98
  %v110 = vpack.c.b16 %v101, %v100
  %v111 = vpack.c.b16 %v103, %v102
  %v120 = vunpack.c.l.b16 %v64
  %v121 = vunpack.c.l.b16 %v65
  %v122 = vunpack.c.l.b16 %v66
  %v123 = vunpack.c.l.b16 %v67
  %v124 = vunpack.c.l.b16 %v68
  %v125 = vunpack.c.l.b16 %v69
  %v126 = vunpack.c.l.b16 %v70
  %v127 = vunpack.c.l.b16 %v71
  %v128 = vpack.c.b16 %v121, %v120
  %v129 = vpack.c.b16 %v123, %v122
  %v130 = vpack.c.b16 %v125, %v124
  %v131 = vpack.c.b16 %v127, %v126
  %vm136 = vcmask 523264
  %v138 = vsel %vm136, %v104, 0
  %v141 = vsel %vm136, %v105, 0
  %v144 = vsel %vm136, %v106, 0
  %v147 = vsel %vm136, %v107, 0
  %v150 = vsel %vm136, %v108, 0
  %v153 = vsel %vm136, %v109, 0
  %v156 = vsel %vm136, %v110, 0
  %v159 = vsel %vm136, %v111, 0
  %161 = vmatpush.bf16.msra.mxu0 0
  %162 = vmatpush.bf16.msra.mxu0 0
  %163 = vmatpush.bf16.msra.mxu0 0
  %164 = vmatpush.bf16.msra.mxu0 0
  %165 = vmatpush.bf16.msra.mxu0 %v131
  %166 = vmatpush.bf16.msra.mxu0 %v130
  %167 = vmatpush.bf16.msra.mxu0 %v129
  %168 = vmatpush.bf16.msra.mxu0 %v128
  %169 = vmatmul.bf16.gmra.mxu0 %v138
  %v170 = vpop.f32.mrf.mxu0
  %v171 = vadd.f32 0.0, %v170
  %v172 = vpop.f32.mrf.mxu0
  %v173 = vadd.f32 0.0, %v172
  %174 = vmatmul.bf16.gmra.mxu0 %v141
  %v175 = vpop.f32.mrf.mxu0
  %v176 = vadd.f32 0.0, %v175
  %v177 = vpop.f32.mrf.mxu0
  %v178 = vadd.f32 0.0, %v177
  %179 = vmatmul.bf16.gmra.mxu0 %v144
  %v180 = vpop.f32.mrf.mxu0
  %v181 = vadd.f32 0.0, %v180
  %v182 = vpop.f32.mrf.mxu0
  %v183 = vadd.f32 0.0, %v182
  %184 = vmatmul.bf16.gmra.mxu0 %v147
  %v185 = vpop.f32.mrf.mxu0
  %v186 = vadd.f32 0.0, %v185
  %v187 = vpop.f32.mrf.mxu0
  %v188 = vadd.f32 0.0, %v187
  %189 = vmatmul.bf16.gmra.mxu0 %v150
  %v190 = vpop.f32.mrf.mxu0
  %v191 = vadd.f32 0.0, %v190
  %v192 = vpop.f32.mrf.mxu0
  %v193 = vadd.f32 0.0, %v192
  %194 = vmatmul.bf16.gmra.mxu0 %v153
  %v195 = vpop.f32.mrf.mxu0
  %v196 = vadd.f32 0.0, %v195
  %v197 = vpop.f32.mrf.mxu0
  %v198 = vadd.f32 0.0, %v197
  %199 = vmatmul.bf16.gmra.mxu0 %v156
  %v200 = vpop.f32.mrf.mxu0
  %v201 = vadd.f32 0.0, %v200
  %v202 = vpop.f32.mrf.mxu0
  %v203 = vadd.f32 0.0, %v202
  %204 = vmatmul.bf16.gmra.mxu0 %v159
  %v205 = vpop.f32.mrf.mxu0
  %v206 = vadd.f32 0.0, %v205
  %v207 = vpop.f32.mrf.mxu0
  %v208 = vadd.f32 0.0, %v207
  %209 = vdwg.mxu0
  %v226 = vunpack.c.l.b16 %v24
  %v227 = vunpack.c.l.b16 %v25
  %v228 = vunpack.c.l.b16 %v26
  %v229 = vunpack.c.l.b16 %v27
  %v230 = vunpack.c.l.b16 %v28
  %v231 = vunpack.c.l.b16 %v29
  %v232 = vunpack.c.l.b16 %v30
  %v233 = vunpack.c.l.b16 %v31
  %v234 = vunpack.c.l.b16 %v32
  %v235 = vunpack.c.l.b16 %v33
  %v236 = vunpack.c.l.b16 %v34
  %v237 = vunpack.c.l.b16 %v35
  %v238 = vunpack.c.l.b16 %v36
  %v239 = vunpack.c.l.b16 %v37
  %v240 = vunpack.c.l.b16 %v38
  %v241 = vunpack.c.l.b16 %v39
  %v242 = vpack.c.b16 %v227, %v226
  %v243 = vpack.c.b16 %v229, %v228
  %v244 = vpack.c.b16 %v231, %v230
  %v245 = vpack.c.b16 %v233, %v232
  %v246 = vpack.c.b16 %v235, %v234
  %v247 = vpack.c.b16 %v237, %v236
  %v248 = vpack.c.b16 %v239, %v238
  %v249 = vpack.c.b16 %v241, %v240
  %v258 = vunpack.c.l.b16 %v40
  %v259 = vunpack.c.l.b16 %v41
  %v260 = vunpack.c.l.b16 %v42
  %v261 = vunpack.c.l.b16 %v43
  %v262 = vunpack.c.l.b16 %v44
  %v263 = vunpack.c.l.b16 %v45
  %v264 = vunpack.c.l.b16 %v46
  %v265 = vunpack.c.l.b16 %v47
  %v266 = vpack.c.b16 %v259, %v258
  %v267 = vpack.c.b16 %v261, %v260
  %v268 = vpack.c.b16 %v263, %v262
  %v269 = vpack.c.b16 %v265, %v264
  %v275 = vsel %vm136, %v242, 0
  %v278 = vsel %vm136, %v243, 0
  %v281 = vsel %vm136, %v244, 0
  %v284 = vsel %vm136, %v245, 0
  %v287 = vsel %vm136, %v246, 0
  %v290 = vsel %vm136, %v247, 0
  %v293 = vsel %vm136, %v248, 0
  %v296 = vsel %vm136, %v249, 0
  %298 = vmatpush.bf16.msra.mxu0 0
  %299 = vmatpush.bf16.msra.mxu0 0
  %300 = vmatpush.bf16.msra.mxu0 0
  %301 = vmatpush.bf16.msra.mxu0 0
  %302 = vmatpush.bf16.msra.mxu0 %v269
  %303 = vmatpush.bf16.msra.mxu0 %v268
  %304 = vmatpush.bf16.msra.mxu0 %v267
  %305 = vmatpush.bf16.msra.mxu0 %v266
  %306 = vmatmul.bf16.gmra.mxu0 %v275
  %v307 = vpop.f32.mrf.mxu0
  %v308 = vadd.f32 %v171, %v307
  %v309 = vpop.f32.mrf.mxu0
  %v310 = vadd.f32 %v173, %v309
  %311 = vmatmul.bf16.gmra.mxu0 %v278
  %v312 = vpop.f32.mrf.mxu0
  %v313 = vadd.f32 %v176, %v312
  %v314 = vpop.f32.mrf.mxu0
  %v315 = vadd.f32 %v178, %v314
  %316 = vmatmul.bf16.gmra.mxu0 %v281
  %v317 = vpop.f32.mrf.mxu0
  %v318 = vadd.f32 %v181, %v317
  %v319 = vpop.f32.mrf.mxu0
  %v320 = vadd.f32 %v183, %v319
  %321 = vmatmul.bf16.gmra.mxu0 %v284
  %v322 = vpop.f32.mrf.mxu0
  %v323 = vadd.f32 %v186, %v322
  %v324 = vpop.f32.mrf.mxu0
  %v325 = vadd.f32 %v188, %v324
  %326 = vmatmul.bf16.gmra.mxu0 %v287
  %v327 = vpop.f32.mrf.mxu0
  %v328 = vadd.f32 %v191, %v327
  %v329 = vpop.f32.mrf.mxu0
  %v330 = vadd.f32 %v193, %v329
  %331 = vmatmul.bf16.gmra.mxu0 %v290
  %v332 = vpop.f32.mrf.mxu0
  %v333 = vadd.f32 %v196, %v332
  %v334 = vpop.f32.mrf.mxu0
  %v335 = vadd.f32 %v198, %v334
  %336 = vmatmul.bf16.gmra.mxu0 %v293
  %v337 = vpop.f32.mrf.mxu0
  %v338 = vadd.f32 %v201, %v337
  %v339 = vpop.f32.mrf.mxu0
  %v340 = vadd.f32 %v203, %v339
  %341 = vmatmul.bf16.gmra.mxu0 %v296
  %v342 = vpop.f32.mrf.mxu0
  %v343 = vadd.f32 %v206, %v342
  %v344 = vpop.f32.mrf.mxu0
  %v345 = vadd.f32 %v208, %v344
  %346 = vdwg.mxu0
  %s347 = scalar_lea.vmem %s0, 64
  %v348 = vld [vmem:[%s347] sm:$0xf]
  %v349 = vld [vmem:[%s347 + $0x4] sm:$0xf]
  %v350 = vld [vmem:[%s347 + $0x8] sm:$0xf]
  %v351 = vld [vmem:[%s347 + $0xc] sm:$0xf]
  %v352 = vld [vmem:[%s347 + $0x10] sm:$0xf]
  %v353 = vld [vmem:[%s347 + $0x14] sm:$0xf]
  %v354 = vld [vmem:[%s347 + $0x18] sm:$0xf]
  %v355 = vld [vmem:[%s347 + $0x1c] sm:$0xf]
  %v356 = vld [vmem:[%s347 + $0x20] sm:$0xf]
  %v357 = vld [vmem:[%s347 + $0x24] sm:$0xf]
  %v358 = vld [vmem:[%s347 + $0x28] sm:$0xf]
  %v359 = vld [vmem:[%s347 + $0x2c] sm:$0xf]
  %v360 = vld [vmem:[%s347 + $0x30] sm:$0xf]
  %v361 = vld [vmem:[%s347 + $0x34] sm:$0xf]
  %v362 = vld [vmem:[%s347 + $0x38] sm:$0xf]
  %v363 = vld [vmem:[%s347 + $0x3c] sm:$0xf]
  %s364 = scalar_lea.vmem %s2, 32
  %v365 = vld [vmem:[%s364] sm:$0xf]
  %v366 = vld [vmem:[%s364 + $0x4] sm:$0xf]
  %v367 = vld [vmem:[%s364 + $0x8] sm:$0xf]
  %v368 = vld [vmem:[%s364 + $0xc] sm:$0xf]
  %v369 = vld [vmem:[%s364 + $0x10] sm:$0xf]
  %v370 = vld [vmem:[%s364 + $0x14] sm:$0xf]
  %v371 = vld [vmem:[%s364 + $0x18] sm:$0xf]
  %v372 = vld [vmem:[%s364 + $0x1c] sm:$0xf]
  %s373 = scalar_lea.vmem %s1, 64
  %v374 = vld [vmem:[%s373] sm:$0xf]
  %v375 = vld [vmem:[%s373 + $0x4] sm:$0xf]
  %v376 = vld [vmem:[%s373 + $0x8] sm:$0xf]
  %v377 = vld [vmem:[%s373 + $0xc] sm:$0xf]
  %v378 = vld [vmem:[%s373 + $0x10] sm:$0xf]
  %v379 = vld [vmem:[%s373 + $0x14] sm:$0xf]
  %v380 = vld [vmem:[%s373 + $0x18] sm:$0xf]
  %v381 = vld [vmem:[%s373 + $0x1c] sm:$0xf]
  %v382 = vld [vmem:[%s373 + $0x20] sm:$0xf]
  %v383 = vld [vmem:[%s373 + $0x24] sm:$0xf]
  %v384 = vld [vmem:[%s373 + $0x28] sm:$0xf]
  %v385 = vld [vmem:[%s373 + $0x2c] sm:$0xf]
  %v386 = vld [vmem:[%s373 + $0x30] sm:$0xf]
  %v387 = vld [vmem:[%s373 + $0x34] sm:$0xf]
  %v388 = vld [vmem:[%s373 + $0x38] sm:$0xf]
  %v389 = vld [vmem:[%s373 + $0x3c] sm:$0xf]
  %s390 = scalar_lea.vmem %s3, 32
  %v391 = vld [vmem:[%s390] sm:$0xf]
  %v392 = vld [vmem:[%s390 + $0x4] sm:$0xf]
  %v393 = vld [vmem:[%s390 + $0x8] sm:$0xf]
  %v394 = vld [vmem:[%s390 + $0xc] sm:$0xf]
  %v395 = vld [vmem:[%s390 + $0x10] sm:$0xf]
  %v396 = vld [vmem:[%s390 + $0x14] sm:$0xf]
  %v397 = vld [vmem:[%s390 + $0x18] sm:$0xf]
  %v398 = vld [vmem:[%s390 + $0x1c] sm:$0xf]
  %v415 = vunpack.c.l.b16 %v374
  %v416 = vunpack.c.l.b16 %v375
  %v417 = vunpack.c.l.b16 %v376
  %v418 = vunpack.c.l.b16 %v377
  %v419 = vunpack.c.l.b16 %v378
  %v420 = vunpack.c.l.b16 %v379
  %v421 = vunpack.c.l.b16 %v380
  %v422 = vunpack.c.l.b16 %v381
  %v423 = vunpack.c.l.b16 %v382
  %v424 = vunpack.c.l.b16 %v383
  %v425 = vunpack.c.l.b16 %v384
  %v426 = vunpack.c.l.b16 %v385
  %v427 = vunpack.c.l.b16 %v386
  %v428 = vunpack.c.l.b16 %v387
  %v429 = vunpack.c.l.b16 %v388
  %v430 = vunpack.c.l.b16 %v389
  %v431 = vpack.c.b16 %v416, %v415
  %v432 = vpack.c.b16 %v418, %v417
  %v433 = vpack.c.b16 %v420, %v419
  %v434 = vpack.c.b16 %v422, %v421
  %v435 = vpack.c.b16 %v424, %v423
  %v436 = vpack.c.b16 %v426, %v425
  %v437 = vpack.c.b16 %v428, %v427
  %v438 = vpack.c.b16 %v430, %v429
  %v447 = vunpack.c.l.b16 %v391
  %v448 = vunpack.c.l.b16 %v392
  %v449 = vunpack.c.l.b16 %v393
  %v450 = vunpack.c.l.b16 %v394
  %v451 = vunpack.c.l.b16 %v395
  %v452 = vunpack.c.l.b16 %v396
  %v453 = vunpack.c.l.b16 %v397
  %v454 = vunpack.c.l.b16 %v398
  %v455 = vpack.c.b16 %v448, %v447
  %v456 = vpack.c.b16 %v450, %v449
  %v457 = vpack.c.b16 %v452, %v451
  %v458 = vpack.c.b16 %v454, %v453
  %v464 = vsel %vm136, %v431, 0
  %v467 = vsel %vm136, %v432, 0
  %v470 = vsel %vm136, %v433, 0
  %v473 = vsel %vm136, %v434, 0
  %v476 = vsel %vm136, %v435, 0
  %v479 = vsel %vm136, %v436, 0
  %v482 = vsel %vm136, %v437, 0
  %v485 = vsel %vm136, %v438, 0
  %487 = vmatpush.bf16.msra.mxu0 0
  %488 = vmatpush.bf16.msra.mxu0 0
  %489 = vmatpush.bf16.msra.mxu0 0
  %490 = vmatpush.bf16.msra.mxu0 0
  %491 = vmatpush.bf16.msra.mxu0 %v458
  %492 = vmatpush.bf16.msra.mxu0 %v457
  %493 = vmatpush.bf16.msra.mxu0 %v456
  %494 = vmatpush.bf16.msra.mxu0 %v455
  %495 = vmatmul.bf16.gmra.mxu0 %v464
  %v496 = vpop.f32.mrf.mxu0
  %v497 = vadd.f32 0.0, %v496
  %v498 = vpop.f32.mrf.mxu0
  %v499 = vadd.f32 0.0, %v498
  %500 = vmatmul.bf16.gmra.mxu0 %v467
  %v501 = vpop.f32.mrf.mxu0
  %v502 = vadd.f32 0.0, %v501
  %v503 = vpop.f32.mrf.mxu0
  %v504 = vadd.f32 0.0, %v503
  %505 = vmatmul.bf16.gmra.mxu0 %v470
  %v506 = vpop.f32.mrf.mxu0
  %v507 = vadd.f32 0.0, %v506
  %v508 = vpop.f32.mrf.mxu0
  %v509 = vadd.f32 0.0, %v508
  %510 = vmatmul.bf16.gmra.mxu0 %v473
  %v511 = vpop.f32.mrf.mxu0
  %v512 = vadd.f32 0.0, %v511
  %v513 = vpop.f32.mrf.mxu0
  %v514 = vadd.f32 0.0, %v513
  %515 = vmatmul.bf16.gmra.mxu0 %v476
  %v516 = vpop.f32.mrf.mxu0
  %v517 = vadd.f32 0.0, %v516
  %v518 = vpop.f32.mrf.mxu0
  %v519 = vadd.f32 0.0, %v518
  %520 = vmatmul.bf16.gmra.mxu0 %v479
  %v521 = vpop.f32.mrf.mxu0
  %v522 = vadd.f32 0.0, %v521
  %v523 = vpop.f32.mrf.mxu0
  %v524 = vadd.f32 0.0, %v523
  %525 = vmatmul.bf16.gmra.mxu0 %v482
  %v526 = vpop.f32.mrf.mxu0
  %v527 = vadd.f32 0.0, %v526
  %v528 = vpop.f32.mrf.mxu0
  %v529 = vadd.f32 0.0, %v528
  %530 = vmatmul.bf16.gmra.mxu0 %v485
  %v531 = vpop.f32.mrf.mxu0
  %v532 = vadd.f32 0.0, %v531
  %v533 = vpop.f32.mrf.mxu0
  %v534 = vadd.f32 0.0, %v533
  %535 = vdwg.mxu0
  %v552 = vunpack.c.l.b16 %v348
  %v553 = vunpack.c.l.b16 %v349
  %v554 = vunpack.c.l.b16 %v350
  %v555 = vunpack.c.l.b16 %v351
  %v556 = vunpack.c.l.b16 %v352
  %v557 = vunpack.c.l.b16 %v353
  %v558 = vunpack.c.l.b16 %v354
  %v559 = vunpack.c.l.b16 %v355
  %v560 = vunpack.c.l.b16 %v356
  %v561 = vunpack.c.l.b16 %v357
  %v562 = vunpack.c.l.b16 %v358
  %v563 = vunpack.c.l.b16 %v359
  %v564 = vunpack.c.l.b16 %v360
  %v565 = vunpack.c.l.b16 %v361
  %v566 = vunpack.c.l.b16 %v362
  %v567 = vunpack.c.l.b16 %v363
  %v568 = vpack.c.b16 %v553, %v552
  %v569 = vpack.c.b16 %v555, %v554
  %v570 = vpack.c.b16 %v557, %v556
  %v571 = vpack.c.b16 %v559, %v558
  %v572 = vpack.c.b16 %v561, %v560
  %v573 = vpack.c.b16 %v563, %v562
  %v574 = vpack.c.b16 %v565, %v564
  %v575 = vpack.c.b16 %v567, %v566
  %v584 = vunpack.c.l.b16 %v365
  %v585 = vunpack.c.l.b16 %v366
  %v586 = vunpack.c.l.b16 %v367
  %v587 = vunpack.c.l.b16 %v368
  %v588 = vunpack.c.l.b16 %v369
  %v589 = vunpack.c.l.b16 %v370
  %v590 = vunpack.c.l.b16 %v371
  %v591 = vunpack.c.l.b16 %v372
  %v592 = vpack.c.b16 %v585, %v584
  %v593 = vpack.c.b16 %v587, %v586
  %v594 = vpack.c.b16 %v589, %v588
  %v595 = vpack.c.b16 %v591, %v590
  %v601 = vsel %vm136, %v568, 0
  %v604 = vsel %vm136, %v569, 0
  %v607 = vsel %vm136, %v570, 0
  %v610 = vsel %vm136, %v571, 0
  %v613 = vsel %vm136, %v572, 0
  %v616 = vsel %vm136, %v573, 0
  %v619 = vsel %vm136, %v574, 0
  %v622 = vsel %vm136, %v575, 0
  %624 = vmatpush.bf16.msra.mxu0 0
  %625 = vmatpush.bf16.msra.mxu0 0
  %626 = vmatpush.bf16.msra.mxu0 0
  %627 = vmatpush.bf16.msra.mxu0 0
  %628 = vmatpush.bf16.msra.mxu0 %v595
  %629 = vmatpush.bf16.msra.mxu0 %v594
  %630 = vmatpush.bf16.msra.mxu0 %v593
  %631 = vmatpush.bf16.msra.mxu0 %v592
  %632 = vmatmul.bf16.gmra.mxu0 %v601
  %v633 = vpop.f32.mrf.mxu0
  %v634 = vadd.f32 %v497, %v633
  %v635 = vpop.f32.mrf.mxu0
  %v636 = vadd.f32 %v499, %v635
  %637 = vmatmul.bf16.gmra.mxu0 %v604
  %v638 = vpop.f32.mrf.mxu0
  %v639 = vadd.f32 %v502, %v638
  %v640 = vpop.f32.mrf.mxu0
  %v641 = vadd.f32 %v504, %v640
  %642 = vmatmul.bf16.gmra.mxu0 %v607
  %v643 = vpop.f32.mrf.mxu0
  %v644 = vadd.f32 %v507, %v643
  %v645 = vpop.f32.mrf.mxu0
  %v646 = vadd.f32 %v509, %v645
  %647 = vmatmul.bf16.gmra.mxu0 %v610
  %v648 = vpop.f32.mrf.mxu0
  %v649 = vadd.f32 %v512, %v648
  %v650 = vpop.f32.mrf.mxu0
  %v651 = vadd.f32 %v514, %v650
  %652 = vmatmul.bf16.gmra.mxu0 %v613
  %v653 = vpop.f32.mrf.mxu0
  %v654 = vadd.f32 %v517, %v653
  %v655 = vpop.f32.mrf.mxu0
  %v656 = vadd.f32 %v519, %v655
  %657 = vmatmul.bf16.gmra.mxu0 %v616
  %v658 = vpop.f32.mrf.mxu0
  %v659 = vadd.f32 %v522, %v658
  %v660 = vpop.f32.mrf.mxu0
  %v661 = vadd.f32 %v524, %v660
  %662 = vmatmul.bf16.gmra.mxu0 %v619
  %v663 = vpop.f32.mrf.mxu0
  %v664 = vadd.f32 %v527, %v663
  %v665 = vpop.f32.mrf.mxu0
  %v666 = vadd.f32 %v529, %v665
  %667 = vmatmul.bf16.gmra.mxu0 %v622
  %v668 = vpop.f32.mrf.mxu0
  %v669 = vadd.f32 %v532, %v668
  %v670 = vpop.f32.mrf.mxu0
  %v671 = vadd.f32 %v534, %v670
  %672 = vdwg.mxu0
  %s673 = scalar_lea.vmem %s0, 128
  %v674 = vld [vmem:[%s673] sm:$0xf]
  %v675 = vld [vmem:[%s673 + $0x4] sm:$0xf]
  %v676 = vld [vmem:[%s673 + $0x8] sm:$0xf]
  %v677 = vld [vmem:[%s673 + $0xc] sm:$0xf]
  %v678 = vld [vmem:[%s673 + $0x10] sm:$0xf]
  %v679 = vld [vmem:[%s673 + $0x14] sm:$0xf]
  %v680 = vld [vmem:[%s673 + $0x18] sm:$0xf]
  %v681 = vld [vmem:[%s673 + $0x1c] sm:$0xf]
  %v682 = vld [vmem:[%s673 + $0x20] sm:$0xf]
  %v683 = vld [vmem:[%s673 + $0x24] sm:$0xf]
  %v684 = vld [vmem:[%s673 + $0x28] sm:$0xf]
  %v685 = vld [vmem:[%s673 + $0x2c] sm:$0xf]
  %v686 = vld [vmem:[%s673 + $0x30] sm:$0xf]
  %v687 = vld [vmem:[%s673 + $0x34] sm:$0xf]
  %v688 = vld [vmem:[%s673 + $0x38] sm:$0xf]
  %v689 = vld [vmem:[%s673 + $0x3c] sm:$0xf]
  %s690 = scalar_lea.vmem %s2, 64
  %v691 = vld [vmem:[%s690] sm:$0xf]
  %v692 = vld [vmem:[%s690 + $0x4] sm:$0xf]
  %v693 = vld [vmem:[%s690 + $0x8] sm:$0xf]
  %v694 = vld [vmem:[%s690 + $0xc] sm:$0xf]
  %v695 = vld [vmem:[%s690 + $0x10] sm:$0xf]
  %v696 = vld [vmem:[%s690 + $0x14] sm:$0xf]
  %v697 = vld [vmem:[%s690 + $0x18] sm:$0xf]
  %v698 = vld [vmem:[%s690 + $0x1c] sm:$0xf]
  %s699 = scalar_lea.vmem %s1, 128
  %v700 = vld [vmem:[%s699] sm:$0xf]
  %v701 = vld [vmem:[%s699 + $0x4] sm:$0xf]
  %v702 = vld [vmem:[%s699 + $0x8] sm:$0xf]
  %v703 = vld [vmem:[%s699 + $0xc] sm:$0xf]
  %v704 = vld [vmem:[%s699 + $0x10] sm:$0xf]
  %v705 = vld [vmem:[%s699 + $0x14] sm:$0xf]
  %v706 = vld [vmem:[%s699 + $0x18] sm:$0xf]
  %v707 = vld [vmem:[%s699 + $0x1c] sm:$0xf]
  %v708 = vld [vmem:[%s699 + $0x20] sm:$0xf]
  %v709 = vld [vmem:[%s699 + $0x24] sm:$0xf]
  %v710 = vld [vmem:[%s699 + $0x28] sm:$0xf]
  %v711 = vld [vmem:[%s699 + $0x2c] sm:$0xf]
  %v712 = vld [vmem:[%s699 + $0x30] sm:$0xf]
  %v713 = vld [vmem:[%s699 + $0x34] sm:$0xf]
  %v714 = vld [vmem:[%s699 + $0x38] sm:$0xf]
  %v715 = vld [vmem:[%s699 + $0x3c] sm:$0xf]
  %s716 = scalar_lea.vmem %s3, 64
  %v717 = vld [vmem:[%s716] sm:$0xf]
  %v718 = vld [vmem:[%s716 + $0x4] sm:$0xf]
  %v719 = vld [vmem:[%s716 + $0x8] sm:$0xf]
  %v720 = vld [vmem:[%s716 + $0xc] sm:$0xf]
  %v721 = vld [vmem:[%s716 + $0x10] sm:$0xf]
  %v722 = vld [vmem:[%s716 + $0x14] sm:$0xf]
  %v723 = vld [vmem:[%s716 + $0x18] sm:$0xf]
  %v724 = vld [vmem:[%s716 + $0x1c] sm:$0xf]
  %v741 = vunpack.c.l.b16 %v700
  %v742 = vunpack.c.l.b16 %v701
  %v743 = vunpack.c.l.b16 %v702
  %v744 = vunpack.c.l.b16 %v703
  %v745 = vunpack.c.l.b16 %v704
  %v746 = vunpack.c.l.b16 %v705
  %v747 = vunpack.c.l.b16 %v706
  %v748 = vunpack.c.l.b16 %v707
  %v749 = vunpack.c.l.b16 %v708
  %v750 = vunpack.c.l.b16 %v709
  %v751 = vunpack.c.l.b16 %v710
  %v752 = vunpack.c.l.b16 %v711
  %v753 = vunpack.c.l.b16 %v712
  %v754 = vunpack.c.l.b16 %v713
  %v755 = vunpack.c.l.b16 %v714
  %v756 = vunpack.c.l.b16 %v715
  %v757 = vpack.c.b16 %v742, %v741
  %v758 = vpack.c.b16 %v744, %v743
  %v759 = vpack.c.b16 %v746, %v745
  %v760 = vpack.c.b16 %v748, %v747
  %v761 = vpack.c.b16 %v750, %v749
  %v762 = vpack.c.b16 %v752, %v751
  %v763 = vpack.c.b16 %v754, %v753
  %v764 = vpack.c.b16 %v756, %v755
  %v773 = vunpack.c.l.b16 %v717
  %v774 = vunpack.c.l.b16 %v718
  %v775 = vunpack.c.l.b16 %v719
  %v776 = vunpack.c.l.b16 %v720
  %v777 = vunpack.c.l.b16 %v721
  %v778 = vunpack.c.l.b16 %v722
  %v779 = vunpack.c.l.b16 %v723
  %v780 = vunpack.c.l.b16 %v724
  %v781 = vpack.c.b16 %v774, %v773
  %v782 = vpack.c.b16 %v776, %v775
  %v783 = vpack.c.b16 %v778, %v777
  %v784 = vpack.c.b16 %v780, %v779
  %v790 = vsel %vm136, %v757, 0
  %v793 = vsel %vm136, %v758, 0
  %v796 = vsel %vm136, %v759, 0
  %v799 = vsel %vm136, %v760, 0
  %v802 = vsel %vm136, %v761, 0
  %v805 = vsel %vm136, %v762, 0
  %v808 = vsel %vm136, %v763, 0
  %v811 = vsel %vm136, %v764, 0
  %813 = vmatpush.bf16.msra.mxu0 0
  %814 = vmatpush.bf16.msra.mxu0 0
  %815 = vmatpush.bf16.msra.mxu0 0
  %816 = vmatpush.bf16.msra.mxu0 0
  %817 = vmatpush.bf16.msra.mxu0 %v784
  %818 = vmatpush.bf16.msra.mxu0 %v783
  %819 = vmatpush.bf16.msra.mxu0 %v782
  %820 = vmatpush.bf16.msra.mxu0 %v781
  %821 = vmatmul.bf16.gmra.mxu0 %v790
  %v822 = vpop.f32.mrf.mxu0
  %v823 = vadd.f32 0.0, %v822
  %v824 = vpop.f32.mrf.mxu0
  %v825 = vadd.f32 0.0, %v824
  %826 = vmatmul.bf16.gmra.mxu0 %v793
  %v827 = vpop.f32.mrf.mxu0
  %v828 = vadd.f32 0.0, %v827
  %v829 = vpop.f32.mrf.mxu0
  %v830 = vadd.f32 0.0, %v829
  %831 = vmatmul.bf16.gmra.mxu0 %v796
  %v832 = vpop.f32.mrf.mxu0
  %v833 = vadd.f32 0.0, %v832
  %v834 = vpop.f32.mrf.mxu0
  %v835 = vadd.f32 0.0, %v834
  %836 = vmatmul.bf16.gmra.mxu0 %v799
  %v837 = vpop.f32.mrf.mxu0
  %v838 = vadd.f32 0.0, %v837
  %v839 = vpop.f32.mrf.mxu0
  %v840 = vadd.f32 0.0, %v839
  %841 = vmatmul.bf16.gmra.mxu0 %v802
  %v842 = vpop.f32.mrf.mxu0
  %v843 = vadd.f32 0.0, %v842
  %v844 = vpop.f32.mrf.mxu0
  %v845 = vadd.f32 0.0, %v844
  %846 = vmatmul.bf16.gmra.mxu0 %v805
  %v847 = vpop.f32.mrf.mxu0
  %v848 = vadd.f32 0.0, %v847
  %v849 = vpop.f32.mrf.mxu0
  %v850 = vadd.f32 0.0, %v849
  %851 = vmatmul.bf16.gmra.mxu0 %v808
  %v852 = vpop.f32.mrf.mxu0
  %v853 = vadd.f32 0.0, %v852
  %v854 = vpop.f32.mrf.mxu0
  %v855 = vadd.f32 0.0, %v854
  %856 = vmatmul.bf16.gmra.mxu0 %v811
  %v857 = vpop.f32.mrf.mxu0
  %v858 = vadd.f32 0.0, %v857
  %v859 = vpop.f32.mrf.mxu0
  %v860 = vadd.f32 0.0, %v859
  %861 = vdwg.mxu0
  %v878 = vunpack.c.l.b16 %v674
  %v879 = vunpack.c.l.b16 %v675
  %v880 = vunpack.c.l.b16 %v676
  %v881 = vunpack.c.l.b16 %v677
  %v882 = vunpack.c.l.b16 %v678
  %v883 = vunpack.c.l.b16 %v679
  %v884 = vunpack.c.l.b16 %v680
  %v885 = vunpack.c.l.b16 %v681
  %v886 = vunpack.c.l.b16 %v682
  %v887 = vunpack.c.l.b16 %v683
  %v888 = vunpack.c.l.b16 %v684
  %v889 = vunpack.c.l.b16 %v685
  %v890 = vunpack.c.l.b16 %v686
  %v891 = vunpack.c.l.b16 %v687
  %v892 = vunpack.c.l.b16 %v688
  %v893 = vunpack.c.l.b16 %v689
  %v894 = vpack.c.b16 %v879, %v878
  %v895 = vpack.c.b16 %v881, %v880
  %v896 = vpack.c.b16 %v883, %v882
  %v897 = vpack.c.b16 %v885, %v884
  %v898 = vpack.c.b16 %v887, %v886
  %v899 = vpack.c.b16 %v889, %v888
  %v900 = vpack.c.b16 %v891, %v890
  %v901 = vpack.c.b16 %v893, %v892
  %v910 = vunpack.c.l.b16 %v691
  %v911 = vunpack.c.l.b16 %v692
  %v912 = vunpack.c.l.b16 %v693
  %v913 = vunpack.c.l.b16 %v694
  %v914 = vunpack.c.l.b16 %v695
  %v915 = vunpack.c.l.b16 %v696
  %v916 = vunpack.c.l.b16 %v697
  %v917 = vunpack.c.l.b16 %v698
  %v918 = vpack.c.b16 %v911, %v910
  %v919 = vpack.c.b16 %v913, %v912
  %v920 = vpack.c.b16 %v915, %v914
  %v921 = vpack.c.b16 %v917, %v916
  %v927 = vsel %vm136, %v894, 0
  %v930 = vsel %vm136, %v895, 0
  %v933 = vsel %vm136, %v896, 0
  %v936 = vsel %vm136, %v897, 0
  %v939 = vsel %vm136, %v898, 0
  %v942 = vsel %vm136, %v899, 0
  %v945 = vsel %vm136, %v900, 0
  %v948 = vsel %vm136, %v901, 0
  %950 = vmatpush.bf16.msra.mxu0 0
  %951 = vmatpush.bf16.msra.mxu0 0
  %952 = vmatpush.bf16.msra.mxu0 0
  %953 = vmatpush.bf16.msra.mxu0 0
  %954 = vmatpush.bf16.msra.mxu0 %v921
  %955 = vmatpush.bf16.msra.mxu0 %v920
  %956 = vmatpush.bf16.msra.mxu0 %v919
  %957 = vmatpush.bf16.msra.mxu0 %v918
  %958 = vmatmul.bf16.gmra.mxu0 %v927
  %v959 = vpop.f32.mrf.mxu0
  %v960 = vadd.f32 %v823, %v959
  %v961 = vpop.f32.mrf.mxu0
  %v962 = vadd.f32 %v825, %v961
  %963 = vmatmul.bf16.gmra.mxu0 %v930
  %v964 = vpop.f32.mrf.mxu0
  %v965 = vadd.f32 %v828, %v964
  %v966 = vpop.f32.mrf.mxu0
  %v967 = vadd.f32 %v830, %v966
  %968 = vmatmul.bf16.gmra.mxu0 %v933
  %v969 = vpop.f32.mrf.mxu0
  %v970 = vadd.f32 %v833, %v969
  %v971 = vpop.f32.mrf.mxu0
  %v972 = vadd.f32 %v835, %v971
  %973 = vmatmul.bf16.gmra.mxu0 %v936
  %v974 = vpop.f32.mrf.mxu0
  %v975 = vadd.f32 %v838, %v974
  %v976 = vpop.f32.mrf.mxu0
  %v977 = vadd.f32 %v840, %v976
  %978 = vmatmul.bf16.gmra.mxu0 %v939
  %v979 = vpop.f32.mrf.mxu0
  %v980 = vadd.f32 %v843, %v979
  %v981 = vpop.f32.mrf.mxu0
  %v982 = vadd.f32 %v845, %v981
  %983 = vmatmul.bf16.gmra.mxu0 %v942
  %v984 = vpop.f32.mrf.mxu0
  %v985 = vadd.f32 %v848, %v984
  %v986 = vpop.f32.mrf.mxu0
  %v987 = vadd.f32 %v850, %v986
  %988 = vmatmul.bf16.gmra.mxu0 %v945
  %v989 = vpop.f32.mrf.mxu0
  %v990 = vadd.f32 %v853, %v989
  %v991 = vpop.f32.mrf.mxu0
  %v992 = vadd.f32 %v855, %v991
  %993 = vmatmul.bf16.gmra.mxu0 %v948
  %v994 = vpop.f32.mrf.mxu0
  %v995 = vadd.f32 %v858, %v994
  %v996 = vpop.f32.mrf.mxu0
  %v997 = vadd.f32 %v860, %v996
  %998 = vdwg.mxu0
  %s999 = scalar_lea.vmem %s0, 192
  %v1000 = vld [vmem:[%s999] sm:$0xf]
  %v1001 = vld [vmem:[%s999 + $0x4] sm:$0xf]
  %v1002 = vld [vmem:[%s999 + $0x8] sm:$0xf]
  %v1003 = vld [vmem:[%s999 + $0xc] sm:$0xf]
  %v1004 = vld [vmem:[%s999 + $0x10] sm:$0xf]
  %v1005 = vld [vmem:[%s999 + $0x14] sm:$0xf]
  %v1006 = vld [vmem:[%s999 + $0x18] sm:$0xf]
  %v1007 = vld [vmem:[%s999 + $0x1c] sm:$0xf]
  %v1008 = vld [vmem:[%s999 + $0x20] sm:$0xf]
  %v1009 = vld [vmem:[%s999 + $0x24] sm:$0xf]
  %v1010 = vld [vmem:[%s999 + $0x28] sm:$0xf]
  %v1011 = vld [vmem:[%s999 + $0x2c] sm:$0xf]
  %v1012 = vld [vmem:[%s999 + $0x30] sm:$0xf]
  %v1013 = vld [vmem:[%s999 + $0x34] sm:$0xf]
  %v1014 = vld [vmem:[%s999 + $0x38] sm:$0xf]
  %v1015 = vld [vmem:[%s999 + $0x3c] sm:$0xf]
  %s1016 = scalar_lea.vmem %s2, 96
  %v1017 = vld [vmem:[%s1016] sm:$0xf]
  %v1018 = vld [vmem:[%s1016 + $0x4] sm:$0xf]
  %v1019 = vld [vmem:[%s1016 + $0x8] sm:$0xf]
  %v1020 = vld [vmem:[%s1016 + $0xc] sm:$0xf]
  %v1021 = vld [vmem:[%s1016 + $0x10] sm:$0xf]
  %v1022 = vld [vmem:[%s1016 + $0x14] sm:$0xf]
  %v1023 = vld [vmem:[%s1016 + $0x18] sm:$0xf]
  %v1024 = vld [vmem:[%s1016 + $0x1c] sm:$0xf]
  %s1025 = scalar_lea.vmem %s1, 192
  %v1026 = vld [vmem:[%s1025] sm:$0xf]
  %v1027 = vld [vmem:[%s1025 + $0x4] sm:$0xf]
  %v1028 = vld [vmem:[%s1025 + $0x8] sm:$0xf]
  %v1029 = vld [vmem:[%s1025 + $0xc] sm:$0xf]
  %v1030 = vld [vmem:[%s1025 + $0x10] sm:$0xf]
  %v1031 = vld [vmem:[%s1025 + $0x14] sm:$0xf]
  %v1032 = vld [vmem:[%s1025 + $0x18] sm:$0xf]
  %v1033 = vld [vmem:[%s1025 + $0x1c] sm:$0xf]
  %v1034 = vld [vmem:[%s1025 + $0x20] sm:$0xf]
  %v1035 = vld [vmem:[%s1025 + $0x24] sm:$0xf]
  %v1036 = vld [vmem:[%s1025 + $0x28] sm:$0xf]
  %v1037 = vld [vmem:[%s1025 + $0x2c] sm:$0xf]
  %v1038 = vld [vmem:[%s1025 + $0x30] sm:$0xf]
  %v1039 = vld [vmem:[%s1025 + $0x34] sm:$0xf]
  %v1040 = vld [vmem:[%s1025 + $0x38] sm:$0xf]
  %v1041 = vld [vmem:[%s1025 + $0x3c] sm:$0xf]
  %s1042 = scalar_lea.vmem %s3, 96
  %v1043 = vld [vmem:[%s1042] sm:$0xf]
  %v1044 = vld [vmem:[%s1042 + $0x4] sm:$0xf]
  %v1045 = vld [vmem:[%s1042 + $0x8] sm:$0xf]
  %v1046 = vld [vmem:[%s1042 + $0xc] sm:$0xf]
  %v1047 = vld [vmem:[%s1042 + $0x10] sm:$0xf]
  %v1048 = vld [vmem:[%s1042 + $0x14] sm:$0xf]
  %v1049 = vld [vmem:[%s1042 + $0x18] sm:$0xf]
  %v1050 = vld [vmem:[%s1042 + $0x1c] sm:$0xf]
  %v1067 = vunpack.c.l.b16 %v1026
  %v1068 = vunpack.c.l.b16 %v1027
  %v1069 = vunpack.c.l.b16 %v1028
  %v1070 = vunpack.c.l.b16 %v1029
  %v1071 = vunpack.c.l.b16 %v1030
  %v1072 = vunpack.c.l.b16 %v1031
  %v1073 = vunpack.c.l.b16 %v1032
  %v1074 = vunpack.c.l.b16 %v1033
  %v1075 = vunpack.c.l.b16 %v1034
  %v1076 = vunpack.c.l.b16 %v1035
  %v1077 = vunpack.c.l.b16 %v1036
  %v1078 = vunpack.c.l.b16 %v1037
  %v1079 = vunpack.c.l.b16 %v1038
  %v1080 = vunpack.c.l.b16 %v1039
  %v1081 = vunpack.c.l.b16 %v1040
  %v1082 = vunpack.c.l.b16 %v1041
  %v1083 = vpack.c.b16 %v1068, %v1067
  %v1084 = vpack.c.b16 %v1070, %v1069
  %v1085 = vpack.c.b16 %v1072, %v1071
  %v1086 = vpack.c.b16 %v1074, %v1073
  %v1087 = vpack.c.b16 %v1076, %v1075
  %v1088 = vpack.c.b16 %v1078, %v1077
  %v1089 = vpack.c.b16 %v1080, %v1079
  %v1090 = vpack.c.b16 %v1082, %v1081
  %v1099 = vunpack.c.l.b16 %v1043
  %v1100 = vunpack.c.l.b16 %v1044
  %v1101 = vunpack.c.l.b16 %v1045
  %v1102 = vunpack.c.l.b16 %v1046
  %v1103 = vunpack.c.l.b16 %v1047
  %v1104 = vunpack.c.l.b16 %v1048
  %v1105 = vunpack.c.l.b16 %v1049
  %v1106 = vunpack.c.l.b16 %v1050
  %v1107 = vpack.c.b16 %v1100, %v1099
  %v1108 = vpack.c.b16 %v1102, %v1101
  %v1109 = vpack.c.b16 %v1104, %v1103
  %v1110 = vpack.c.b16 %v1106, %v1105
  %v1116 = vsel %vm136, %v1083, 0
  %v1119 = vsel %vm136, %v1084, 0
  %v1122 = vsel %vm136, %v1085, 0
  %v1125 = vsel %vm136, %v1086, 0
  %v1128 = vsel %vm136, %v1087, 0
  %v1131 = vsel %vm136, %v1088, 0
  %v1134 = vsel %vm136, %v1089, 0
  %v1137 = vsel %vm136, %v1090, 0
  %1139 = vmatpush.bf16.msra.mxu0 0
  %1140 = vmatpush.bf16.msra.mxu0 0
  %1141 = vmatpush.bf16.msra.mxu0 0
  %1142 = vmatpush.bf16.msra.mxu0 0
  %1143 = vmatpush.bf16.msra.mxu0 %v1110
  %1144 = vmatpush.bf16.msra.mxu0 %v1109
  %1145 = vmatpush.bf16.msra.mxu0 %v1108
  %1146 = vmatpush.bf16.msra.mxu0 %v1107
  %1147 = vmatmul.bf16.gmra.mxu0 %v1116
  %v1148 = vpop.f32.mrf.mxu0
  %v1149 = vadd.f32 0.0, %v1148
  %v1150 = vpop.f32.mrf.mxu0
  %v1151 = vadd.f32 0.0, %v1150
  %1152 = vmatmul.bf16.gmra.mxu0 %v1119
  %v1153 = vpop.f32.mrf.mxu0
  %v1154 = vadd.f32 0.0, %v1153
  %v1155 = vpop.f32.mrf.mxu0
  %v1156 = vadd.f32 0.0, %v1155
  %1157 = vmatmul.bf16.gmra.mxu0 %v1122
  %v1158 = vpop.f32.mrf.mxu0
  %v1159 = vadd.f32 0.0, %v1158
  %v1160 = vpop.f32.mrf.mxu0
  %v1161 = vadd.f32 0.0, %v1160
  %1162 = vmatmul.bf16.gmra.mxu0 %v1125
  %v1163 = vpop.f32.mrf.mxu0
  %v1164 = vadd.f32 0.0, %v1163
  %v1165 = vpop.f32.mrf.mxu0
  %v1166 = vadd.f32 0.0, %v1165
  %1167 = vmatmul.bf16.gmra.mxu0 %v1128
  %v1168 = vpop.f32.mrf.mxu0
  %v1169 = vadd.f32 0.0, %v1168
  %v1170 = vpop.f32.mrf.mxu0
  %v1171 = vadd.f32 0.0, %v1170
  %1172 = vmatmul.bf16.gmra.mxu0 %v1131
  %v1173 = vpop.f32.mrf.mxu0
  %v1174 = vadd.f32 0.0, %v1173
  %v1175 = vpop.f32.mrf.mxu0
  %v1176 = vadd.f32 0.0, %v1175
  %1177 = vmatmul.bf16.gmra.mxu0 %v1134
  %v1178 = vpop.f32.mrf.mxu0
  %v1179 = vadd.f32 0.0, %v1178
  %v1180 = vpop.f32.mrf.mxu0
  %v1181 = vadd.f32 0.0, %v1180
  %1182 = vmatmul.bf16.gmra.mxu0 %v1137
  %v1183 = vpop.f32.mrf.mxu0
  %v1184 = vadd.f32 0.0, %v1183
  %v1185 = vpop.f32.mrf.mxu0
  %v1186 = vadd.f32 0.0, %v1185
  %1187 = vdwg.mxu0
  %v1204 = vunpack.c.l.b16 %v1000
  %v1205 = vunpack.c.l.b16 %v1001
  %v1206 = vunpack.c.l.b16 %v1002
  %v1207 = vunpack.c.l.b16 %v1003
  %v1208 = vunpack.c.l.b16 %v1004
  %v1209 = vunpack.c.l.b16 %v1005
  %v1210 = vunpack.c.l.b16 %v1006
  %v1211 = vunpack.c.l.b16 %v1007
  %v1212 = vunpack.c.l.b16 %v1008
  %v1213 = vunpack.c.l.b16 %v1009
  %v1214 = vunpack.c.l.b16 %v1010
  %v1215 = vunpack.c.l.b16 %v1011
  %v1216 = vunpack.c.l.b16 %v1012
  %v1217 = vunpack.c.l.b16 %v1013
  %v1218 = vunpack.c.l.b16 %v1014
  %v1219 = vunpack.c.l.b16 %v1015
  %v1220 = vpack.c.b16 %v1205, %v1204
  %v1221 = vpack.c.b16 %v1207, %v1206
  %v1222 = vpack.c.b16 %v1209, %v1208
  %v1223 = vpack.c.b16 %v1211, %v1210
  %v1224 = vpack.c.b16 %v1213, %v1212
  %v1225 = vpack.c.b16 %v1215, %v1214
  %v1226 = vpack.c.b16 %v1217, %v1216
  %v1227 = vpack.c.b16 %v1219, %v1218
  %v1236 = vunpack.c.l.b16 %v1017
  %v1237 = vunpack.c.l.b16 %v1018
  %v1238 = vunpack.c.l.b16 %v1019
  %v1239 = vunpack.c.l.b16 %v1020
  %v1240 = vunpack.c.l.b16 %v1021
  %v1241 = vunpack.c.l.b16 %v1022
  %v1242 = vunpack.c.l.b16 %v1023
  %v1243 = vunpack.c.l.b16 %v1024
  %v1244 = vpack.c.b16 %v1237, %v1236
  %v1245 = vpack.c.b16 %v1239, %v1238
  %v1246 = vpack.c.b16 %v1241, %v1240
  %v1247 = vpack.c.b16 %v1243, %v1242
  %v1253 = vsel %vm136, %v1220, 0
  %v1256 = vsel %vm136, %v1221, 0
  %v1259 = vsel %vm136, %v1222, 0
  %v1262 = vsel %vm136, %v1223, 0
  %v1265 = vsel %vm136, %v1224, 0
  %v1268 = vsel %vm136, %v1225, 0
  %v1271 = vsel %vm136, %v1226, 0
  %v1274 = vsel %vm136, %v1227, 0
  %1276 = vmatpush.bf16.msra.mxu0 0
  %1277 = vmatpush.bf16.msra.mxu0 0
  %1278 = vmatpush.bf16.msra.mxu0 0
  %1279 = vmatpush.bf16.msra.mxu0 0
  %1280 = vmatpush.bf16.msra.mxu0 %v1247
  %1281 = vmatpush.bf16.msra.mxu0 %v1246
  %1282 = vmatpush.bf16.msra.mxu0 %v1245
  %1283 = vmatpush.bf16.msra.mxu0 %v1244
  %1284 = vmatmul.bf16.gmra.mxu0 %v1253
  %v1285 = vpop.f32.mrf.mxu0
  %v1286 = vadd.f32 %v1149, %v1285
  %v1287 = vpop.f32.mrf.mxu0
  %v1288 = vadd.f32 %v1151, %v1287
  %1289 = vmatmul.bf16.gmra.mxu0 %v1256
  %v1290 = vpop.f32.mrf.mxu0
  %v1291 = vadd.f32 %v1154, %v1290
  %v1292 = vpop.f32.mrf.mxu0
  %v1293 = vadd.f32 %v1156, %v1292
  %1294 = vmatmul.bf16.gmra.mxu0 %v1259
  %v1295 = vpop.f32.mrf.mxu0
  %v1296 = vadd.f32 %v1159, %v1295
  %v1297 = vpop.f32.mrf.mxu0
  %v1298 = vadd.f32 %v1161, %v1297
  %1299 = vmatmul.bf16.gmra.mxu0 %v1262
  %v1300 = vpop.f32.mrf.mxu0
  %v1301 = vadd.f32 %v1164, %v1300
  %v1302 = vpop.f32.mrf.mxu0
  %v1303 = vadd.f32 %v1166, %v1302
  %1304 = vmatmul.bf16.gmra.mxu0 %v1265
  %v1305 = vpop.f32.mrf.mxu0
  %v1306 = vadd.f32 %v1169, %v1305
  %v1307 = vpop.f32.mrf.mxu0
  %v1308 = vadd.f32 %v1171, %v1307
  %1309 = vmatmul.bf16.gmra.mxu0 %v1268
  %v1310 = vpop.f32.mrf.mxu0
  %v1311 = vadd.f32 %v1174, %v1310
  %v1312 = vpop.f32.mrf.mxu0
  %v1313 = vadd.f32 %v1176, %v1312
  %1314 = vmatmul.bf16.gmra.mxu0 %v1271
  %v1315 = vpop.f32.mrf.mxu0
  %v1316 = vadd.f32 %v1179, %v1315
  %v1317 = vpop.f32.mrf.mxu0
  %v1318 = vadd.f32 %v1181, %v1317
  %1319 = vmatmul.bf16.gmra.mxu0 %v1274
  %v1320 = vpop.f32.mrf.mxu0
  %v1321 = vadd.f32 %v1184, %v1320
  %v1322 = vpop.f32.mrf.mxu0
  %v1323 = vadd.f32 %v1186, %v1322
  %1324 = vdwg.mxu0
  %v1325 = vld [vmem:[%s4] sm:$0x1]
  %v1326 = vld [vmem:[%s5] sm:$0x1]
  %vm1327 = vcmask 64512
  %v1328 = vsel %vm1327, %v308, 0.0
  %v1329 = vsel %vm1327, %v310, 0.0
  %v1330 = vadd.f32 %v1328, %v1329
  %v1331 = vsel %vm1327, %v313, 0.0
  %v1332 = vadd.f32 %v1330, %v1331
  %v1333 = vsel %vm1327, %v315, 0.0
  %v1334 = vadd.f32 %v1332, %v1333
  %v1335 = vsel %vm1327, %v318, 0.0
  %v1336 = vadd.f32 %v1334, %v1335
  %v1337 = vsel %vm1327, %v320, 0.0
  %v1338 = vadd.f32 %v1336, %v1337
  %v1339 = vsel %vm1327, %v323, 0.0
  %v1340 = vadd.f32 %v1338, %v1339
  %v1341 = vsel %vm1327, %v325, 0.0
  %v1342 = vadd.f32 %v1340, %v1341
  %v1343 = vsel %vm1327, %v328, 0.0
  %v1344 = vadd.f32 %v1342, %v1343
  %v1345 = vsel %vm1327, %v330, 0.0
  %v1346 = vadd.f32 %v1344, %v1345
  %v1347 = vsel %vm1327, %v333, 0.0
  %v1348 = vadd.f32 %v1346, %v1347
  %v1349 = vsel %vm1327, %v335, 0.0
  %v1350 = vadd.f32 %v1348, %v1349
  %v1351 = vsel %vm1327, %v338, 0.0
  %v1352 = vadd.f32 %v1350, %v1351
  %v1353 = vsel %vm1327, %v340, 0.0
  %v1354 = vadd.f32 %v1352, %v1353
  %v1355 = vsel %vm1327, %v343, 0.0
  %v1356 = vadd.f32 %v1354, %v1355
  %v1357 = vsel %vm1327, %v345, 0.0
  %v1358 = vadd.f32 %v1356, %v1357
  %v1359 = vrot.slane %v1358, 4
  %v1360 = vadd.f32 %v1358, %v1359
  %v1361 = vrot.slane %v1360, 2
  %v1362 = vadd.f32 %v1360, %v1361
  %v1363 = vrot.slane %v1362, 1
  %v1364 = vadd.f32 %v1362, %v1363
  %v1365 = vadd.f32 %v1364, 0.0
  %v1366 = vsel %vm1327, %v634, 0.0
  %v1367 = vsel %vm1327, %v636, 0.0
  %v1368 = vadd.f32 %v1366, %v1367
  %v1369 = vsel %vm1327, %v639, 0.0
  %v1370 = vadd.f32 %v1368, %v1369
  %v1371 = vsel %vm1327, %v641, 0.0
  %v1372 = vadd.f32 %v1370, %v1371
  %v1373 = vsel %vm1327, %v644, 0.0
  %v1374 = vadd.f32 %v1372, %v1373
  %v1375 = vsel %vm1327, %v646, 0.0
  %v1376 = vadd.f32 %v1374, %v1375
  %v1377 = vsel %vm1327, %v649, 0.0
  %v1378 = vadd.f32 %v1376, %v1377
  %v1379 = vsel %vm1327, %v651, 0.0
  %v1380 = vadd.f32 %v1378, %v1379
  %v1381 = vsel %vm1327, %v654, 0.0
  %v1382 = vadd.f32 %v1380, %v1381
  %v1383 = vsel %vm1327, %v656, 0.0
  %v1384 = vadd.f32 %v1382, %v1383
  %v1385 = vsel %vm1327, %v659, 0.0
  %v1386 = vadd.f32 %v1384, %v1385
  %v1387 = vsel %vm1327, %v661, 0.0
  %v1388 = vadd.f32 %v1386, %v1387
  %v1389 = vsel %vm1327, %v664, 0.0
  %v1390 = vadd.f32 %v1388, %v1389
  %v1391 = vsel %vm1327, %v666, 0.0
  %v1392 = vadd.f32 %v1390, %v1391
  %v1393 = vsel %vm1327, %v669, 0.0
  %v1394 = vadd.f32 %v1392, %v1393
  %v1395 = vsel %vm1327, %v671, 0.0
  %v1396 = vadd.f32 %v1394, %v1395
  %v1397 = vrot.slane %v1396, 4
  %v1398 = vadd.f32 %v1396, %v1397
  %v1399 = vrot.slane %v1398, 2
  %v1400 = vadd.f32 %v1398, %v1399
  %v1401 = vrot.slane %v1400, 1
  %v1402 = vadd.f32 %v1400, %v1401
  %v1403 = vadd.f32 %v1365, %v1402
  %v1404 = vsel %vm1327, %v960, 0.0
  %v1405 = vsel %vm1327, %v962, 0.0
  %v1406 = vadd.f32 %v1404, %v1405
  %v1407 = vsel %vm1327, %v965, 0.0
  %v1408 = vadd.f32 %v1406, %v1407
  %v1409 = vsel %vm1327, %v967, 0.0
  %v1410 = vadd.f32 %v1408, %v1409
  %v1411 = vsel %vm1327, %v970, 0.0
  %v1412 = vadd.f32 %v1410, %v1411
  %v1413 = vsel %vm1327, %v972, 0.0
  %v1414 = vadd.f32 %v1412, %v1413
  %v1415 = vsel %vm1327, %v975, 0.0
  %v1416 = vadd.f32 %v1414, %v1415
  %v1417 = vsel %vm1327, %v977, 0.0
  %v1418 = vadd.f32 %v1416, %v1417
  %v1419 = vsel %vm1327, %v980, 0.0
  %v1420 = vadd.f32 %v1418, %v1419
  %v1421 = vsel %vm1327, %v982, 0.0
  %v1422 = vadd.f32 %v1420, %v1421
  %v1423 = vsel %vm1327, %v985, 0.0
  %v1424 = vadd.f32 %v1422, %v1423
  %v1425 = vsel %vm1327, %v987, 0.0
  %v1426 = vadd.f32 %v1424, %v1425
  %v1427 = vsel %vm1327, %v990, 0.0
  %v1428 = vadd.f32 %v1426, %v1427
  %v1429 = vsel %vm1327, %v992, 0.0
  %v1430 = vadd.f32 %v1428, %v1429
  %v1431 = vsel %vm1327, %v995, 0.0
  %v1432 = vadd.f32 %v1430, %v1431
  %v1433 = vsel %vm1327, %v997, 0.0
  %v1434 = vadd.f32 %v1432, %v1433
  %v1435 = vrot.slane %v1434, 4
  %v1436 = vadd.f32 %v1434, %v1435
  %v1437 = vrot.slane %v1436, 2
  %v1438 = vadd.f32 %v1436, %v1437
  %v1439 = vrot.slane %v1438, 1
  %v1440 = vadd.f32 %v1438, %v1439
  %v1441 = vadd.f32 %v1403, %v1440
  %v1442 = vsel %vm1327, %v1286, 0.0
  %v1443 = vsel %vm1327, %v1288, 0.0
  %v1444 = vadd.f32 %v1442, %v1443
  %v1445 = vsel %vm1327, %v1291, 0.0
  %v1446 = vadd.f32 %v1444, %v1445
  %v1447 = vsel %vm1327, %v1293, 0.0
  %v1448 = vadd.f32 %v1446, %v1447
  %v1449 = vsel %vm1327, %v1296, 0.0
  %v1450 = vadd.f32 %v1448, %v1449
  %v1451 = vsel %vm1327, %v1298, 0.0
  %v1452 = vadd.f32 %v1450, %v1451
  %v1453 = vsel %vm1327, %v1301, 0.0
  %v1454 = vadd.f32 %v1452, %v1453
  %v1455 = vsel %vm1327, %v1303, 0.0
  %v1456 = vadd.f32 %v1454, %v1455
  %v1457 = vsel %vm1327, %v1306, 0.0
  %v1458 = vadd.f32 %v1456, %v1457
  %v1459 = vsel %vm1327, %v1308, 0.0
  %v1460 = vadd.f32 %v1458, %v1459
  %v1461 = vsel %vm1327, %v1311, 0.0
  %v1462 = vadd.f32 %v1460, %v1461
  %v1463 = vsel %vm1327, %v1313, 0.0
  %v1464 = vadd.f32 %v1462, %v1463
  %v1465 = vsel %vm1327, %v1316, 0.0
  %v1466 = vadd.f32 %v1464, %v1465
  %v1467 = vsel %vm1327, %v1318, 0.0
  %v1468 = vadd.f32 %v1466, %v1467
  %v1469 = vsel %vm1327, %v1321, 0.0
  %v1470 = vadd.f32 %v1468, %v1469
  %v1471 = vsel %vm1327, %v1323, 0.0
  %v1472 = vadd.f32 %v1470, %v1471
  %v1473 = vrot.slane %v1472, 4
  %v1474 = vadd.f32 %v1472, %v1473
  %v1475 = vrot.slane %v1474, 2
  %v1476 = vadd.f32 %v1474, %v1475
  %v1477 = vrot.slane %v1476, 1
  %v1478 = vadd.f32 %v1476, %v1477
  %v1479 = vadd.f32 %v1441, %v1478
  %v1480 = vrcp.pop 512.0
  %v1481 = vmul.f32 512.0, %v1480
  %v1482 = vsub.f32 1.0, %v1481
  %v1483 = vmul.f32 %v1480, %v1482
  %v1484 = vadd.f32 %v1480, %v1483
  %vm1485 = vweird.f32 %v1480
  %v1486 = vsel %vm1485, %v1480, %v1484
  %v1487 = vmul.f32 %v1479, %v1486
  %v1488 = vsub.f32 %v308, %v1487
  %v1489 = vsub.f32 %v310, %v1487
  %v1490 = vsub.f32 %v313, %v1487
  %v1491 = vsub.f32 %v315, %v1487
  %v1492 = vsub.f32 %v318, %v1487
  %v1493 = vsub.f32 %v320, %v1487
  %v1494 = vsub.f32 %v323, %v1487
  %v1495 = vsub.f32 %v325, %v1487
  %v1496 = vsub.f32 %v328, %v1487
  %v1497 = vsub.f32 %v330, %v1487
  %v1498 = vsub.f32 %v333, %v1487
  %v1499 = vsub.f32 %v335, %v1487
  %v1500 = vsub.f32 %v338, %v1487
  %v1501 = vsub.f32 %v340, %v1487
  %v1502 = vsub.f32 %v343, %v1487
  %v1503 = vsub.f32 %v345, %v1487
  %v1504 = vmul.f32 %v1488, %v1488
  %v1505 = vmul.f32 %v1489, %v1489
  %v1506 = vmul.f32 %v1490, %v1490
  %v1507 = vmul.f32 %v1491, %v1491
  %v1508 = vmul.f32 %v1492, %v1492
  %v1509 = vmul.f32 %v1493, %v1493
  %v1510 = vmul.f32 %v1494, %v1494
  %v1511 = vmul.f32 %v1495, %v1495
  %v1512 = vmul.f32 %v1496, %v1496
  %v1513 = vmul.f32 %v1497, %v1497
  %v1514 = vmul.f32 %v1498, %v1498
  %v1515 = vmul.f32 %v1499, %v1499
  %v1516 = vmul.f32 %v1500, %v1500
  %v1517 = vmul.f32 %v1501, %v1501
  %v1518 = vmul.f32 %v1502, %v1502
  %v1519 = vmul.f32 %v1503, %v1503
  %v1520 = vsel %vm1327, %v1504, 0.0
  %v1521 = vsel %vm1327, %v1505, 0.0
  %v1522 = vadd.f32 %v1520, %v1521
  %v1523 = vsel %vm1327, %v1506, 0.0
  %v1524 = vadd.f32 %v1522, %v1523
  %v1525 = vsel %vm1327, %v1507, 0.0
  %v1526 = vadd.f32 %v1524, %v1525
  %v1527 = vsel %vm1327, %v1508, 0.0
  %v1528 = vadd.f32 %v1526, %v1527
  %v1529 = vsel %vm1327, %v1509, 0.0
  %v1530 = vadd.f32 %v1528, %v1529
  %v1531 = vsel %vm1327, %v1510, 0.0
  %v1532 = vadd.f32 %v1530, %v1531
  %v1533 = vsel %vm1327, %v1511, 0.0
  %v1534 = vadd.f32 %v1532, %v1533
  %v1535 = vsel %vm1327, %v1512, 0.0
  %v1536 = vadd.f32 %v1534, %v1535
  %v1537 = vsel %vm1327, %v1513, 0.0
  %v1538 = vadd.f32 %v1536, %v1537
  %v1539 = vsel %vm1327, %v1514, 0.0
  %v1540 = vadd.f32 %v1538, %v1539
  %v1541 = vsel %vm1327, %v1515, 0.0
  %v1542 = vadd.f32 %v1540, %v1541
  %v1543 = vsel %vm1327, %v1516, 0.0
  %v1544 = vadd.f32 %v1542, %v1543
  %v1545 = vsel %vm1327, %v1517, 0.0
  %v1546 = vadd.f32 %v1544, %v1545
  %v1547 = vsel %vm1327, %v1518, 0.0
  %v1548 = vadd.f32 %v1546, %v1547
  %v1549 = vsel %vm1327, %v1519, 0.0
  %v1550 = vadd.f32 %v1548, %v1549
  %v1551 = vrot.slane %v1550, 4
  %v1552 = vadd.f32 %v1550, %v1551
  %v1553 = vrot.slane %v1552, 2
  %v1554 = vadd.f32 %v1552, %v1553
  %v1555 = vrot.slane %v1554, 1
  %v1556 = vadd.f32 %v1554, %v1555
  %v1557 = vadd.f32 %v1556, 0.0
  %v1558 = vsub.f32 %v634, %v1487
  %v1559 = vsub.f32 %v636, %v1487
  %v1560 = vsub.f32 %v639, %v1487
  %v1561 = vsub.f32 %v641, %v1487
  %v1562 = vsub.f32 %v644, %v1487
  %v1563 = vsub.f32 %v646, %v1487
  %v1564 = vsub.f32 %v649, %v1487
  %v1565 = vsub.f32 %v651, %v1487
  %v1566 = vsub.f32 %v654, %v1487
  %v1567 = vsub.f32 %v656, %v1487
  %v1568 = vsub.f32 %v659, %v1487
  %v1569 = vsub.f32 %v661, %v1487
  %v1570 = vsub.f32 %v664, %v1487
  %v1571 = vsub.f32 %v666, %v1487
  %v1572 = vsub.f32 %v669, %v1487
  %v1573 = vsub.f32 %v671, %v1487
  %v1574 = vmul.f32 %v1558, %v1558
  %v1575 = vmul.f32 %v1559, %v1559
  %v1576 = vmul.f32 %v1560, %v1560
  %v1577 = vmul.f32 %v1561, %v1561
  %v1578 = vmul.f32 %v1562, %v1562
  %v1579 = vmul.f32 %v1563, %v1563
  %v1580 = vmul.f32 %v1564, %v1564
  %v1581 = vmul.f32 %v1565, %v1565
  %v1582 = vmul.f32 %v1566, %v1566
  %v1583 = vmul.f32 %v1567, %v1567
  %v1584 = vmul.f32 %v1568, %v1568
  %v1585 = vmul.f32 %v1569, %v1569
  %v1586 = vmul.f32 %v1570, %v1570
  %v1587 = vmul.f32 %v1571, %v1571
  %v1588 = vmul.f32 %v1572, %v1572
  %v1589 = vmul.f32 %v1573, %v1573
  %v1590 = vsel %vm1327, %v1574, 0.0
  %v1591 = vsel %vm1327, %v1575, 0.0
  %v1592 = vadd.f32 %v1590, %v1591
  %v1593 = vsel %vm1327, %v1576, 0.0
  %v1594 = vadd.f32 %v1592, %v1593
  %v1595 = vsel %vm1327, %v1577, 0.0
  %v1596 = vadd.f32 %v1594, %v1595
  %v1597 = vsel %vm1327, %v1578, 0.0
  %v1598 = vadd.f32 %v1596, %v1597
  %v1599 = vsel %vm1327, %v1579, 0.0
  %v1600 = vadd.f32 %v1598, %v1599
  %v1601 = vsel %vm1327, %v1580, 0.0
  %v1602 = vadd.f32 %v1600, %v1601
  %v1603 = vsel %vm1327, %v1581, 0.0
  %v1604 = vadd.f32 %v1602, %v1603
  %v1605 = vsel %vm1327, %v1582, 0.0
  %v1606 = vadd.f32 %v1604, %v1605
  %v1607 = vsel %vm1327, %v1583, 0.0
  %v1608 = vadd.f32 %v1606, %v1607
  %v1609 = vsel %vm1327, %v1584, 0.0
  %v1610 = vadd.f32 %v1608, %v1609
  %v1611 = vsel %vm1327, %v1585, 0.0
  %v1612 = vadd.f32 %v1610, %v1611
  %v1613 = vsel %vm1327, %v1586, 0.0
  %v1614 = vadd.f32 %v1612, %v1613
  %v1615 = vsel %vm1327, %v1587, 0.0
  %v1616 = vadd.f32 %v1614, %v1615
  %v1617 = vsel %vm1327, %v1588, 0.0
  %v1618 = vadd.f32 %v1616, %v1617
  %v1619 = vsel %vm1327, %v1589, 0.0
  %v1620 = vadd.f32 %v1618, %v1619
  %v1621 = vrot.slane %v1620, 4
  %v1622 = vadd.f32 %v1620, %v1621
  %v1623 = vrot.slane %v1622, 2
  %v1624 = vadd.f32 %v1622, %v1623
  %v1625 = vrot.slane %v1624, 1
  %v1626 = vadd.f32 %v1624, %v1625
  %v1627 = vadd.f32 %v1557, %v1626
  %v1628 = vsub.f32 %v960, %v1487
  %v1629 = vsub.f32 %v962, %v1487
  %v1630 = vsub.f32 %v965, %v1487
  %v1631 = vsub.f32 %v967, %v1487
  %v1632 = vsub.f32 %v970, %v1487
  %v1633 = vsub.f32 %v972, %v1487
  %v1634 = vsub.f32 %v975, %v1487
  %v1635 = vsub.f32 %v977, %v1487
  %v1636 = vsub.f32 %v980, %v1487
  %v1637 = vsub.f32 %v982, %v1487
  %v1638 = vsub.f32 %v985, %v1487
  %v1639 = vsub.f32 %v987, %v1487
  %v1640 = vsub.f32 %v990, %v1487
  %v1641 = vsub.f32 %v992, %v1487
  %v1642 = vsub.f32 %v995, %v1487
  %v1643 = vsub.f32 %v997, %v1487
  %v1644 = vmul.f32 %v1628, %v1628
  %v1645 = vmul.f32 %v1629, %v1629
  %v1646 = vmul.f32 %v1630, %v1630
  %v1647 = vmul.f32 %v1631, %v1631
  %v1648 = vmul.f32 %v1632, %v1632
  %v1649 = vmul.f32 %v1633, %v1633
  %v1650 = vmul.f32 %v1634, %v1634
  %v1651 = vmul.f32 %v1635, %v1635
  %v1652 = vmul.f32 %v1636, %v1636
  %v1653 = vmul.f32 %v1637, %v1637
  %v1654 = vmul.f32 %v1638, %v1638
  %v1655 = vmul.f32 %v1639, %v1639
  %v1656 = vmul.f32 %v1640, %v1640
  %v1657 = vmul.f32 %v1641, %v1641
  %v1658 = vmul.f32 %v1642, %v1642
  %v1659 = vmul.f32 %v1643, %v1643
  %v1660 = vsel %vm1327, %v1644, 0.0
  %v1661 = vsel %vm1327, %v1645, 0.0
  %v1662 = vadd.f32 %v1660, %v1661
  %v1663 = vsel %vm1327, %v1646, 0.0
  %v1664 = vadd.f32 %v1662, %v1663
  %v1665 = vsel %vm1327, %v1647, 0.0
  %v1666 = vadd.f32 %v1664, %v1665
  %v1667 = vsel %vm1327, %v1648, 0.0
  %v1668 = vadd.f32 %v1666, %v1667
  %v1669 = vsel %vm1327, %v1649, 0.0
  %v1670 = vadd.f32 %v1668, %v1669
  %v1671 = vsel %vm1327, %v1650, 0.0
  %v1672 = vadd.f32 %v1670, %v1671
  %v1673 = vsel %vm1327, %v1651, 0.0
  %v1674 = vadd.f32 %v1672, %v1673
  %v1675 = vsel %vm1327, %v1652, 0.0
  %v1676 = vadd.f32 %v1674, %v1675
  %v1677 = vsel %vm1327, %v1653, 0.0
  %v1678 = vadd.f32 %v1676, %v1677
  %v1679 = vsel %vm1327, %v1654, 0.0
  %v1680 = vadd.f32 %v1678, %v1679
  %v1681 = vsel %vm1327, %v1655, 0.0
  %v1682 = vadd.f32 %v1680, %v1681
  %v1683 = vsel %vm1327, %v1656, 0.0
  %v1684 = vadd.f32 %v1682, %v1683
  %v1685 = vsel %vm1327, %v1657, 0.0
  %v1686 = vadd.f32 %v1684, %v1685
  %v1687 = vsel %vm1327, %v1658, 0.0
  %v1688 = vadd.f32 %v1686, %v1687
  %v1689 = vsel %vm1327, %v1659, 0.0
  %v1690 = vadd.f32 %v1688, %v1689
  %v1691 = vrot.slane %v1690, 4
  %v1692 = vadd.f32 %v1690, %v1691
  %v1693 = vrot.slane %v1692, 2
  %v1694 = vadd.f32 %v1692, %v1693
  %v1695 = vrot.slane %v1694, 1
  %v1696 = vadd.f32 %v1694, %v1695
  %v1697 = vadd.f32 %v1627, %v1696
  %v1698 = vsub.f32 %v1286, %v1487
  %v1699 = vsub.f32 %v1288, %v1487
  %v1700 = vsub.f32 %v1291, %v1487
  %v1701 = vsub.f32 %v1293, %v1487
  %v1702 = vsub.f32 %v1296, %v1487
  %v1703 = vsub.f32 %v1298, %v1487
  %v1704 = vsub.f32 %v1301, %v1487
  %v1705 = vsub.f32 %v1303, %v1487
  %v1706 = vsub.f32 %v1306, %v1487
  %v1707 = vsub.f32 %v1308, %v1487
  %v1708 = vsub.f32 %v1311, %v1487
  %v1709 = vsub.f32 %v1313, %v1487
  %v1710 = vsub.f32 %v1316, %v1487
  %v1711 = vsub.f32 %v1318, %v1487
  %v1712 = vsub.f32 %v1321, %v1487
  %v1713 = vsub.f32 %v1323, %v1487
  %v1714 = vmul.f32 %v1698, %v1698
  %v1715 = vmul.f32 %v1699, %v1699
  %v1716 = vmul.f32 %v1700, %v1700
  %v1717 = vmul.f32 %v1701, %v1701
  %v1718 = vmul.f32 %v1702, %v1702
  %v1719 = vmul.f32 %v1703, %v1703
  %v1720 = vmul.f32 %v1704, %v1704
  %v1721 = vmul.f32 %v1705, %v1705
  %v1722 = vmul.f32 %v1706, %v1706
  %v1723 = vmul.f32 %v1707, %v1707
  %v1724 = vmul.f32 %v1708, %v1708
  %v1725 = vmul.f32 %v1709, %v1709
  %v1726 = vmul.f32 %v1710, %v1710
  %v1727 = vmul.f32 %v1711, %v1711
  %v1728 = vmul.f32 %v1712, %v1712
  %v1729 = vmul.f32 %v1713, %v1713
  %v1730 = vsel %vm1327, %v1714, 0.0
  %v1731 = vsel %vm1327, %v1715, 0.0
  %v1732 = vadd.f32 %v1730, %v1731
  %v1733 = vsel %vm1327, %v1716, 0.0
  %v1734 = vadd.f32 %v1732, %v1733
  %v1735 = vsel %vm1327, %v1717, 0.0
  %v1736 = vadd.f32 %v1734, %v1735
  %v1737 = vsel %vm1327, %v1718, 0.0
  %v1738 = vadd.f32 %v1736, %v1737
  %v1739 = vsel %vm1327, %v1719, 0.0
  %v1740 = vadd.f32 %v1738, %v1739
  %v1741 = vsel %vm1327, %v1720, 0.0
  %v1742 = vadd.f32 %v1740, %v1741
  %v1743 = vsel %vm1327, %v1721, 0.0
  %v1744 = vadd.f32 %v1742, %v1743
  %v1745 = vsel %vm1327, %v1722, 0.0
  %v1746 = vadd.f32 %v1744, %v1745
  %v1747 = vsel %vm1327, %v1723, 0.0
  %v1748 = vadd.f32 %v1746, %v1747
  %v1749 = vsel %vm1327, %v1724, 0.0
  %v1750 = vadd.f32 %v1748, %v1749
  %v1751 = vsel %vm1327, %v1725, 0.0
  %v1752 = vadd.f32 %v1750, %v1751
  %v1753 = vsel %vm1327, %v1726, 0.0
  %v1754 = vadd.f32 %v1752, %v1753
  %v1755 = vsel %vm1327, %v1727, 0.0
  %v1756 = vadd.f32 %v1754, %v1755
  %v1757 = vsel %vm1327, %v1728, 0.0
  %v1758 = vadd.f32 %v1756, %v1757
  %v1759 = vsel %vm1327, %v1729, 0.0
  %v1760 = vadd.f32 %v1758, %v1759
  %v1761 = vrot.slane %v1760, 4
  %v1762 = vadd.f32 %v1760, %v1761
  %v1763 = vrot.slane %v1762, 2
  %v1764 = vadd.f32 %v1762, %v1763
  %v1765 = vrot.slane %v1764, 1
  %v1766 = vadd.f32 %v1764, %v1765
  %v1767 = vadd.f32 %v1697, %v1766
  %v1768 = vmul.f32 %v1767, %v1486
  %v1769 = vadd.f32 %v1768, 1e-05
  %v1770 = vrsqrt.pop %v1769
  %v1771 = vmul.f32 %v1770, %v1769
  %v1772 = vmul.f32 %v1771, %v1770
  %v1773 = vmul.f32 0.5, %v1772
  %v1774 = vsub.f32 1.5, %v1773
  %v1775 = vmul.f32 %v1770, %v1774
  %vm1776 = vweird.f32 %v1769
  %vm1777 = vweird.f32 %v1770
  %vm1778 = vmor %vm1776, %vm1777
  %v1779 = vsel %vm1778, %v1770, %v1775
  %v1780 = vmul.f32 %v1325, %v1779
  %v1781 = vmul.f32 %v1487, %v1780
  %v1782 = vsub.f32 %v1326, %v1781
  %v1784 = vperm.slane %v1780, 0
  %v1786 = vmul.f32 %v308, %v1784
  %v1787 = vmul.f32 %v310, %v1784
  %v1788 = vmul.f32 %v313, %v1784
  %v1789 = vmul.f32 %v315, %v1784
  %v1790 = vmul.f32 %v318, %v1784
  %v1791 = vmul.f32 %v320, %v1784
  %v1792 = vmul.f32 %v323, %v1784
  %v1793 = vmul.f32 %v325, %v1784
  %v1794 = vmul.f32 %v328, %v1784
  %v1795 = vmul.f32 %v330, %v1784
  %v1796 = vmul.f32 %v333, %v1784
  %v1797 = vmul.f32 %v335, %v1784
  %v1798 = vmul.f32 %v338, %v1784
  %v1799 = vmul.f32 %v340, %v1784
  %v1800 = vmul.f32 %v343, %v1784
  %v1801 = vmul.f32 %v345, %v1784
  %v1803 = vperm.slane %v1782, 0
  %v1805 = vadd.f32 %v1786, %v1803
  %v1806 = vadd.f32 %v1787, %v1803
  %v1807 = vadd.f32 %v1788, %v1803
  %v1808 = vadd.f32 %v1789, %v1803
  %v1809 = vadd.f32 %v1790, %v1803
  %v1810 = vadd.f32 %v1791, %v1803
  %v1811 = vadd.f32 %v1792, %v1803
  %v1812 = vadd.f32 %v1793, %v1803
  %v1813 = vadd.f32 %v1794, %v1803
  %v1814 = vadd.f32 %v1795, %v1803
  %v1815 = vadd.f32 %v1796, %v1803
  %v1816 = vadd.f32 %v1797, %v1803
  %v1817 = vadd.f32 %v1798, %v1803
  %v1818 = vadd.f32 %v1799, %v1803
  %v1819 = vadd.f32 %v1800, %v1803
  %v1820 = vadd.f32 %v1801, %v1803
  %v1821 = vmul.f32 %v634, %v1784
  %v1822 = vmul.f32 %v636, %v1784
  %v1823 = vmul.f32 %v639, %v1784
  %v1824 = vmul.f32 %v641, %v1784
  %v1825 = vmul.f32 %v644, %v1784
  %v1826 = vmul.f32 %v646, %v1784
  %v1827 = vmul.f32 %v649, %v1784
  %v1828 = vmul.f32 %v651, %v1784
  %v1829 = vmul.f32 %v654, %v1784
  %v1830 = vmul.f32 %v656, %v1784
  %v1831 = vmul.f32 %v659, %v1784
  %v1832 = vmul.f32 %v661, %v1784
  %v1833 = vmul.f32 %v664, %v1784
  %v1834 = vmul.f32 %v666, %v1784
  %v1835 = vmul.f32 %v669, %v1784
  %v1836 = vmul.f32 %v671, %v1784
  %v1837 = vadd.f32 %v1821, %v1803
  %v1838 = vadd.f32 %v1822, %v1803
  %v1839 = vadd.f32 %v1823, %v1803
  %v1840 = vadd.f32 %v1824, %v1803
  %v1841 = vadd.f32 %v1825, %v1803
  %v1842 = vadd.f32 %v1826, %v1803
  %v1843 = vadd.f32 %v1827, %v1803
  %v1844 = vadd.f32 %v1828, %v1803
  %v1845 = vadd.f32 %v1829, %v1803
  %v1846 = vadd.f32 %v1830, %v1803
  %v1847 = vadd.f32 %v1831, %v1803
  %v1848 = vadd.f32 %v1832, %v1803
  %v1849 = vadd.f32 %v1833, %v1803
  %v1850 = vadd.f32 %v1834, %v1803
  %v1851 = vadd.f32 %v1835, %v1803
  %v1852 = vadd.f32 %v1836, %v1803
  %v1853 = vmul.f32 %v960, %v1784
  %v1854 = vmul.f32 %v962, %v1784
  %v1855 = vmul.f32 %v965, %v1784
  %v1856 = vmul.f32 %v967, %v1784
  %v1857 = vmul.f32 %v970, %v1784
  %v1858 = vmul.f32 %v972, %v1784
  %v1859 = vmul.f32 %v975, %v1784
  %v1860 = vmul.f32 %v977, %v1784
  %v1861 = vmul.f32 %v980, %v1784
  %v1862 = vmul.f32 %v982, %v1784
  %v1863 = vmul.f32 %v985, %v1784
  %v1864 = vmul.f32 %v987, %v1784
  %v1865 = vmul.f32 %v990, %v1784
  %v1866 = vmul.f32 %v992, %v1784
  %v1867 = vmul.f32 %v995, %v1784
  %v1868 = vmul.f32 %v997, %v1784
  %v1869 = vadd.f32 %v1853, %v1803
  %v1870 = vadd.f32 %v1854, %v1803
  %v1871 = vadd.f32 %v1855, %v1803
  %v1872 = vadd.f32 %v1856, %v1803
  %v1873 = vadd.f32 %v1857, %v1803
  %v1874 = vadd.f32 %v1858, %v1803
  %v1875 = vadd.f32 %v1859, %v1803
  %v1876 = vadd.f32 %v1860, %v1803
  %v1877 = vadd.f32 %v1861, %v1803
  %v1878 = vadd.f32 %v1862, %v1803
  %v1879 = vadd.f32 %v1863, %v1803
  %v1880 = vadd.f32 %v1864, %v1803
  %v1881 = vadd.f32 %v1865, %v1803
  %v1882 = vadd.f32 %v1866, %v1803
  %v1883 = vadd.f32 %v1867, %v1803
  %v1884 = vadd.f32 %v1868, %v1803
  %v1885 = vmul.f32 %v1286, %v1784
  %v1886 = vmul.f32 %v1288, %v1784
  %v1887 = vmul.f32 %v1291, %v1784
  %v1888 = vmul.f32 %v1293, %v1784
  %v1889 = vmul.f32 %v1296, %v1784
  %v1890 = vmul.f32 %v1298, %v1784
  %v1891 = vmul.f32 %v1301, %v1784
  %v1892 = vmul.f32 %v1303, %v1784
  %v1893 = vmul.f32 %v1306, %v1784
  %v1894 = vmul.f32 %v1308, %v1784
  %v1895 = vmul.f32 %v1311, %v1784
  %v1896 = vmul.f32 %v1313, %v1784
  %v1897 = vmul.f32 %v1316, %v1784
  %v1898 = vmul.f32 %v1318, %v1784
  %v1899 = vmul.f32 %v1321, %v1784
  %v1900 = vmul.f32 %v1323, %v1784
  %v1901 = vadd.f32 %v1885, %v1803
  %v1902 = vadd.f32 %v1886, %v1803
  %v1903 = vadd.f32 %v1887, %v1803
  %v1904 = vadd.f32 %v1888, %v1803
  %v1905 = vadd.f32 %v1889, %v1803
  %v1906 = vadd.f32 %v1890, %v1803
  %v1907 = vadd.f32 %v1891, %v1803
  %v1908 = vadd.f32 %v1892, %v1803
  %v1909 = vadd.f32 %v1893, %v1803
  %v1910 = vadd.f32 %v1894, %v1803
  %v1911 = vadd.f32 %v1895, %v1803
  %v1912 = vadd.f32 %v1896, %v1803
  %v1913 = vadd.f32 %v1897, %v1803
  %v1914 = vadd.f32 %v1898, %v1803
  %v1915 = vadd.f32 %v1899, %v1803
  %v1916 = vadd.f32 %v1900, %v1803
  %v1917 = vmax.f32 %v1805, 0.0
  %v1918 = vmax.f32 %v1806, 0.0
  %v1919 = vmax.f32 %v1807, 0.0
  %v1920 = vmax.f32 %v1808, 0.0
  %v1921 = vmax.f32 %v1809, 0.0
  %v1922 = vmax.f32 %v1810, 0.0
  %v1923 = vmax.f32 %v1811, 0.0
  %v1924 = vmax.f32 %v1812, 0.0
  %v1925 = vmax.f32 %v1813, 0.0
  %v1926 = vmax.f32 %v1814, 0.0
  %v1927 = vmax.f32 %v1815, 0.0
  %v1928 = vmax.f32 %v1816, 0.0
  %v1929 = vmax.f32 %v1817, 0.0
  %v1930 = vmax.f32 %v1818, 0.0
  %v1931 = vmax.f32 %v1819, 0.0
  %v1932 = vmax.f32 %v1820, 0.0
  %v1933 = vmax.f32 %v1837, 0.0
  %v1934 = vmax.f32 %v1838, 0.0
  %v1935 = vmax.f32 %v1839, 0.0
  %v1936 = vmax.f32 %v1840, 0.0
  %v1937 = vmax.f32 %v1841, 0.0
  %v1938 = vmax.f32 %v1842, 0.0
  %v1939 = vmax.f32 %v1843, 0.0
  %v1940 = vmax.f32 %v1844, 0.0
  %v1941 = vmax.f32 %v1845, 0.0
  %v1942 = vmax.f32 %v1846, 0.0
  %v1943 = vmax.f32 %v1847, 0.0
  %v1944 = vmax.f32 %v1848, 0.0
  %v1945 = vmax.f32 %v1849, 0.0
  %v1946 = vmax.f32 %v1850, 0.0
  %v1947 = vmax.f32 %v1851, 0.0
  %v1948 = vmax.f32 %v1852, 0.0
  %v1949 = vmax.f32 %v1869, 0.0
  %v1950 = vmax.f32 %v1870, 0.0
  %v1951 = vmax.f32 %v1871, 0.0
  %v1952 = vmax.f32 %v1872, 0.0
  %v1953 = vmax.f32 %v1873, 0.0
  %v1954 = vmax.f32 %v1874, 0.0
  %v1955 = vmax.f32 %v1875, 0.0
  %v1956 = vmax.f32 %v1876, 0.0
  %v1957 = vmax.f32 %v1877, 0.0
  %v1958 = vmax.f32 %v1878, 0.0
  %v1959 = vmax.f32 %v1879, 0.0
  %v1960 = vmax.f32 %v1880, 0.0
  %v1961 = vmax.f32 %v1881, 0.0
  %v1962 = vmax.f32 %v1882, 0.0
  %v1963 = vmax.f32 %v1883, 0.0
  %v1964 = vmax.f32 %v1884, 0.0
  %v1965 = vmax.f32 %v1901, 0.0
  %v1966 = vmax.f32 %v1902, 0.0
  %v1967 = vmax.f32 %v1903, 0.0
  %v1968 = vmax.f32 %v1904, 0.0
  %v1969 = vmax.f32 %v1905, 0.0
  %v1970 = vmax.f32 %v1906, 0.0
  %v1971 = vmax.f32 %v1907, 0.0
  %v1972 = vmax.f32 %v1908, 0.0
  %v1973 = vmax.f32 %v1909, 0.0
  %v1974 = vmax.f32 %v1910, 0.0
  %v1975 = vmax.f32 %v1911, 0.0
  %v1976 = vmax.f32 %v1912, 0.0
  %v1977 = vmax.f32 %v1913, 0.0
  %v1978 = vmax.f32 %v1914, 0.0
  %v1979 = vmax.f32 %v1915, 0.0
  %v1980 = vmax.f32 %v1916, 0.0
  %1997 = vrot.lane.b32.xlu0 %v1933, 8
  %v1998 = vpop.permute.xlu0 %1997
  %1999 = vrot.lane.b32.xlu0 %v1934, 8
  %v2000 = vpop.permute.xlu0 %1999
  %2001 = vrot.lane.b32.xlu0 %v1935, 8
  %v2002 = vpop.permute.xlu0 %2001
  %2003 = vrot.lane.b32.xlu0 %v1936, 8
  %v2004 = vpop.permute.xlu0 %2003
  %2005 = vrot.lane.b32.xlu0 %v1937, 8
  %v2006 = vpop.permute.xlu0 %2005
  %2007 = vrot.lane.b32.xlu0 %v1938, 8
  %v2008 = vpop.permute.xlu0 %2007
  %2009 = vrot.lane.b32.xlu0 %v1939, 8
  %v2010 = vpop.permute.xlu0 %2009
  %2011 = vrot.lane.b32.xlu0 %v1940, 8
  %v2012 = vpop.permute.xlu0 %2011
  %2013 = vrot.lane.b32.xlu0 %v1941, 8
  %v2014 = vpop.permute.xlu0 %2013
  %2015 = vrot.lane.b32.xlu0 %v1942, 8
  %v2016 = vpop.permute.xlu0 %2015
  %2017 = vrot.lane.b32.xlu0 %v1943, 8
  %v2018 = vpop.permute.xlu0 %2017
  %2019 = vrot.lane.b32.xlu0 %v1944, 8
  %v2020 = vpop.permute.xlu0 %2019
  %2021 = vrot.lane.b32.xlu0 %v1945, 8
  %v2022 = vpop.permute.xlu0 %2021
  %2023 = vrot.lane.b32.xlu0 %v1946, 8
  %v2024 = vpop.permute.xlu0 %2023
  %2025 = vrot.lane.b32.xlu0 %v1947, 8
  %v2026 = vpop.permute.xlu0 %2025
  %2027 = vrot.lane.b32.xlu0 %v1948, 8
  %v2028 = vpop.permute.xlu0 %2027
  %2061 = vrot.lane.b32.xlu0 %v1949, 16
  %v2062 = vpop.permute.xlu0 %2061
  %2063 = vrot.lane.b32.xlu0 %v1950, 16
  %v2064 = vpop.permute.xlu0 %2063
  %2065 = vrot.lane.b32.xlu0 %v1951, 16
  %v2066 = vpop.permute.xlu0 %2065
  %2067 = vrot.lane.b32.xlu0 %v1952, 16
  %v2068 = vpop.permute.xlu0 %2067
  %2069 = vrot.lane.b32.xlu0 %v1953, 16
  %v2070 = vpop.permute.xlu0 %2069
  %2071 = vrot.lane.b32.xlu0 %v1954, 16
  %v2072 = vpop.permute.xlu0 %2071
  %2073 = vrot.lane.b32.xlu0 %v1955, 16
  %v2074 = vpop.permute.xlu0 %2073
  %2075 = vrot.lane.b32.xlu0 %v1956, 16
  %v2076 = vpop.permute.xlu0 %2075
  %2077 = vrot.lane.b32.xlu0 %v1957, 16
  %v2078 = vpop.permute.xlu0 %2077
  %2079 = vrot.lane.b32.xlu0 %v1958, 16
  %v2080 = vpop.permute.xlu0 %2079
  %2081 = vrot.lane.b32.xlu0 %v1959, 16
  %v2082 = vpop.permute.xlu0 %2081
  %2083 = vrot.lane.b32.xlu0 %v1960, 16
  %v2084 = vpop.permute.xlu0 %2083
  %2085 = vrot.lane.b32.xlu0 %v1961, 16
  %v2086 = vpop.permute.xlu0 %2085
  %2087 = vrot.lane.b32.xlu0 %v1962, 16
  %v2088 = vpop.permute.xlu0 %2087
  %2089 = vrot.lane.b32.xlu0 %v1963, 16
  %v2090 = vpop.permute.xlu0 %2089
  %2091 = vrot.lane.b32.xlu0 %v1964, 16
  %v2092 = vpop.permute.xlu0 %2091
  %2125 = vrot.lane.b32.xlu0 %v1965, 24
  %v2126 = vpop.permute.xlu0 %2125
  %2127 = vrot.lane.b32.xlu0 %v1966, 24
  %v2128 = vpop.permute.xlu0 %2127
  %2129 = vrot.lane.b32.xlu0 %v1967, 24
  %v2130 = vpop.permute.xlu0 %2129
  %2131 = vrot.lane.b32.xlu0 %v1968, 24
  %v2132 = vpop.permute.xlu0 %2131
  %2133 = vrot.lane.b32.xlu0 %v1969, 24
  %v2134 = vpop.permute.xlu0 %2133
  %2135 = vrot.lane.b32.xlu0 %v1970, 24
  %v2136 = vpop.permute.xlu0 %2135
  %2137 = vrot.lane.b32.xlu0 %v1971, 24
  %v2138 = vpop.permute.xlu0 %2137
  %2139 = vrot.lane.b32.xlu0 %v1972, 24
  %v2140 = vpop.permute.xlu0 %2139
  %2141 = vrot.lane.b32.xlu0 %v1973, 24
  %v2142 = vpop.permute.xlu0 %2141
  %2143 = vrot.lane.b32.xlu0 %v1974, 24
  %v2144 = vpop.permute.xlu0 %2143
  %2145 = vrot.lane.b32.xlu0 %v1975, 24
  %v2146 = vpop.permute.xlu0 %2145
  %2147 = vrot.lane.b32.xlu0 %v1976, 24
  %v2148 = vpop.permute.xlu0 %2147
  %2149 = vrot.lane.b32.xlu0 %v1977, 24
  %v2150 = vpop.permute.xlu0 %2149
  %2151 = vrot.lane.b32.xlu0 %v1978, 24
  %v2152 = vpop.permute.xlu0 %2151
  %2153 = vrot.lane.b32.xlu0 %v1979, 24
  %v2154 = vpop.permute.xlu0 %2153
  %2155 = vrot.lane.b32.xlu0 %v1980, 24
  %v2156 = vpop.permute.xlu0 %2155
  %v2173 = vsel %vm1327, %v1917, %v1998
  %v2174 = vsel %vm1327, %v1918, %v2000
  %v2175 = vsel %vm1327, %v1919, %v2002
  %v2176 = vsel %vm1327, %v1920, %v2004
  %v2177 = vsel %vm1327, %v1921, %v2006
  %v2178 = vsel %vm1327, %v1922, %v2008
  %v2179 = vsel %vm1327, %v1923, %v2010
  %v2180 = vsel %vm1327, %v1924, %v2012
  %v2181 = vsel %vm1327, %v1925, %v2014
  %v2182 = vsel %vm1327, %v1926, %v2016
  %v2183 = vsel %vm1327, %v1927, %v2018
  %v2184 = vsel %vm1327, %v1928, %v2020
  %v2185 = vsel %vm1327, %v1929, %v2022
  %v2186 = vsel %vm1327, %v1930, %v2024
  %v2187 = vsel %vm1327, %v1931, %v2026
  %v2188 = vsel %vm1327, %v1932, %v2028
  %vm2189 = vcmask 130048
  %v2190 = vsel %vm2189, %v2173, %v2062
  %v2191 = vsel %vm2189, %v2174, %v2064
  %v2192 = vsel %vm2189, %v2175, %v2066
  %v2193 = vsel %vm2189, %v2176, %v2068
  %v2194 = vsel %vm2189, %v2177, %v2070
  %v2195 = vsel %vm2189, %v2178, %v2072
  %v2196 = vsel %vm2189, %v2179, %v2074
  %v2197 = vsel %vm2189, %v2180, %v2076
  %v2198 = vsel %vm2189, %v2181, %v2078
  %v2199 = vsel %vm2189, %v2182, %v2080
  %v2200 = vsel %vm2189, %v2183, %v2082
  %v2201 = vsel %vm2189, %v2184, %v2084
  %v2202 = vsel %vm2189, %v2185, %v2086
  %v2203 = vsel %vm2189, %v2186, %v2088
  %v2204 = vsel %vm2189, %v2187, %v2090
  %v2205 = vsel %vm2189, %v2188, %v2092
  %vm2206 = vcmask 195584
  %v2207 = vsel %vm2206, %v2190, %v2126
  %v2208 = vsel %vm2206, %v2191, %v2128
  %v2209 = vsel %vm2206, %v2192, %v2130
  %v2210 = vsel %vm2206, %v2193, %v2132
  %v2211 = vsel %vm2206, %v2194, %v2134
  %v2212 = vsel %vm2206, %v2195, %v2136
  %v2213 = vsel %vm2206, %v2196, %v2138
  %v2214 = vsel %vm2206, %v2197, %v2140
  %v2215 = vsel %vm2206, %v2198, %v2142
  %v2216 = vsel %vm2206, %v2199, %v2144
  %v2217 = vsel %vm2206, %v2200, %v2146
  %v2218 = vsel %vm2206, %v2201, %v2148
  %v2219 = vsel %vm2206, %v2202, %v2150
  %v2220 = vsel %vm2206, %v2203, %v2152
  %v2221 = vsel %vm2206, %v2204, %v2154
  %v2222 = vsel %vm2206, %v2205, %v2156
  %vm2223 = vcmask 261120
  %2224 = vst.msk [vmem:[%s6] sm:$0xff] %vm2223, %v2207
  %2225 = vst.msk [vmem:[%s6 + $0x8] sm:$0xff] %vm2223, %v2208
  %2226 = vst.msk [vmem:[%s6 + $0x10] sm:$0xff] %vm2223, %v2209
  %2227 = vst.msk [vmem:[%s6 + $0x18] sm:$0xff] %vm2223, %v2210
  %2228 = vst.msk [vmem:[%s6 + $0x20] sm:$0xff] %vm2223, %v2211
  %2229 = vst.msk [vmem:[%s6 + $0x28] sm:$0xff] %vm2223, %v2212
  %2230 = vst.msk [vmem:[%s6 + $0x30] sm:$0xff] %vm2223, %v2213
  %2231 = vst.msk [vmem:[%s6 + $0x38] sm:$0xff] %vm2223, %v2214
  %2232 = vst.msk [vmem:[%s6 + $0x40] sm:$0xff] %vm2223, %v2215
  %2233 = vst.msk [vmem:[%s6 + $0x48] sm:$0xff] %vm2223, %v2216
  %2234 = vst.msk [vmem:[%s6 + $0x50] sm:$0xff] %vm2223, %v2217
  %2235 = vst.msk [vmem:[%s6 + $0x58] sm:$0xff] %vm2223, %v2218
  %2236 = vst.msk [vmem:[%s6 + $0x60] sm:$0xff] %vm2223, %v2219
  %2237 = vst.msk [vmem:[%s6 + $0x68] sm:$0xff] %vm2223, %v2220
  %2238 = vst.msk [vmem:[%s6 + $0x70] sm:$0xff] %vm2223, %v2221
  %2239 = vst.msk [vmem:[%s6 + $0x78] sm:$0xff] %vm2223, %v2222
  // Predicated region
  $region26: #{unet_forward.14} parent=0 // pred_check
    _
  $region27: #{unet_forward.14} parent=0 // pred_check_branch
    %2241 = sbr.rel (0) target = $region29
  $region28: #{unet_forward.14} parent=0 // pred_region
    _
  $region29: #{unet_forward.14} parent=0 // pred_fallthru
    _
  // Predicated region
  $region30: #{unet_forward.14} parent=0 // pred_check
    _
  $region31: #{unet_forward.14} parent=0 // pred_check_branch
    %2243 = sbr.rel (0) target = $region33
  $region32: #{unet_forward.14} parent=0 // pred_region
    _
  $region33: #{unet_forward.14} parent=0 // pred_fallthru
    _

// kernel: unet_forward.15
$region0: #{unet_forward.15}
  #allocation0 [shape = 'u32[]', space=smem, size = 0x4, offset = 0x4, fixed_abs, tag = 'smem constant byte address 0x4 - core index']
  #allocation1 [shape = 'u32[72,128]{1,0:T(1,128)}', space=vmem, size = 0x9000, scoped, tag = 'internal scratch']
  %s0 = inlined_call_operand.vmem [shape: bf16[4,512,32], index: 0, kind: input, shape index: {}]
  %s1 = inlined_call_operand.vmem [shape: bf16[4,512,32], index: 1, kind: input, shape index: {}]
  %s2 = inlined_call_operand.vmem [shape: bf16[4,32,3], index: 2, kind: input, shape index: {}]
  %s3 = inlined_call_operand.vmem [shape: bf16[4,32,3], index: 3, kind: input, shape index: {}]
  %s4 = inlined_call_operand.vmem [shape: f32[1,3], index: 4, kind: input, shape index: {}]
  %s5 = inlined_call_operand.vmem [shape: f32[512,12], index: 5, kind: output, shape index: {}]
  %s6 = sld [smem:[#allocation0]]
  $region30: #{unet_forward.15} parent=0
    _
  %s8 = ssub.s32 1, %s6
  %s9 = scalar_select 0, %s8, %s6
  // Predicated region
  $region2: #{unet_forward.15} parent=0 // pred_check
    _
  $region3: #{unet_forward.15} parent=0 // pred_check_branch
    %11 = sbr.rel (0) target = $region5
  $region4: #{unet_forward.15} parent=0 // pred_region
    _
  $region5: #{unet_forward.15} parent=0 // pred_fallthru
    _
  // Predicated region
  $region6: #{unet_forward.15} parent=0 // pred_check
    _
  $region7: #{unet_forward.15} parent=0 // pred_check_branch
    %13 = sbr.rel (0) target = $region9
  $region8: #{unet_forward.15} parent=0 // pred_region
    _
  $region9: #{unet_forward.15} parent=0 // pred_fallthru
    _
  // Predicated region
  $region10: #{unet_forward.15} parent=0 // pred_check
    _
  $region11: #{unet_forward.15} parent=0 // pred_check_branch
    %15 = sbr.rel (0) target = $region13
  $region12: #{unet_forward.15} parent=0 // pred_region
    _
  $region13: #{unet_forward.15} parent=0 // pred_fallthru
    _
  // Predicated region
  $region14: #{unet_forward.15} parent=0 // pred_check
    _
  $region15: #{unet_forward.15} parent=0 // pred_check_branch
    %17 = sbr.rel (0) target = $region17
  $region16: #{unet_forward.15} parent=0 // pred_region
    _
  $region17: #{unet_forward.15} parent=0 // pred_fallthru
    _
  // Predicated region
  $region18: #{unet_forward.15} parent=0 // pred_check
    _
  $region19: #{unet_forward.15} parent=0 // pred_check_branch
    %19 = sbr.rel (0) target = $region21
  $region20: #{unet_forward.15} parent=0 // pred_region
    _
  $region21: #{unet_forward.15} parent=0 // pred_fallthru
    _
  %v21 = vld [vmem:[%s0] sm:$0xf]
  %v22 = vld [vmem:[%s0 + $0x4] sm:$0xf]
  %v23 = vld [vmem:[%s0 + $0x8] sm:$0xf]
  %v24 = vld [vmem:[%s0 + $0xc] sm:$0xf]
  %v25 = vld [vmem:[%s0 + $0x10] sm:$0xf]
  %v26 = vld [vmem:[%s0 + $0x14] sm:$0xf]
  %v27 = vld [vmem:[%s0 + $0x18] sm:$0xf]
  %v28 = vld [vmem:[%s0 + $0x1c] sm:$0xf]
  %v29 = vld [vmem:[%s0 + $0x20] sm:$0xf]
  %v30 = vld [vmem:[%s0 + $0x24] sm:$0xf]
  %v31 = vld [vmem:[%s0 + $0x28] sm:$0xf]
  %v32 = vld [vmem:[%s0 + $0x2c] sm:$0xf]
  %v33 = vld [vmem:[%s0 + $0x30] sm:$0xf]
  %v34 = vld [vmem:[%s0 + $0x34] sm:$0xf]
  %v35 = vld [vmem:[%s0 + $0x38] sm:$0xf]
  %v36 = vld [vmem:[%s0 + $0x3c] sm:$0xf]
  %v37 = vld [vmem:[%s0 + $0x40] sm:$0xf]
  %v38 = vld [vmem:[%s0 + $0x44] sm:$0xf]
  %v39 = vld [vmem:[%s0 + $0x48] sm:$0xf]
  %v40 = vld [vmem:[%s0 + $0x4c] sm:$0xf]
  %v41 = vld [vmem:[%s0 + $0x50] sm:$0xf]
  %v42 = vld [vmem:[%s0 + $0x54] sm:$0xf]
  %v43 = vld [vmem:[%s0 + $0x58] sm:$0xf]
  %v44 = vld [vmem:[%s0 + $0x5c] sm:$0xf]
  %v45 = vld [vmem:[%s0 + $0x60] sm:$0xf]
  %v46 = vld [vmem:[%s0 + $0x64] sm:$0xf]
  %v47 = vld [vmem:[%s0 + $0x68] sm:$0xf]
  %v48 = vld [vmem:[%s0 + $0x6c] sm:$0xf]
  %v49 = vld [vmem:[%s0 + $0x70] sm:$0xf]
  %v50 = vld [vmem:[%s0 + $0x74] sm:$0xf]
  %v51 = vld [vmem:[%s0 + $0x78] sm:$0xf]
  %v52 = vld [vmem:[%s0 + $0x7c] sm:$0xf]
  %v53 = vld [vmem:[%s0 + $0x80] sm:$0xf]
  %v54 = vld [vmem:[%s0 + $0x84] sm:$0xf]
  %v55 = vld [vmem:[%s0 + $0x88] sm:$0xf]
  %v56 = vld [vmem:[%s0 + $0x8c] sm:$0xf]
  %v57 = vld [vmem:[%s0 + $0x90] sm:$0xf]
  %v58 = vld [vmem:[%s0 + $0x94] sm:$0xf]
  %v59 = vld [vmem:[%s0 + $0x98] sm:$0xf]
  %v60 = vld [vmem:[%s0 + $0x9c] sm:$0xf]
  %v61 = vld [vmem:[%s0 + $0xa0] sm:$0xf]
  %v62 = vld [vmem:[%s0 + $0xa4] sm:$0xf]
  %v63 = vld [vmem:[%s0 + $0xa8] sm:$0xf]
  %v64 = vld [vmem:[%s0 + $0xac] sm:$0xf]
  %v65 = vld [vmem:[%s0 + $0xb0] sm:$0xf]
  %v66 = vld [vmem:[%s0 + $0xb4] sm:$0xf]
  %v67 = vld [vmem:[%s0 + $0xb8] sm:$0xf]
  %v68 = vld [vmem:[%s0 + $0xbc] sm:$0xf]
  %v69 = vld [vmem:[%s0 + $0xc0] sm:$0xf]
  %v70 = vld [vmem:[%s0 + $0xc4] sm:$0xf]
  %v71 = vld [vmem:[%s0 + $0xc8] sm:$0xf]
  %v72 = vld [vmem:[%s0 + $0xcc] sm:$0xf]
  %v73 = vld [vmem:[%s0 + $0xd0] sm:$0xf]
  %v74 = vld [vmem:[%s0 + $0xd4] sm:$0xf]
  %v75 = vld [vmem:[%s0 + $0xd8] sm:$0xf]
  %v76 = vld [vmem:[%s0 + $0xdc] sm:$0xf]
  %v77 = vld [vmem:[%s0 + $0xe0] sm:$0xf]
  %v78 = vld [vmem:[%s0 + $0xe4] sm:$0xf]
  %v79 = vld [vmem:[%s0 + $0xe8] sm:$0xf]
  %v80 = vld [vmem:[%s0 + $0xec] sm:$0xf]
  %v81 = vld [vmem:[%s0 + $0xf0] sm:$0xf]
  %v82 = vld [vmem:[%s0 + $0xf4] sm:$0xf]
  %v83 = vld [vmem:[%s0 + $0xf8] sm:$0xf]
  %v84 = vld [vmem:[%s0 + $0xfc] sm:$0xf]
  %v85 = vld [vmem:[%s2] sm:$0xf]
  %v86 = vld [vmem:[%s2 + $0x4] sm:$0xf]
  %v87 = vld [vmem:[%s2 + $0x8] sm:$0xf]
  %v88 = vld [vmem:[%s2 + $0xc] sm:$0xf]
  %v89 = vld [vmem:[%s1] sm:$0xf]
  %v90 = vld [vmem:[%s1 + $0x4] sm:$0xf]
  %v91 = vld [vmem:[%s1 + $0x8] sm:$0xf]
  %v92 = vld [vmem:[%s1 + $0xc] sm:$0xf]
  %v93 = vld [vmem:[%s1 + $0x10] sm:$0xf]
  %v94 = vld [vmem:[%s1 + $0x14] sm:$0xf]
  %v95 = vld [vmem:[%s1 + $0x18] sm:$0xf]
  %v96 = vld [vmem:[%s1 + $0x1c] sm:$0xf]
  %v97 = vld [vmem:[%s1 + $0x20] sm:$0xf]
  %v98 = vld [vmem:[%s1 + $0x24] sm:$0xf]
  %v99 = vld [vmem:[%s1 + $0x28] sm:$0xf]
  %v100 = vld [vmem:[%s1 + $0x2c] sm:$0xf]
  %v101 = vld [vmem:[%s1 + $0x30] sm:$0xf]
  %v102 = vld [vmem:[%s1 + $0x34] sm:$0xf]
  %v103 = vld [vmem:[%s1 + $0x38] sm:$0xf]
  %v104 = vld [vmem:[%s1 + $0x3c] sm:$0xf]
  %v105 = vld [vmem:[%s1 + $0x40] sm:$0xf]
  %v106 = vld [vmem:[%s1 + $0x44] sm:$0xf]
  %v107 = vld [vmem:[%s1 + $0x48] sm:$0xf]
  %v108 = vld [vmem:[%s1 + $0x4c] sm:$0xf]
  %v109 = vld [vmem:[%s1 + $0x50] sm:$0xf]
  %v110 = vld [vmem:[%s1 + $0x54] sm:$0xf]
  %v111 = vld [vmem:[%s1 + $0x58] sm:$0xf]
  %v112 = vld [vmem:[%s1 + $0x5c] sm:$0xf]
  %v113 = vld [vmem:[%s1 + $0x60] sm:$0xf]
  %v114 = vld [vmem:[%s1 + $0x64] sm:$0xf]
  %v115 = vld [vmem:[%s1 + $0x68] sm:$0xf]
  %v116 = vld [vmem:[%s1 + $0x6c] sm:$0xf]
  %v117 = vld [vmem:[%s1 + $0x70] sm:$0xf]
  %v118 = vld [vmem:[%s1 + $0x74] sm:$0xf]
  %v119 = vld [vmem:[%s1 + $0x78] sm:$0xf]
  %v120 = vld [vmem:[%s1 + $0x7c] sm:$0xf]
  %v121 = vld [vmem:[%s1 + $0x80] sm:$0xf]
  %v122 = vld [vmem:[%s1 + $0x84] sm:$0xf]
  %v123 = vld [vmem:[%s1 + $0x88] sm:$0xf]
  %v124 = vld [vmem:[%s1 + $0x8c] sm:$0xf]
  %v125 = vld [vmem:[%s1 + $0x90] sm:$0xf]
  %v126 = vld [vmem:[%s1 + $0x94] sm:$0xf]
  %v127 = vld [vmem:[%s1 + $0x98] sm:$0xf]
  %v128 = vld [vmem:[%s1 + $0x9c] sm:$0xf]
  %v129 = vld [vmem:[%s1 + $0xa0] sm:$0xf]
  %v130 = vld [vmem:[%s1 + $0xa4] sm:$0xf]
  %v131 = vld [vmem:[%s1 + $0xa8] sm:$0xf]
  %v132 = vld [vmem:[%s1 + $0xac] sm:$0xf]
  %v133 = vld [vmem:[%s1 + $0xb0] sm:$0xf]
  %v134 = vld [vmem:[%s1 + $0xb4] sm:$0xf]
  %v135 = vld [vmem:[%s1 + $0xb8] sm:$0xf]
  %v136 = vld [vmem:[%s1 + $0xbc] sm:$0xf]
  %v137 = vld [vmem:[%s1 + $0xc0] sm:$0xf]
  %v138 = vld [vmem:[%s1 + $0xc4] sm:$0xf]
  %v139 = vld [vmem:[%s1 + $0xc8] sm:$0xf]
  %v140 = vld [vmem:[%s1 + $0xcc] sm:$0xf]
  %v141 = vld [vmem:[%s1 + $0xd0] sm:$0xf]
  %v142 = vld [vmem:[%s1 + $0xd4] sm:$0xf]
  %v143 = vld [vmem:[%s1 + $0xd8] sm:$0xf]
  %v144 = vld [vmem:[%s1 + $0xdc] sm:$0xf]
  %v145 = vld [vmem:[%s1 + $0xe0] sm:$0xf]
  %v146 = vld [vmem:[%s1 + $0xe4] sm:$0xf]
  %v147 = vld [vmem:[%s1 + $0xe8] sm:$0xf]
  %v148 = vld [vmem:[%s1 + $0xec] sm:$0xf]
  %v149 = vld [vmem:[%s1 + $0xf0] sm:$0xf]
  %v150 = vld [vmem:[%s1 + $0xf4] sm:$0xf]
  %v151 = vld [vmem:[%s1 + $0xf8] sm:$0xf]
  %v152 = vld [vmem:[%s1 + $0xfc] sm:$0xf]
  %v153 = vld [vmem:[%s3] sm:$0xf]
  %v154 = vld [vmem:[%s3 + $0x4] sm:$0xf]
  %v155 = vld [vmem:[%s3 + $0x8] sm:$0xf]
  %v156 = vld [vmem:[%s3 + $0xc] sm:$0xf]
  %v221 = vunpack.c.l.b16 %v89
  %v222 = vunpack.c.l.b16 %v90
  %v223 = vunpack.c.l.b16 %v91
  %v224 = vunpack.c.l.b16 %v92
  %v225 = vunpack.c.l.b16 %v93
  %v226 = vunpack.c.l.b16 %v94
  %v227 = vunpack.c.l.b16 %v95
  %v228 = vunpack.c.l.b16 %v96
  %v229 = vunpack.c.l.b16 %v97
  %v230 = vunpack.c.l.b16 %v98
  %v231 = vunpack.c.l.b16 %v99
  %v232 = vunpack.c.l.b16 %v100
  %v233 = vunpack.c.l.b16 %v101
  %v234 = vunpack.c.l.b16 %v102
  %v235 = vunpack.c.l.b16 %v103
  %v236 = vunpack.c.l.b16 %v104
  %v237 = vunpack.c.l.b16 %v105
  %v238 = vunpack.c.l.b16 %v106
  %v239 = vunpack.c.l.b16 %v107
  %v240 = vunpack.c.l.b16 %v108
  %v241 = vunpack.c.l.b16 %v109
  %v242 = vunpack.c.l.b16 %v110
  %v243 = vunpack.c.l.b16 %v111
  %v244 = vunpack.c.l.b16 %v112
  %v245 = vunpack.c.l.b16 %v113
  %v246 = vunpack.c.l.b16 %v114
  %v247 = vunpack.c.l.b16 %v115
  %v248 = vunpack.c.l.b16 %v116
  %v249 = vunpack.c.l.b16 %v117
  %v250 = vunpack.c.l.b16 %v118
  %v251 = vunpack.c.l.b16 %v119
  %v252 = vunpack.c.l.b16 %v120
  %v253 = vunpack.c.l.b16 %v121
  %v254 = vunpack.c.l.b16 %v122
  %v255 = vunpack.c.l.b16 %v123
  %v256 = vunpack.c.l.b16 %v124
  %v257 = vunpack.c.l.b16 %v125
  %v258 = vunpack.c.l.b16 %v126
  %v259 = vunpack.c.l.b16 %v127
  %v260 = vunpack.c.l.b16 %v128
  %v261 = vunpack.c.l.b16 %v129
  %v262 = vunpack.c.l.b16 %v130
  %v263 = vunpack.c.l.b16 %v131
  %v264 = vunpack.c.l.b16 %v132
  %v265 = vunpack.c.l.b16 %v133
  %v266 = vunpack.c.l.b16 %v134
  %v267 = vunpack.c.l.b16 %v135
  %v268 = vunpack.c.l.b16 %v136
  %v269 = vunpack.c.l.b16 %v137
  %v270 = vunpack.c.l.b16 %v138
  %v271 = vunpack.c.l.b16 %v139
  %v272 = vunpack.c.l.b16 %v140
  %v273 = vunpack.c.l.b16 %v141
  %v274 = vunpack.c.l.b16 %v142
  %v275 = vunpack.c.l.b16 %v143
  %v276 = vunpack.c.l.b16 %v144
  %v277 = vunpack.c.l.b16 %v145
  %v278 = vunpack.c.l.b16 %v146
  %v279 = vunpack.c.l.b16 %v147
  %v280 = vunpack.c.l.b16 %v148
  %v281 = vunpack.c.l.b16 %v149
  %v282 = vunpack.c.l.b16 %v150
  %v283 = vunpack.c.l.b16 %v151
  %v284 = vunpack.c.l.b16 %v152
  %v285 = vpack.c.b16 %v222, %v221
  %v286 = vpack.c.b16 %v224, %v223
  %v287 = vpack.c.b16 %v226, %v225
  %v288 = vpack.c.b16 %v228, %v227
  %v289 = vpack.c.b16 %v230, %v229
  %v290 = vpack.c.b16 %v232, %v231
  %v291 = vpack.c.b16 %v234, %v233
  %v292 = vpack.c.b16 %v236, %v235
  %v293 = vpack.c.b16 %v238, %v237
  %v294 = vpack.c.b16 %v240, %v239
  %v295 = vpack.c.b16 %v242, %v241
  %v296 = vpack.c.b16 %v244, %v243
  %v297 = vpack.c.b16 %v246, %v245
  %v298 = vpack.c.b16 %v248, %v247
  %v299 = vpack.c.b16 %v250, %v249
  %v300 = vpack.c.b16 %v252, %v251
  %v301 = vpack.c.b16 %v254, %v253
  %v302 = vpack.c.b16 %v256, %v255
  %v303 = vpack.c.b16 %v258, %v257
  %v304 = vpack.c.b16 %v260, %v259
  %v305 = vpack.c.b16 %v262, %v261
  %v306 = vpack.c.b16 %v264, %v263
  %v307 = vpack.c.b16 %v266, %v265
  %v308 = vpack.c.b16 %v268, %v267
  %v309 = vpack.c.b16 %v270, %v269
  %v310 = vpack.c.b16 %v272, %v271
  %v311 = vpack.c.b16 %v274, %v273
  %v312 = vpack.c.b16 %v276, %v275
  %v313 = vpack.c.b16 %v278, %v277
  %v314 = vpack.c.b16 %v280, %v279
  %v315 = vpack.c.b16 %v282, %v281
  %v316 = vpack.c.b16 %v284, %v283
  %v321 = vunpack.c.l.b16 %v153
  %v322 = vunpack.c.l.b16 %v154
  %v323 = vunpack.c.l.b16 %v155
  %v324 = vunpack.c.l.b16 %v156
  %v325 = vpack.c.b16 %v322, %v321
  %v326 = vpack.c.b16 %v324, %v323
  %vm329 = vcmask 261120
  %v331 = vsel %vm329, %v285, 0
  %v334 = vsel %vm329, %v286, 0
  %v337 = vsel %vm329, %v287, 0
  %v340 = vsel %vm329, %v288, 0
  %v343 = vsel %vm329, %v289, 0
  %v346 = vsel %vm329, %v290, 0
  %v349 = vsel %vm329, %v291, 0
  %v352 = vsel %vm329, %v292, 0
  %v355 = vsel %vm329, %v293, 0
  %v358 = vsel %vm329, %v294, 0
  %v361 = vsel %vm329, %v295, 0
  %v364 = vsel %vm329, %v296, 0
  %v367 = vsel %vm329, %v297, 0
  %v370 = vsel %vm329, %v298, 0
  %v373 = vsel %vm329, %v299, 0
  %v376 = vsel %vm329, %v300, 0
  %v379 = vsel %vm329, %v301, 0
  %v382 = vsel %vm329, %v302, 0
  %v385 = vsel %vm329, %v303, 0
  %v388 = vsel %vm329, %v304, 0
  %v391 = vsel %vm329, %v305, 0
  %v394 = vsel %vm329, %v306, 0
  %v397 = vsel %vm329, %v307, 0
  %v400 = vsel %vm329, %v308, 0
  %v403 = vsel %vm329, %v309, 0
  %v406 = vsel %vm329, %v310, 0
  %v409 = vsel %vm329, %v311, 0
  %v412 = vsel %vm329, %v312, 0
  %v415 = vsel %vm329, %v313, 0
  %v418 = vsel %vm329, %v314, 0
  %v421 = vsel %vm329, %v315, 0
  %v424 = vsel %vm329, %v316, 0
  %426 = vmatpush.bf16.msra.mxu0 0
  %427 = vmatpush.bf16.msra.mxu0 0
  %428 = vmatpush.bf16.msra.mxu0 0
  %429 = vmatpush.bf16.msra.mxu0 0
  %430 = vmatpush.bf16.msra.mxu0 0
  %431 = vmatpush.bf16.msra.mxu0 0
  %432 = vmatpush.bf16.msra.mxu0 %v326
  %433 = vmatpush.bf16.msra.mxu0 %v325
  %434 = vmatmul.bf16.gmra.mxu0 %v331
  %v435 = vpop.f32.mrf.mxu0
  %v436 = vadd.f32 0.0, %v435
  %v437 = vpop.f32.mrf.mxu0
  %v438 = vadd.f32 0.0, %v437
  %439 = vmatmul.bf16.gmra.mxu0 %v334
  %v440 = vpop.f32.mrf.mxu0
  %v441 = vadd.f32 0.0, %v440
  %v442 = vpop.f32.mrf.mxu0
  %v443 = vadd.f32 0.0, %v442
  %444 = vmatmul.bf16.gmra.mxu0 %v337
  %v445 = vpop.f32.mrf.mxu0
  %v446 = vadd.f32 0.0, %v445
  %v447 = vpop.f32.mrf.mxu0
  %v448 = vadd.f32 0.0, %v447
  %449 = vmatmul.bf16.gmra.mxu0 %v340
  %v450 = vpop.f32.mrf.mxu0
  %v451 = vadd.f32 0.0, %v450
  %v452 = vpop.f32.mrf.mxu0
  %v453 = vadd.f32 0.0, %v452
  %454 = vmatmul.bf16.gmra.mxu0 %v343
  %v455 = vpop.f32.mrf.mxu0
  %v456 = vadd.f32 0.0, %v455
  %v457 = vpop.f32.mrf.mxu0
  %v458 = vadd.f32 0.0, %v457
  %459 = vmatmul.bf16.gmra.mxu0 %v346
  %v460 = vpop.f32.mrf.mxu0
  %v461 = vadd.f32 0.0, %v460
  %v462 = vpop.f32.mrf.mxu0
  %v463 = vadd.f32 0.0, %v462
  %464 = vmatmul.bf16.gmra.mxu0 %v349
  %v465 = vpop.f32.mrf.mxu0
  %v466 = vadd.f32 0.0, %v465
  %v467 = vpop.f32.mrf.mxu0
  %v468 = vadd.f32 0.0, %v467
  %469 = vmatmul.bf16.gmra.mxu0 %v352
  %v470 = vpop.f32.mrf.mxu0
  %v471 = vadd.f32 0.0, %v470
  %v472 = vpop.f32.mrf.mxu0
  %v473 = vadd.f32 0.0, %v472
  %474 = vmatmul.bf16.gmra.mxu0 %v355
  %v475 = vpop.f32.mrf.mxu0
  %v476 = vadd.f32 0.0, %v475
  %v477 = vpop.f32.mrf.mxu0
  %v478 = vadd.f32 0.0, %v477
  %479 = vmatmul.bf16.gmra.mxu0 %v358
  %v480 = vpop.f32.mrf.mxu0
  %v481 = vadd.f32 0.0, %v480
  %v482 = vpop.f32.mrf.mxu0
  %v483 = vadd.f32 0.0, %v482
  %484 = vmatmul.bf16.gmra.mxu0 %v361
  %v485 = vpop.f32.mrf.mxu0
  %v486 = vadd.f32 0.0, %v485
  %v487 = vpop.f32.mrf.mxu0
  %v488 = vadd.f32 0.0, %v487
  %489 = vmatmul.bf16.gmra.mxu0 %v364
  %v490 = vpop.f32.mrf.mxu0
  %v491 = vadd.f32 0.0, %v490
  %v492 = vpop.f32.mrf.mxu0
  %v493 = vadd.f32 0.0, %v492
  %494 = vmatmul.bf16.gmra.mxu0 %v367
  %v495 = vpop.f32.mrf.mxu0
  %v496 = vadd.f32 0.0, %v495
  %v497 = vpop.f32.mrf.mxu0
  %v498 = vadd.f32 0.0, %v497
  %499 = vmatmul.bf16.gmra.mxu0 %v370
  %v500 = vpop.f32.mrf.mxu0
  %v501 = vadd.f32 0.0, %v500
  %v502 = vpop.f32.mrf.mxu0
  %v503 = vadd.f32 0.0, %v502
  %504 = vmatmul.bf16.gmra.mxu0 %v373
  %v505 = vpop.f32.mrf.mxu0
  %v506 = vadd.f32 0.0, %v505
  %v507 = vpop.f32.mrf.mxu0
  %v508 = vadd.f32 0.0, %v507
  %509 = vmatmul.bf16.gmra.mxu0 %v376
  %v510 = vpop.f32.mrf.mxu0
  %v511 = vadd.f32 0.0, %v510
  %v512 = vpop.f32.mrf.mxu0
  %v513 = vadd.f32 0.0, %v512
  %514 = vmatmul.bf16.gmra.mxu0 %v379
  %v515 = vpop.f32.mrf.mxu0
  %v516 = vadd.f32 0.0, %v515
  %v517 = vpop.f32.mrf.mxu0
  %v518 = vadd.f32 0.0, %v517
  %519 = vmatmul.bf16.gmra.mxu0 %v382
  %v520 = vpop.f32.mrf.mxu0
  %v521 = vadd.f32 0.0, %v520
  %v522 = vpop.f32.mrf.mxu0
  %v523 = vadd.f32 0.0, %v522
  %524 = vmatmul.bf16.gmra.mxu0 %v385
  %v525 = vpop.f32.mrf.mxu0
  %v526 = vadd.f32 0.0, %v525
  %v527 = vpop.f32.mrf.mxu0
  %v528 = vadd.f32 0.0, %v527
  %529 = vmatmul.bf16.gmra.mxu0 %v388
  %v530 = vpop.f32.mrf.mxu0
  %v531 = vadd.f32 0.0, %v530
  %v532 = vpop.f32.mrf.mxu0
  %v533 = vadd.f32 0.0, %v532
  %534 = vmatmul.bf16.gmra.mxu0 %v391
  %v535 = vpop.f32.mrf.mxu0
  %v536 = vadd.f32 0.0, %v535
  %v537 = vpop.f32.mrf.mxu0
  %v538 = vadd.f32 0.0, %v537
  %539 = vmatmul.bf16.gmra.mxu0 %v394
  %v540 = vpop.f32.mrf.mxu0
  %v541 = vadd.f32 0.0, %v540
  %v542 = vpop.f32.mrf.mxu0
  %v543 = vadd.f32 0.0, %v542
  %544 = vmatmul.bf16.gmra.mxu0 %v397
  %v545 = vpop.f32.mrf.mxu0
  %v546 = vadd.f32 0.0, %v545
  %v547 = vpop.f32.mrf.mxu0
  %v548 = vadd.f32 0.0, %v547
  %549 = vmatmul.bf16.gmra.mxu0 %v400
  %v550 = vpop.f32.mrf.mxu0
  %v551 = vadd.f32 0.0, %v550
  %v552 = vpop.f32.mrf.mxu0
  %v553 = vadd.f32 0.0, %v552
  %554 = vmatmul.bf16.gmra.mxu0 %v403
  %v555 = vpop.f32.mrf.mxu0
  %v556 = vadd.f32 0.0, %v555
  %v557 = vpop.f32.mrf.mxu0
  %v558 = vadd.f32 0.0, %v557
  %559 = vmatmul.bf16.gmra.mxu0 %v406
  %v560 = vpop.f32.mrf.mxu0
  %v561 = vadd.f32 0.0, %v560
  %v562 = vpop.f32.mrf.mxu0
  %v563 = vadd.f32 0.0, %v562
  %564 = vmatmul.bf16.gmra.mxu0 %v409
  %v565 = vpop.f32.mrf.mxu0
  %v566 = vadd.f32 0.0, %v565
  %v567 = vpop.f32.mrf.mxu0
  %v568 = vadd.f32 0.0, %v567
  %569 = vmatmul.bf16.gmra.mxu0 %v412
  %v570 = vpop.f32.mrf.mxu0
  %v571 = vadd.f32 0.0, %v570
  %v572 = vpop.f32.mrf.mxu0
  %v573 = vadd.f32 0.0, %v572
  %574 = vmatmul.bf16.gmra.mxu0 %v415
  %v575 = vpop.f32.mrf.mxu0
  %v576 = vadd.f32 0.0, %v575
  %v577 = vpop.f32.mrf.mxu0
  %v578 = vadd.f32 0.0, %v577
  %579 = vmatmul.bf16.gmra.mxu0 %v418
  %v580 = vpop.f32.mrf.mxu0
  %v581 = vadd.f32 0.0, %v580
  %v582 = vpop.f32.mrf.mxu0
  %v583 = vadd.f32 0.0, %v582
  %584 = vmatmul.bf16.gmra.mxu0 %v421
  %v585 = vpop.f32.mrf.mxu0
  %v586 = vadd.f32 0.0, %v585
  %v587 = vpop.f32.mrf.mxu0
  %v588 = vadd.f32 0.0, %v587
  %589 = vmatmul.bf16.gmra.mxu0 %v424
  %v590 = vpop.f32.mrf.mxu0
  %v591 = vadd.f32 0.0, %v590
  %v592 = vpop.f32.mrf.mxu0
  %v593 = vadd.f32 0.0, %v592
  %594 = vdwg.mxu0
  %v659 = vunpack.c.l.b16 %v21
  %v660 = vunpack.c.l.b16 %v22
  %v661 = vunpack.c.l.b16 %v23
  %v662 = vunpack.c.l.b16 %v24
  %v663 = vunpack.c.l.b16 %v25
  %v664 = vunpack.c.l.b16 %v26
  %v665 = vunpack.c.l.b16 %v27
  %v666 = vunpack.c.l.b16 %v28
  %v667 = vunpack.c.l.b16 %v29
  %v668 = vunpack.c.l.b16 %v30
  %v669 = vunpack.c.l.b16 %v31
  %v670 = vunpack.c.l.b16 %v32
  %v671 = vunpack.c.l.b16 %v33
  %v672 = vunpack.c.l.b16 %v34
  %v673 = vunpack.c.l.b16 %v35
  %v674 = vunpack.c.l.b16 %v36
  %v675 = vunpack.c.l.b16 %v37
  %v676 = vunpack.c.l.b16 %v38
  %v677 = vunpack.c.l.b16 %v39
  %v678 = vunpack.c.l.b16 %v40
  %v679 = vunpack.c.l.b16 %v41
  %v680 = vunpack.c.l.b16 %v42
  %v681 = vunpack.c.l.b16 %v43
  %v682 = vunpack.c.l.b16 %v44
  %v683 = vunpack.c.l.b16 %v45
  %v684 = vunpack.c.l.b16 %v46
  %v685 = vunpack.c.l.b16 %v47
  %v686 = vunpack.c.l.b16 %v48
  %v687 = vunpack.c.l.b16 %v49
  %v688 = vunpack.c.l.b16 %v50
  %v689 = vunpack.c.l.b16 %v51
  %v690 = vunpack.c.l.b16 %v52
  %v691 = vunpack.c.l.b16 %v53
  %v692 = vunpack.c.l.b16 %v54
  %v693 = vunpack.c.l.b16 %v55
  %v694 = vunpack.c.l.b16 %v56
  %v695 = vunpack.c.l.b16 %v57
  %v696 = vunpack.c.l.b16 %v58
  %v697 = vunpack.c.l.b16 %v59
  %v698 = vunpack.c.l.b16 %v60
  %v699 = vunpack.c.l.b16 %v61
  %v700 = vunpack.c.l.b16 %v62
  %v701 = vunpack.c.l.b16 %v63
  %v702 = vunpack.c.l.b16 %v64
  %v703 = vunpack.c.l.b16 %v65
  %v704 = vunpack.c.l.b16 %v66
  %v705 = vunpack.c.l.b16 %v67
  %v706 = vunpack.c.l.b16 %v68
  %v707 = vunpack.c.l.b16 %v69
  %v708 = vunpack.c.l.b16 %v70
  %v709 = vunpack.c.l.b16 %v71
  %v710 = vunpack.c.l.b16 %v72
  %v711 = vunpack.c.l.b16 %v73
  %v712 = vunpack.c.l.b16 %v74
  %v713 = vunpack.c.l.b16 %v75
  %v714 = vunpack.c.l.b16 %v76
  %v715 = vunpack.c.l.b16 %v77
  %v716 = vunpack.c.l.b16 %v78
  %v717 = vunpack.c.l.b16 %v79
  %v718 = vunpack.c.l.b16 %v80
  %v719 = vunpack.c.l.b16 %v81
  %v720 = vunpack.c.l.b16 %v82
  %v721 = vunpack.c.l.b16 %v83
  %v722 = vunpack.c.l.b16 %v84
  %v723 = vpack.c.b16 %v660, %v659
  %v724 = vpack.c.b16 %v662, %v661
  %v725 = vpack.c.b16 %v664, %v663
  %v726 = vpack.c.b16 %v666, %v665
  %v727 = vpack.c.b16 %v668, %v667
  %v728 = vpack.c.b16 %v670, %v669
  %v729 = vpack.c.b16 %v672, %v671
  %v730 = vpack.c.b16 %v674, %v673
  %v731 = vpack.c.b16 %v676, %v675
  %v732 = vpack.c.b16 %v678, %v677
  %v733 = vpack.c.b16 %v680, %v679
  %v734 = vpack.c.b16 %v682, %v681
  %v735 = vpack.c.b16 %v684, %v683
  %v736 = vpack.c.b16 %v686, %v685
  %v737 = vpack.c.b16 %v688, %v687
  %v738 = vpack.c.b16 %v690, %v689
  %v739 = vpack.c.b16 %v692, %v691
  %v740 = vpack.c.b16 %v694, %v693
  %v741 = vpack.c.b16 %v696, %v695
  %v742 = vpack.c.b16 %v698, %v697
  %v743 = vpack.c.b16 %v700, %v699
  %v744 = vpack.c.b16 %v702, %v701
  %v745 = vpack.c.b16 %v704, %v703
  %v746 = vpack.c.b16 %v706, %v705
  %v747 = vpack.c.b16 %v708, %v707
  %v748 = vpack.c.b16 %v710, %v709
  %v749 = vpack.c.b16 %v712, %v711
  %v750 = vpack.c.b16 %v714, %v713
  %v751 = vpack.c.b16 %v716, %v715
  %v752 = vpack.c.b16 %v718, %v717
  %v753 = vpack.c.b16 %v720, %v719
  %v754 = vpack.c.b16 %v722, %v721
  %v759 = vunpack.c.l.b16 %v85
  %v760 = vunpack.c.l.b16 %v86
  %v761 = vunpack.c.l.b16 %v87
  %v762 = vunpack.c.l.b16 %v88
  %v763 = vpack.c.b16 %v760, %v759
  %v764 = vpack.c.b16 %v762, %v761
  %v768 = vsel %vm329, %v723, 0
  %v771 = vsel %vm329, %v724, 0
  %v774 = vsel %vm329, %v725, 0
  %v777 = vsel %vm329, %v726, 0
  %v780 = vsel %vm329, %v727, 0
  %v783 = vsel %vm329, %v728, 0
  %v786 = vsel %vm329, %v729, 0
  %v789 = vsel %vm329, %v730, 0
  %v792 = vsel %vm329, %v731, 0
  %v795 = vsel %vm329, %v732, 0
  %v798 = vsel %vm329, %v733, 0
  %v801 = vsel %vm329, %v734, 0
  %v804 = vsel %vm329, %v735, 0
  %v807 = vsel %vm329, %v736, 0
  %v810 = vsel %vm329, %v737, 0
  %v813 = vsel %vm329, %v738, 0
  %v816 = vsel %vm329, %v739, 0
  %v819 = vsel %vm329, %v740, 0
  %v822 = vsel %vm329, %v741, 0
  %v825 = vsel %vm329, %v742, 0
  %v828 = vsel %vm329, %v743, 0
  %v831 = vsel %vm329, %v744, 0
  %v834 = vsel %vm329, %v745, 0
  %v837 = vsel %vm329, %v746, 0
  %v840 = vsel %vm329, %v747, 0
  %v843 = vsel %vm329, %v748, 0
  %v846 = vsel %vm329, %v749, 0
  %v849 = vsel %vm329, %v750, 0
  %v852 = vsel %vm329, %v751, 0
  %v855 = vsel %vm329, %v752, 0
  %v858 = vsel %vm329, %v753, 0
  %v861 = vsel %vm329, %v754, 0
  %863 = vmatpush.bf16.msra.mxu0 0
  %864 = vmatpush.bf16.msra.mxu0 0
  %865 = vmatpush.bf16.msra.mxu0 0
  %866 = vmatpush.bf16.msra.mxu0 0
  %867 = vmatpush.bf16.msra.mxu0 0
  %868 = vmatpush.bf16.msra.mxu0 0
  %869 = vmatpush.bf16.msra.mxu0 %v764
  %870 = vmatpush.bf16.msra.mxu0 %v763
  %871 = vmatmul.bf16.gmra.mxu0 %v768
  %v872 = vpop.f32.mrf.mxu0
  %v873 = vadd.f32 %v436, %v872
  %v874 = vpop.f32.mrf.mxu0
  %v875 = vadd.f32 %v438, %v874
  %876 = vmatmul.bf16.gmra.mxu0 %v771
  %v877 = vpop.f32.mrf.mxu0
  %v878 = vadd.f32 %v441, %v877
  %v879 = vpop.f32.mrf.mxu0
  %v880 = vadd.f32 %v443, %v879
  %881 = vmatmul.bf16.gmra.mxu0 %v774
  %v882 = vpop.f32.mrf.mxu0
  %v883 = vadd.f32 %v446, %v882
  %v884 = vpop.f32.mrf.mxu0
  %v885 = vadd.f32 %v448, %v884
  %886 = vmatmul.bf16.gmra.mxu0 %v777
  %v887 = vpop.f32.mrf.mxu0
  %v888 = vadd.f32 %v451, %v887
  %v889 = vpop.f32.mrf.mxu0
  %v890 = vadd.f32 %v453, %v889
  %891 = vmatmul.bf16.gmra.mxu0 %v780
  %v892 = vpop.f32.mrf.mxu0
  %v893 = vadd.f32 %v456, %v892
  %v894 = vpop.f32.mrf.mxu0
  %v895 = vadd.f32 %v458, %v894
  %896 = vmatmul.bf16.gmra.mxu0 %v783
  %v897 = vpop.f32.mrf.mxu0
  %v898 = vadd.f32 %v461, %v897
  %v899 = vpop.f32.mrf.mxu0
  %v900 = vadd.f32 %v463, %v899
  %901 = vmatmul.bf16.gmra.mxu0 %v786
  %v902 = vpop.f32.mrf.mxu0
  %v903 = vadd.f32 %v466, %v902
  %v904 = vpop.f32.mrf.mxu0
  %v905 = vadd.f32 %v468, %v904
  %906 = vmatmul.bf16.gmra.mxu0 %v789
  %v907 = vpop.f32.mrf.mxu0
  %v908 = vadd.f32 %v471, %v907
  %v909 = vpop.f32.mrf.mxu0
  %v910 = vadd.f32 %v473, %v909
  %911 = vmatmul.bf16.gmra.mxu0 %v792
  %v912 = vpop.f32.mrf.mxu0
  %v913 = vadd.f32 %v476, %v912
  %v914 = vpop.f32.mrf.mxu0
  %v915 = vadd.f32 %v478, %v914
  %916 = vmatmul.bf16.gmra.mxu0 %v795
  %v917 = vpop.f32.mrf.mxu0
  %v918 = vadd.f32 %v481, %v917
  %v919 = vpop.f32.mrf.mxu0
  %v920 = vadd.f32 %v483, %v919
  %921 = vmatmul.bf16.gmra.mxu0 %v798
  %v922 = vpop.f32.mrf.mxu0
  %v923 = vadd.f32 %v486, %v922
  %v924 = vpop.f32.mrf.mxu0
  %v925 = vadd.f32 %v488, %v924
  %926 = vmatmul.bf16.gmra.mxu0 %v801
  %v927 = vpop.f32.mrf.mxu0
  %v928 = vadd.f32 %v491, %v927
  %v929 = vpop.f32.mrf.mxu0
  %v930 = vadd.f32 %v493, %v929
  %931 = vmatmul.bf16.gmra.mxu0 %v804
  %v932 = vpop.f32.mrf.mxu0
  %v933 = vadd.f32 %v496, %v932
  %v934 = vpop.f32.mrf.mxu0
  %v935 = vadd.f32 %v498, %v934
  %936 = vmatmul.bf16.gmra.mxu0 %v807
  %v937 = vpop.f32.mrf.mxu0
  %v938 = vadd.f32 %v501, %v937
  %v939 = vpop.f32.mrf.mxu0
  %v940 = vadd.f32 %v503, %v939
  %941 = vmatmul.bf16.gmra.mxu0 %v810
  %v942 = vpop.f32.mrf.mxu0
  %v943 = vadd.f32 %v506, %v942
  %v944 = vpop.f32.mrf.mxu0
  %v945 = vadd.f32 %v508, %v944
  %946 = vmatmul.bf16.gmra.mxu0 %v813
  %v947 = vpop.f32.mrf.mxu0
  %v948 = vadd.f32 %v511, %v947
  %v949 = vpop.f32.mrf.mxu0
  %v950 = vadd.f32 %v513, %v949
  %951 = vmatmul.bf16.gmra.mxu0 %v816
  %v952 = vpop.f32.mrf.mxu0
  %v953 = vadd.f32 %v516, %v952
  %v954 = vpop.f32.mrf.mxu0
  %v955 = vadd.f32 %v518, %v954
  %956 = vmatmul.bf16.gmra.mxu0 %v819
  %v957 = vpop.f32.mrf.mxu0
  %v958 = vadd.f32 %v521, %v957
  %v959 = vpop.f32.mrf.mxu0
  %v960 = vadd.f32 %v523, %v959
  %961 = vmatmul.bf16.gmra.mxu0 %v822
  %v962 = vpop.f32.mrf.mxu0
  %v963 = vadd.f32 %v526, %v962
  %v964 = vpop.f32.mrf.mxu0
  %v965 = vadd.f32 %v528, %v964
  %966 = vmatmul.bf16.gmra.mxu0 %v825
  %v967 = vpop.f32.mrf.mxu0
  %v968 = vadd.f32 %v531, %v967
  %v969 = vpop.f32.mrf.mxu0
  %v970 = vadd.f32 %v533, %v969
  %971 = vmatmul.bf16.gmra.mxu0 %v828
  %v972 = vpop.f32.mrf.mxu0
  %v973 = vadd.f32 %v536, %v972
  %v974 = vpop.f32.mrf.mxu0
  %v975 = vadd.f32 %v538, %v974
  %976 = vmatmul.bf16.gmra.mxu0 %v831
  %v977 = vpop.f32.mrf.mxu0
  %v978 = vadd.f32 %v541, %v977
  %v979 = vpop.f32.mrf.mxu0
  %v980 = vadd.f32 %v543, %v979
  %981 = vmatmul.bf16.gmra.mxu0 %v834
  %v982 = vpop.f32.mrf.mxu0
  %v983 = vadd.f32 %v546, %v982
  %v984 = vpop.f32.mrf.mxu0
  %v985 = vadd.f32 %v548, %v984
  %986 = vmatmul.bf16.gmra.mxu0 %v837
  %v987 = vpop.f32.mrf.mxu0
  %v988 = vadd.f32 %v551, %v987
  %v989 = vpop.f32.mrf.mxu0
  %v990 = vadd.f32 %v553, %v989
  %991 = vmatmul.bf16.gmra.mxu0 %v840
  %v992 = vpop.f32.mrf.mxu0
  %v993 = vadd.f32 %v556, %v992
  %v994 = vpop.f32.mrf.mxu0
  %v995 = vadd.f32 %v558, %v994
  %996 = vmatmul.bf16.gmra.mxu0 %v843
  %v997 = vpop.f32.mrf.mxu0
  %v998 = vadd.f32 %v561, %v997
  %v999 = vpop.f32.mrf.mxu0
  %v1000 = vadd.f32 %v563, %v999
  %1001 = vmatmul.bf16.gmra.mxu0 %v846
  %v1002 = vpop.f32.mrf.mxu0
  %v1003 = vadd.f32 %v566, %v1002
  %v1004 = vpop.f32.mrf.mxu0
  %v1005 = vadd.f32 %v568, %v1004
  %1006 = vmatmul.bf16.gmra.mxu0 %v849
  %v1007 = vpop.f32.mrf.mxu0
  %v1008 = vadd.f32 %v571, %v1007
  %v1009 = vpop.f32.mrf.mxu0
  %v1010 = vadd.f32 %v573, %v1009
  %1011 = vmatmul.bf16.gmra.mxu0 %v852
  %v1012 = vpop.f32.mrf.mxu0
  %v1013 = vadd.f32 %v576, %v1012
  %v1014 = vpop.f32.mrf.mxu0
  %v1015 = vadd.f32 %v578, %v1014
  %1016 = vmatmul.bf16.gmra.mxu0 %v855
  %v1017 = vpop.f32.mrf.mxu0
  %v1018 = vadd.f32 %v581, %v1017
  %v1019 = vpop.f32.mrf.mxu0
  %v1020 = vadd.f32 %v583, %v1019
  %1021 = vmatmul.bf16.gmra.mxu0 %v858
  %v1022 = vpop.f32.mrf.mxu0
  %v1023 = vadd.f32 %v586, %v1022
  %v1024 = vpop.f32.mrf.mxu0
  %v1025 = vadd.f32 %v588, %v1024
  %1026 = vmatmul.bf16.gmra.mxu0 %v861
  %v1027 = vpop.f32.mrf.mxu0
  %v1028 = vadd.f32 %v591, %v1027
  %v1029 = vpop.f32.mrf.mxu0
  %v1030 = vadd.f32 %v593, %v1029
  %1031 = vdwg.mxu0
  %v1032 = vld [vmem:[%s4] sm:$0x1]
  %v1034 = vperm.slane %v1032, 0
  %v1036 = vadd.f32 %v873, %v1034
  %v1037 = vadd.f32 %v875, %v1034
  %v1038 = vadd.f32 %v878, %v1034
  %v1039 = vadd.f32 %v880, %v1034
  %v1040 = vadd.f32 %v883, %v1034
  %v1041 = vadd.f32 %v885, %v1034
  %v1042 = vadd.f32 %v888, %v1034
  %v1043 = vadd.f32 %v890, %v1034
  %v1044 = vadd.f32 %v893, %v1034
  %v1045 = vadd.f32 %v895, %v1034
  %v1046 = vadd.f32 %v898, %v1034
  %v1047 = vadd.f32 %v900, %v1034
  %v1048 = vadd.f32 %v903, %v1034
  %v1049 = vadd.f32 %v905, %v1034
  %v1050 = vadd.f32 %v908, %v1034
  %v1051 = vadd.f32 %v910, %v1034
  %v1052 = vadd.f32 %v913, %v1034
  %v1053 = vadd.f32 %v915, %v1034
  %v1054 = vadd.f32 %v918, %v1034
  %v1055 = vadd.f32 %v920, %v1034
  %v1056 = vadd.f32 %v923, %v1034
  %v1057 = vadd.f32 %v925, %v1034
  %v1058 = vadd.f32 %v928, %v1034
  %v1059 = vadd.f32 %v930, %v1034
  %v1060 = vadd.f32 %v933, %v1034
  %v1061 = vadd.f32 %v935, %v1034
  %v1062 = vadd.f32 %v938, %v1034
  %v1063 = vadd.f32 %v940, %v1034
  %v1064 = vadd.f32 %v943, %v1034
  %v1065 = vadd.f32 %v945, %v1034
  %v1066 = vadd.f32 %v948, %v1034
  %v1067 = vadd.f32 %v950, %v1034
  %v1068 = vadd.f32 %v953, %v1034
  %v1069 = vadd.f32 %v955, %v1034
  %v1070 = vadd.f32 %v958, %v1034
  %v1071 = vadd.f32 %v960, %v1034
  %v1072 = vadd.f32 %v963, %v1034
  %v1073 = vadd.f32 %v965, %v1034
  %v1074 = vadd.f32 %v968, %v1034
  %v1075 = vadd.f32 %v970, %v1034
  %v1076 = vadd.f32 %v973, %v1034
  %v1077 = vadd.f32 %v975, %v1034
  %v1078 = vadd.f32 %v978, %v1034
  %v1079 = vadd.f32 %v980, %v1034
  %v1080 = vadd.f32 %v983, %v1034
  %v1081 = vadd.f32 %v985, %v1034
  %v1082 = vadd.f32 %v988, %v1034
  %v1083 = vadd.f32 %v990, %v1034
  %v1084 = vadd.f32 %v993, %v1034
  %v1085 = vadd.f32 %v995, %v1034
  %v1086 = vadd.f32 %v998, %v1034
  %v1087 = vadd.f32 %v1000, %v1034
  %v1088 = vadd.f32 %v1003, %v1034
  %v1089 = vadd.f32 %v1005, %v1034
  %v1090 = vadd.f32 %v1008, %v1034
  %v1091 = vadd.f32 %v1010, %v1034
  %v1092 = vadd.f32 %v1013, %v1034
  %v1093 = vadd.f32 %v1015, %v1034
  %v1094 = vadd.f32 %v1018, %v1034
  %v1095 = vadd.f32 %v1020, %v1034
  %v1096 = vadd.f32 %v1023, %v1034
  %v1097 = vadd.f32 %v1025, %v1034
  %v1098 = vadd.f32 %v1028, %v1034
  %v1099 = vadd.f32 %v1030, %v1034
  %v1100 = vtanh.pop %v1036
  %v1101 = vtanh.pop %v1037
  %v1102 = vtanh.pop %v1038
  %v1103 = vtanh.pop %v1039
  %v1104 = vtanh.pop %v1040
  %v1105 = vtanh.pop %v1041
  %v1106 = vtanh.pop %v1042
  %v1107 = vtanh.pop %v1043
  %v1108 = vtanh.pop %v1044
  %v1109 = vtanh.pop %v1045
  %v1110 = vtanh.pop %v1046
  %v1111 = vtanh.pop %v1047
  %v1112 = vtanh.pop %v1048
  %v1113 = vtanh.pop %v1049
  %v1114 = vtanh.pop %v1050
  %v1115 = vtanh.pop %v1051
  %v1116 = vtanh.pop %v1052
  %v1117 = vtanh.pop %v1053
  %v1118 = vtanh.pop %v1054
  %v1119 = vtanh.pop %v1055
  %v1120 = vtanh.pop %v1056
  %v1121 = vtanh.pop %v1057
  %v1122 = vtanh.pop %v1058
  %v1123 = vtanh.pop %v1059
  %v1124 = vtanh.pop %v1060
  %v1125 = vtanh.pop %v1061
  %v1126 = vtanh.pop %v1062
  %v1127 = vtanh.pop %v1063
  %v1128 = vtanh.pop %v1064
  %v1129 = vtanh.pop %v1065
  %v1130 = vtanh.pop %v1066
  %v1131 = vtanh.pop %v1067
  %v1132 = vtanh.pop %v1068
  %v1133 = vtanh.pop %v1069
  %v1134 = vtanh.pop %v1070
  %v1135 = vtanh.pop %v1071
  %v1136 = vtanh.pop %v1072
  %v1137 = vtanh.pop %v1073
  %v1138 = vtanh.pop %v1074
  %v1139 = vtanh.pop %v1075
  %v1140 = vtanh.pop %v1076
  %v1141 = vtanh.pop %v1077
  %v1142 = vtanh.pop %v1078
  %v1143 = vtanh.pop %v1079
  %v1144 = vtanh.pop %v1080
  %v1145 = vtanh.pop %v1081
  %v1146 = vtanh.pop %v1082
  %v1147 = vtanh.pop %v1083
  %v1148 = vtanh.pop %v1084
  %v1149 = vtanh.pop %v1085
  %v1150 = vtanh.pop %v1086
  %v1151 = vtanh.pop %v1087
  %v1152 = vtanh.pop %v1088
  %v1153 = vtanh.pop %v1089
  %v1154 = vtanh.pop %v1090
  %v1155 = vtanh.pop %v1091
  %v1156 = vtanh.pop %v1092
  %v1157 = vtanh.pop %v1093
  %v1158 = vtanh.pop %v1094
  %v1159 = vtanh.pop %v1095
  %v1160 = vtanh.pop %v1096
  %v1161 = vtanh.pop %v1097
  %v1162 = vtanh.pop %v1098
  %v1163 = vtanh.pop %v1099
  %s1164 = scalar_lea.vmem %s0, 256
  %v1165 = vld [vmem:[%s1164] sm:$0xf]
  %v1166 = vld [vmem:[%s1164 + $0x4] sm:$0xf]
  %v1167 = vld [vmem:[%s1164 + $0x8] sm:$0xf]
  %v1168 = vld [vmem:[%s1164 + $0xc] sm:$0xf]
  %v1169 = vld [vmem:[%s1164 + $0x10] sm:$0xf]
  %v1170 = vld [vmem:[%s1164 + $0x14] sm:$0xf]
  %v1171 = vld [vmem:[%s1164 + $0x18] sm:$0xf]
  %v1172 = vld [vmem:[%s1164 + $0x1c] sm:$0xf]
  %v1173 = vld [vmem:[%s1164 + $0x20] sm:$0xf]
  %v1174 = vld [vmem:[%s1164 + $0x24] sm:$0xf]
  %v1175 = vld [vmem:[%s1164 + $0x28] sm:$0xf]
  %v1176 = vld [vmem:[%s1164 + $0x2c] sm:$0xf]
  %v1177 = vld [vmem:[%s1164 + $0x30] sm:$0xf]
  %v1178 = vld [vmem:[%s1164 + $0x34] sm:$0xf]
  %v1179 = vld [vmem:[%s1164 + $0x38] sm:$0xf]
  %v1180 = vld [vmem:[%s1164 + $0x3c] sm:$0xf]
  %v1181 = vld [vmem:[%s1164 + $0x40] sm:$0xf]
  %v1182 = vld [vmem:[%s1164 + $0x44] sm:$0xf]
  %v1183 = vld [vmem:[%s1164 + $0x48] sm:$0xf]
  %v1184 = vld [vmem:[%s1164 + $0x4c] sm:$0xf]
  %v1185 = vld [vmem:[%s1164 + $0x50] sm:$0xf]
  %v1186 = vld [vmem:[%s1164 + $0x54] sm:$0xf]
  %v1187 = vld [vmem:[%s1164 + $0x58] sm:$0xf]
  %v1188 = vld [vmem:[%s1164 + $0x5c] sm:$0xf]
  %v1189 = vld [vmem:[%s1164 + $0x60] sm:$0xf]
  %v1190 = vld [vmem:[%s1164 + $0x64] sm:$0xf]
  %v1191 = vld [vmem:[%s1164 + $0x68] sm:$0xf]
  %v1192 = vld [vmem:[%s1164 + $0x6c] sm:$0xf]
  %v1193 = vld [vmem:[%s1164 + $0x70] sm:$0xf]
  %v1194 = vld [vmem:[%s1164 + $0x74] sm:$0xf]
  %v1195 = vld [vmem:[%s1164 + $0x78] sm:$0xf]
  %v1196 = vld [vmem:[%s1164 + $0x7c] sm:$0xf]
  %v1197 = vld [vmem:[%s1164 + $0x80] sm:$0xf]
  %v1198 = vld [vmem:[%s1164 + $0x84] sm:$0xf]
  %v1199 = vld [vmem:[%s1164 + $0x88] sm:$0xf]
  %v1200 = vld [vmem:[%s1164 + $0x8c] sm:$0xf]
  %v1201 = vld [vmem:[%s1164 + $0x90] sm:$0xf]
  %v1202 = vld [vmem:[%s1164 + $0x94] sm:$0xf]
  %v1203 = vld [vmem:[%s1164 + $0x98] sm:$0xf]
  %v1204 = vld [vmem:[%s1164 + $0x9c] sm:$0xf]
  %v1205 = vld [vmem:[%s1164 + $0xa0] sm:$0xf]
  %v1206 = vld [vmem:[%s1164 + $0xa4] sm:$0xf]
  %v1207 = vld [vmem:[%s1164 + $0xa8] sm:$0xf]
  %v1208 = vld [vmem:[%s1164 + $0xac] sm:$0xf]
  %v1209 = vld [vmem:[%s1164 + $0xb0] sm:$0xf]
  %v1210 = vld [vmem:[%s1164 + $0xb4] sm:$0xf]
  %v1211 = vld [vmem:[%s1164 + $0xb8] sm:$0xf]
  %v1212 = vld [vmem:[%s1164 + $0xbc] sm:$0xf]
  %v1213 = vld [vmem:[%s1164 + $0xc0] sm:$0xf]
  %v1214 = vld [vmem:[%s1164 + $0xc4] sm:$0xf]
  %v1215 = vld [vmem:[%s1164 + $0xc8] sm:$0xf]
  %v1216 = vld [vmem:[%s1164 + $0xcc] sm:$0xf]
  %v1217 = vld [vmem:[%s1164 + $0xd0] sm:$0xf]
  %v1218 = vld [vmem:[%s1164 + $0xd4] sm:$0xf]
  %v1219 = vld [vmem:[%s1164 + $0xd8] sm:$0xf]
  %v1220 = vld [vmem:[%s1164 + $0xdc] sm:$0xf]
  %v1221 = vld [vmem:[%s1164 + $0xe0] sm:$0xf]
  %v1222 = vld [vmem:[%s1164 + $0xe4] sm:$0xf]
  %v1223 = vld [vmem:[%s1164 + $0xe8] sm:$0xf]
  %v1224 = vld [vmem:[%s1164 + $0xec] sm:$0xf]
  %v1225 = vld [vmem:[%s1164 + $0xf0] sm:$0xf]
  %v1226 = vld [vmem:[%s1164 + $0xf4] sm:$0xf]
  %v1227 = vld [vmem:[%s1164 + $0xf8] sm:$0xf]
  %v1228 = vld [vmem:[%s1164 + $0xfc] sm:$0xf]
  %s1229 = scalar_lea.vmem %s2, 16
  %v1230 = vld [vmem:[%s1229] sm:$0xf]
  %v1231 = vld [vmem:[%s1229 + $0x4] sm:$0xf]
  %v1232 = vld [vmem:[%s1229 + $0x8] sm:$0xf]
  %v1233 = vld [vmem:[%s1229 + $0xc] sm:$0xf]
  %s1234 = scalar_lea.vmem %s1, 256
  %v1235 = vld [vmem:[%s1234] sm:$0xf]
  %v1236 = vld [vmem:[%s1234 + $0x4] sm:$0xf]
  %v1237 = vld [vmem:[%s1234 + $0x8] sm:$0xf]
  %v1238 = vld [vmem:[%s1234 + $0xc] sm:$0xf]
  %v1239 = vld [vmem:[%s1234 + $0x10] sm:$0xf]
  %v1240 = vld [vmem:[%s1234 + $0x14] sm:$0xf]
  %v1241 = vld [vmem:[%s1234 + $0x18] sm:$0xf]
  %v1242 = vld [vmem:[%s1234 + $0x1c] sm:$0xf]
  %v1243 = vld [vmem:[%s1234 + $0x20] sm:$0xf]
  %v1244 = vld [vmem:[%s1234 + $0x24] sm:$0xf]
  %v1245 = vld [vmem:[%s1234 + $0x28] sm:$0xf]
  %v1246 = vld [vmem:[%s1234 + $0x2c] sm:$0xf]
  %v1247 = vld [vmem:[%s1234 + $0x30] sm:$0xf]
  %v1248 = vld [vmem:[%s1234 + $0x34] sm:$0xf]
  %v1249 = vld [vmem:[%s1234 + $0x38] sm:$0xf]
  %v1250 = vld [vmem:[%s1234 + $0x3c] sm:$0xf]
  %v1251 = vld [vmem:[%s1234 + $0x40] sm:$0xf]
  %v1252 = vld [vmem:[%s1234 + $0x44] sm:$0xf]
  %v1253 = vld [vmem:[%s1234 + $0x48] sm:$0xf]
  %v1254 = vld [vmem:[%s1234 + $0x4c] sm:$0xf]
  %v1255 = vld [vmem:[%s1234 + $0x50] sm:$0xf]
  %v1256 = vld [vmem:[%s1234 + $0x54] sm:$0xf]
  %v1257 = vld [vmem:[%s1234 + $0x58] sm:$0xf]
  %v1258 = vld [vmem:[%s1234 + $0x5c] sm:$0xf]
  %v1259 = vld [vmem:[%s1234 + $0x60] sm:$0xf]
  %v1260 = vld [vmem:[%s1234 + $0x64] sm:$0xf]
  %v1261 = vld [vmem:[%s1234 + $0x68] sm:$0xf]
  %v1262 = vld [vmem:[%s1234 + $0x6c] sm:$0xf]
  %v1263 = vld [vmem:[%s1234 + $0x70] sm:$0xf]
  %v1264 = vld [vmem:[%s1234 + $0x74] sm:$0xf]
  %v1265 = vld [vmem:[%s1234 + $0x78] sm:$0xf]
  %v1266 = vld [vmem:[%s1234 + $0x7c] sm:$0xf]
  %v1267 = vld [vmem:[%s1234 + $0x80] sm:$0xf]
  %v1268 = vld [vmem:[%s1234 + $0x84] sm:$0xf]
  %v1269 = vld [vmem:[%s1234 + $0x88] sm:$0xf]
  %v1270 = vld [vmem:[%s1234 + $0x8c] sm:$0xf]
  %v1271 = vld [vmem:[%s1234 + $0x90] sm:$0xf]
  %v1272 = vld [vmem:[%s1234 + $0x94] sm:$0xf]
  %v1273 = vld [vmem:[%s1234 + $0x98] sm:$0xf]
  %v1274 = vld [vmem:[%s1234 + $0x9c] sm:$0xf]
  %v1275 = vld [vmem:[%s1234 + $0xa0] sm:$0xf]
  %v1276 = vld [vmem:[%s1234 + $0xa4] sm:$0xf]
  %v1277 = vld [vmem:[%s1234 + $0xa8] sm:$0xf]
  %v1278 = vld [vmem:[%s1234 + $0xac] sm:$0xf]
  %v1279 = vld [vmem:[%s1234 + $0xb0] sm:$0xf]
  %v1280 = vld [vmem:[%s1234 + $0xb4] sm:$0xf]
  %v1281 = vld [vmem:[%s1234 + $0xb8] sm:$0xf]
  %v1282 = vld [vmem:[%s1234 + $0xbc] sm:$0xf]
  %v1283 = vld [vmem:[%s1234 + $0xc0] sm:$0xf]
  %v1284 = vld [vmem:[%s1234 + $0xc4] sm:$0xf]
  %v1285 = vld [vmem:[%s1234 + $0xc8] sm:$0xf]
  %v1286 = vld [vmem:[%s1234 + $0xcc] sm:$0xf]
  %v1287 = vld [vmem:[%s1234 + $0xd0] sm:$0xf]
  %v1288 = vld [vmem:[%s1234 + $0xd4] sm:$0xf]
  %v1289 = vld [vmem:[%s1234 + $0xd8] sm:$0xf]
  %v1290 = vld [vmem:[%s1234 + $0xdc] sm:$0xf]
  %v1291 = vld [vmem:[%s1234 + $0xe0] sm:$0xf]
  %v1292 = vld [vmem:[%s1234 + $0xe4] sm:$0xf]
  %v1293 = vld [vmem:[%s1234 + $0xe8] sm:$0xf]
  %v1294 = vld [vmem:[%s1234 + $0xec] sm:$0xf]
  %v1295 = vld [vmem:[%s1234 + $0xf0] sm:$0xf]
  %v1296 = vld [vmem:[%s1234 + $0xf4] sm:$0xf]
  %v1297 = vld [vmem:[%s1234 + $0xf8] sm:$0xf]
  %v1298 = vld [vmem:[%s1234 + $0xfc] sm:$0xf]
  %s1299 = scalar_lea.vmem %s3, 16
  %v1300 = vld [vmem:[%s1299] sm:$0xf]
  %v1301 = vld [vmem:[%s1299 + $0x4] sm:$0xf]
  %v1302 = vld [vmem:[%s1299 + $0x8] sm:$0xf]
  %v1303 = vld [vmem:[%s1299 + $0xc] sm:$0xf]
  %v1368 = vunpack.c.l.b16 %v1235
  %v1369 = vunpack.c.l.b16 %v1236
  %v1370 = vunpack.c.l.b16 %v1237
  %v1371 = vunpack.c.l.b16 %v1238
  %v1372 = vunpack.c.l.b16 %v1239
  %v1373 = vunpack.c.l.b16 %v1240
  %v1374 = vunpack.c.l.b16 %v1241
  %v1375 = vunpack.c.l.b16 %v1242
  %v1376 = vunpack.c.l.b16 %v1243
  %v1377 = vunpack.c.l.b16 %v1244
  %v1378 = vunpack.c.l.b16 %v1245
  %v1379 = vunpack.c.l.b16 %v1246
  %v1380 = vunpack.c.l.b16 %v1247
  %v1381 = vunpack.c.l.b16 %v1248
  %v1382 = vunpack.c.l.b16 %v1249
  %v1383 = vunpack.c.l.b16 %v1250
  %v1384 = vunpack.c.l.b16 %v1251
  %v1385 = vunpack.c.l.b16 %v1252
  %v1386 = vunpack.c.l.b16 %v1253
  %v1387 = vunpack.c.l.b16 %v1254
  %v1388 = vunpack.c.l.b16 %v1255
  %v1389 = vunpack.c.l.b16 %v1256
  %v1390 = vunpack.c.l.b16 %v1257
  %v1391 = vunpack.c.l.b16 %v1258
  %v1392 = vunpack.c.l.b16 %v1259
  %v1393 = vunpack.c.l.b16 %v1260
  %v1394 = vunpack.c.l.b16 %v1261
  %v1395 = vunpack.c.l.b16 %v1262
  %v1396 = vunpack.c.l.b16 %v1263
  %v1397 = vunpack.c.l.b16 %v1264
  %v1398 = vunpack.c.l.b16 %v1265
  %v1399 = vunpack.c.l.b16 %v1266
  %v1400 = vunpack.c.l.b16 %v1267
  %v1401 = vunpack.c.l.b16 %v1268
  %v1402 = vunpack.c.l.b16 %v1269
  %v1403 = vunpack.c.l.b16 %v1270
  %v1404 = vunpack.c.l.b16 %v1271
  %v1405 = vunpack.c.l.b16 %v1272
  %v1406 = vunpack.c.l.b16 %v1273
  %v1407 = vunpack.c.l.b16 %v1274
  %v1408 = vunpack.c.l.b16 %v1275
  %v1409 = vunpack.c.l.b16 %v1276
  %v1410 = vunpack.c.l.b16 %v1277
  %v1411 = vunpack.c.l.b16 %v1278
  %v1412 = vunpack.c.l.b16 %v1279
  %v1413 = vunpack.c.l.b16 %v1280
  %v1414 = vunpack.c.l.b16 %v1281
  %v1415 = vunpack.c.l.b16 %v1282
  %v1416 = vunpack.c.l.b16 %v1283
  %v1417 = vunpack.c.l.b16 %v1284
  %v1418 = vunpack.c.l.b16 %v1285
  %v1419 = vunpack.c.l.b16 %v1286
  %v1420 = vunpack.c.l.b16 %v1287
  %v1421 = vunpack.c.l.b16 %v1288
  %v1422 = vunpack.c.l.b16 %v1289
  %v1423 = vunpack.c.l.b16 %v1290
  %v1424 = vunpack.c.l.b16 %v1291
  %v1425 = vunpack.c.l.b16 %v1292
  %v1426 = vunpack.c.l.b16 %v1293
  %v1427 = vunpack.c.l.b16 %v1294
  %v1428 = vunpack.c.l.b16 %v1295
  %v1429 = vunpack.c.l.b16 %v1296
  %v1430 = vunpack.c.l.b16 %v1297
  %v1431 = vunpack.c.l.b16 %v1298
  %v1432 = vpack.c.b16 %v1369, %v1368
  %v1433 = vpack.c.b16 %v1371, %v1370
  %v1434 = vpack.c.b16 %v1373, %v1372
  %v1435 = vpack.c.b16 %v1375, %v1374
  %v1436 = vpack.c.b16 %v1377, %v1376
  %v1437 = vpack.c.b16 %v1379, %v1378
  %v1438 = vpack.c.b16 %v1381, %v1380
  %v1439 = vpack.c.b16 %v1383, %v1382
  %v1440 = vpack.c.b16 %v1385, %v1384
  %v1441 = vpack.c.b16 %v1387, %v1386
  %v1442 = vpack.c.b16 %v1389, %v1388
  %v1443 = vpack.c.b16 %v1391, %v1390
  %v1444 = vpack.c.b16 %v1393, %v1392
  %v1445 = vpack.c.b16 %v1395, %v1394
  %v1446 = vpack.c.b16 %v1397, %v1396
  %v1447 = vpack.c.b16 %v1399, %v1398
  %v1448 = vpack.c.b16 %v1401, %v1400
  %v1449 = vpack.c.b16 %v1403, %v1402
  %v1450 = vpack.c.b16 %v1405, %v1404
  %v1451 = vpack.c.b16 %v1407, %v1406
  %v1452 = vpack.c.b16 %v1409, %v1408
  %v1453 = vpack.c.b16 %v1411, %v1410
  %v1454 = vpack.c.b16 %v1413, %v1412
  %v1455 = vpack.c.b16 %v1415, %v1414
  %v1456 = vpack.c.b16 %v1417, %v1416
  %v1457 = vpack.c.b16 %v1419, %v1418
  %v1458 = vpack.c.b16 %v1421, %v1420
  %v1459 = vpack.c.b16 %v1423, %v1422
  %v1460 = vpack.c.b16 %v1425, %v1424
  %v1461 = vpack.c.b16 %v1427, %v1426
  %v1462 = vpack.c.b16 %v1429, %v1428
  %v1463 = vpack.c.b16 %v1431, %v1430
  %v1468 = vunpack.c.l.b16 %v1300
  %v1469 = vunpack.c.l.b16 %v1301
  %v1470 = vunpack.c.l.b16 %v1302
  %v1471 = vunpack.c.l.b16 %v1303
  %v1472 = vpack.c.b16 %v1469, %v1468
  %v1473 = vpack.c.b16 %v1471, %v1470
  %v1477 = vsel %vm329, %v1432, 0
  %v1480 = vsel %vm329, %v1433, 0
  %v1483 = vsel %vm329, %v1434, 0
  %v1486 = vsel %vm329, %v1435, 0
  %v1489 = vsel %vm329, %v1436, 0
  %v1492 = vsel %vm329, %v1437, 0
  %v1495 = vsel %vm329, %v1438, 0
  %v1498 = vsel %vm329, %v1439, 0
  %v1501 = vsel %vm329, %v1440, 0
  %v1504 = vsel %vm329, %v1441, 0
  %v1507 = vsel %vm329, %v1442, 0
  %v1510 = vsel %vm329, %v1443, 0
  %v1513 = vsel %vm329, %v1444, 0
  %v1516 = vsel %vm329, %v1445, 0
  %v1519 = vsel %vm329, %v1446, 0
  %v1522 = vsel %vm329, %v1447, 0
  %v1525 = vsel %vm329, %v1448, 0
  %v1528 = vsel %vm329, %v1449, 0
  %v1531 = vsel %vm329, %v1450, 0
  %v1534 = vsel %vm329, %v1451, 0
  %v1537 = vsel %vm329, %v1452, 0
  %v1540 = vsel %vm329, %v1453, 0
  %v1543 = vsel %vm329, %v1454, 0
  %v1546 = vsel %vm329, %v1455, 0
  %v1549 = vsel %vm329, %v1456, 0
  %v1552 = vsel %vm329, %v1457, 0
  %v1555 = vsel %vm329, %v1458, 0
  %v1558 = vsel %vm329, %v1459, 0
  %v1561 = vsel %vm329, %v1460, 0
  %v1564 = vsel %vm329, %v1461, 0
  %v1567 = vsel %vm329, %v1462, 0
  %v1570 = vsel %vm329, %v1463, 0
  %1572 = vmatpush.bf16.msra.mxu0 0
  %1573 = vmatpush.bf16.msra.mxu0 0
  %1574 = vmatpush.bf16.msra.mxu0 0
  %1575 = vmatpush.bf16.msra.mxu0 0
  %1576 = vmatpush.bf16.msra.mxu0 0
  %1577 = vmatpush.bf16.msra.mxu0 0
  %1578 = vmatpush.bf16.msra.mxu0 %v1473
  %1579 = vmatpush.bf16.msra.mxu0 %v1472
  %1580 = vmatmul.bf16.gmra.mxu0 %v1477
  %v1581 = vpop.f32.mrf.mxu0
  %v1582 = vadd.f32 0.0, %v1581
  %v1583 = vpop.f32.mrf.mxu0
  %v1584 = vadd.f32 0.0, %v1583
  %1585 = vmatmul.bf16.gmra.mxu0 %v1480
  %v1586 = vpop.f32.mrf.mxu0
  %v1587 = vadd.f32 0.0, %v1586
  %v1588 = vpop.f32.mrf.mxu0
  %v1589 = vadd.f32 0.0, %v1588
  %1590 = vmatmul.bf16.gmra.mxu0 %v1483
  %v1591 = vpop.f32.mrf.mxu0
  %v1592 = vadd.f32 0.0, %v1591
  %v1593 = vpop.f32.mrf.mxu0
  %v1594 = vadd.f32 0.0, %v1593
  %1595 = vmatmul.bf16.gmra.mxu0 %v1486
  %v1596 = vpop.f32.mrf.mxu0
  %v1597 = vadd.f32 0.0, %v1596
  %v1598 = vpop.f32.mrf.mxu0
  %v1599 = vadd.f32 0.0, %v1598
  %1600 = vmatmul.bf16.gmra.mxu0 %v1489
  %v1601 = vpop.f32.mrf.mxu0
  %v1602 = vadd.f32 0.0, %v1601
  %v1603 = vpop.f32.mrf.mxu0
  %v1604 = vadd.f32 0.0, %v1603
  %1605 = vmatmul.bf16.gmra.mxu0 %v1492
  %v1606 = vpop.f32.mrf.mxu0
  %v1607 = vadd.f32 0.0, %v1606
  %v1608 = vpop.f32.mrf.mxu0
  %v1609 = vadd.f32 0.0, %v1608
  %1610 = vmatmul.bf16.gmra.mxu0 %v1495
  %v1611 = vpop.f32.mrf.mxu0
  %v1612 = vadd.f32 0.0, %v1611
  %v1613 = vpop.f32.mrf.mxu0
  %v1614 = vadd.f32 0.0, %v1613
  %1615 = vmatmul.bf16.gmra.mxu0 %v1498
  %v1616 = vpop.f32.mrf.mxu0
  %v1617 = vadd.f32 0.0, %v1616
  %v1618 = vpop.f32.mrf.mxu0
  %v1619 = vadd.f32 0.0, %v1618
  %1620 = vmatmul.bf16.gmra.mxu0 %v1501
  %v1621 = vpop.f32.mrf.mxu0
  %v1622 = vadd.f32 0.0, %v1621
  %v1623 = vpop.f32.mrf.mxu0
  %v1624 = vadd.f32 0.0, %v1623
  %1625 = vmatmul.bf16.gmra.mxu0 %v1504
  %v1626 = vpop.f32.mrf.mxu0
  %v1627 = vadd.f32 0.0, %v1626
  %v1628 = vpop.f32.mrf.mxu0
  %v1629 = vadd.f32 0.0, %v1628
  %1630 = vmatmul.bf16.gmra.mxu0 %v1507
  %v1631 = vpop.f32.mrf.mxu0
  %v1632 = vadd.f32 0.0, %v1631
  %v1633 = vpop.f32.mrf.mxu0
  %v1634 = vadd.f32 0.0, %v1633
  %1635 = vmatmul.bf16.gmra.mxu0 %v1510
  %v1636 = vpop.f32.mrf.mxu0
  %v1637 = vadd.f32 0.0, %v1636
  %v1638 = vpop.f32.mrf.mxu0
  %v1639 = vadd.f32 0.0, %v1638
  %1640 = vmatmul.bf16.gmra.mxu0 %v1513
  %v1641 = vpop.f32.mrf.mxu0
  %v1642 = vadd.f32 0.0, %v1641
  %v1643 = vpop.f32.mrf.mxu0
  %v1644 = vadd.f32 0.0, %v1643
  %1645 = vmatmul.bf16.gmra.mxu0 %v1516
  %v1646 = vpop.f32.mrf.mxu0
  %v1647 = vadd.f32 0.0, %v1646
  %v1648 = vpop.f32.mrf.mxu0
  %v1649 = vadd.f32 0.0, %v1648
  %1650 = vmatmul.bf16.gmra.mxu0 %v1519
  %v1651 = vpop.f32.mrf.mxu0
  %v1652 = vadd.f32 0.0, %v1651
  %v1653 = vpop.f32.mrf.mxu0
  %v1654 = vadd.f32 0.0, %v1653
  %1655 = vmatmul.bf16.gmra.mxu0 %v1522
  %v1656 = vpop.f32.mrf.mxu0
  %v1657 = vadd.f32 0.0, %v1656
  %v1658 = vpop.f32.mrf.mxu0
  %v1659 = vadd.f32 0.0, %v1658
  %1660 = vmatmul.bf16.gmra.mxu0 %v1525
  %v1661 = vpop.f32.mrf.mxu0
  %v1662 = vadd.f32 0.0, %v1661
  %v1663 = vpop.f32.mrf.mxu0
  %v1664 = vadd.f32 0.0, %v1663
  %1665 = vmatmul.bf16.gmra.mxu0 %v1528
  %v1666 = vpop.f32.mrf.mxu0
  %v1667 = vadd.f32 0.0, %v1666
  %v1668 = vpop.f32.mrf.mxu0
  %v1669 = vadd.f32 0.0, %v1668
  %1670 = vmatmul.bf16.gmra.mxu0 %v1531
  %v1671 = vpop.f32.mrf.mxu0
  %v1672 = vadd.f32 0.0, %v1671
  %v1673 = vpop.f32.mrf.mxu0
  %v1674 = vadd.f32 0.0, %v1673
  %1675 = vmatmul.bf16.gmra.mxu0 %v1534
  %v1676 = vpop.f32.mrf.mxu0
  %v1677 = vadd.f32 0.0, %v1676
  %v1678 = vpop.f32.mrf.mxu0
  %v1679 = vadd.f32 0.0, %v1678
  %1680 = vmatmul.bf16.gmra.mxu0 %v1537
  %v1681 = vpop.f32.mrf.mxu0
  %v1682 = vadd.f32 0.0, %v1681
  %v1683 = vpop.f32.mrf.mxu0
  %v1684 = vadd.f32 0.0, %v1683
  %1685 = vmatmul.bf16.gmra.mxu0 %v1540
  %v1686 = vpop.f32.mrf.mxu0
  %v1687 = vadd.f32 0.0, %v1686
  %v1688 = vpop.f32.mrf.mxu0
  %v1689 = vadd.f32 0.0, %v1688
  %1690 = vmatmul.bf16.gmra.mxu0 %v1543
  %v1691 = vpop.f32.mrf.mxu0
  %v1692 = vadd.f32 0.0, %v1691
  %v1693 = vpop.f32.mrf.mxu0
  %v1694 = vadd.f32 0.0, %v1693
  %1695 = vmatmul.bf16.gmra.mxu0 %v1546
  %v1696 = vpop.f32.mrf.mxu0
  %v1697 = vadd.f32 0.0, %v1696
  %v1698 = vpop.f32.mrf.mxu0
  %v1699 = vadd.f32 0.0, %v1698
  %1700 = vmatmul.bf16.gmra.mxu0 %v1549
  %v1701 = vpop.f32.mrf.mxu0
  %v1702 = vadd.f32 0.0, %v1701
  %v1703 = vpop.f32.mrf.mxu0
  %v1704 = vadd.f32 0.0, %v1703
  %1705 = vmatmul.bf16.gmra.mxu0 %v1552
  %v1706 = vpop.f32.mrf.mxu0
  %v1707 = vadd.f32 0.0, %v1706
  %v1708 = vpop.f32.mrf.mxu0
  %v1709 = vadd.f32 0.0, %v1708
  %1710 = vmatmul.bf16.gmra.mxu0 %v1555
  %v1711 = vpop.f32.mrf.mxu0
  %v1712 = vadd.f32 0.0, %v1711
  %v1713 = vpop.f32.mrf.mxu0
  %v1714 = vadd.f32 0.0, %v1713
  %1715 = vmatmul.bf16.gmra.mxu0 %v1558
  %v1716 = vpop.f32.mrf.mxu0
  %v1717 = vadd.f32 0.0, %v1716
  %v1718 = vpop.f32.mrf.mxu0
  %v1719 = vadd.f32 0.0, %v1718
  %1720 = vmatmul.bf16.gmra.mxu0 %v1561
  %v1721 = vpop.f32.mrf.mxu0
  %v1722 = vadd.f32 0.0, %v1721
  %v1723 = vpop.f32.mrf.mxu0
  %v1724 = vadd.f32 0.0, %v1723
  %1725 = vmatmul.bf16.gmra.mxu0 %v1564
  %v1726 = vpop.f32.mrf.mxu0
  %v1727 = vadd.f32 0.0, %v1726
  %v1728 = vpop.f32.mrf.mxu0
  %v1729 = vadd.f32 0.0, %v1728
  %1730 = vmatmul.bf16.gmra.mxu0 %v1567
  %v1731 = vpop.f32.mrf.mxu0
  %v1732 = vadd.f32 0.0, %v1731
  %v1733 = vpop.f32.mrf.mxu0
  %v1734 = vadd.f32 0.0, %v1733
  %1735 = vmatmul.bf16.gmra.mxu0 %v1570
  %v1736 = vpop.f32.mrf.mxu0
  %v1737 = vadd.f32 0.0, %v1736
  %v1738 = vpop.f32.mrf.mxu0
  %v1739 = vadd.f32 0.0, %v1738
  %1740 = vdwg.mxu0
  %v1805 = vunpack.c.l.b16 %v1165
  %v1806 = vunpack.c.l.b16 %v1166
  %v1807 = vunpack.c.l.b16 %v1167
  %v1808 = vunpack.c.l.b16 %v1168
  %v1809 = vunpack.c.l.b16 %v1169
  %v1810 = vunpack.c.l.b16 %v1170
  %v1811 = vunpack.c.l.b16 %v1171
  %v1812 = vunpack.c.l.b16 %v1172
  %v1813 = vunpack.c.l.b16 %v1173
  %v1814 = vunpack.c.l.b16 %v1174
  %v1815 = vunpack.c.l.b16 %v1175
  %v1816 = vunpack.c.l.b16 %v1176
  %v1817 = vunpack.c.l.b16 %v1177
  %v1818 = vunpack.c.l.b16 %v1178
  %v1819 = vunpack.c.l.b16 %v1179
  %v1820 = vunpack.c.l.b16 %v1180
  %v1821 = vunpack.c.l.b16 %v1181
  %v1822 = vunpack.c.l.b16 %v1182
  %v1823 = vunpack.c.l.b16 %v1183
  %v1824 = vunpack.c.l.b16 %v1184
  %v1825 = vunpack.c.l.b16 %v1185
  %v1826 = vunpack.c.l.b16 %v1186
  %v1827 = vunpack.c.l.b16 %v1187
  %v1828 = vunpack.c.l.b16 %v1188
  %v1829 = vunpack.c.l.b16 %v1189
  %v1830 = vunpack.c.l.b16 %v1190
  %v1831 = vunpack.c.l.b16 %v1191
  %v1832 = vunpack.c.l.b16 %v1192
  %v1833 = vunpack.c.l.b16 %v1193
  %v1834 = vunpack.c.l.b16 %v1194
  %v1835 = vunpack.c.l.b16 %v1195
  %v1836 = vunpack.c.l.b16 %v1196
  %v1837 = vunpack.c.l.b16 %v1197
  %v1838 = vunpack.c.l.b16 %v1198
  %v1839 = vunpack.c.l.b16 %v1199
  %v1840 = vunpack.c.l.b16 %v1200
  %v1841 = vunpack.c.l.b16 %v1201
  %v1842 = vunpack.c.l.b16 %v1202
  %v1843 = vunpack.c.l.b16 %v1203
  %v1844 = vunpack.c.l.b16 %v1204
  %v1845 = vunpack.c.l.b16 %v1205
  %v1846 = vunpack.c.l.b16 %v1206
  %v1847 = vunpack.c.l.b16 %v1207
  %v1848 = vunpack.c.l.b16 %v1208
  %v1849 = vunpack.c.l.b16 %v1209
  %v1850 = vunpack.c.l.b16 %v1210
  %v1851 = vunpack.c.l.b16 %v1211
  %v1852 = vunpack.c.l.b16 %v1212
  %v1853 = vunpack.c.l.b16 %v1213
  %v1854 = vunpack.c.l.b16 %v1214
  %v1855 = vunpack.c.l.b16 %v1215
  %v1856 = vunpack.c.l.b16 %v1216
  %v1857 = vunpack.c.l.b16 %v1217
  %v1858 = vunpack.c.l.b16 %v1218
  %v1859 = vunpack.c.l.b16 %v1219
  %v1860 = vunpack.c.l.b16 %v1220
  %v1861 = vunpack.c.l.b16 %v1221
  %v1862 = vunpack.c.l.b16 %v1222
  %v1863 = vunpack.c.l.b16 %v1223
  %v1864 = vunpack.c.l.b16 %v1224
  %v1865 = vunpack.c.l.b16 %v1225
  %v1866 = vunpack.c.l.b16 %v1226
  %v1867 = vunpack.c.l.b16 %v1227
  %v1868 = vunpack.c.l.b16 %v1228
  %v1869 = vpack.c.b16 %v1806, %v1805
  %v1870 = vpack.c.b16 %v1808, %v1807
  %v1871 = vpack.c.b16 %v1810, %v1809
  %v1872 = vpack.c.b16 %v1812, %v1811
  %v1873 = vpack.c.b16 %v1814, %v1813
  %v1874 = vpack.c.b16 %v1816, %v1815
  %v1875 = vpack.c.b16 %v1818, %v1817
  %v1876 = vpack.c.b16 %v1820, %v1819
  %v1877 = vpack.c.b16 %v1822, %v1821
  %v1878 = vpack.c.b16 %v1824, %v1823
  %v1879 = vpack.c.b16 %v1826, %v1825
  %v1880 = vpack.c.b16 %v1828, %v1827
  %v1881 = vpack.c.b16 %v1830, %v1829
  %v1882 = vpack.c.b16 %v1832, %v1831
  %v1883 = vpack.c.b16 %v1834, %v1833
  %v1884 = vpack.c.b16 %v1836, %v1835
  %v1885 = vpack.c.b16 %v1838, %v1837
  %v1886 = vpack.c.b16 %v1840, %v1839
  %v1887 = vpack.c.b16 %v1842, %v1841
  %v1888 = vpack.c.b16 %v1844, %v1843
  %v1889 = vpack.c.b16 %v1846, %v1845
  %v1890 = vpack.c.b16 %v1848, %v1847
  %v1891 = vpack.c.b16 %v1850, %v1849
  %v1892 = vpack.c.b16 %v1852, %v1851
  %v1893 = vpack.c.b16 %v1854, %v1853
  %v1894 = vpack.c.b16 %v1856, %v1855
  %v1895 = vpack.c.b16 %v1858, %v1857
  %v1896 = vpack.c.b16 %v1860, %v1859
  %v1897 = vpack.c.b16 %v1862, %v1861
  %v1898 = vpack.c.b16 %v1864, %v1863
  %v1899 = vpack.c.b16 %v1866, %v1865
  %v1900 = vpack.c.b16 %v1868, %v1867
  %v1905 = vunpack.c.l.b16 %v1230
  %v1906 = vunpack.c.l.b16 %v1231
  %v1907 = vunpack.c.l.b16 %v1232
  %v1908 = vunpack.c.l.b16 %v1233
  %v1909 = vpack.c.b16 %v1906, %v1905
  %v1910 = vpack.c.b16 %v1908, %v1907
  %v1914 = vsel %vm329, %v1869, 0
  %v1917 = vsel %vm329, %v1870, 0
  %v1920 = vsel %vm329, %v1871, 0
  %v1923 = vsel %vm329, %v1872, 0
  %v1926 = vsel %vm329, %v1873, 0
  %v1929 = vsel %vm329, %v1874, 0
  %v1932 = vsel %vm329, %v1875, 0
  %v1935 = vsel %vm329, %v1876, 0
  %v1938 = vsel %vm329, %v1877, 0
  %v1941 = vsel %vm329, %v1878, 0
  %v1944 = vsel %vm329, %v1879, 0
  %v1947 = vsel %vm329, %v1880, 0
  %v1950 = vsel %vm329, %v1881, 0
  %v1953 = vsel %vm329, %v1882, 0
  %v1956 = vsel %vm329, %v1883, 0
  %v1959 = vsel %vm329, %v1884, 0
  %v1962 = vsel %vm329, %v1885, 0
  %v1965 = vsel %vm329, %v1886, 0
  %v1968 = vsel %vm329, %v1887, 0
  %v1971 = vsel %vm329, %v1888, 0
  %v1974 = vsel %vm329, %v1889, 0
  %v1977 = vsel %vm329, %v1890, 0
  %v1980 = vsel %vm329, %v1891, 0
  %v1983 = vsel %vm329, %v1892, 0
  %v1986 = vsel %vm329, %v1893, 0
  %v1989 = vsel %vm329, %v1894, 0
  %v1992 = vsel %vm329, %v1895, 0
  %v1995 = vsel %vm329, %v1896, 0
  %v1998 = vsel %vm329, %v1897, 0
  %v2001 = vsel %vm329, %v1898, 0
  %v2004 = vsel %vm329, %v1899, 0
  %v2007 = vsel %vm329, %v1900, 0
  %2009 = vmatpush.bf16.msra.mxu0 0
  %2010 = vmatpush.bf16.msra.mxu0 0
  %2011 = vmatpush.bf16.msra.mxu0 0
  %2012 = vmatpush.bf16.msra.mxu0 0
  %2013 = vmatpush.bf16.msra.mxu0 0
  %2014 = vmatpush.bf16.msra.mxu0 0
  %2015 = vmatpush.bf16.msra.mxu0 %v1910
  %2016 = vmatpush.bf16.msra.mxu0 %v1909
  %2017 = vmatmul.bf16.gmra.mxu0 %v1914
  %v2018 = vpop.f32.mrf.mxu0
  %v2019 = vadd.f32 %v1582, %v2018
  %v2020 = vpop.f32.mrf.mxu0
  %v2021 = vadd.f32 %v1584, %v2020
  %2022 = vmatmul.bf16.gmra.mxu0 %v1917
  %v2023 = vpop.f32.mrf.mxu0
  %v2024 = vadd.f32 %v1587, %v2023
  %v2025 = vpop.f32.mrf.mxu0
  %v2026 = vadd.f32 %v1589, %v2025
  %2027 = vmatmul.bf16.gmra.mxu0 %v1920
  %v2028 = vpop.f32.mrf.mxu0
  %v2029 = vadd.f32 %v1592, %v2028
  %v2030 = vpop.f32.mrf.mxu0
  %v2031 = vadd.f32 %v1594, %v2030
  %2032 = vmatmul.bf16.gmra.mxu0 %v1923
  %v2033 = vpop.f32.mrf.mxu0
  %v2034 = vadd.f32 %v1597, %v2033
  %v2035 = vpop.f32.mrf.mxu0
  %v2036 = vadd.f32 %v1599, %v2035
  %2037 = vmatmul.bf16.gmra.mxu0 %v1926
  %v2038 = vpop.f32.mrf.mxu0
  %v2039 = vadd.f32 %v1602, %v2038
  %v2040 = vpop.f32.mrf.mxu0
  %v2041 = vadd.f32 %v1604, %v2040
  %2042 = vmatmul.bf16.gmra.mxu0 %v1929
  %v2043 = vpop.f32.mrf.mxu0
  %v2044 = vadd.f32 %v1607, %v2043
  %v2045 = vpop.f32.mrf.mxu0
  %v2046 = vadd.f32 %v1609, %v2045
  %2047 = vmatmul.bf16.gmra.mxu0 %v1932
  %v2048 = vpop.f32.mrf.mxu0
  %v2049 = vadd.f32 %v1612, %v2048
  %v2050 = vpop.f32.mrf.mxu0
  %v2051 = vadd.f32 %v1614, %v2050
  %2052 = vmatmul.bf16.gmra.mxu0 %v1935
  %v2053 = vpop.f32.mrf.mxu0
  %v2054 = vadd.f32 %v1617, %v2053
  %v2055 = vpop.f32.mrf.mxu0
  %v2056 = vadd.f32 %v1619, %v2055
  %2057 = vmatmul.bf16.gmra.mxu0 %v1938
  %v2058 = vpop.f32.mrf.mxu0
  %v2059 = vadd.f32 %v1622, %v2058
  %v2060 = vpop.f32.mrf.mxu0
  %v2061 = vadd.f32 %v1624, %v2060
  %2062 = vmatmul.bf16.gmra.mxu0 %v1941
  %v2063 = vpop.f32.mrf.mxu0
  %v2064 = vadd.f32 %v1627, %v2063
  %v2065 = vpop.f32.mrf.mxu0
  %v2066 = vadd.f32 %v1629, %v2065
  %2067 = vmatmul.bf16.gmra.mxu0 %v1944
  %v2068 = vpop.f32.mrf.mxu0
  %v2069 = vadd.f32 %v1632, %v2068
  %v2070 = vpop.f32.mrf.mxu0
  %v2071 = vadd.f32 %v1634, %v2070
  %2072 = vmatmul.bf16.gmra.mxu0 %v1947
  %v2073 = vpop.f32.mrf.mxu0
  %v2074 = vadd.f32 %v1637, %v2073
  %v2075 = vpop.f32.mrf.mxu0
  %v2076 = vadd.f32 %v1639, %v2075
  %2077 = vmatmul.bf16.gmra.mxu0 %v1950
  %v2078 = vpop.f32.mrf.mxu0
  %v2079 = vadd.f32 %v1642, %v2078
  %v2080 = vpop.f32.mrf.mxu0
  %v2081 = vadd.f32 %v1644, %v2080
  %2082 = vmatmul.bf16.gmra.mxu0 %v1953
  %v2083 = vpop.f32.mrf.mxu0
  %v2084 = vadd.f32 %v1647, %v2083
  %v2085 = vpop.f32.mrf.mxu0
  %v2086 = vadd.f32 %v1649, %v2085
  %2087 = vmatmul.bf16.gmra.mxu0 %v1956
  %v2088 = vpop.f32.mrf.mxu0
  %v2089 = vadd.f32 %v1652, %v2088
  %v2090 = vpop.f32.mrf.mxu0
  %v2091 = vadd.f32 %v1654, %v2090
  %2092 = vmatmul.bf16.gmra.mxu0 %v1959
  %v2093 = vpop.f32.mrf.mxu0
  %v2094 = vadd.f32 %v1657, %v2093
  %v2095 = vpop.f32.mrf.mxu0
  %v2096 = vadd.f32 %v1659, %v2095
  %2097 = vmatmul.bf16.gmra.mxu0 %v1962
  %v2098 = vpop.f32.mrf.mxu0
  %v2099 = vadd.f32 %v1662, %v2098
  %v2100 = vpop.f32.mrf.mxu0
  %v2101 = vadd.f32 %v1664, %v2100
  %2102 = vmatmul.bf16.gmra.mxu0 %v1965
  %v2103 = vpop.f32.mrf.mxu0
  %v2104 = vadd.f32 %v1667, %v2103
  %v2105 = vpop.f32.mrf.mxu0
  %v2106 = vadd.f32 %v1669, %v2105
  %2107 = vmatmul.bf16.gmra.mxu0 %v1968
  %v2108 = vpop.f32.mrf.mxu0
  %v2109 = vadd.f32 %v1672, %v2108
  %v2110 = vpop.f32.mrf.mxu0
  %v2111 = vadd.f32 %v1674, %v2110
  %2112 = vmatmul.bf16.gmra.mxu0 %v1971
  %v2113 = vpop.f32.mrf.mxu0
  %v2114 = vadd.f32 %v1677, %v2113
  %v2115 = vpop.f32.mrf.mxu0
  %v2116 = vadd.f32 %v1679, %v2115
  %2117 = vmatmul.bf16.gmra.mxu0 %v1974
  %v2118 = vpop.f32.mrf.mxu0
  %v2119 = vadd.f32 %v1682, %v2118
  %v2120 = vpop.f32.mrf.mxu0
  %v2121 = vadd.f32 %v1684, %v2120
  %2122 = vmatmul.bf16.gmra.mxu0 %v1977
  %v2123 = vpop.f32.mrf.mxu0
  %v2124 = vadd.f32 %v1687, %v2123
  %v2125 = vpop.f32.mrf.mxu0
  %v2126 = vadd.f32 %v1689, %v2125
  %2127 = vmatmul.bf16.gmra.mxu0 %v1980
  %v2128 = vpop.f32.mrf.mxu0
  %v2129 = vadd.f32 %v1692, %v2128
  %v2130 = vpop.f32.mrf.mxu0
  %v2131 = vadd.f32 %v1694, %v2130
  %2132 = vmatmul.bf16.gmra.mxu0 %v1983
  %v2133 = vpop.f32.mrf.mxu0
  %v2134 = vadd.f32 %v1697, %v2133
  %v2135 = vpop.f32.mrf.mxu0
  %v2136 = vadd.f32 %v1699, %v2135
  %2137 = vmatmul.bf16.gmra.mxu0 %v1986
  %v2138 = vpop.f32.mrf.mxu0
  %v2139 = vadd.f32 %v1702, %v2138
  %v2140 = vpop.f32.mrf.mxu0
  %v2141 = vadd.f32 %v1704, %v2140
  %2142 = vmatmul.bf16.gmra.mxu0 %v1989
  %v2143 = vpop.f32.mrf.mxu0
  %v2144 = vadd.f32 %v1707, %v2143
  %v2145 = vpop.f32.mrf.mxu0
  %v2146 = vadd.f32 %v1709, %v2145
  %2147 = vmatmul.bf16.gmra.mxu0 %v1992
  %v2148 = vpop.f32.mrf.mxu0
  %v2149 = vadd.f32 %v1712, %v2148
  %v2150 = vpop.f32.mrf.mxu0
  %v2151 = vadd.f32 %v1714, %v2150
  %2152 = vmatmul.bf16.gmra.mxu0 %v1995
  %v2153 = vpop.f32.mrf.mxu0
  %v2154 = vadd.f32 %v1717, %v2153
  %v2155 = vpop.f32.mrf.mxu0
  %v2156 = vadd.f32 %v1719, %v2155
  %2157 = vmatmul.bf16.gmra.mxu0 %v1998
  %v2158 = vpop.f32.mrf.mxu0
  %v2159 = vadd.f32 %v1722, %v2158
  %v2160 = vpop.f32.mrf.mxu0
  %v2161 = vadd.f32 %v1724, %v2160
  %2162 = vmatmul.bf16.gmra.mxu0 %v2001
  %v2163 = vpop.f32.mrf.mxu0
  %v2164 = vadd.f32 %v1727, %v2163
  %v2165 = vpop.f32.mrf.mxu0
  %v2166 = vadd.f32 %v1729, %v2165
  %2167 = vmatmul.bf16.gmra.mxu0 %v2004
  %v2168 = vpop.f32.mrf.mxu0
  %v2169 = vadd.f32 %v1732, %v2168
  %v2170 = vpop.f32.mrf.mxu0
  %v2171 = vadd.f32 %v1734, %v2170
  %2172 = vmatmul.bf16.gmra.mxu0 %v2007
  %v2173 = vpop.f32.mrf.mxu0
  %v2174 = vadd.f32 %v1737, %v2173
  %v2175 = vpop.f32.mrf.mxu0
  %v2176 = vadd.f32 %v1739, %v2175
  %2177 = vdwg.mxu0
  %v2178 = vadd.f32 %v2019, %v1034
  %v2179 = vadd.f32 %v2021, %v1034
  %v2180 = vadd.f32 %v2024, %v1034
  %v2181 = vadd.f32 %v2026, %v1034
  %v2182 = vadd.f32 %v2029, %v1034
  %v2183 = vadd.f32 %v2031, %v1034
  %v2184 = vadd.f32 %v2034, %v1034
  %v2185 = vadd.f32 %v2036, %v1034
  %v2186 = vadd.f32 %v2039, %v1034
  %v2187 = vadd.f32 %v2041, %v1034
  %v2188 = vadd.f32 %v2044, %v1034
  %v2189 = vadd.f32 %v2046, %v1034
  %v2190 = vadd.f32 %v2049, %v1034
  %v2191 = vadd.f32 %v2051, %v1034
  %v2192 = vadd.f32 %v2054, %v1034
  %v2193 = vadd.f32 %v2056, %v1034
  %v2194 = vadd.f32 %v2059, %v1034
  %v2195 = vadd.f32 %v2061, %v1034
  %v2196 = vadd.f32 %v2064, %v1034
  %v2197 = vadd.f32 %v2066, %v1034
  %v2198 = vadd.f32 %v2069, %v1034
  %v2199 = vadd.f32 %v2071, %v1034
  %v2200 = vadd.f32 %v2074, %v1034
  %v2201 = vadd.f32 %v2076, %v1034
  %v2202 = vadd.f32 %v2079, %v1034
  %v2203 = vadd.f32 %v2081, %v1034
  %v2204 = vadd.f32 %v2084, %v1034
  %v2205 = vadd.f32 %v2086, %v1034
  %v2206 = vadd.f32 %v2089, %v1034
  %v2207 = vadd.f32 %v2091, %v1034
  %v2208 = vadd.f32 %v2094, %v1034
  %v2209 = vadd.f32 %v2096, %v1034
  %v2210 = vadd.f32 %v2099, %v1034
  %v2211 = vadd.f32 %v2101, %v1034
  %v2212 = vadd.f32 %v2104, %v1034
  %v2213 = vadd.f32 %v2106, %v1034
  %v2214 = vadd.f32 %v2109, %v1034
  %v2215 = vadd.f32 %v2111, %v1034
  %v2216 = vadd.f32 %v2114, %v1034
  %v2217 = vadd.f32 %v2116, %v1034
  %v2218 = vadd.f32 %v2119, %v1034
  %v2219 = vadd.f32 %v2121, %v1034
  %v2220 = vadd.f32 %v2124, %v1034
  %v2221 = vadd.f32 %v2126, %v1034
  %v2222 = vadd.f32 %v2129, %v1034
  %v2223 = vadd.f32 %v2131, %v1034
  %v2224 = vadd.f32 %v2134, %v1034
  %v2225 = vadd.f32 %v2136, %v1034
  %v2226 = vadd.f32 %v2139, %v1034
  %v2227 = vadd.f32 %v2141, %v1034
  %v2228 = vadd.f32 %v2144, %v1034
  %v2229 = vadd.f32 %v2146, %v1034
  %v2230 = vadd.f32 %v2149, %v1034
  %v2231 = vadd.f32 %v2151, %v1034
  %v2232 = vadd.f32 %v2154, %v1034
  %v2233 = vadd.f32 %v2156, %v1034
  %v2234 = vadd.f32 %v2159, %v1034
  %v2235 = vadd.f32 %v2161, %v1034
  %v2236 = vadd.f32 %v2164, %v1034
  %v2237 = vadd.f32 %v2166, %v1034
  %v2238 = vadd.f32 %v2169, %v1034
  %v2239 = vadd.f32 %v2171, %v1034
  %v2240 = vadd.f32 %v2174, %v1034
  %v2241 = vadd.f32 %v2176, %v1034
  %v2242 = vtanh.pop %v2178
  %v2243 = vtanh.pop %v2179
  %v2244 = vtanh.pop %v2180
  %v2245 = vtanh.pop %v2181
  %v2246 = vtanh.pop %v2182
  %v2247 = vtanh.pop %v2183
  %v2248 = vtanh.pop %v2184
  %v2249 = vtanh.pop %v2185
  %v2250 = vtanh.pop %v2186
  %v2251 = vtanh.pop %v2187
  %v2252 = vtanh.pop %v2188
  %v2253 = vtanh.pop %v2189
  %v2254 = vtanh.pop %v2190
  %v2255 = vtanh.pop %v2191
  %v2256 = vtanh.pop %v2192
  %v2257 = vtanh.pop %v2193
  %v2258 = vtanh.pop %v2194
  %v2259 = vtanh.pop %v2195
  %v2260 = vtanh.pop %v2196
  %v2261 = vtanh.pop %v2197
  %v2262 = vtanh.pop %v2198
  %v2263 = vtanh.pop %v2199
  %v2264 = vtanh.pop %v2200
  %v2265 = vtanh.pop %v2201
  %v2266 = vtanh.pop %v2202
  %v2267 = vtanh.pop %v2203
  %v2268 = vtanh.pop %v2204
  %v2269 = vtanh.pop %v2205
  %v2270 = vtanh.pop %v2206
  %v2271 = vtanh.pop %v2207
  %v2272 = vtanh.pop %v2208
  %v2273 = vtanh.pop %v2209
  %v2274 = vtanh.pop %v2210
  %v2275 = vtanh.pop %v2211
  %v2276 = vtanh.pop %v2212
  %v2277 = vtanh.pop %v2213
  %v2278 = vtanh.pop %v2214
  %v2279 = vtanh.pop %v2215
  %v2280 = vtanh.pop %v2216
  %v2281 = vtanh.pop %v2217
  %v2282 = vtanh.pop %v2218
  %v2283 = vtanh.pop %v2219
  %v2284 = vtanh.pop %v2220
  %v2285 = vtanh.pop %v2221
  %v2286 = vtanh.pop %v2222
  %v2287 = vtanh.pop %v2223
  %v2288 = vtanh.pop %v2224
  %v2289 = vtanh.pop %v2225
  %v2290 = vtanh.pop %v2226
  %v2291 = vtanh.pop %v2227
  %v2292 = vtanh.pop %v2228
  %v2293 = vtanh.pop %v2229
  %v2294 = vtanh.pop %v2230
  %v2295 = vtanh.pop %v2231
  %v2296 = vtanh.pop %v2232
  %v2297 = vtanh.pop %v2233
  %v2298 = vtanh.pop %v2234
  %v2299 = vtanh.pop %v2235
  %v2300 = vtanh.pop %v2236
  %v2301 = vtanh.pop %v2237
  %v2302 = vtanh.pop %v2238
  %v2303 = vtanh.pop %v2239
  %v2304 = vtanh.pop %v2240
  %v2305 = vtanh.pop %v2241
  %s2306 = scalar_lea.vmem %s0, 512
  %v2307 = vld [vmem:[%s2306] sm:$0xf]
  %v2308 = vld [vmem:[%s2306 + $0x4] sm:$0xf]
  %v2309 = vld [vmem:[%s2306 + $0x8] sm:$0xf]
  %v2310 = vld [vmem:[%s2306 + $0xc] sm:$0xf]
  %v2311 = vld [vmem:[%s2306 + $0x10] sm:$0xf]
  %v2312 = vld [vmem:[%s2306 + $0x14] sm:$0xf]
  %v2313 = vld [vmem:[%s2306 + $0x18] sm:$0xf]
  %v2314 = vld [vmem:[%s2306 + $0x1c] sm:$0xf]
  %v2315 = vld [vmem:[%s2306 + $0x20] sm:$0xf]
  %v2316 = vld [vmem:[%s2306 + $0x24] sm:$0xf]
  %v2317 = vld [vmem:[%s2306 + $0x28] sm:$0xf]
  %v2318 = vld [vmem:[%s2306 + $0x2c] sm:$0xf]
  %v2319 = vld [vmem:[%s2306 + $0x30] sm:$0xf]
  %v2320 = vld [vmem:[%s2306 + $0x34] sm:$0xf]
  %v2321 = vld [vmem:[%s2306 + $0x38] sm:$0xf]
  %v2322 = vld [vmem:[%s2306 + $0x3c] sm:$0xf]
  %v2323 = vld [vmem:[%s2306 + $0x40] sm:$0xf]
  %v2324 = vld [vmem:[%s2306 + $0x44] sm:$0xf]
  %v2325 = vld [vmem:[%s2306 + $0x48] sm:$0xf]
  %v2326 = vld [vmem:[%s2306 + $0x4c] sm:$0xf]
  %v2327 = vld [vmem:[%s2306 + $0x50] sm:$0xf]
  %v2328 = vld [vmem:[%s2306 + $0x54] sm:$0xf]
  %v2329 = vld [vmem:[%s2306 + $0x58] sm:$0xf]
  %v2330 = vld [vmem:[%s2306 + $0x5c] sm:$0xf]
  %v2331 = vld [vmem:[%s2306 + $0x60] sm:$0xf]
  %v2332 = vld [vmem:[%s2306 + $0x64] sm:$0xf]
  %v2333 = vld [vmem:[%s2306 + $0x68] sm:$0xf]
  %v2334 = vld [vmem:[%s2306 + $0x6c] sm:$0xf]
  %v2335 = vld [vmem:[%s2306 + $0x70] sm:$0xf]
  %v2336 = vld [vmem:[%s2306 + $0x74] sm:$0xf]
  %v2337 = vld [vmem:[%s2306 + $0x78] sm:$0xf]
  %v2338 = vld [vmem:[%s2306 + $0x7c] sm:$0xf]
  %v2339 = vld [vmem:[%s2306 + $0x80] sm:$0xf]
  %v2340 = vld [vmem:[%s2306 + $0x84] sm:$0xf]
  %v2341 = vld [vmem:[%s2306 + $0x88] sm:$0xf]
  %v2342 = vld [vmem:[%s2306 + $0x8c] sm:$0xf]
  %v2343 = vld [vmem:[%s2306 + $0x90] sm:$0xf]
  %v2344 = vld [vmem:[%s2306 + $0x94] sm:$0xf]
  %v2345 = vld [vmem:[%s2306 + $0x98] sm:$0xf]
  %v2346 = vld [vmem:[%s2306 + $0x9c] sm:$0xf]
  %v2347 = vld [vmem:[%s2306 + $0xa0] sm:$0xf]
  %v2348 = vld [vmem:[%s2306 + $0xa4] sm:$0xf]
  %v2349 = vld [vmem:[%s2306 + $0xa8] sm:$0xf]
  %v2350 = vld [vmem:[%s2306 + $0xac] sm:$0xf]
  %v2351 = vld [vmem:[%s2306 + $0xb0] sm:$0xf]
  %v2352 = vld [vmem:[%s2306 + $0xb4] sm:$0xf]
  %v2353 = vld [vmem:[%s2306 + $0xb8] sm:$0xf]
  %v2354 = vld [vmem:[%s2306 + $0xbc] sm:$0xf]
  %v2355 = vld [vmem:[%s2306 + $0xc0] sm:$0xf]
  %v2356 = vld [vmem:[%s2306 + $0xc4] sm:$0xf]
  %v2357 = vld [vmem:[%s2306 + $0xc8] sm:$0xf]
  %v2358 = vld [vmem:[%s2306 + $0xcc] sm:$0xf]
  %v2359 = vld [vmem:[%s2306 + $0xd0] sm:$0xf]
  %v2360 = vld [vmem:[%s2306 + $0xd4] sm:$0xf]
  %v2361 = vld [vmem:[%s2306 + $0xd8] sm:$0xf]
  %v2362 = vld [vmem:[%s2306 + $0xdc] sm:$0xf]
  %v2363 = vld [vmem:[%s2306 + $0xe0] sm:$0xf]
  %v2364 = vld [vmem:[%s2306 + $0xe4] sm:$0xf]
  %v2365 = vld [vmem:[%s2306 + $0xe8] sm:$0xf]
  %v2366 = vld [vmem:[%s2306 + $0xec] sm:$0xf]
  %v2367 = vld [vmem:[%s2306 + $0xf0] sm:$0xf]
  %v2368 = vld [vmem:[%s2306 + $0xf4] sm:$0xf]
  %v2369 = vld [vmem:[%s2306 + $0xf8] sm:$0xf]
  %v2370 = vld [vmem:[%s2306 + $0xfc] sm:$0xf]
  %s2371 = scalar_lea.vmem %s2, 32
  %v2372 = vld [vmem:[%s2371] sm:$0xf]
  %v2373 = vld [vmem:[%s2371 + $0x4] sm:$0xf]
  %v2374 = vld [vmem:[%s2371 + $0x8] sm:$0xf]
  %v2375 = vld [vmem:[%s2371 + $0xc] sm:$0xf]
  %s2376 = scalar_lea.vmem %s1, 512
  %v2377 = vld [vmem:[%s2376] sm:$0xf]
  %v2378 = vld [vmem:[%s2376 + $0x4] sm:$0xf]
  %v2379 = vld [vmem:[%s2376 + $0x8] sm:$0xf]
  %v2380 = vld [vmem:[%s2376 + $0xc] sm:$0xf]
  %v2381 = vld [vmem:[%s2376 + $0x10] sm:$0xf]
  %v2382 = vld [vmem:[%s2376 + $0x14] sm:$0xf]
  %v2383 = vld [vmem:[%s2376 + $0x18] sm:$0xf]
  %v2384 = vld [vmem:[%s2376 + $0x1c] sm:$0xf]
  %v2385 = vld [vmem:[%s2376 + $0x20] sm:$0xf]
  %v2386 = vld [vmem:[%s2376 + $0x24] sm:$0xf]
  %v2387 = vld [vmem:[%s2376 + $0x28] sm:$0xf]
  %v2388 = vld [vmem:[%s2376 + $0x2c] sm:$0xf]
  %v2389 = vld [vmem:[%s2376 + $0x30] sm:$0xf]
  %v2390 = vld [vmem:[%s2376 + $0x34] sm:$0xf]
  %v2391 = vld [vmem:[%s2376 + $0x38] sm:$0xf]
  %v2392 = vld [vmem:[%s2376 + $0x3c] sm:$0xf]
  %v2393 = vld [vmem:[%s2376 + $0x40] sm:$0xf]
  %v2394 = vld [vmem:[%s2376 + $0x44] sm:$0xf]
  %v2395 = vld [vmem:[%s2376 + $0x48] sm:$0xf]
  %v2396 = vld [vmem:[%s2376 + $0x4c] sm:$0xf]
  %v2397 = vld [vmem:[%s2376 + $0x50] sm:$0xf]
  %v2398 = vld [vmem:[%s2376 + $0x54] sm:$0xf]
  %v2399 = vld [vmem:[%s2376 + $0x58] sm:$0xf]
  %v2400 = vld [vmem:[%s2376 + $0x5c] sm:$0xf]
  %v2401 = vld [vmem:[%s2376 + $0x60] sm:$0xf]
  %v2402 = vld [vmem:[%s2376 + $0x64] sm:$0xf]
  %v2403 = vld [vmem:[%s2376 + $0x68] sm:$0xf]
  %v2404 = vld [vmem:[%s2376 + $0x6c] sm:$0xf]
  %v2405 = vld [vmem:[%s2376 + $0x70] sm:$0xf]
  %v2406 = vld [vmem:[%s2376 + $0x74] sm:$0xf]
  %v2407 = vld [vmem:[%s2376 + $0x78] sm:$0xf]
  %v2408 = vld [vmem:[%s2376 + $0x7c] sm:$0xf]
  %v2409 = vld [vmem:[%s2376 + $0x80] sm:$0xf]
  %v2410 = vld [vmem:[%s2376 + $0x84] sm:$0xf]
  %v2411 = vld [vmem:[%s2376 + $0x88] sm:$0xf]
  %v2412 = vld [vmem:[%s2376 + $0x8c] sm:$0xf]
  %v2413 = vld [vmem:[%s2376 + $0x90] sm:$0xf]
  %v2414 = vld [vmem:[%s2376 + $0x94] sm:$0xf]
  %v2415 = vld [vmem:[%s2376 + $0x98] sm:$0xf]
  %v2416 = vld [vmem:[%s2376 + $0x9c] sm:$0xf]
  %v2417 = vld [vmem:[%s2376 + $0xa0] sm:$0xf]
  %v2418 = vld [vmem:[%s2376 + $0xa4] sm:$0xf]
  %v2419 = vld [vmem:[%s2376 + $0xa8] sm:$0xf]
  %v2420 = vld [vmem:[%s2376 + $0xac] sm:$0xf]
  %v2421 = vld [vmem:[%s2376 + $0xb0] sm:$0xf]
  %v2422 = vld [vmem:[%s2376 + $0xb4] sm:$0xf]
  %v2423 = vld [vmem:[%s2376 + $0xb8] sm:$0xf]
  %v2424 = vld [vmem:[%s2376 + $0xbc] sm:$0xf]
  %v2425 = vld [vmem:[%s2376 + $0xc0] sm:$0xf]
  %v2426 = vld [vmem:[%s2376 + $0xc4] sm:$0xf]
  %v2427 = vld [vmem:[%s2376 + $0xc8] sm:$0xf]
  %v2428 = vld [vmem:[%s2376 + $0xcc] sm:$0xf]
  %v2429 = vld [vmem:[%s2376 + $0xd0] sm:$0xf]
  %v2430 = vld [vmem:[%s2376 + $0xd4] sm:$0xf]
  %v2431 = vld [vmem:[%s2376 + $0xd8] sm:$0xf]
  %v2432 = vld [vmem:[%s2376 + $0xdc] sm:$0xf]
  %v2433 = vld [vmem:[%s2376 + $0xe0] sm:$0xf]
  %v2434 = vld [vmem:[%s2376 + $0xe4] sm:$0xf]
  %v2435 = vld [vmem:[%s2376 + $0xe8] sm:$0xf]
  %v2436 = vld [vmem:[%s2376 + $0xec] sm:$0xf]
  %v2437 = vld [vmem:[%s2376 + $0xf0] sm:$0xf]
  %v2438 = vld [vmem:[%s2376 + $0xf4] sm:$0xf]
  %v2439 = vld [vmem:[%s2376 + $0xf8] sm:$0xf]
  %v2440 = vld [vmem:[%s2376 + $0xfc] sm:$0xf]
  %s2441 = scalar_lea.vmem %s3, 32
  %v2442 = vld [vmem:[%s2441] sm:$0xf]
  %v2443 = vld [vmem:[%s2441 + $0x4] sm:$0xf]
  %v2444 = vld [vmem:[%s2441 + $0x8] sm:$0xf]
  %v2445 = vld [vmem:[%s2441 + $0xc] sm:$0xf]
  %v2510 = vunpack.c.l.b16 %v2377
  %v2511 = vunpack.c.l.b16 %v2378
  %v2512 = vunpack.c.l.b16 %v2379
  %v2513 = vunpack.c.l.b16 %v2380
  %v2514 = vunpack.c.l.b16 %v2381
  %v2515 = vunpack.c.l.b16 %v2382
  %v2516 = vunpack.c.l.b16 %v2383
  %v2517 = vunpack.c.l.b16 %v2384
  %v2518 = vunpack.c.l.b16 %v2385
  %v2519 = vunpack.c.l.b16 %v2386
  %v2520 = vunpack.c.l.b16 %v2387
  %v2521 = vunpack.c.l.b16 %v2388
  %v2522 = vunpack.c.l.b16 %v2389
  %v2523 = vunpack.c.l.b16 %v2390
  %v2524 = vunpack.c.l.b16 %v2391
  %v2525 = vunpack.c.l.b16 %v2392
  %v2526 = vunpack.c.l.b16 %v2393
  %v2527 = vunpack.c.l.b16 %v2394
  %v2528 = vunpack.c.l.b16 %v2395
  %v2529 = vunpack.c.l.b16 %v2396
  %v2530 = vunpack.c.l.b16 %v2397
  %v2531 = vunpack.c.l.b16 %v2398
  %v2532 = vunpack.c.l.b16 %v2399
  %v2533 = vunpack.c.l.b16 %v2400
  %v2534 = vunpack.c.l.b16 %v2401
  %v2535 = vunpack.c.l.b16 %v2402
  %v2536 = vunpack.c.l.b16 %v2403
  %v2537 = vunpack.c.l.b16 %v2404
  %v2538 = vunpack.c.l.b16 %v2405
  %v2539 = vunpack.c.l.b16 %v2406
  %v2540 = vunpack.c.l.b16 %v2407
  %v2541 = vunpack.c.l.b16 %v2408
  %v2542 = vunpack.c.l.b16 %v2409
  %v2543 = vunpack.c.l.b16 %v2410
  %v2544 = vunpack.c.l.b16 %v2411
  %v2545 = vunpack.c.l.b16 %v2412
  %v2546 = vunpack.c.l.b16 %v2413
  %v2547 = vunpack.c.l.b16 %v2414
  %v2548 = vunpack.c.l.b16 %v2415
  %v2549 = vunpack.c.l.b16 %v2416
  %v2550 = vunpack.c.l.b16 %v2417
  %v2551 = vunpack.c.l.b16 %v2418
  %v2552 = vunpack.c.l.b16 %v2419
  %v2553 = vunpack.c.l.b16 %v2420
  %v2554 = vunpack.c.l.b16 %v2421
  %v2555 = vunpack.c.l.b16 %v2422
  %v2556 = vunpack.c.l.b16 %v2423
  %v2557 = vunpack.c.l.b16 %v2424
  %v2558 = vunpack.c.l.b16 %v2425
  %v2559 = vunpack.c.l.b16 %v2426
  %v2560 = vunpack.c.l.b16 %v2427
  %v2561 = vunpack.c.l.b16 %v2428
  %v2562 = vunpack.c.l.b16 %v2429
  %v2563 = vunpack.c.l.b16 %v2430
  %v2564 = vunpack.c.l.b16 %v2431
  %v2565 = vunpack.c.l.b16 %v2432
  %v2566 = vunpack.c.l.b16 %v2433
  %v2567 = vunpack.c.l.b16 %v2434
  %v2568 = vunpack.c.l.b16 %v2435
  %v2569 = vunpack.c.l.b16 %v2436
  %v2570 = vunpack.c.l.b16 %v2437
  %v2571 = vunpack.c.l.b16 %v2438
  %v2572 = vunpack.c.l.b16 %v2439
  %v2573 = vunpack.c.l.b16 %v2440
  %v2574 = vpack.c.b16 %v2511, %v2510
  %v2575 = vpack.c.b16 %v2513, %v2512
  %v2576 = vpack.c.b16 %v2515, %v2514
  %v2577 = vpack.c.b16 %v2517, %v2516
  %v2578 = vpack.c.b16 %v2519, %v2518
  %v2579 = vpack.c.b16 %v2521, %v2520
  %v2580 = vpack.c.b16 %v2523, %v2522
  %v2581 = vpack.c.b16 %v2525, %v2524
  %v2582 = vpack.c.b16 %v2527, %v2526
  %v2583 = vpack.c.b16 %v2529, %v2528
  %v2584 = vpack.c.b16 %v2531, %v2530
  %v2585 = vpack.c.b16 %v2533, %v2532
  %v2586 = vpack.c.b16 %v2535, %v2534
  %v2587 = vpack.c.b16 %v2537, %v2536
  %v2588 = vpack.c.b16 %v2539, %v2538
  %v2589 = vpack.c.b16 %v2541, %v2540
  %v2590 = vpack.c.b16 %v2543, %v2542
  %v2591 = vpack.c.b16 %v2545, %v2544
  %v2592 = vpack.c.b16 %v2547, %v2546
  %v2593 = vpack.c.b16 %v2549, %v2548
  %v2594 = vpack.c.b16 %v2551, %v2550
  %v2595 = vpack.c.b16 %v2553, %v2552
  %v2596 = vpack.c.b16 %v2555, %v2554
  %v2597 = vpack.c.b16 %v2557, %v2556
  %v2598 = vpack.c.b16 %v2559, %v2558
  %v2599 = vpack.c.b16 %v2561, %v2560
  %v2600 = vpack.c.b16 %v2563, %v2562
  %v2601 = vpack.c.b16 %v2565, %v2564
  %v2602 = vpack.c.b16 %v2567, %v2566
  %v2603 = vpack.c.b16 %v2569, %v2568
  %v2604 = vpack.c.b16 %v2571, %v2570
  %v2605 = vpack.c.b16 %v2573, %v2572
  %v2610 = vunpack.c.l.b16 %v2442
  %v2611 = vunpack.c.l.b16 %v2443
  %v2612 = vunpack.c.l.b16 %v2444
  %v2613 = vunpack.c.l.b16 %v2445
  %v2614 = vpack.c.b16 %v2611, %v2610
  %v2615 = vpack.c.b16 %v2613, %v2612
  %v2619 = vsel %vm329, %v2574, 0
  %v2622 = vsel %vm329, %v2575, 0
  %v2625 = vsel %vm329, %v2576, 0
  %v2628 = vsel %vm329, %v2577, 0
  %v2631 = vsel %vm329, %v2578, 0
  %v2634 = vsel %vm329, %v2579, 0
  %v2637 = vsel %vm329, %v2580, 0
  %v2640 = vsel %vm329, %v2581, 0
  %v2643 = vsel %vm329, %v2582, 0
  %v2646 = vsel %vm329, %v2583, 0
  %v2649 = vsel %vm329, %v2584, 0
  %v2652 = vsel %vm329, %v2585, 0
  %v2655 = vsel %vm329, %v2586, 0
  %v2658 = vsel %vm329, %v2587, 0
  %v2661 = vsel %vm329, %v2588, 0
  %v2664 = vsel %vm329, %v2589, 0
  %v2667 = vsel %vm329, %v2590, 0
  %v2670 = vsel %vm329, %v2591, 0
  %v2673 = vsel %vm329, %v2592, 0
  %v2676 = vsel %vm329, %v2593, 0
  %v2679 = vsel %vm329, %v2594, 0
  %v2682 = vsel %vm329, %v2595, 0
  %v2685 = vsel %vm329, %v2596, 0
  %v2688 = vsel %vm329, %v2597, 0
  %v2691 = vsel %vm329, %v2598, 0
  %v2694 = vsel %vm329, %v2599, 0
  %v2697 = vsel %vm329, %v2600, 0
  %v2700 = vsel %vm329, %v2601, 0
  %v2703 = vsel %vm329, %v2602, 0
  %v2706 = vsel %vm329, %v2603, 0
  %v2709 = vsel %vm329, %v2604, 0
  %v2712 = vsel %vm329, %v2605, 0
  %2714 = vmatpush.bf16.msra.mxu0 0
  %2715 = vmatpush.bf16.msra.mxu0 0
  %2716 = vmatpush.bf16.msra.mxu0 0
  %2717 = vmatpush.bf16.msra.mxu0 0
  %2718 = vmatpush.bf16.msra.mxu0 0
  %2719 = vmatpush.bf16.msra.mxu0 0
  %2720 = vmatpush.bf16.msra.mxu0 %v2615
  %2721 = vmatpush.bf16.msra.mxu0 %v2614
  %2722 = vmatmul.bf16.gmra.mxu0 %v2619
  %v2723 = vpop.f32.mrf.mxu0
  %v2724 = vadd.f32 0.0, %v2723
  %v2725 = vpop.f32.mrf.mxu0
  %v2726 = vadd.f32 0.0, %v2725
  %2727 = vmatmul.bf16.gmra.mxu0 %v2622
  %v2728 = vpop.f32.mrf.mxu0
  %v2729 = vadd.f32 0.0, %v2728
  %v2730 = vpop.f32.mrf.mxu0
  %v2731 = vadd.f32 0.0, %v2730
  %2732 = vmatmul.bf16.gmra.mxu0 %v2625
  %v2733 = vpop.f32.mrf.mxu0
  %v2734 = vadd.f32 0.0, %v2733
  %v2735 = vpop.f32.mrf.mxu0
  %v2736 = vadd.f32 0.0, %v2735
  %2737 = vmatmul.bf16.gmra.mxu0 %v2628
  %v2738 = vpop.f32.mrf.mxu0
  %v2739 = vadd.f32 0.0, %v2738
  %v2740 = vpop.f32.mrf.mxu0
  %v2741 = vadd.f32 0.0, %v2740
  %2742 = vmatmul.bf16.gmra.mxu0 %v2631
  %v2743 = vpop.f32.mrf.mxu0
  %v2744 = vadd.f32 0.0, %v2743
  %v2745 = vpop.f32.mrf.mxu0
  %v2746 = vadd.f32 0.0, %v2745
  %2747 = vmatmul.bf16.gmra.mxu0 %v2634
  %v2748 = vpop.f32.mrf.mxu0
  %v2749 = vadd.f32 0.0, %v2748
  %v2750 = vpop.f32.mrf.mxu0
  %v2751 = vadd.f32 0.0, %v2750
  %2752 = vmatmul.bf16.gmra.mxu0 %v2637
  %v2753 = vpop.f32.mrf.mxu0
  %v2754 = vadd.f32 0.0, %v2753
  %v2755 = vpop.f32.mrf.mxu0
  %v2756 = vadd.f32 0.0, %v2755
  %2757 = vmatmul.bf16.gmra.mxu0 %v2640
  %v2758 = vpop.f32.mrf.mxu0
  %v2759 = vadd.f32 0.0, %v2758
  %v2760 = vpop.f32.mrf.mxu0
  %v2761 = vadd.f32 0.0, %v2760
  %2762 = vmatmul.bf16.gmra.mxu0 %v2643
  %v2763 = vpop.f32.mrf.mxu0
  %v2764 = vadd.f32 0.0, %v2763
  %v2765 = vpop.f32.mrf.mxu0
  %v2766 = vadd.f32 0.0, %v2765
  %2767 = vmatmul.bf16.gmra.mxu0 %v2646
  %v2768 = vpop.f32.mrf.mxu0
  %v2769 = vadd.f32 0.0, %v2768
  %v2770 = vpop.f32.mrf.mxu0
  %v2771 = vadd.f32 0.0, %v2770
  %2772 = vmatmul.bf16.gmra.mxu0 %v2649
  %v2773 = vpop.f32.mrf.mxu0
  %v2774 = vadd.f32 0.0, %v2773
  %v2775 = vpop.f32.mrf.mxu0
  %v2776 = vadd.f32 0.0, %v2775
  %2777 = vmatmul.bf16.gmra.mxu0 %v2652
  %v2778 = vpop.f32.mrf.mxu0
  %v2779 = vadd.f32 0.0, %v2778
  %v2780 = vpop.f32.mrf.mxu0
  %v2781 = vadd.f32 0.0, %v2780
  %2782 = vmatmul.bf16.gmra.mxu0 %v2655
  %v2783 = vpop.f32.mrf.mxu0
  %v2784 = vadd.f32 0.0, %v2783
  %v2785 = vpop.f32.mrf.mxu0
  %v2786 = vadd.f32 0.0, %v2785
  %2787 = vmatmul.bf16.gmra.mxu0 %v2658
  %v2788 = vpop.f32.mrf.mxu0
  %v2789 = vadd.f32 0.0, %v2788
  %v2790 = vpop.f32.mrf.mxu0
  %v2791 = vadd.f32 0.0, %v2790
  %2792 = vmatmul.bf16.gmra.mxu0 %v2661
  %v2793 = vpop.f32.mrf.mxu0
  %v2794 = vadd.f32 0.0, %v2793
  %v2795 = vpop.f32.mrf.mxu0
  %v2796 = vadd.f32 0.0, %v2795
  %2797 = vmatmul.bf16.gmra.mxu0 %v2664
  %v2798 = vpop.f32.mrf.mxu0
  %v2799 = vadd.f32 0.0, %v2798
  %v2800 = vpop.f32.mrf.mxu0
  %v2801 = vadd.f32 0.0, %v2800
  %2802 = vmatmul.bf16.gmra.mxu0 %v2667
  %v2803 = vpop.f32.mrf.mxu0
  %v2804 = vadd.f32 0.0, %v2803
  %v2805 = vpop.f32.mrf.mxu0
  %v2806 = vadd.f32 0.0, %v2805
  %2807 = vmatmul.bf16.gmra.mxu0 %v2670
  %v2808 = vpop.f32.mrf.mxu0
  %v2809 = vadd.f32 0.0, %v2808
  %v2810 = vpop.f32.mrf.mxu0
  %v2811 = vadd.f32 0.0, %v2810
  %2812 = vmatmul.bf16.gmra.mxu0 %v2673
  %v2813 = vpop.f32.mrf.mxu0
  %v2814 = vadd.f32 0.0, %v2813
  %v2815 = vpop.f32.mrf.mxu0
  %v2816 = vadd.f32 0.0, %v2815
  %2817 = vmatmul.bf16.gmra.mxu0 %v2676
  %v2818 = vpop.f32.mrf.mxu0
  %v2819 = vadd.f32 0.0, %v2818
  %v2820 = vpop.f32.mrf.mxu0
  %v2821 = vadd.f32 0.0, %v2820
  %2822 = vmatmul.bf16.gmra.mxu0 %v2679
  %v2823 = vpop.f32.mrf.mxu0
  %v2824 = vadd.f32 0.0, %v2823
  %v2825 = vpop.f32.mrf.mxu0
  %v2826 = vadd.f32 0.0, %v2825
  %2827 = vmatmul.bf16.gmra.mxu0 %v2682
  %v2828 = vpop.f32.mrf.mxu0
  %v2829 = vadd.f32 0.0, %v2828
  %v2830 = vpop.f32.mrf.mxu0
  %v2831 = vadd.f32 0.0, %v2830
  %2832 = vmatmul.bf16.gmra.mxu0 %v2685
  %v2833 = vpop.f32.mrf.mxu0
  %v2834 = vadd.f32 0.0, %v2833
  %v2835 = vpop.f32.mrf.mxu0
  %v2836 = vadd.f32 0.0, %v2835
  %2837 = vmatmul.bf16.gmra.mxu0 %v2688
  %v2838 = vpop.f32.mrf.mxu0
  %v2839 = vadd.f32 0.0, %v2838
  %v2840 = vpop.f32.mrf.mxu0
  %v2841 = vadd.f32 0.0, %v2840
  %2842 = vmatmul.bf16.gmra.mxu0 %v2691
  %v2843 = vpop.f32.mrf.mxu0
  %v2844 = vadd.f32 0.0, %v2843
  %v2845 = vpop.f32.mrf.mxu0
  %v2846 = vadd.f32 0.0, %v2845
  %2847 = vmatmul.bf16.gmra.mxu0 %v2694
  %v2848 = vpop.f32.mrf.mxu0
  %v2849 = vadd.f32 0.0, %v2848
  %v2850 = vpop.f32.mrf.mxu0
  %v2851 = vadd.f32 0.0, %v2850
  %2852 = vmatmul.bf16.gmra.mxu0 %v2697
  %v2853 = vpop.f32.mrf.mxu0
  %v2854 = vadd.f32 0.0, %v2853
  %v2855 = vpop.f32.mrf.mxu0
  %v2856 = vadd.f32 0.0, %v2855
  %2857 = vmatmul.bf16.gmra.mxu0 %v2700
  %v2858 = vpop.f32.mrf.mxu0
  %v2859 = vadd.f32 0.0, %v2858
  %v2860 = vpop.f32.mrf.mxu0
  %v2861 = vadd.f32 0.0, %v2860
  %2862 = vmatmul.bf16.gmra.mxu0 %v2703
  %v2863 = vpop.f32.mrf.mxu0
  %v2864 = vadd.f32 0.0, %v2863
  %v2865 = vpop.f32.mrf.mxu0
  %v2866 = vadd.f32 0.0, %v2865
  %2867 = vmatmul.bf16.gmra.mxu0 %v2706
  %v2868 = vpop.f32.mrf.mxu0
  %v2869 = vadd.f32 0.0, %v2868
  %v2870 = vpop.f32.mrf.mxu0
  %v2871 = vadd.f32 0.0, %v2870
  %2872 = vmatmul.bf16.gmra.mxu0 %v2709
  %v2873 = vpop.f32.mrf.mxu0
  %v2874 = vadd.f32 0.0, %v2873
  %v2875 = vpop.f32.mrf.mxu0
  %v2876 = vadd.f32 0.0, %v2875
  %2877 = vmatmul.bf16.gmra.mxu0 %v2712
  %v2878 = vpop.f32.mrf.mxu0
  %v2879 = vadd.f32 0.0, %v2878
  %v2880 = vpop.f32.mrf.mxu0
  %v2881 = vadd.f32 0.0, %v2880
  %2882 = vdwg.mxu0
  %v2947 = vunpack.c.l.b16 %v2307
  %v2948 = vunpack.c.l.b16 %v2308
  %v2949 = vunpack.c.l.b16 %v2309
  %v2950 = vunpack.c.l.b16 %v2310
  %v2951 = vunpack.c.l.b16 %v2311
  %v2952 = vunpack.c.l.b16 %v2312
  %v2953 = vunpack.c.l.b16 %v2313
  %v2954 = vunpack.c.l.b16 %v2314
  %v2955 = vunpack.c.l.b16 %v2315
  %v2956 = vunpack.c.l.b16 %v2316
  %v2957 = vunpack.c.l.b16 %v2317
  %v2958 = vunpack.c.l.b16 %v2318
  %v2959 = vunpack.c.l.b16 %v2319
  %v2960 = vunpack.c.l.b16 %v2320
  %v2961 = vunpack.c.l.b16 %v2321
  %v2962 = vunpack.c.l.b16 %v2322
  %v2963 = vunpack.c.l.b16 %v2323
  %v2964 = vunpack.c.l.b16 %v2324
  %v2965 = vunpack.c.l.b16 %v2325
  %v2966 = vunpack.c.l.b16 %v2326
  %v2967 = vunpack.c.l.b16 %v2327
  %v2968 = vunpack.c.l.b16 %v2328
  %v2969 = vunpack.c.l.b16 %v2329
  %v2970 = vunpack.c.l.b16 %v2330
  %v2971 = vunpack.c.l.b16 %v2331
  %v2972 = vunpack.c.l.b16 %v2332
  %v2973 = vunpack.c.l.b16 %v2333
  %v2974 = vunpack.c.l.b16 %v2334
  %v2975 = vunpack.c.l.b16 %v2335
  %v2976 = vunpack.c.l.b16 %v2336
  %v2977 = vunpack.c.l.b16 %v2337
  %v2978 = vunpack.c.l.b16 %v2338
  %v2979 = vunpack.c.l.b16 %v2339
  %v2980 = vunpack.c.l.b16 %v2340
  %v2981 = vunpack.c.l.b16 %v2341
  %v2982 = vunpack.c.l.b16 %v2342
  %v2983 = vunpack.c.l.b16 %v2343
  %v2984 = vunpack.c.l.b16 %v2344
  %v2985 = vunpack.c.l.b16 %v2345
  %v2986 = vunpack.c.l.b16 %v2346
  %v2987 = vunpack.c.l.b16 %v2347
  %v2988 = vunpack.c.l.b16 %v2348
  %v2989 = vunpack.c.l.b16 %v2349
  %v2990 = vunpack.c.l.b16 %v2350
  %v2991 = vunpack.c.l.b16 %v2351
  %v2992 = vunpack.c.l.b16 %v2352
  %v2993 = vunpack.c.l.b16 %v2353
  %v2994 = vunpack.c.l.b16 %v2354
  %v2995 = vunpack.c.l.b16 %v2355
  %v2996 = vunpack.c.l.b16 %v2356
  %v2997 = vunpack.c.l.b16 %v2357
  %v2998 = vunpack.c.l.b16 %v2358
  %v2999 = vunpack.c.l.b16 %v2359
  %v3000 = vunpack.c.l.b16 %v2360
  %v3001 = vunpack.c.l.b16 %v2361
  %v3002 = vunpack.c.l.b16 %v2362
  %v3003 = vunpack.c.l.b16 %v2363
  %v3004 = vunpack.c.l.b16 %v2364
  %v3005 = vunpack.c.l.b16 %v2365
  %v3006 = vunpack.c.l.b16 %v2366
  %v3007 = vunpack.c.l.b16 %v2367
  %v3008 = vunpack.c.l.b16 %v2368
  %v3009 = vunpack.c.l.b16 %v2369
  %v3010 = vunpack.c.l.b16 %v2370
  %v3011 = vpack.c.b16 %v2948, %v2947
  %v3012 = vpack.c.b16 %v2950, %v2949
  %v3013 = vpack.c.b16 %v2952, %v2951
  %v3014 = vpack.c.b16 %v2954, %v2953
  %v3015 = vpack.c.b16 %v2956, %v2955
  %v3016 = vpack.c.b16 %v2958, %v2957
  %v3017 = vpack.c.b16 %v2960, %v2959
  %v3018 = vpack.c.b16 %v2962, %v2961
  %v3019 = vpack.c.b16 %v2964, %v2963
  %v3020 = vpack.c.b16 %v2966, %v2965
  %v3021 = vpack.c.b16 %v2968, %v2967
  %v3022 = vpack.c.b16 %v2970, %v2969
  %v3023 = vpack.c.b16 %v2972, %v2971
  %v3024 = vpack.c.b16 %v2974, %v2973
  %v3025 = vpack.c.b16 %v2976, %v2975
  %v3026 = vpack.c.b16 %v2978, %v2977
  %v3027 = vpack.c.b16 %v2980, %v2979
  %v3028 = vpack.c.b16 %v2982, %v2981
  %v3029 = vpack.c.b16 %v2984, %v2983
  %v3030 = vpack.c.b16 %v2986, %v2985
  %v3031 = vpack.c.b16 %v2988, %v2987
  %v3032 = vpack.c.b16 %v2990, %v2989
  %v3033 = vpack.c.b16 %v2992, %v2991
  %v3034 = vpack.c.b16 %v2994, %v2993
  %v3035 = vpack.c.b16 %v2996, %v2995
  %v3036 = vpack.c.b16 %v2998, %v2997
  %v3037 = vpack.c.b16 %v3000, %v2999
  %v3038 = vpack.c.b16 %v3002, %v3001
  %v3039 = vpack.c.b16 %v3004, %v3003
  %v3040 = vpack.c.b16 %v3006, %v3005
  %v3041 = vpack.c.b16 %v3008, %v3007
  %v3042 = vpack.c.b16 %v3010, %v3009
  %v3047 = vunpack.c.l.b16 %v2372
  %v3048 = vunpack.c.l.b16 %v2373
  %v3049 = vunpack.c.l.b16 %v2374
  %v3050 = vunpack.c.l.b16 %v2375
  %v3051 = vpack.c.b16 %v3048, %v3047
  %v3052 = vpack.c.b16 %v3050, %v3049
  %v3056 = vsel %vm329, %v3011, 0
  %v3059 = vsel %vm329, %v3012, 0
  %v3062 = vsel %vm329, %v3013, 0
  %v3065 = vsel %vm329, %v3014, 0
  %v3068 = vsel %vm329, %v3015, 0
  %v3071 = vsel %vm329, %v3016, 0
  %v3074 = vsel %vm329, %v3017, 0
  %v3077 = vsel %vm329, %v3018, 0
  %v3080 = vsel %vm329, %v3019, 0
  %v3083 = vsel %vm329, %v3020, 0
  %v3086 = vsel %vm329, %v3021, 0
  %v3089 = vsel %vm329, %v3022, 0
  %v3092 = vsel %vm329, %v3023, 0
  %v3095 = vsel %vm329, %v3024, 0
  %v3098 = vsel %vm329, %v3025, 0
  %v3101 = vsel %vm329, %v3026, 0
  %v3104 = vsel %vm329, %v3027, 0
  %v3107 = vsel %vm329, %v3028, 0
  %v3110 = vsel %vm329, %v3029, 0
  %v3113 = vsel %vm329, %v3030, 0
  %v3116 = vsel %vm329, %v3031, 0
  %v3119 = vsel %vm329, %v3032, 0
  %v3122 = vsel %vm329, %v3033, 0
  %v3125 = vsel %vm329, %v3034, 0
  %v3128 = vsel %vm329, %v3035, 0
  %v3131 = vsel %vm329, %v3036, 0
  %v3134 = vsel %vm329, %v3037, 0
  %v3137 = vsel %vm329, %v3038, 0
  %v3140 = vsel %vm329, %v3039, 0
  %v3143 = vsel %vm329, %v3040, 0
  %v3146 = vsel %vm329, %v3041, 0
  %v3149 = vsel %vm329, %v3042, 0
  %3151 = vmatpush.bf16.msra.mxu0 0
  %3152 = vmatpush.bf16.msra.mxu0 0
  %3153 = vmatpush.bf16.msra.mxu0 0
  %3154 = vmatpush.bf16.msra.mxu0 0
  %3155 = vmatpush.bf16.msra.mxu0 0
  %3156 = vmatpush.bf16.msra.mxu0 0
  %3157 = vmatpush.bf16.msra.mxu0 %v3052
  %3158 = vmatpush.bf16.msra.mxu0 %v3051
  %3159 = vmatmul.bf16.gmra.mxu0 %v3056
  %v3160 = vpop.f32.mrf.mxu0
  %v3161 = vadd.f32 %v2724, %v3160
  %v3162 = vpop.f32.mrf.mxu0
  %v3163 = vadd.f32 %v2726, %v3162
  %3164 = vmatmul.bf16.gmra.mxu0 %v3059
  %v3165 = vpop.f32.mrf.mxu0
  %v3166 = vadd.f32 %v2729, %v3165
  %v3167 = vpop.f32.mrf.mxu0
  %v3168 = vadd.f32 %v2731, %v3167
  %3169 = vmatmul.bf16.gmra.mxu0 %v3062
  %v3170 = vpop.f32.mrf.mxu0
  %v3171 = vadd.f32 %v2734, %v3170
  %v3172 = vpop.f32.mrf.mxu0
  %v3173 = vadd.f32 %v2736, %v3172
  %3174 = vmatmul.bf16.gmra.mxu0 %v3065
  %v3175 = vpop.f32.mrf.mxu0
  %v3176 = vadd.f32 %v2739, %v3175
  %v3177 = vpop.f32.mrf.mxu0
  %v3178 = vadd.f32 %v2741, %v3177
  %3179 = vmatmul.bf16.gmra.mxu0 %v3068
  %v3180 = vpop.f32.mrf.mxu0
  %v3181 = vadd.f32 %v2744, %v3180
  %v3182 = vpop.f32.mrf.mxu0
  %v3183 = vadd.f32 %v2746, %v3182
  %3184 = vmatmul.bf16.gmra.mxu0 %v3071
  %v3185 = vpop.f32.mrf.mxu0
  %v3186 = vadd.f32 %v2749, %v3185
  %v3187 = vpop.f32.mrf.mxu0
  %v3188 = vadd.f32 %v2751, %v3187
  %3189 = vmatmul.bf16.gmra.mxu0 %v3074
  %v3190 = vpop.f32.mrf.mxu0
  %v3191 = vadd.f32 %v2754, %v3190
  %v3192 = vpop.f32.mrf.mxu0
  %v3193 = vadd.f32 %v2756, %v3192
  %3194 = vmatmul.bf16.gmra.mxu0 %v3077
  %v3195 = vpop.f32.mrf.mxu0
  %v3196 = vadd.f32 %v2759, %v3195
  %v3197 = vpop.f32.mrf.mxu0
  %v3198 = vadd.f32 %v2761, %v3197
  %3199 = vmatmul.bf16.gmra.mxu0 %v3080
  %v3200 = vpop.f32.mrf.mxu0
  %v3201 = vadd.f32 %v2764, %v3200
  %v3202 = vpop.f32.mrf.mxu0
  %v3203 = vadd.f32 %v2766, %v3202
  %3204 = vmatmul.bf16.gmra.mxu0 %v3083
  %v3205 = vpop.f32.mrf.mxu0
  %v3206 = vadd.f32 %v2769, %v3205
  %v3207 = vpop.f32.mrf.mxu0
  %v3208 = vadd.f32 %v2771, %v3207
  %3209 = vmatmul.bf16.gmra.mxu0 %v3086
  %v3210 = vpop.f32.mrf.mxu0
  %v3211 = vadd.f32 %v2774, %v3210
  %v3212 = vpop.f32.mrf.mxu0
  %v3213 = vadd.f32 %v2776, %v3212
  %3214 = vmatmul.bf16.gmra.mxu0 %v3089
  %v3215 = vpop.f32.mrf.mxu0
  %v3216 = vadd.f32 %v2779, %v3215
  %v3217 = vpop.f32.mrf.mxu0
  %v3218 = vadd.f32 %v2781, %v3217
  %3219 = vmatmul.bf16.gmra.mxu0 %v3092
  %v3220 = vpop.f32.mrf.mxu0
  %v3221 = vadd.f32 %v2784, %v3220
  %v3222 = vpop.f32.mrf.mxu0
  %v3223 = vadd.f32 %v2786, %v3222
  %3224 = vmatmul.bf16.gmra.mxu0 %v3095
  %v3225 = vpop.f32.mrf.mxu0
  %v3226 = vadd.f32 %v2789, %v3225
  %v3227 = vpop.f32.mrf.mxu0
  %v3228 = vadd.f32 %v2791, %v3227
  %3229 = vmatmul.bf16.gmra.mxu0 %v3098
  %v3230 = vpop.f32.mrf.mxu0
  %v3231 = vadd.f32 %v2794, %v3230
  %v3232 = vpop.f32.mrf.mxu0
  %v3233 = vadd.f32 %v2796, %v3232
  %3234 = vmatmul.bf16.gmra.mxu0 %v3101
  %v3235 = vpop.f32.mrf.mxu0
  %v3236 = vadd.f32 %v2799, %v3235
  %v3237 = vpop.f32.mrf.mxu0
  %v3238 = vadd.f32 %v2801, %v3237
  %3239 = vmatmul.bf16.gmra.mxu0 %v3104
  %v3240 = vpop.f32.mrf.mxu0
  %v3241 = vadd.f32 %v2804, %v3240
  %v3242 = vpop.f32.mrf.mxu0
  %v3243 = vadd.f32 %v2806, %v3242
  %3244 = vmatmul.bf16.gmra.mxu0 %v3107
  %v3245 = vpop.f32.mrf.mxu0
  %v3246 = vadd.f32 %v2809, %v3245
  %v3247 = vpop.f32.mrf.mxu0
  %v3248 = vadd.f32 %v2811, %v3247
  %3249 = vmatmul.bf16.gmra.mxu0 %v3110
  %v3250 = vpop.f32.mrf.mxu0
  %v3251 = vadd.f32 %v2814, %v3250
  %v3252 = vpop.f32.mrf.mxu0
  %v3253 = vadd.f32 %v2816, %v3252
  %3254 = vmatmul.bf16.gmra.mxu0 %v3113
  %v3255 = vpop.f32.mrf.mxu0
  %v3256 = vadd.f32 %v2819, %v3255
  %v3257 = vpop.f32.mrf.mxu0
  %v3258 = vadd.f32 %v2821, %v3257
  %3259 = vmatmul.bf16.gmra.mxu0 %v3116
  %v3260 = vpop.f32.mrf.mxu0
  %v3261 = vadd.f32 %v2824, %v3260
  %v3262 = vpop.f32.mrf.mxu0
  %v3263 = vadd.f32 %v2826, %v3262
  %3264 = vmatmul.bf16.gmra.mxu0 %v3119
  %v3265 = vpop.f32.mrf.mxu0
  %v3266 = vadd.f32 %v2829, %v3265
  %v3267 = vpop.f32.mrf.mxu0
  %v3268 = vadd.f32 %v2831, %v3267
  %3269 = vmatmul.bf16.gmra.mxu0 %v3122
  %v3270 = vpop.f32.mrf.mxu0
  %v3271 = vadd.f32 %v2834, %v3270
  %v3272 = vpop.f32.mrf.mxu0
  %v3273 = vadd.f32 %v2836, %v3272
  %3274 = vmatmul.bf16.gmra.mxu0 %v3125
  %v3275 = vpop.f32.mrf.mxu0
  %v3276 = vadd.f32 %v2839, %v3275
  %v3277 = vpop.f32.mrf.mxu0
  %v3278 = vadd.f32 %v2841, %v3277
  %3279 = vmatmul.bf16.gmra.mxu0 %v3128
  %v3280 = vpop.f32.mrf.mxu0
  %v3281 = vadd.f32 %v2844, %v3280
  %v3282 = vpop.f32.mrf.mxu0
  %v3283 = vadd.f32 %v2846, %v3282
  %3284 = vmatmul.bf16.gmra.mxu0 %v3131
  %v3285 = vpop.f32.mrf.mxu0
  %v3286 = vadd.f32 %v2849, %v3285
  %v3287 = vpop.f32.mrf.mxu0
  %v3288 = vadd.f32 %v2851, %v3287
  %3289 = vmatmul.bf16.gmra.mxu0 %v3134
  %v3290 = vpop.f32.mrf.mxu0
  %v3291 = vadd.f32 %v2854, %v3290
  %v3292 = vpop.f32.mrf.mxu0
  %v3293 = vadd.f32 %v2856, %v3292
  %3294 = vmatmul.bf16.gmra.mxu0 %v3137
  %v3295 = vpop.f32.mrf.mxu0
  %v3296 = vadd.f32 %v2859, %v3295
  %v3297 = vpop.f32.mrf.mxu0
  %v3298 = vadd.f32 %v2861, %v3297
  %3299 = vmatmul.bf16.gmra.mxu0 %v3140
  %v3300 = vpop.f32.mrf.mxu0
  %v3301 = vadd.f32 %v2864, %v3300
  %v3302 = vpop.f32.mrf.mxu0
  %v3303 = vadd.f32 %v2866, %v3302
  %3304 = vmatmul.bf16.gmra.mxu0 %v3143
  %v3305 = vpop.f32.mrf.mxu0
  %v3306 = vadd.f32 %v2869, %v3305
  %v3307 = vpop.f32.mrf.mxu0
  %v3308 = vadd.f32 %v2871, %v3307
  %3309 = vmatmul.bf16.gmra.mxu0 %v3146
  %v3310 = vpop.f32.mrf.mxu0
  %v3311 = vadd.f32 %v2874, %v3310
  %v3312 = vpop.f32.mrf.mxu0
  %v3313 = vadd.f32 %v2876, %v3312
  %3314 = vmatmul.bf16.gmra.mxu0 %v3149
  %v3315 = vpop.f32.mrf.mxu0
  %v3316 = vadd.f32 %v2879, %v3315
  %v3317 = vpop.f32.mrf.mxu0
  %v3318 = vadd.f32 %v2881, %v3317
  %3319 = vdwg.mxu0
  %v3320 = vadd.f32 %v3161, %v1034
  %v3321 = vadd.f32 %v3163, %v1034
  %v3322 = vadd.f32 %v3166, %v1034
  %v3323 = vadd.f32 %v3168, %v1034
  %v3324 = vadd.f32 %v3171, %v1034
  %v3325 = vadd.f32 %v3173, %v1034
  %v3326 = vadd.f32 %v3176, %v1034
  %v3327 = vadd.f32 %v3178, %v1034
  %v3328 = vadd.f32 %v3181, %v1034
  %v3329 = vadd.f32 %v3183, %v1034
  %v3330 = vadd.f32 %v3186, %v1034
  %v3331 = vadd.f32 %v3188, %v1034
  %v3332 = vadd.f32 %v3191, %v1034
  %v3333 = vadd.f32 %v3193, %v1034
  %v3334 = vadd.f32 %v3196, %v1034
  %v3335 = vadd.f32 %v3198, %v1034
  %v3336 = vadd.f32 %v3201, %v1034
  %v3337 = vadd.f32 %v3203, %v1034
  %v3338 = vadd.f32 %v3206, %v1034
  %v3339 = vadd.f32 %v3208, %v1034
  %v3340 = vadd.f32 %v3211, %v1034
  %v3341 = vadd.f32 %v3213, %v1034
  %v3342 = vadd.f32 %v3216, %v1034
  %v3343 = vadd.f32 %v3218, %v1034
  %v3344 = vadd.f32 %v3221, %v1034
  %v3345 = vadd.f32 %v3223, %v1034
  %v3346 = vadd.f32 %v3226, %v1034
  %v3347 = vadd.f32 %v3228, %v1034
  %v3348 = vadd.f32 %v3231, %v1034
  %v3349 = vadd.f32 %v3233, %v1034
  %v3350 = vadd.f32 %v3236, %v1034
  %v3351 = vadd.f32 %v3238, %v1034
  %v3352 = vadd.f32 %v3241, %v1034
  %v3353 = vadd.f32 %v3243, %v1034
  %v3354 = vadd.f32 %v3246, %v1034
  %v3355 = vadd.f32 %v3248, %v1034
  %v3356 = vadd.f32 %v3251, %v1034
  %v3357 = vadd.f32 %v3253, %v1034
  %v3358 = vadd.f32 %v3256, %v1034
  %v3359 = vadd.f32 %v3258, %v1034
  %v3360 = vadd.f32 %v3261, %v1034
  %v3361 = vadd.f32 %v3263, %v1034
  %v3362 = vadd.f32 %v3266, %v1034
  %v3363 = vadd.f32 %v3268, %v1034
  %v3364 = vadd.f32 %v3271, %v1034
  %v3365 = vadd.f32 %v3273, %v1034
  %v3366 = vadd.f32 %v3276, %v1034
  %v3367 = vadd.f32 %v3278, %v1034
  %v3368 = vadd.f32 %v3281, %v1034
  %v3369 = vadd.f32 %v3283, %v1034
  %v3370 = vadd.f32 %v3286, %v1034
  %v3371 = vadd.f32 %v3288, %v1034
  %v3372 = vadd.f32 %v3291, %v1034
  %v3373 = vadd.f32 %v3293, %v1034
  %v3374 = vadd.f32 %v3296, %v1034
  %v3375 = vadd.f32 %v3298, %v1034
  %v3376 = vadd.f32 %v3301, %v1034
  %v3377 = vadd.f32 %v3303, %v1034
  %v3378 = vadd.f32 %v3306, %v1034
  %v3379 = vadd.f32 %v3308, %v1034
  %v3380 = vadd.f32 %v3311, %v1034
  %v3381 = vadd.f32 %v3313, %v1034
  %v3382 = vadd.f32 %v3316, %v1034
  %v3383 = vadd.f32 %v3318, %v1034
  %v3384 = vtanh.pop %v3320
  %v3385 = vtanh.pop %v3321
  %v3386 = vtanh.pop %v3322
  %v3387 = vtanh.pop %v3323
  %v3388 = vtanh.pop %v3324
  %v3389 = vtanh.pop %v3325
  %v3390 = vtanh.pop %v3326
  %v3391 = vtanh.pop %v3327
  %v3392 = vtanh.pop %v3328
  %v3393 = vtanh.pop %v3329
  %v3394 = vtanh.pop %v3330
  %v3395 = vtanh.pop %v3331
  %v3396 = vtanh.pop %v3332
  %v3397 = vtanh.pop %v3333
  %v3398 = vtanh.pop %v3334
  %v3399 = vtanh.pop %v3335
  %v3400 = vtanh.pop %v3336
  %v3401 = vtanh.pop %v3337
  %v3402 = vtanh.pop %v3338
  %v3403 = vtanh.pop %v3339
  %v3404 = vtanh.pop %v3340
  %v3405 = vtanh.pop %v3341
  %v3406 = vtanh.pop %v3342
  %v3407 = vtanh.pop %v3343
  %v3408 = vtanh.pop %v3344
  %v3409 = vtanh.pop %v3345
  %v3410 = vtanh.pop %v3346
  %v3411 = vtanh.pop %v3347
  %v3412 = vtanh.pop %v3348
  %v3413 = vtanh.pop %v3349
  %v3414 = vtanh.pop %v3350
  %v3415 = vtanh.pop %v3351
  %v3416 = vtanh.pop %v3352
  %v3417 = vtanh.pop %v3353
  %v3418 = vtanh.pop %v3354
  %v3419 = vtanh.pop %v3355
  %v3420 = vtanh.pop %v3356
  %v3421 = vtanh.pop %v3357
  %v3422 = vtanh.pop %v3358
  %v3423 = vtanh.pop %v3359
  %v3424 = vtanh.pop %v3360
  %v3425 = vtanh.pop %v3361
  %v3426 = vtanh.pop %v3362
  %v3427 = vtanh.pop %v3363
  %v3428 = vtanh.pop %v3364
  %v3429 = vtanh.pop %v3365
  %v3430 = vtanh.pop %v3366
  %v3431 = vtanh.pop %v3367
  %v3432 = vtanh.pop %v3368
  %v3433 = vtanh.pop %v3369
  %v3434 = vtanh.pop %v3370
  %v3435 = vtanh.pop %v3371
  %v3436 = vtanh.pop %v3372
  %v3437 = vtanh.pop %v3373
  %v3438 = vtanh.pop %v3374
  %v3439 = vtanh.pop %v3375
  %v3440 = vtanh.pop %v3376
  %v3441 = vtanh.pop %v3377
  %v3442 = vtanh.pop %v3378
  %v3443 = vtanh.pop %v3379
  %v3444 = vtanh.pop %v3380
  %v3445 = vtanh.pop %v3381
  %v3446 = vtanh.pop %v3382
  %v3447 = vtanh.pop %v3383
  %s3448 = scalar_lea.vmem %s0, 768
  %v3449 = vld [vmem:[%s3448] sm:$0xf]
  %v3450 = vld [vmem:[%s3448 + $0x4] sm:$0xf]
  %v3451 = vld [vmem:[%s3448 + $0x8] sm:$0xf]
  %v3452 = vld [vmem:[%s3448 + $0xc] sm:$0xf]
  %v3453 = vld [vmem:[%s3448 + $0x10] sm:$0xf]
  %v3454 = vld [vmem:[%s3448 + $0x14] sm:$0xf]
  %v3455 = vld [vmem:[%s3448 + $0x18] sm:$0xf]
  %v3456 = vld [vmem:[%s3448 + $0x1c] sm:$0xf]
  %v3457 = vld [vmem:[%s3448 + $0x20] sm:$0xf]
  %v3458 = vld [vmem:[%s3448 + $0x24] sm:$0xf]
  %v3459 = vld [vmem:[%s3448 + $0x28] sm:$0xf]
  %v3460 = vld [vmem:[%s3448 + $0x2c] sm:$0xf]
  %v3461 = vld [vmem:[%s3448 + $0x30] sm:$0xf]
  %v3462 = vld [vmem:[%s3448 + $0x34] sm:$0xf]
  %v3463 = vld [vmem:[%s3448 + $0x38] sm:$0xf]
  %v3464 = vld [vmem:[%s3448 + $0x3c] sm:$0xf]
  %v3465 = vld [vmem:[%s3448 + $0x40] sm:$0xf]
  %v3466 = vld [vmem:[%s3448 + $0x44] sm:$0xf]
  %v3467 = vld [vmem:[%s3448 + $0x48] sm:$0xf]
  %v3468 = vld [vmem:[%s3448 + $0x4c] sm:$0xf]
  %v3469 = vld [vmem:[%s3448 + $0x50] sm:$0xf]
  %v3470 = vld [vmem:[%s3448 + $0x54] sm:$0xf]
  %v3471 = vld [vmem:[%s3448 + $0x58] sm:$0xf]
  %v3472 = vld [vmem:[%s3448 + $0x5c] sm:$0xf]
  %v3473 = vld [vmem:[%s3448 + $0x60] sm:$0xf]
  %v3474 = vld [vmem:[%s3448 + $0x64] sm:$0xf]
  %v3475 = vld [vmem:[%s3448 + $0x68] sm:$0xf]
  %v3476 = vld [vmem:[%s3448 + $0x6c] sm:$0xf]
  %v3477 = vld [vmem:[%s3448 + $0x70] sm:$0xf]
  %v3478 = vld [vmem:[%s3448 + $0x74] sm:$0xf]
  %v3479 = vld [vmem:[%s3448 + $0x78] sm:$0xf]
  %v3480 = vld [vmem:[%s3448 + $0x7c] sm:$0xf]
  %v3481 = vld [vmem:[%s3448 + $0x80] sm:$0xf]
  %v3482 = vld [vmem:[%s3448 + $0x84] sm:$0xf]
  %v3483 = vld [vmem:[%s3448 + $0x88] sm:$0xf]
  %v3484 = vld [vmem:[%s3448 + $0x8c] sm:$0xf]
  %v3485 = vld [vmem:[%s3448 + $0x90] sm:$0xf]
  %v3486 = vld [vmem:[%s3448 + $0x94] sm:$0xf]
  %v3487 = vld [vmem:[%s3448 + $0x98] sm:$0xf]
  %v3488 = vld [vmem:[%s3448 + $0x9c] sm:$0xf]
  %v3489 = vld [vmem:[%s3448 + $0xa0] sm:$0xf]
  %v3490 = vld [vmem:[%s3448 + $0xa4] sm:$0xf]
  %v3491 = vld [vmem:[%s3448 + $0xa8] sm:$0xf]
  %v3492 = vld [vmem:[%s3448 + $0xac] sm:$0xf]
  %v3493 = vld [vmem:[%s3448 + $0xb0] sm:$0xf]
  %v3494 = vld [vmem:[%s3448 + $0xb4] sm:$0xf]
  %v3495 = vld [vmem:[%s3448 + $0xb8] sm:$0xf]
  %v3496 = vld [vmem:[%s3448 + $0xbc] sm:$0xf]
  %v3497 = vld [vmem:[%s3448 + $0xc0] sm:$0xf]
  %v3498 = vld [vmem:[%s3448 + $0xc4] sm:$0xf]
  %v3499 = vld [vmem:[%s3448 + $0xc8] sm:$0xf]
  %v3500 = vld [vmem:[%s3448 + $0xcc] sm:$0xf]
  %v3501 = vld [vmem:[%s3448 + $0xd0] sm:$0xf]
  %v3502 = vld [vmem:[%s3448 + $0xd4] sm:$0xf]
  %v3503 = vld [vmem:[%s3448 + $0xd8] sm:$0xf]
  %v3504 = vld [vmem:[%s3448 + $0xdc] sm:$0xf]
  %v3505 = vld [vmem:[%s3448 + $0xe0] sm:$0xf]
  %v3506 = vld [vmem:[%s3448 + $0xe4] sm:$0xf]
  %v3507 = vld [vmem:[%s3448 + $0xe8] sm:$0xf]
  %v3508 = vld [vmem:[%s3448 + $0xec] sm:$0xf]
  %v3509 = vld [vmem:[%s3448 + $0xf0] sm:$0xf]
  %v3510 = vld [vmem:[%s3448 + $0xf4] sm:$0xf]
  %v3511 = vld [vmem:[%s3448 + $0xf8] sm:$0xf]
  %v3512 = vld [vmem:[%s3448 + $0xfc] sm:$0xf]
  %s3513 = scalar_lea.vmem %s2, 48
  %v3514 = vld [vmem:[%s3513] sm:$0xf]
  %v3515 = vld [vmem:[%s3513 + $0x4] sm:$0xf]
  %v3516 = vld [vmem:[%s3513 + $0x8] sm:$0xf]
  %v3517 = vld [vmem:[%s3513 + $0xc] sm:$0xf]
  %s3518 = scalar_lea.vmem %s1, 768
  %v3519 = vld [vmem:[%s3518] sm:$0xf]
  %v3520 = vld [vmem:[%s3518 + $0x4] sm:$0xf]
  %v3521 = vld [vmem:[%s3518 + $0x8] sm:$0xf]
  %v3522 = vld [vmem:[%s3518 + $0xc] sm:$0xf]
  %v3523 = vld [vmem:[%s3518 + $0x10] sm:$0xf]
  %v3524 = vld [vmem:[%s3518 + $0x14] sm:$0xf]
  %v3525 = vld [vmem:[%s3518 + $0x18] sm:$0xf]
  %v3526 = vld [vmem:[%s3518 + $0x1c] sm:$0xf]
  %v3527 = vld [vmem:[%s3518 + $0x20] sm:$0xf]
  %v3528 = vld [vmem:[%s3518 + $0x24] sm:$0xf]
  %v3529 = vld [vmem:[%s3518 + $0x28] sm:$0xf]
  %v3530 = vld [vmem:[%s3518 + $0x2c] sm:$0xf]
  %v3531 = vld [vmem:[%s3518 + $0x30] sm:$0xf]
  %v3532 = vld [vmem:[%s3518 + $0x34] sm:$0xf]
  %v3533 = vld [vmem:[%s3518 + $0x38] sm:$0xf]
  %v3534 = vld [vmem:[%s3518 + $0x3c] sm:$0xf]
  %v3535 = vld [vmem:[%s3518 + $0x40] sm:$0xf]
  %v3536 = vld [vmem:[%s3518 + $0x44] sm:$0xf]
  %v3537 = vld [vmem:[%s3518 + $0x48] sm:$0xf]
  %v3538 = vld [vmem:[%s3518 + $0x4c] sm:$0xf]
  %v3539 = vld [vmem:[%s3518 + $0x50] sm:$0xf]
  %v3540 = vld [vmem:[%s3518 + $0x54] sm:$0xf]
  %v3541 = vld [vmem:[%s3518 + $0x58] sm:$0xf]
  %v3542 = vld [vmem:[%s3518 + $0x5c] sm:$0xf]
  %v3543 = vld [vmem:[%s3518 + $0x60] sm:$0xf]
  %v3544 = vld [vmem:[%s3518 + $0x64] sm:$0xf]
  %v3545 = vld [vmem:[%s3518 + $0x68] sm:$0xf]
  %v3546 = vld [vmem:[%s3518 + $0x6c] sm:$0xf]
  %v3547 = vld [vmem:[%s3518 + $0x70] sm:$0xf]
  %v3548 = vld [vmem:[%s3518 + $0x74] sm:$0xf]
  %v3549 = vld [vmem:[%s3518 + $0x78] sm:$0xf]
  %v3550 = vld [vmem:[%s3518 + $0x7c] sm:$0xf]
  %v3551 = vld [vmem:[%s3518 + $0x80] sm:$0xf]
  %v3552 = vld [vmem:[%s3518 + $0x84] sm:$0xf]
  %v3553 = vld [vmem:[%s3518 + $0x88] sm:$0xf]
  %v3554 = vld [vmem:[%s3518 + $0x8c] sm:$0xf]
  %v3555 = vld [vmem:[%s3518 + $0x90] sm:$0xf]
  %v3556 = vld [vmem:[%s3518 + $0x94] sm:$0xf]
  %v3557 = vld [vmem:[%s3518 + $0x98] sm:$0xf]
  %v3558 = vld [vmem:[%s3518 + $0x9c] sm:$0xf]
  %v3559 = vld [vmem:[%s3518 + $0xa0] sm:$0xf]
  %v3560 = vld [vmem:[%s3518 + $0xa4] sm:$0xf]
  %v3561 = vld [vmem:[%s3518 + $0xa8] sm:$0xf]
  %v3562 = vld [vmem:[%s3518 + $0xac] sm:$0xf]
  %v3563 = vld [vmem:[%s3518 + $0xb0] sm:$0xf]
  %v3564 = vld [vmem:[%s3518 + $0xb4] sm:$0xf]
  %v3565 = vld [vmem:[%s3518 + $0xb8] sm:$0xf]
  %v3566 = vld [vmem:[%s3518 + $0xbc] sm:$0xf]
  %v3567 = vld [vmem:[%s3518 + $0xc0] sm:$0xf]
  %v3568 = vld [vmem:[%s3518 + $0xc4] sm:$0xf]
  %v3569 = vld [vmem:[%s3518 + $0xc8] sm:$0xf]
  %v3570 = vld [vmem:[%s3518 + $0xcc] sm:$0xf]
  %v3571 = vld [vmem:[%s3518 + $0xd0] sm:$0xf]
  %v3572 = vld [vmem:[%s3518 + $0xd4] sm:$0xf]
  %v3573 = vld [vmem:[%s3518 + $0xd8] sm:$0xf]
  %v3574 = vld [vmem:[%s3518 + $0xdc] sm:$0xf]
  %v3575 = vld [vmem:[%s3518 + $0xe0] sm:$0xf]
  %v3576 = vld [vmem:[%s3518 + $0xe4] sm:$0xf]
  %v3577 = vld [vmem:[%s3518 + $0xe8] sm:$0xf]
  %v3578 = vld [vmem:[%s3518 + $0xec] sm:$0xf]
  %v3579 = vld [vmem:[%s3518 + $0xf0] sm:$0xf]
  %v3580 = vld [vmem:[%s3518 + $0xf4] sm:$0xf]
  %v3581 = vld [vmem:[%s3518 + $0xf8] sm:$0xf]
  %v3582 = vld [vmem:[%s3518 + $0xfc] sm:$0xf]
  %s3583 = scalar_lea.vmem %s3, 48
  %v3584 = vld [vmem:[%s3583] sm:$0xf]
  %v3585 = vld [vmem:[%s3583 + $0x4] sm:$0xf]
  %v3586 = vld [vmem:[%s3583 + $0x8] sm:$0xf]
  %v3587 = vld [vmem:[%s3583 + $0xc] sm:$0xf]
  %v3652 = vunpack.c.l.b16 %v3519
  %v3653 = vunpack.c.l.b16 %v3520
  %v3654 = vunpack.c.l.b16 %v3521
  %v3655 = vunpack.c.l.b16 %v3522
  %v3656 = vunpack.c.l.b16 %v3523
  %v3657 = vunpack.c.l.b16 %v3524
  %v3658 = vunpack.c.l.b16 %v3525
  %v3659 = vunpack.c.l.b16 %v3526
  %v3660 = vunpack.c.l.b16 %v3527
  %v3661 = vunpack.c.l.b16 %v3528
  %v3662 = vunpack.c.l.b16 %v3529
  %v3663 = vunpack.c.l.b16 %v3530
  %v3664 = vunpack.c.l.b16 %v3531
  %v3665 = vunpack.c.l.b16 %v3532
  %v3666 = vunpack.c.l.b16 %v3533
  %v3667 = vunpack.c.l.b16 %v3534
  %v3668 = vunpack.c.l.b16 %v3535
  %v3669 = vunpack.c.l.b16 %v3536
  %v3670 = vunpack.c.l.b16 %v3537
  %v3671 = vunpack.c.l.b16 %v3538
  %v3672 = vunpack.c.l.b16 %v3539
  %v3673 = vunpack.c.l.b16 %v3540
  %v3674 = vunpack.c.l.b16 %v3541
  %v3675 = vunpack.c.l.b16 %v3542
  %v3676 = vunpack.c.l.b16 %v3543
  %v3677 = vunpack.c.l.b16 %v3544
  %v3678 = vunpack.c.l.b16 %v3545
  %v3679 = vunpack.c.l.b16 %v3546
  %v3680 = vunpack.c.l.b16 %v3547
  %v3681 = vunpack.c.l.b16 %v3548
  %v3682 = vunpack.c.l.b16 %v3549
  %v3683 = vunpack.c.l.b16 %v3550
  %v3684 = vunpack.c.l.b16 %v3551
  %v3685 = vunpack.c.l.b16 %v3552
  %v3686 = vunpack.c.l.b16 %v3553
  %v3687 = vunpack.c.l.b16 %v3554
  %v3688 = vunpack.c.l.b16 %v3555
  %v3689 = vunpack.c.l.b16 %v3556
  %v3690 = vunpack.c.l.b16 %v3557
  %v3691 = vunpack.c.l.b16 %v3558
  %v3692 = vunpack.c.l.b16 %v3559
  %v3693 = vunpack.c.l.b16 %v3560
  %v3694 = vunpack.c.l.b16 %v3561
  %v3695 = vunpack.c.l.b16 %v3562
  %v3696 = vunpack.c.l.b16 %v3563
  %v3697 = vunpack.c.l.b16 %v3564
  %v3698 = vunpack.c.l.b16 %v3565
  %v3699 = vunpack.c.l.b16 %v3566
  %v3700 = vunpack.c.l.b16 %v3567
  %v3701 = vunpack.c.l.b16 %v3568
  %v3702 = vunpack.c.l.b16 %v3569
  %v3703 = vunpack.c.l.b16 %v3570
  %v3704 = vunpack.c.l.b16 %v3571
  %v3705 = vunpack.c.l.b16 %v3572
  %v3706 = vunpack.c.l.b16 %v3573
  %v3707 = vunpack.c.l.b16 %v3574
  %v3708 = vunpack.c.l.b16 %v3575
  %v3709 = vunpack.c.l.b16 %v3576
  %v3710 = vunpack.c.l.b16 %v3577
  %v3711 = vunpack.c.l.b16 %v3578
  %v3712 = vunpack.c.l.b16 %v3579
  %v3713 = vunpack.c.l.b16 %v3580
  %v3714 = vunpack.c.l.b16 %v3581
  %v3715 = vunpack.c.l.b16 %v3582
  %v3716 = vpack.c.b16 %v3653, %v3652
  %v3717 = vpack.c.b16 %v3655, %v3654
  %v3718 = vpack.c.b16 %v3657, %v3656
  %v3719 = vpack.c.b16 %v3659, %v3658
  %v3720 = vpack.c.b16 %v3661, %v3660
  %v3721 = vpack.c.b16 %v3663, %v3662
  %v3722 = vpack.c.b16 %v3665, %v3664
  %v3723 = vpack.c.b16 %v3667, %v3666
  %v3724 = vpack.c.b16 %v3669, %v3668
  %v3725 = vpack.c.b16 %v3671, %v3670
  %v3726 = vpack.c.b16 %v3673, %v3672
  %v3727 = vpack.c.b16 %v3675, %v3674
  %v3728 = vpack.c.b16 %v3677, %v3676
  %v3729 = vpack.c.b16 %v3679, %v3678
  %v3730 = vpack.c.b16 %v3681, %v3680
  %v3731 = vpack.c.b16 %v3683, %v3682
  %v3732 = vpack.c.b16 %v3685, %v3684
  %v3733 = vpack.c.b16 %v3687, %v3686
  %v3734 = vpack.c.b16 %v3689, %v3688
  %v3735 = vpack.c.b16 %v3691, %v3690
  %v3736 = vpack.c.b16 %v3693, %v3692
  %v3737 = vpack.c.b16 %v3695, %v3694
  %v3738 = vpack.c.b16 %v3697, %v3696
  %v3739 = vpack.c.b16 %v3699, %v3698
  %v3740 = vpack.c.b16 %v3701, %v3700
  %v3741 = vpack.c.b16 %v3703, %v3702
  %v3742 = vpack.c.b16 %v3705, %v3704
  %v3743 = vpack.c.b16 %v3707, %v3706
  %v3744 = vpack.c.b16 %v3709, %v3708
  %v3745 = vpack.c.b16 %v3711, %v3710
  %v3746 = vpack.c.b16 %v3713, %v3712
  %v3747 = vpack.c.b16 %v3715, %v3714
  %v3752 = vunpack.c.l.b16 %v3584
  %v3753 = vunpack.c.l.b16 %v3585
  %v3754 = vunpack.c.l.b16 %v3586
  %v3755 = vunpack.c.l.b16 %v3587
  %v3756 = vpack.c.b16 %v3753, %v3752
  %v3757 = vpack.c.b16 %v3755, %v3754
  %v3761 = vsel %vm329, %v3716, 0
  %v3764 = vsel %vm329, %v3717, 0
  %v3767 = vsel %vm329, %v3718, 0
  %v3770 = vsel %vm329, %v3719, 0
  %v3773 = vsel %vm329, %v3720, 0
  %v3776 = vsel %vm329, %v3721, 0
  %v3779 = vsel %vm329, %v3722, 0
  %v3782 = vsel %vm329, %v3723, 0
  %v3785 = vsel %vm329, %v3724, 0
  %v3788 = vsel %vm329, %v3725, 0
  %v3791 = vsel %vm329, %v3726, 0
  %v3794 = vsel %vm329, %v3727, 0
  %v3797 = vsel %vm329, %v3728, 0
  %v3800 = vsel %vm329, %v3729, 0
  %v3803 = vsel %vm329, %v3730, 0
  %v3806 = vsel %vm329, %v3731, 0
  %v3809 = vsel %vm329, %v3732, 0
  %v3812 = vsel %vm329, %v3733, 0
  %v3815 = vsel %vm329, %v3734, 0
  %v3818 = vsel %vm329, %v3735, 0
  %v3821 = vsel %vm329, %v3736, 0
  %v3824 = vsel %vm329, %v3737, 0
  %v3827 = vsel %vm329, %v3738, 0
  %v3830 = vsel %vm329, %v3739, 0
  %v3833 = vsel %vm329, %v3740, 0
  %v3836 = vsel %vm329, %v3741, 0
  %v3839 = vsel %vm329, %v3742, 0
  %v3842 = vsel %vm329, %v3743, 0
  %v3845 = vsel %vm329, %v3744, 0
  %v3848 = vsel %vm329, %v3745, 0
  %v3851 = vsel %vm329, %v3746, 0
  %v3854 = vsel %vm329, %v3747, 0
  %3856 = vmatpush.bf16.msra.mxu0 0
  %3857 = vmatpush.bf16.msra.mxu0 0
  %3858 = vmatpush.bf16.msra.mxu0 0
  %3859 = vmatpush.bf16.msra.mxu0 0
  %3860 = vmatpush.bf16.msra.mxu0 0
  %3861 = vmatpush.bf16.msra.mxu0 0
  %3862 = vmatpush.bf16.msra.mxu0 %v3757
  %3863 = vmatpush.bf16.msra.mxu0 %v3756
  %3864 = vmatmul.bf16.gmra.mxu0 %v3761
  %v3865 = vpop.f32.mrf.mxu0
  %v3866 = vadd.f32 0.0, %v3865
  %v3867 = vpop.f32.mrf.mxu0
  %v3868 = vadd.f32 0.0, %v3867
  %3869 = vmatmul.bf16.gmra.mxu0 %v3764
  %v3870 = vpop.f32.mrf.mxu0
  %v3871 = vadd.f32 0.0, %v3870
  %v3872 = vpop.f32.mrf.mxu0
  %v3873 = vadd.f32 0.0, %v3872
  %3874 = vmatmul.bf16.gmra.mxu0 %v3767
  %v3875 = vpop.f32.mrf.mxu0
  %v3876 = vadd.f32 0.0, %v3875
  %v3877 = vpop.f32.mrf.mxu0
  %v3878 = vadd.f32 0.0, %v3877
  %3879 = vmatmul.bf16.gmra.mxu0 %v3770
  %v3880 = vpop.f32.mrf.mxu0
  %v3881 = vadd.f32 0.0, %v3880
  %v3882 = vpop.f32.mrf.mxu0
  %v3883 = vadd.f32 0.0, %v3882
  %3884 = vmatmul.bf16.gmra.mxu0 %v3773
  %v3885 = vpop.f32.mrf.mxu0
  %v3886 = vadd.f32 0.0, %v3885
  %v3887 = vpop.f32.mrf.mxu0
  %v3888 = vadd.f32 0.0, %v3887
  %3889 = vmatmul.bf16.gmra.mxu0 %v3776
  %v3890 = vpop.f32.mrf.mxu0
  %v3891 = vadd.f32 0.0, %v3890
  %v3892 = vpop.f32.mrf.mxu0
  %v3893 = vadd.f32 0.0, %v3892
  %3894 = vmatmul.bf16.gmra.mxu0 %v3779
  %v3895 = vpop.f32.mrf.mxu0
  %v3896 = vadd.f32 0.0, %v3895
  %v3897 = vpop.f32.mrf.mxu0
  %v3898 = vadd.f32 0.0, %v3897
  %3899 = vmatmul.bf16.gmra.mxu0 %v3782
  %v3900 = vpop.f32.mrf.mxu0
  %v3901 = vadd.f32 0.0, %v3900
  %v3902 = vpop.f32.mrf.mxu0
  %v3903 = vadd.f32 0.0, %v3902
  %3904 = vmatmul.bf16.gmra.mxu0 %v3785
  %v3905 = vpop.f32.mrf.mxu0
  %v3906 = vadd.f32 0.0, %v3905
  %v3907 = vpop.f32.mrf.mxu0
  %v3908 = vadd.f32 0.0, %v3907
  %3909 = vmatmul.bf16.gmra.mxu0 %v3788
  %v3910 = vpop.f32.mrf.mxu0
  %v3911 = vadd.f32 0.0, %v3910
  %v3912 = vpop.f32.mrf.mxu0
  %v3913 = vadd.f32 0.0, %v3912
  %3914 = vmatmul.bf16.gmra.mxu0 %v3791
  %v3915 = vpop.f32.mrf.mxu0
  %v3916 = vadd.f32 0.0, %v3915
  %v3917 = vpop.f32.mrf.mxu0
  %v3918 = vadd.f32 0.0, %v3917
  %3919 = vmatmul.bf16.gmra.mxu0 %v3794
  %v3920 = vpop.f32.mrf.mxu0
  %v3921 = vadd.f32 0.0, %v3920
  %v3922 = vpop.f32.mrf.mxu0
  %v3923 = vadd.f32 0.0, %v3922
  %3924 = vmatmul.bf16.gmra.mxu0 %v3797
  %v3925 = vpop.f32.mrf.mxu0
  %v3926 = vadd.f32 0.0, %v3925
  %v3927 = vpop.f32.mrf.mxu0
  %v3928 = vadd.f32 0.0, %v3927
  %3929 = vmatmul.bf16.gmra.mxu0 %v3800
  %v3930 = vpop.f32.mrf.mxu0
  %v3931 = vadd.f32 0.0, %v3930
  %v3932 = vpop.f32.mrf.mxu0
  %v3933 = vadd.f32 0.0, %v3932
  %3934 = vmatmul.bf16.gmra.mxu0 %v3803
  %v3935 = vpop.f32.mrf.mxu0
  %v3936 = vadd.f32 0.0, %v3935
  %v3937 = vpop.f32.mrf.mxu0
  %v3938 = vadd.f32 0.0, %v3937
  %3939 = vmatmul.bf16.gmra.mxu0 %v3806
  %v3940 = vpop.f32.mrf.mxu0
  %v3941 = vadd.f32 0.0, %v3940
  %v3942 = vpop.f32.mrf.mxu0
  %v3943 = vadd.f32 0.0, %v3942
  %3944 = vmatmul.bf16.gmra.mxu0 %v3809
  %v3945 = vpop.f32.mrf.mxu0
  %v3946 = vadd.f32 0.0, %v3945
  %v3947 = vpop.f32.mrf.mxu0
  %v3948 = vadd.f32 0.0, %v3947
  %3949 = vmatmul.bf16.gmra.mxu0 %v3812
  %v3950 = vpop.f32.mrf.mxu0
  %v3951 = vadd.f32 0.0, %v3950
  %v3952 = vpop.f32.mrf.mxu0
  %v3953 = vadd.f32 0.0, %v3952
  %3954 = vmatmul.bf16.gmra.mxu0 %v3815
  %v3955 = vpop.f32.mrf.mxu0
  %v3956 = vadd.f32 0.0, %v3955
  %v3957 = vpop.f32.mrf.mxu0
  %v3958 = vadd.f32 0.0, %v3957
  %3959 = vmatmul.bf16.gmra.mxu0 %v3818
  %v3960 = vpop.f32.mrf.mxu0
  %v3961 = vadd.f32 0.0, %v3960
  %v3962 = vpop.f32.mrf.mxu0
  %v3963 = vadd.f32 0.0, %v3962
  %3964 = vmatmul.bf16.gmra.mxu0 %v3821
  %v3965 = vpop.f32.mrf.mxu0
  %v3966 = vadd.f32 0.0, %v3965
  %v3967 = vpop.f32.mrf.mxu0
  %v3968 = vadd.f32 0.0, %v3967
  %3969 = vmatmul.bf16.gmra.mxu0 %v3824
  %v3970 = vpop.f32.mrf.mxu0
  %v3971 = vadd.f32 0.0, %v3970
  %v3972 = vpop.f32.mrf.mxu0
  %v3973 = vadd.f32 0.0, %v3972
  %3974 = vmatmul.bf16.gmra.mxu0 %v3827
  %v3975 = vpop.f32.mrf.mxu0
  %v3976 = vadd.f32 0.0, %v3975
  %v3977 = vpop.f32.mrf.mxu0
  %v3978 = vadd.f32 0.0, %v3977
  %3979 = vmatmul.bf16.gmra.mxu0 %v3830
  %v3980 = vpop.f32.mrf.mxu0
  %v3981 = vadd.f32 0.0, %v3980
  %v3982 = vpop.f32.mrf.mxu0
  %v3983 = vadd.f32 0.0, %v3982
  %3984 = vmatmul.bf16.gmra.mxu0 %v3833
  %v3985 = vpop.f32.mrf.mxu0
  %v3986 = vadd.f32 0.0, %v3985
  %v3987 = vpop.f32.mrf.mxu0
  %v3988 = vadd.f32 0.0, %v3987
  %3989 = vmatmul.bf16.gmra.mxu0 %v3836
  %v3990 = vpop.f32.mrf.mxu0
  %v3991 = vadd.f32 0.0, %v3990
  %v3992 = vpop.f32.mrf.mxu0
  %v3993 = vadd.f32 0.0, %v3992
  %3994 = vmatmul.bf16.gmra.mxu0 %v3839
  %v3995 = vpop.f32.mrf.mxu0
  %v3996 = vadd.f32 0.0, %v3995
  %v3997 = vpop.f32.mrf.mxu0
  %v3998 = vadd.f32 0.0, %v3997
  %3999 = vmatmul.bf16.gmra.mxu0 %v3842
  %v4000 = vpop.f32.mrf.mxu0
  %v4001 = vadd.f32 0.0, %v4000
  %v4002 = vpop.f32.mrf.mxu0
  %v4003 = vadd.f32 0.0, %v4002
  %4004 = vmatmul.bf16.gmra.mxu0 %v3845
  %v4005 = vpop.f32.mrf.mxu0
  %v4006 = vadd.f32 0.0, %v4005
  %v4007 = vpop.f32.mrf.mxu0
  %v4008 = vadd.f32 0.0, %v4007
  %4009 = vmatmul.bf16.gmra.mxu0 %v3848
  %v4010 = vpop.f32.mrf.mxu0
  %v4011 = vadd.f32 0.0, %v4010
  %v4012 = vpop.f32.mrf.mxu0
  %v4013 = vadd.f32 0.0, %v4012
  %4014 = vmatmul.bf16.gmra.mxu0 %v3851
  %v4015 = vpop.f32.mrf.mxu0
  %v4016 = vadd.f32 0.0, %v4015
  %v4017 = vpop.f32.mrf.mxu0
  %v4018 = vadd.f32 0.0, %v4017
  %4019 = vmatmul.bf16.gmra.mxu0 %v3854
  %v4020 = vpop.f32.mrf.mxu0
  %v4021 = vadd.f32 0.0, %v4020
  %v4022 = vpop.f32.mrf.mxu0
  %v4023 = vadd.f32 0.0, %v4022
  %4024 = vdwg.mxu0
  %v4089 = vunpack.c.l.b16 %v3449
  %v4090 = vunpack.c.l.b16 %v3450
  %v4091 = vunpack.c.l.b16 %v3451
  %v4092 = vunpack.c.l.b16 %v3452
  %v4093 = vunpack.c.l.b16 %v3453
  %v4094 = vunpack.c.l.b16 %v3454
  %v4095 = vunpack.c.l.b16 %v3455
  %v4096 = vunpack.c.l.b16 %v3456
  %v4097 = vunpack.c.l.b16 %v3457
  %v4098 = vunpack.c.l.b16 %v3458
  %v4099 = vunpack.c.l.b16 %v3459
  %v4100 = vunpack.c.l.b16 %v3460
  %v4101 = vunpack.c.l.b16 %v3461
  %v4102 = vunpack.c.l.b16 %v3462
  %v4103 = vunpack.c.l.b16 %v3463
  %v4104 = vunpack.c.l.b16 %v3464
  %v4105 = vunpack.c.l.b16 %v3465
  %v4106 = vunpack.c.l.b16 %v3466
  %v4107 = vunpack.c.l.b16 %v3467
  %v4108 = vunpack.c.l.b16 %v3468
  %v4109 = vunpack.c.l.b16 %v3469
  %v4110 = vunpack.c.l.b16 %v3470
  %v4111 = vunpack.c.l.b16 %v3471
  %v4112 = vunpack.c.l.b16 %v3472
  %v4113 = vunpack.c.l.b16 %v3473
  %v4114 = vunpack.c.l.b16 %v3474
  %v4115 = vunpack.c.l.b16 %v3475
  %v4116 = vunpack.c.l.b16 %v3476
  %v4117 = vunpack.c.l.b16 %v3477
  %v4118 = vunpack.c.l.b16 %v3478
  %v4119 = vunpack.c.l.b16 %v3479
  %v4120 = vunpack.c.l.b16 %v3480
  %v4121 = vunpack.c.l.b16 %v3481
  %v4122 = vunpack.c.l.b16 %v3482
  %v4123 = vunpack.c.l.b16 %v3483
  %v4124 = vunpack.c.l.b16 %v3484
  %v4125 = vunpack.c.l.b16 %v3485
  %v4126 = vunpack.c.l.b16 %v3486
  %v4127 = vunpack.c.l.b16 %v3487
  %v4128 = vunpack.c.l.b16 %v3488
  %v4129 = vunpack.c.l.b16 %v3489
  %v4130 = vunpack.c.l.b16 %v3490
  %v4131 = vunpack.c.l.b16 %v3491
  %v4132 = vunpack.c.l.b16 %v3492
  %v4133 = vunpack.c.l.b16 %v3493
  %v4134 = vunpack.c.l.b16 %v3494
  %v4135 = vunpack.c.l.b16 %v3495
  %v4136 = vunpack.c.l.b16 %v3496
  %v4137 = vunpack.c.l.b16 %v3497
  %v4138 = vunpack.c.l.b16 %v3498
  %v4139 = vunpack.c.l.b16 %v3499
  %v4140 = vunpack.c.l.b16 %v3500
  %v4141 = vunpack.c.l.b16 %v3501
  %v4142 = vunpack.c.l.b16 %v3502
  %v4143 = vunpack.c.l.b16 %v3503
  %v4144 = vunpack.c.l.b16 %v3504
  %v4145 = vunpack.c.l.b16 %v3505
  %v4146 = vunpack.c.l.b16 %v3506
  %v4147 = vunpack.c.l.b16 %v3507
  %v4148 = vunpack.c.l.b16 %v3508
  %v4149 = vunpack.c.l.b16 %v3509
  %v4150 = vunpack.c.l.b16 %v3510
  %v4151 = vunpack.c.l.b16 %v3511
  %v4152 = vunpack.c.l.b16 %v3512
  %v4153 = vpack.c.b16 %v4090, %v4089
  %v4154 = vpack.c.b16 %v4092, %v4091
  %v4155 = vpack.c.b16 %v4094, %v4093
  %v4156 = vpack.c.b16 %v4096, %v4095
  %v4157 = vpack.c.b16 %v4098, %v4097
  %v4158 = vpack.c.b16 %v4100, %v4099
  %v4159 = vpack.c.b16 %v4102, %v4101
  %v4160 = vpack.c.b16 %v4104, %v4103
  %v4161 = vpack.c.b16 %v4106, %v4105
  %v4162 = vpack.c.b16 %v4108, %v4107
  %v4163 = vpack.c.b16 %v4110, %v4109
  %v4164 = vpack.c.b16 %v4112, %v4111
  %v4165 = vpack.c.b16 %v4114, %v4113
  %v4166 = vpack.c.b16 %v4116, %v4115
  %v4167 = vpack.c.b16 %v4118, %v4117
  %v4168 = vpack.c.b16 %v4120, %v4119
  %v4169 = vpack.c.b16 %v4122, %v4121
  %v4170 = vpack.c.b16 %v4124, %v4123
  %v4171 = vpack.c.b16 %v4126, %v4125
  %v4172 = vpack.c.b16 %v4128, %v4127
  %v4173 = vpack.c.b16 %v4130, %v4129
  %v4174 = vpack.c.b16 %v4132, %v4131
  %v4175 = vpack.c.b16 %v4134, %v4133
  %v4176 = vpack.c.b16 %v4136, %v4135
  %v4177 = vpack.c.b16 %v4138, %v4137
  %v4178 = vpack.c.b16 %v4140, %v4139
  %v4179 = vpack.c.b16 %v4142, %v4141
  %v4180 = vpack.c.b16 %v4144, %v4143
  %v4181 = vpack.c.b16 %v4146, %v4145
  %v4182 = vpack.c.b16 %v4148, %v4147
  %v4183 = vpack.c.b16 %v4150, %v4149
  %v4184 = vpack.c.b16 %v4152, %v4151
  %v4189 = vunpack.c.l.b16 %v3514
  %v4190 = vunpack.c.l.b16 %v3515
  %v4191 = vunpack.c.l.b16 %v3516
  %v4192 = vunpack.c.l.b16 %v3517
  %v4193 = vpack.c.b16 %v4190, %v4189
  %v4194 = vpack.c.b16 %v4192, %v4191
  %v4198 = vsel %vm329, %v4153, 0
  %v4201 = vsel %vm329, %v4154, 0
  %v4204 = vsel %vm329, %v4155, 0
  %v4207 = vsel %vm329, %v4156, 0
  %v4210 = vsel %vm329, %v4157, 0
  %v4213 = vsel %vm329, %v4158, 0
  %v4216 = vsel %vm329, %v4159, 0
  %v4219 = vsel %vm329, %v4160, 0
  %v4222 = vsel %vm329, %v4161, 0
  %v4225 = vsel %vm329, %v4162, 0
  %v4228 = vsel %vm329, %v4163, 0
  %v4231 = vsel %vm329, %v4164, 0
  %v4234 = vsel %vm329, %v4165, 0
  %v4237 = vsel %vm329, %v4166, 0
  %v4240 = vsel %vm329, %v4167, 0
  %v4243 = vsel %vm329, %v4168, 0
  %v4246 = vsel %vm329, %v4169, 0
  %v4249 = vsel %vm329, %v4170, 0
  %v4252 = vsel %vm329, %v4171, 0
  %v4255 = vsel %vm329, %v4172, 0
  %v4258 = vsel %vm329, %v4173, 0
  %v4261 = vsel %vm329, %v4174, 0
  %v4264 = vsel %vm329, %v4175, 0
  %v4267 = vsel %vm329, %v4176, 0
  %v4270 = vsel %vm329, %v4177, 0
  %v4273 = vsel %vm329, %v4178, 0
  %v4276 = vsel %vm329, %v4179, 0
  %v4279 = vsel %vm329, %v4180, 0
  %v4282 = vsel %vm329, %v4181, 0
  %v4285 = vsel %vm329, %v4182, 0
  %v4288 = vsel %vm329, %v4183, 0
  %v4291 = vsel %vm329, %v4184, 0
  %4293 = vmatpush.bf16.msra.mxu0 0
  %4294 = vmatpush.bf16.msra.mxu0 0
  %4295 = vmatpush.bf16.msra.mxu0 0
  %4296 = vmatpush.bf16.msra.mxu0 0
  %4297 = vmatpush.bf16.msra.mxu0 0
  %4298 = vmatpush.bf16.msra.mxu0 0
  %4299 = vmatpush.bf16.msra.mxu0 %v4194
  %4300 = vmatpush.bf16.msra.mxu0 %v4193
  %4301 = vmatmul.bf16.gmra.mxu0 %v4198
  %v4302 = vpop.f32.mrf.mxu0
  %v4303 = vadd.f32 %v3866, %v4302
  %v4304 = vpop.f32.mrf.mxu0
  %v4305 = vadd.f32 %v3868, %v4304
  %4306 = vmatmul.bf16.gmra.mxu0 %v4201
  %v4307 = vpop.f32.mrf.mxu0
  %v4308 = vadd.f32 %v3871, %v4307
  %v4309 = vpop.f32.mrf.mxu0
  %v4310 = vadd.f32 %v3873, %v4309
  %4311 = vmatmul.bf16.gmra.mxu0 %v4204
  %v4312 = vpop.f32.mrf.mxu0
  %v4313 = vadd.f32 %v3876, %v4312
  %v4314 = vpop.f32.mrf.mxu0
  %v4315 = vadd.f32 %v3878, %v4314
  %4316 = vmatmul.bf16.gmra.mxu0 %v4207
  %v4317 = vpop.f32.mrf.mxu0
  %v4318 = vadd.f32 %v3881, %v4317
  %v4319 = vpop.f32.mrf.mxu0
  %v4320 = vadd.f32 %v3883, %v4319
  %4321 = vmatmul.bf16.gmra.mxu0 %v4210
  %v4322 = vpop.f32.mrf.mxu0
  %v4323 = vadd.f32 %v3886, %v4322
  %v4324 = vpop.f32.mrf.mxu0
  %v4325 = vadd.f32 %v3888, %v4324
  %4326 = vmatmul.bf16.gmra.mxu0 %v4213
  %v4327 = vpop.f32.mrf.mxu0
  %v4328 = vadd.f32 %v3891, %v4327
  %v4329 = vpop.f32.mrf.mxu0
  %v4330 = vadd.f32 %v3893, %v4329
  %4331 = vmatmul.bf16.gmra.mxu0 %v4216
  %v4332 = vpop.f32.mrf.mxu0
  %v4333 = vadd.f32 %v3896, %v4332
  %v4334 = vpop.f32.mrf.mxu0
  %v4335 = vadd.f32 %v3898, %v4334
  %4336 = vmatmul.bf16.gmra.mxu0 %v4219
  %v4337 = vpop.f32.mrf.mxu0
  %v4338 = vadd.f32 %v3901, %v4337
  %v4339 = vpop.f32.mrf.mxu0
  %v4340 = vadd.f32 %v3903, %v4339
  %4341 = vmatmul.bf16.gmra.mxu0 %v4222
  %v4342 = vpop.f32.mrf.mxu0
  %v4343 = vadd.f32 %v3906, %v4342
  %v4344 = vpop.f32.mrf.mxu0
  %v4345 = vadd.f32 %v3908, %v4344
  %4346 = vmatmul.bf16.gmra.mxu0 %v4225
  %v4347 = vpop.f32.mrf.mxu0
  %v4348 = vadd.f32 %v3911, %v4347
  %v4349 = vpop.f32.mrf.mxu0
  %v4350 = vadd.f32 %v3913, %v4349
  %4351 = vmatmul.bf16.gmra.mxu0 %v4228
  %v4352 = vpop.f32.mrf.mxu0
  %v4353 = vadd.f32 %v3916, %v4352
  %v4354 = vpop.f32.mrf.mxu0
  %v4355 = vadd.f32 %v3918, %v4354
  %4356 = vmatmul.bf16.gmra.mxu0 %v4231
  %v4357 = vpop.f32.mrf.mxu0
  %v4358 = vadd.f32 %v3921, %v4357
  %v4359 = vpop.f32.mrf.mxu0
  %v4360 = vadd.f32 %v3923, %v4359
  %4361 = vmatmul.bf16.gmra.mxu0 %v4234
  %v4362 = vpop.f32.mrf.mxu0
  %v4363 = vadd.f32 %v3926, %v4362
  %v4364 = vpop.f32.mrf.mxu0
  %v4365 = vadd.f32 %v3928, %v4364
  %4366 = vmatmul.bf16.gmra.mxu0 %v4237
  %v4367 = vpop.f32.mrf.mxu0
  %v4368 = vadd.f32 %v3931, %v4367
  %v4369 = vpop.f32.mrf.mxu0
  %v4370 = vadd.f32 %v3933, %v4369
  %4371 = vmatmul.bf16.gmra.mxu0 %v4240
  %v4372 = vpop.f32.mrf.mxu0
  %v4373 = vadd.f32 %v3936, %v4372
  %v4374 = vpop.f32.mrf.mxu0
  %v4375 = vadd.f32 %v3938, %v4374
  %4376 = vmatmul.bf16.gmra.mxu0 %v4243
  %v4377 = vpop.f32.mrf.mxu0
  %v4378 = vadd.f32 %v3941, %v4377
  %v4379 = vpop.f32.mrf.mxu0
  %v4380 = vadd.f32 %v3943, %v4379
  %4381 = vmatmul.bf16.gmra.mxu0 %v4246
  %v4382 = vpop.f32.mrf.mxu0
  %v4383 = vadd.f32 %v3946, %v4382
  %v4384 = vpop.f32.mrf.mxu0
  %v4385 = vadd.f32 %v3948, %v4384
  %4386 = vmatmul.bf16.gmra.mxu0 %v4249
  %v4387 = vpop.f32.mrf.mxu0
  %v4388 = vadd.f32 %v3951, %v4387
  %v4389 = vpop.f32.mrf.mxu0
  %v4390 = vadd.f32 %v3953, %v4389
  %4391 = vmatmul.bf16.gmra.mxu0 %v4252
  %v4392 = vpop.f32.mrf.mxu0
  %v4393 = vadd.f32 %v3956, %v4392
  %v4394 = vpop.f32.mrf.mxu0
  %v4395 = vadd.f32 %v3958, %v4394
  %4396 = vmatmul.bf16.gmra.mxu0 %v4255
  %v4397 = vpop.f32.mrf.mxu0
  %v4398 = vadd.f32 %v3961, %v4397
  %v4399 = vpop.f32.mrf.mxu0
  %v4400 = vadd.f32 %v3963, %v4399
  %4401 = vmatmul.bf16.gmra.mxu0 %v4258
  %v4402 = vpop.f32.mrf.mxu0
  %v4403 = vadd.f32 %v3966, %v4402
  %v4404 = vpop.f32.mrf.mxu0
  %v4405 = vadd.f32 %v3968, %v4404
  %4406 = vmatmul.bf16.gmra.mxu0 %v4261
  %v4407 = vpop.f32.mrf.mxu0
  %v4408 = vadd.f32 %v3971, %v4407
  %v4409 = vpop.f32.mrf.mxu0
  %v4410 = vadd.f32 %v3973, %v4409
  %4411 = vmatmul.bf16.gmra.mxu0 %v4264
  %v4412 = vpop.f32.mrf.mxu0
  %v4413 = vadd.f32 %v3976, %v4412
  %v4414 = vpop.f32.mrf.mxu0
  %v4415 = vadd.f32 %v3978, %v4414
  %4416 = vmatmul.bf16.gmra.mxu0 %v4267
  %v4417 = vpop.f32.mrf.mxu0
  %v4418 = vadd.f32 %v3981, %v4417
  %v4419 = vpop.f32.mrf.mxu0
  %v4420 = vadd.f32 %v3983, %v4419
  %4421 = vmatmul.bf16.gmra.mxu0 %v4270
  %v4422 = vpop.f32.mrf.mxu0
  %v4423 = vadd.f32 %v3986, %v4422
  %v4424 = vpop.f32.mrf.mxu0
  %v4425 = vadd.f32 %v3988, %v4424
  %4426 = vmatmul.bf16.gmra.mxu0 %v4273
  %v4427 = vpop.f32.mrf.mxu0
  %v4428 = vadd.f32 %v3991, %v4427
  %v4429 = vpop.f32.mrf.mxu0
  %v4430 = vadd.f32 %v3993, %v4429
  %4431 = vmatmul.bf16.gmra.mxu0 %v4276
  %v4432 = vpop.f32.mrf.mxu0
  %v4433 = vadd.f32 %v3996, %v4432
  %v4434 = vpop.f32.mrf.mxu0
  %v4435 = vadd.f32 %v3998, %v4434
  %4436 = vmatmul.bf16.gmra.mxu0 %v4279
  %v4437 = vpop.f32.mrf.mxu0
  %v4438 = vadd.f32 %v4001, %v4437
  %v4439 = vpop.f32.mrf.mxu0
  %v4440 = vadd.f32 %v4003, %v4439
  %4441 = vmatmul.bf16.gmra.mxu0 %v4282
  %v4442 = vpop.f32.mrf.mxu0
  %v4443 = vadd.f32 %v4006, %v4442
  %v4444 = vpop.f32.mrf.mxu0
  %v4445 = vadd.f32 %v4008, %v4444
  %4446 = vmatmul.bf16.gmra.mxu0 %v4285
  %v4447 = vpop.f32.mrf.mxu0
  %v4448 = vadd.f32 %v4011, %v4447
  %v4449 = vpop.f32.mrf.mxu0
  %v4450 = vadd.f32 %v4013, %v4449
  %4451 = vmatmul.bf16.gmra.mxu0 %v4288
  %v4452 = vpop.f32.mrf.mxu0
  %v4453 = vadd.f32 %v4016, %v4452
  %v4454 = vpop.f32.mrf.mxu0
  %v4455 = vadd.f32 %v4018, %v4454
  %4456 = vmatmul.bf16.gmra.mxu0 %v4291
  %v4457 = vpop.f32.mrf.mxu0
  %v4458 = vadd.f32 %v4021, %v4457
  %v4459 = vpop.f32.mrf.mxu0
  %v4460 = vadd.f32 %v4023, %v4459
  %4461 = vdwg.mxu0
  %v4462 = vadd.f32 %v4303, %v1034
  %v4463 = vadd.f32 %v4305, %v1034
  %v4464 = vadd.f32 %v4308, %v1034
  %v4465 = vadd.f32 %v4310, %v1034
  %v4466 = vadd.f32 %v4313, %v1034
  %v4467 = vadd.f32 %v4315, %v1034
  %v4468 = vadd.f32 %v4318, %v1034
  %v4469 = vadd.f32 %v4320, %v1034
  %v4470 = vadd.f32 %v4323, %v1034
  %v4471 = vadd.f32 %v4325, %v1034
  %v4472 = vadd.f32 %v4328, %v1034
  %v4473 = vadd.f32 %v4330, %v1034
  %v4474 = vadd.f32 %v4333, %v1034
  %v4475 = vadd.f32 %v4335, %v1034
  %v4476 = vadd.f32 %v4338, %v1034
  %v4477 = vadd.f32 %v4340, %v1034
  %v4478 = vadd.f32 %v4343, %v1034
  %v4479 = vadd.f32 %v4345, %v1034
  %v4480 = vadd.f32 %v4348, %v1034
  %v4481 = vadd.f32 %v4350, %v1034
  %v4482 = vadd.f32 %v4353, %v1034
  %v4483 = vadd.f32 %v4355, %v1034
  %v4484 = vadd.f32 %v4358, %v1034
  %v4485 = vadd.f32 %v4360, %v1034
  %v4486 = vadd.f32 %v4363, %v1034
  %v4487 = vadd.f32 %v4365, %v1034
  %v4488 = vadd.f32 %v4368, %v1034
  %v4489 = vadd.f32 %v4370, %v1034
  %v4490 = vadd.f32 %v4373, %v1034
  %v4491 = vadd.f32 %v4375, %v1034
  %v4492 = vadd.f32 %v4378, %v1034
  %v4493 = vadd.f32 %v4380, %v1034
  %v4494 = vadd.f32 %v4383, %v1034
  %v4495 = vadd.f32 %v4385, %v1034
  %v4496 = vadd.f32 %v4388, %v1034
  %v4497 = vadd.f32 %v4390, %v1034
  %v4498 = vadd.f32 %v4393, %v1034
  %v4499 = vadd.f32 %v4395, %v1034
  %v4500 = vadd.f32 %v4398, %v1034
  %v4501 = vadd.f32 %v4400, %v1034
  %v4502 = vadd.f32 %v4403, %v1034
  %v4503 = vadd.f32 %v4405, %v1034
  %v4504 = vadd.f32 %v4408, %v1034
  %v4505 = vadd.f32 %v4410, %v1034
  %v4506 = vadd.f32 %v4413, %v1034
  %v4507 = vadd.f32 %v4415, %v1034
  %v4508 = vadd.f32 %v4418, %v1034
  %v4509 = vadd.f32 %v4420, %v1034
  %v4510 = vadd.f32 %v4423, %v1034
  %v4511 = vadd.f32 %v4425, %v1034
  %v4512 = vadd.f32 %v4428, %v1034
  %v4513 = vadd.f32 %v4430, %v1034
  %v4514 = vadd.f32 %v4433, %v1034
  %v4515 = vadd.f32 %v4435, %v1034
  %v4516 = vadd.f32 %v4438, %v1034
  %v4517 = vadd.f32 %v4440, %v1034
  %v4518 = vadd.f32 %v4443, %v1034
  %v4519 = vadd.f32 %v4445, %v1034
  %v4520 = vadd.f32 %v4448, %v1034
  %v4521 = vadd.f32 %v4450, %v1034
  %v4522 = vadd.f32 %v4453, %v1034
  %v4523 = vadd.f32 %v4455, %v1034
  %v4524 = vadd.f32 %v4458, %v1034
  %v4525 = vadd.f32 %v4460, %v1034
  %v4526 = vtanh.pop %v4462
  %v4527 = vtanh.pop %v4463
  %v4528 = vtanh.pop %v4464
  %v4529 = vtanh.pop %v4465
  %v4530 = vtanh.pop %v4466
  %v4531 = vtanh.pop %v4467
  %v4532 = vtanh.pop %v4468
  %v4533 = vtanh.pop %v4469
  %v4534 = vtanh.pop %v4470
  %v4535 = vtanh.pop %v4471
  %v4536 = vtanh.pop %v4472
  %v4537 = vtanh.pop %v4473
  %v4538 = vtanh.pop %v4474
  %v4539 = vtanh.pop %v4475
  %v4540 = vtanh.pop %v4476
  %v4541 = vtanh.pop %v4477
  %v4542 = vtanh.pop %v4478
  %v4543 = vtanh.pop %v4479
  %v4544 = vtanh.pop %v4480
  %v4545 = vtanh.pop %v4481
  %v4546 = vtanh.pop %v4482
  %v4547 = vtanh.pop %v4483
  %v4548 = vtanh.pop %v4484
  %v4549 = vtanh.pop %v4485
  %v4550 = vtanh.pop %v4486
  %v4551 = vtanh.pop %v4487
  %v4552 = vtanh.pop %v4488
  %v4553 = vtanh.pop %v4489
  %v4554 = vtanh.pop %v4490
  %v4555 = vtanh.pop %v4491
  %v4556 = vtanh.pop %v4492
  %v4557 = vtanh.pop %v4493
  %v4558 = vtanh.pop %v4494
  %v4559 = vtanh.pop %v4495
  %v4560 = vtanh.pop %v4496
  %v4561 = vtanh.pop %v4497
  %v4562 = vtanh.pop %v4498
  %v4563 = vtanh.pop %v4499
  %v4564 = vtanh.pop %v4500
  %v4565 = vtanh.pop %v4501
  %v4566 = vtanh.pop %v4502
  %v4567 = vtanh.pop %v4503
  %v4568 = vtanh.pop %v4504
  %v4569 = vtanh.pop %v4505
  %v4570 = vtanh.pop %v4506
  %v4571 = vtanh.pop %v4507
  %v4572 = vtanh.pop %v4508
  %v4573 = vtanh.pop %v4509
  %v4574 = vtanh.pop %v4510
  %v4575 = vtanh.pop %v4511
  %v4576 = vtanh.pop %v4512
  %v4577 = vtanh.pop %v4513
  %v4578 = vtanh.pop %v4514
  %v4579 = vtanh.pop %v4515
  %v4580 = vtanh.pop %v4516
  %v4581 = vtanh.pop %v4517
  %v4582 = vtanh.pop %v4518
  %v4583 = vtanh.pop %v4519
  %v4584 = vtanh.pop %v4520
  %v4585 = vtanh.pop %v4521
  %v4586 = vtanh.pop %v4522
  %v4587 = vtanh.pop %v4523
  %v4588 = vtanh.pop %v4524
  %v4589 = vtanh.pop %v4525
  %4654 = vrot.lane.b32.xlu0 %v2242, 3
  %v4655 = vpop.permute.xlu0 %4654
  %4656 = vrot.lane.b32.xlu0 %v2243, 3
  %v4657 = vpop.permute.xlu0 %4656
  %4658 = vrot.lane.b32.xlu0 %v2244, 3
  %v4659 = vpop.permute.xlu0 %4658
  %4660 = vrot.lane.b32.xlu0 %v2245, 3
  %v4661 = vpop.permute.xlu0 %4660
  %4662 = vrot.lane.b32.xlu0 %v2246, 3
  %v4663 = vpop.permute.xlu0 %4662
  %4664 = vrot.lane.b32.xlu0 %v2247, 3
  %v4665 = vpop.permute.xlu0 %4664
  %4666 = vrot.lane.b32.xlu0 %v2248, 3
  %v4667 = vpop.permute.xlu0 %4666
  %4668 = vrot.lane.b32.xlu0 %v2249, 3
  %v4669 = vpop.permute.xlu0 %4668
  %4670 = vrot.lane.b32.xlu0 %v2250, 3
  %v4671 = vpop.permute.xlu0 %4670
  %4672 = vrot.lane.b32.xlu0 %v2251, 3
  %v4673 = vpop.permute.xlu0 %4672
  %4674 = vrot.lane.b32.xlu0 %v2252, 3
  %v4675 = vpop.permute.xlu0 %4674
  %4676 = vrot.lane.b32.xlu0 %v2253, 3
  %v4677 = vpop.permute.xlu0 %4676
  %4678 = vrot.lane.b32.xlu0 %v2254, 3
  %v4679 = vpop.permute.xlu0 %4678
  %4680 = vrot.lane.b32.xlu0 %v2255, 3
  %v4681 = vpop.permute.xlu0 %4680
  %4682 = vrot.lane.b32.xlu0 %v2256, 3
  %v4683 = vpop.permute.xlu0 %4682
  %4684 = vrot.lane.b32.xlu0 %v2257, 3
  %v4685 = vpop.permute.xlu0 %4684
  %4686 = vrot.lane.b32.xlu0 %v2258, 3
  %v4687 = vpop.permute.xlu0 %4686
  %4688 = vrot.lane.b32.xlu0 %v2259, 3
  %v4689 = vpop.permute.xlu0 %4688
  %4690 = vrot.lane.b32.xlu0 %v2260, 3
  %v4691 = vpop.permute.xlu0 %4690
  %4692 = vrot.lane.b32.xlu0 %v2261, 3
  %v4693 = vpop.permute.xlu0 %4692
  %4694 = vrot.lane.b32.xlu0 %v2262, 3
  %v4695 = vpop.permute.xlu0 %4694
  %4696 = vrot.lane.b32.xlu0 %v2263, 3
  %v4697 = vpop.permute.xlu0 %4696
  %4698 = vrot.lane.b32.xlu0 %v2264, 3
  %v4699 = vpop.permute.xlu0 %4698
  %4700 = vrot.lane.b32.xlu0 %v2265, 3
  %v4701 = vpop.permute.xlu0 %4700
  %4702 = vrot.lane.b32.xlu0 %v2266, 3
  %v4703 = vpop.permute.xlu0 %4702
  %4704 = vrot.lane.b32.xlu0 %v2267, 3
  %v4705 = vpop.permute.xlu0 %4704
  %4706 = vrot.lane.b32.xlu0 %v2268, 3
  %v4707 = vpop.permute.xlu0 %4706
  %4708 = vrot.lane.b32.xlu0 %v2269, 3
  %v4709 = vpop.permute.xlu0 %4708
  %4710 = vrot.lane.b32.xlu0 %v2270, 3
  %v4711 = vpop.permute.xlu0 %4710
  %4712 = vrot.lane.b32.xlu0 %v2271, 3
  %v4713 = vpop.permute.xlu0 %4712
  %4714 = vrot.lane.b32.xlu0 %v2272, 3
  %v4715 = vpop.permute.xlu0 %4714
  %4716 = vrot.lane.b32.xlu0 %v2273, 3
  %v4717 = vpop.permute.xlu0 %4716
  %4718 = vrot.lane.b32.xlu0 %v2274, 3
  %v4719 = vpop.permute.xlu0 %4718
  %4720 = vrot.lane.b32.xlu0 %v2275, 3
  %v4721 = vpop.permute.xlu0 %4720
  %4722 = vrot.lane.b32.xlu0 %v2276, 3
  %v4723 = vpop.permute.xlu0 %4722
  %4724 = vrot.lane.b32.xlu0 %v2277, 3
  %v4725 = vpop.permute.xlu0 %4724
  %4726 = vrot.lane.b32.xlu0 %v2278, 3
  %v4727 = vpop.permute.xlu0 %4726
  %4728 = vrot.lane.b32.xlu0 %v2279, 3
  %v4729 = vpop.permute.xlu0 %4728
  %4730 = vrot.lane.b32.xlu0 %v2280, 3
  %v4731 = vpop.permute.xlu0 %4730
  %4732 = vrot.lane.b32.xlu0 %v2281, 3
  %v4733 = vpop.permute.xlu0 %4732
  %4734 = vrot.lane.b32.xlu0 %v2282, 3
  %v4735 = vpop.permute.xlu0 %4734
  %4736 = vrot.lane.b32.xlu0 %v2283, 3
  %v4737 = vpop.permute.xlu0 %4736
  %4738 = vrot.lane.b32.xlu0 %v2284, 3
  %v4739 = vpop.permute.xlu0 %4738
  %4740 = vrot.lane.b32.xlu0 %v2285, 3
  %v4741 = vpop.permute.xlu0 %4740
  %4742 = vrot.lane.b32.xlu0 %v2286, 3
  %v4743 = vpop.permute.xlu0 %4742
  %4744 = vrot.lane.b32.xlu0 %v2287, 3
  %v4745 = vpop.permute.xlu0 %4744
  %4746 = vrot.lane.b32.xlu0 %v2288, 3
  %v4747 = vpop.permute.xlu0 %4746
  %4748 = vrot.lane.b32.xlu0 %v2289, 3
  %v4749 = vpop.permute.xlu0 %4748
  %4750 = vrot.lane.b32.xlu0 %v2290, 3
  %v4751 = vpop.permute.xlu0 %4750
  %4752 = vrot.lane.b32.xlu0 %v2291, 3
  %v4753 = vpop.permute.xlu0 %4752
  %4754 = vrot.lane.b32.xlu0 %v2292, 3
  %v4755 = vpop.permute.xlu0 %4754
  %4756 = vrot.lane.b32.xlu0 %v2293, 3
  %v4757 = vpop.permute.xlu0 %4756
  %4758 = vrot.lane.b32.xlu0 %v2294, 3
  %v4759 = vpop.permute.xlu0 %4758
  %4760 = vrot.lane.b32.xlu0 %v2295, 3
  %v4761 = vpop.permute.xlu0 %4760
  %4762 = vrot.lane.b32.xlu0 %v2296, 3
  %v4763 = vpop.permute.xlu0 %4762
  %4764 = vrot.lane.b32.xlu0 %v2297, 3
  %v4765 = vpop.permute.xlu0 %4764
  %4766 = vrot.lane.b32.xlu0 %v2298, 3
  %v4767 = vpop.permute.xlu0 %4766
  %4768 = vrot.lane.b32.xlu0 %v2299, 3
  %v4769 = vpop.permute.xlu0 %4768
  %4770 = vrot.lane.b32.xlu0 %v2300, 3
  %v4771 = vpop.permute.xlu0 %4770
  %4772 = vrot.lane.b32.xlu0 %v2301, 3
  %v4773 = vpop.permute.xlu0 %4772
  %4774 = vrot.lane.b32.xlu0 %v2302, 3
  %v4775 = vpop.permute.xlu0 %4774
  %4776 = vrot.lane.b32.xlu0 %v2303, 3
  %v4777 = vpop.permute.xlu0 %4776
  %4778 = vrot.lane.b32.xlu0 %v2304, 3
  %v4779 = vpop.permute.xlu0 %4778
  %4780 = vrot.lane.b32.xlu0 %v2305, 3
  %v4781 = vpop.permute.xlu0 %4780
  %4910 = vrot.lane.b32.xlu0 %v3384, 6
  %v4911 = vpop.permute.xlu0 %4910
  %4912 = vrot.lane.b32.xlu0 %v3385, 6
  %v4913 = vpop.permute.xlu0 %4912
  %4914 = vrot.lane.b32.xlu0 %v3386, 6
  %v4915 = vpop.permute.xlu0 %4914
  %4916 = vrot.lane.b32.xlu0 %v3387, 6
  %v4917 = vpop.permute.xlu0 %4916
  %4918 = vrot.lane.b32.xlu0 %v3388, 6
  %v4919 = vpop.permute.xlu0 %4918
  %4920 = vrot.lane.b32.xlu0 %v3389, 6
  %v4921 = vpop.permute.xlu0 %4920
  %4922 = vrot.lane.b32.xlu0 %v3390, 6
  %v4923 = vpop.permute.xlu0 %4922
  %4924 = vrot.lane.b32.xlu0 %v3391, 6
  %v4925 = vpop.permute.xlu0 %4924
  %4926 = vrot.lane.b32.xlu0 %v3392, 6
  %v4927 = vpop.permute.xlu0 %4926
  %4928 = vrot.lane.b32.xlu0 %v3393, 6
  %v4929 = vpop.permute.xlu0 %4928
  %4930 = vrot.lane.b32.xlu0 %v3394, 6
  %v4931 = vpop.permute.xlu0 %4930
  %4932 = vrot.lane.b32.xlu0 %v3395, 6
  %v4933 = vpop.permute.xlu0 %4932
  %4934 = vrot.lane.b32.xlu0 %v3396, 6
  %v4935 = vpop.permute.xlu0 %4934
  %4936 = vrot.lane.b32.xlu0 %v3397, 6
  %v4937 = vpop.permute.xlu0 %4936
  %4938 = vrot.lane.b32.xlu0 %v3398, 6
  %v4939 = vpop.permute.xlu0 %4938
  %4940 = vrot.lane.b32.xlu0 %v3399, 6
  %v4941 = vpop.permute.xlu0 %4940
  %4942 = vrot.lane.b32.xlu0 %v3400, 6
  %v4943 = vpop.permute.xlu0 %4942
  %4944 = vrot.lane.b32.xlu0 %v3401, 6
  %v4945 = vpop.permute.xlu0 %4944
  %4946 = vrot.lane.b32.xlu0 %v3402, 6
  %v4947 = vpop.permute.xlu0 %4946
  %4948 = vrot.lane.b32.xlu0 %v3403, 6
  %v4949 = vpop.permute.xlu0 %4948
  %4950 = vrot.lane.b32.xlu0 %v3404, 6
  %v4951 = vpop.permute.xlu0 %4950
  %4952 = vrot.lane.b32.xlu0 %v3405, 6
  %v4953 = vpop.permute.xlu0 %4952
  %4954 = vrot.lane.b32.xlu0 %v3406, 6
  %v4955 = vpop.permute.xlu0 %4954
  %4956 = vrot.lane.b32.xlu0 %v3407, 6
  %v4957 = vpop.permute.xlu0 %4956
  %4958 = vrot.lane.b32.xlu0 %v3408, 6
  %v4959 = vpop.permute.xlu0 %4958
  %4960 = vrot.lane.b32.xlu0 %v3409, 6
  %v4961 = vpop.permute.xlu0 %4960
  %4962 = vrot.lane.b32.xlu0 %v3410, 6
  %v4963 = vpop.permute.xlu0 %4962
  %4964 = vrot.lane.b32.xlu0 %v3411, 6
  %v4965 = vpop.permute.xlu0 %4964
  %4966 = vrot.lane.b32.xlu0 %v3412, 6
  %v4967 = vpop.permute.xlu0 %4966
  %4968 = vrot.lane.b32.xlu0 %v3413, 6
  %v4969 = vpop.permute.xlu0 %4968
  %4970 = vrot.lane.b32.xlu0 %v3414, 6
  %v4971 = vpop.permute.xlu0 %4970
  %4972 = vrot.lane.b32.xlu0 %v3415, 6
  %v4973 = vpop.permute.xlu0 %4972
  %4974 = vrot.lane.b32.xlu0 %v3416, 6
  %v4975 = vpop.permute.xlu0 %4974
  %4976 = vrot.lane.b32.xlu0 %v3417, 6
  %v4977 = vpop.permute.xlu0 %4976
  %4978 = vrot.lane.b32.xlu0 %v3418, 6
  %v4979 = vpop.permute.xlu0 %4978
  %4980 = vrot.lane.b32.xlu0 %v3419, 6
  %v4981 = vpop.permute.xlu0 %4980
  %4982 = vrot.lane.b32.xlu0 %v3420, 6
  %v4983 = vpop.permute.xlu0 %4982
  %4984 = vrot.lane.b32.xlu0 %v3421, 6
  %v4985 = vpop.permute.xlu0 %4984
  %4986 = vrot.lane.b32.xlu0 %v3422, 6
  %v4987 = vpop.permute.xlu0 %4986
  %4988 = vrot.lane.b32.xlu0 %v3423, 6
  %v4989 = vpop.permute.xlu0 %4988
  %4990 = vrot.lane.b32.xlu0 %v3424, 6
  %v4991 = vpop.permute.xlu0 %4990
  %4992 = vrot.lane.b32.xlu0 %v3425, 6
  %v4993 = vpop.permute.xlu0 %4992
  %4994 = vrot.lane.b32.xlu0 %v3426, 6
  %v4995 = vpop.permute.xlu0 %4994
  %4996 = vrot.lane.b32.xlu0 %v3427, 6
  %v4997 = vpop.permute.xlu0 %4996
  %4998 = vrot.lane.b32.xlu0 %v3428, 6
  %v4999 = vpop.permute.xlu0 %4998
  %5000 = vrot.lane.b32.xlu0 %v3429, 6
  %v5001 = vpop.permute.xlu0 %5000
  %5002 = vrot.lane.b32.xlu0 %v3430, 6
  %v5003 = vpop.permute.xlu0 %5002
  %5004 = vrot.lane.b32.xlu0 %v3431, 6
  %v5005 = vpop.permute.xlu0 %5004
  %5006 = vrot.lane.b32.xlu0 %v3432, 6
  %v5007 = vpop.permute.xlu0 %5006
  %5008 = vrot.lane.b32.xlu0 %v3433, 6
  %v5009 = vpop.permute.xlu0 %5008
  %5010 = vrot.lane.b32.xlu0 %v3434, 6
  %v5011 = vpop.permute.xlu0 %5010
  %5012 = vrot.lane.b32.xlu0 %v3435, 6
  %v5013 = vpop.permute.xlu0 %5012
  %5014 = vrot.lane.b32.xlu0 %v3436, 6
  %v5015 = vpop.permute.xlu0 %5014
  %5016 = vrot.lane.b32.xlu0 %v3437, 6
  %v5017 = vpop.permute.xlu0 %5016
  %5018 = vrot.lane.b32.xlu0 %v3438, 6
  %v5019 = vpop.permute.xlu0 %5018
  %5020 = vrot.lane.b32.xlu0 %v3439, 6
  %v5021 = vpop.permute.xlu0 %5020
  %5022 = vrot.lane.b32.xlu0 %v3440, 6
  %v5023 = vpop.permute.xlu0 %5022
  %5024 = vrot.lane.b32.xlu0 %v3441, 6
  %v5025 = vpop.permute.xlu0 %5024
  %5026 = vrot.lane.b32.xlu0 %v3442, 6
  %v5027 = vpop.permute.xlu0 %5026
  %5028 = vrot.lane.b32.xlu0 %v3443, 6
  %v5029 = vpop.permute.xlu0 %5028
  %5030 = vrot.lane.b32.xlu0 %v3444, 6
  %v5031 = vpop.permute.xlu0 %5030
  %5032 = vrot.lane.b32.xlu0 %v3445, 6
  %v5033 = vpop.permute.xlu0 %5032
  %5034 = vrot.lane.b32.xlu0 %v3446, 6
  %v5035 = vpop.permute.xlu0 %5034
  %5036 = vrot.lane.b32.xlu0 %v3447, 6
  %v5037 = vpop.permute.xlu0 %5036
  %5166 = vrot.lane.b32.xlu0 %v4526, 9
  %v5167 = vpop.permute.xlu0 %5166
  %5168 = vrot.lane.b32.xlu0 %v4527, 9
  %v5169 = vpop.permute.xlu0 %5168
  %5170 = vrot.lane.b32.xlu0 %v4528, 9
  %v5171 = vpop.permute.xlu0 %5170
  %5172 = vrot.lane.b32.xlu0 %v4529, 9
  %v5173 = vpop.permute.xlu0 %5172
  %5174 = vrot.lane.b32.xlu0 %v4530, 9
  %v5175 = vpop.permute.xlu0 %5174
  %5176 = vrot.lane.b32.xlu0 %v4531, 9
  %v5177 = vpop.permute.xlu0 %5176
  %5178 = vrot.lane.b32.xlu0 %v4532, 9
  %v5179 = vpop.permute.xlu0 %5178
  %5180 = vrot.lane.b32.xlu0 %v4533, 9
  %v5181 = vpop.permute.xlu0 %5180
  %5182 = vrot.lane.b32.xlu0 %v4534, 9
  %v5183 = vpop.permute.xlu0 %5182
  %5184 = vrot.lane.b32.xlu0 %v4535, 9
  %v5185 = vpop.permute.xlu0 %5184
  %5186 = vrot.lane.b32.xlu0 %v4536, 9
  %v5187 = vpop.permute.xlu0 %5186
  %5188 = vrot.lane.b32.xlu0 %v4537, 9
  %v5189 = vpop.permute.xlu0 %5188
  %5190 = vrot.lane.b32.xlu0 %v4538, 9
  %v5191 = vpop.permute.xlu0 %5190
  %5192 = vrot.lane.b32.xlu0 %v4539, 9
  %v5193 = vpop.permute.xlu0 %5192
  %5194 = vrot.lane.b32.xlu0 %v4540, 9
  %v5195 = vpop.permute.xlu0 %5194
  %5196 = vrot.lane.b32.xlu0 %v4541, 9
  %v5197 = vpop.permute.xlu0 %5196
  %5198 = vrot.lane.b32.xlu0 %v4542, 9
  %v5199 = vpop.permute.xlu0 %5198
  %5200 = vrot.lane.b32.xlu0 %v4543, 9
  %v5201 = vpop.permute.xlu0 %5200
  %5202 = vrot.lane.b32.xlu0 %v4544, 9
  %v5203 = vpop.permute.xlu0 %5202
  %5204 = vrot.lane.b32.xlu0 %v4545, 9
  %v5205 = vpop.permute.xlu0 %5204
  %5206 = vrot.lane.b32.xlu0 %v4546, 9
  %v5207 = vpop.permute.xlu0 %5206
  %5208 = vrot.lane.b32.xlu0 %v4547, 9
  %v5209 = vpop.permute.xlu0 %5208
  %5210 = vrot.lane.b32.xlu0 %v4548, 9
  %v5211 = vpop.permute.xlu0 %5210
  %5212 = vrot.lane.b32.xlu0 %v4549, 9
  %v5213 = vpop.permute.xlu0 %5212
  %5214 = vrot.lane.b32.xlu0 %v4550, 9
  %v5215 = vpop.permute.xlu0 %5214
  %5216 = vrot.lane.b32.xlu0 %v4551, 9
  %v5217 = vpop.permute.xlu0 %5216
  %5218 = vrot.lane.b32.xlu0 %v4552, 9
  %v5219 = vpop.permute.xlu0 %5218
  %5220 = vrot.lane.b32.xlu0 %v4553, 9
  %v5221 = vpop.permute.xlu0 %5220
  %5222 = vrot.lane.b32.xlu0 %v4554, 9
  %v5223 = vpop.permute.xlu0 %5222
  %5224 = vrot.lane.b32.xlu0 %v4555, 9
  %v5225 = vpop.permute.xlu0 %5224
  %5226 = vrot.lane.b32.xlu0 %v4556, 9
  %v5227 = vpop.permute.xlu0 %5226
  %5228 = vrot.lane.b32.xlu0 %v4557, 9
  %v5229 = vpop.permute.xlu0 %5228
  %5230 = vrot.lane.b32.xlu0 %v4558, 9
  %v5231 = vpop.permute.xlu0 %5230
  %5232 = vrot.lane.b32.xlu0 %v4559, 9
  %v5233 = vpop.permute.xlu0 %5232
  %5234 = vrot.lane.b32.xlu0 %v4560, 9
  %v5235 = vpop.permute.xlu0 %5234
  %5236 = vrot.lane.b32.xlu0 %v4561, 9
  %v5237 = vpop.permute.xlu0 %5236
  %5238 = vrot.lane.b32.xlu0 %v4562, 9
  %v5239 = vpop.permute.xlu0 %5238
  %5240 = vrot.lane.b32.xlu0 %v4563, 9
  %v5241 = vpop.permute.xlu0 %5240
  %5242 = vrot.lane.b32.xlu0 %v4564, 9
  %v5243 = vpop.permute.xlu0 %5242
  %5244 = vrot.lane.b32.xlu0 %v4565, 9
  %v5245 = vpop.permute.xlu0 %5244
  %5246 = vrot.lane.b32.xlu0 %v4566, 9
  %v5247 = vpop.permute.xlu0 %5246
  %5248 = vrot.lane.b32.xlu0 %v4567, 9
  %v5249 = vpop.permute.xlu0 %5248
  %5250 = vrot.lane.b32.xlu0 %v4568, 9
  %v5251 = vpop.permute.xlu0 %5250
  %5252 = vrot.lane.b32.xlu0 %v4569, 9
  %v5253 = vpop.permute.xlu0 %5252
  %5254 = vrot.lane.b32.xlu0 %v4570, 9
  %v5255 = vpop.permute.xlu0 %5254
  %5256 = vrot.lane.b32.xlu0 %v4571, 9
  %v5257 = vpop.permute.xlu0 %5256
  %5258 = vrot.lane.b32.xlu0 %v4572, 9
  %v5259 = vpop.permute.xlu0 %5258
  %5260 = vrot.lane.b32.xlu0 %v4573, 9
  %v5261 = vpop.permute.xlu0 %5260
  %5262 = vrot.lane.b32.xlu0 %v4574, 9
  %v5263 = vpop.permute.xlu0 %5262
  %5264 = vrot.lane.b32.xlu0 %v4575, 9
  %v5265 = vpop.permute.xlu0 %5264
  %5266 = vrot.lane.b32.xlu0 %v4576, 9
  %v5267 = vpop.permute.xlu0 %5266
  %5268 = vrot.lane.b32.xlu0 %v4577, 9
  %v5269 = vpop.permute.xlu0 %5268
  %5270 = vrot.lane.b32.xlu0 %v4578, 9
  %v5271 = vpop.permute.xlu0 %5270
  %5272 = vrot.lane.b32.xlu0 %v4579, 9
  %v5273 = vpop.permute.xlu0 %5272
  %5274 = vrot.lane.b32.xlu0 %v4580, 9
  %v5275 = vpop.permute.xlu0 %5274
  %5276 = vrot.lane.b32.xlu0 %v4581, 9
  %v5277 = vpop.permute.xlu0 %5276
  %5278 = vrot.lane.b32.xlu0 %v4582, 9
  %v5279 = vpop.permute.xlu0 %5278
  %5280 = vrot.lane.b32.xlu0 %v4583, 9
  %v5281 = vpop.permute.xlu0 %5280
  %5282 = vrot.lane.b32.xlu0 %v4584, 9
  %v5283 = vpop.permute.xlu0 %5282
  %5284 = vrot.lane.b32.xlu0 %v4585, 9
  %v5285 = vpop.permute.xlu0 %5284
  %5286 = vrot.lane.b32.xlu0 %v4586, 9
  %v5287 = vpop.permute.xlu0 %5286
  %5288 = vrot.lane.b32.xlu0 %v4587, 9
  %v5289 = vpop.permute.xlu0 %5288
  %5290 = vrot.lane.b32.xlu0 %v4588, 9
  %v5291 = vpop.permute.xlu0 %5290
  %5292 = vrot.lane.b32.xlu0 %v4589, 9
  %v5293 = vpop.permute.xlu0 %5292
  %vm5358 = vcmask 23552
  %v5359 = vsel %vm5358, %v1100, %v4655
  %v5360 = vsel %vm5358, %v1101, %v4657
  %v5361 = vsel %vm5358, %v1102, %v4659
  %v5362 = vsel %vm5358, %v1103, %v4661
  %v5363 = vsel %vm5358, %v1104, %v4663
  %v5364 = vsel %vm5358, %v1105, %v4665
  %v5365 = vsel %vm5358, %v1106, %v4667
  %v5366 = vsel %vm5358, %v1107, %v4669
  %v5367 = vsel %vm5358, %v1108, %v4671
  %v5368 = vsel %vm5358, %v1109, %v4673
  %v5369 = vsel %vm5358, %v1110, %v4675
  %v5370 = vsel %vm5358, %v1111, %v4677
  %v5371 = vsel %vm5358, %v1112, %v4679
  %v5372 = vsel %vm5358, %v1113, %v4681
  %v5373 = vsel %vm5358, %v1114, %v4683
  %v5374 = vsel %vm5358, %v1115, %v4685
  %v5375 = vsel %vm5358, %v1116, %v4687
  %v5376 = vsel %vm5358, %v1117, %v4689
  %v5377 = vsel %vm5358, %v1118, %v4691
  %v5378 = vsel %vm5358, %v1119, %v4693
  %v5379 = vsel %vm5358, %v1120, %v4695
  %v5380 = vsel %vm5358, %v1121, %v4697
  %v5381 = vsel %vm5358, %v1122, %v4699
  %v5382 = vsel %vm5358, %v1123, %v4701
  %v5383 = vsel %vm5358, %v1124, %v4703
  %v5384 = vsel %vm5358, %v1125, %v4705
  %v5385 = vsel %vm5358, %v1126, %v4707
  %v5386 = vsel %vm5358, %v1127, %v4709
  %v5387 = vsel %vm5358, %v1128, %v4711
  %v5388 = vsel %vm5358, %v1129, %v4713
  %v5389 = vsel %vm5358, %v1130, %v4715
  %v5390 = vsel %vm5358, %v1131, %v4717
  %v5391 = vsel %vm5358, %v1132, %v4719
  %v5392 = vsel %vm5358, %v1133, %v4721
  %v5393 = vsel %vm5358, %v1134, %v4723
  %v5394 = vsel %vm5358, %v1135, %v4725
  %v5395 = vsel %vm5358, %v1136, %v4727
  %v5396 = vsel %vm5358, %v1137, %v4729
  %v5397 = vsel %vm5358, %v1138, %v4731
  %v5398 = vsel %vm5358, %v1139, %v4733
  %v5399 = vsel %vm5358, %v1140, %v4735
  %v5400 = vsel %vm5358, %v1141, %v4737
  %v5401 = vsel %vm5358, %v1142, %v4739
  %v5402 = vsel %vm5358, %v1143, %v4741
  %v5403 = vsel %vm5358, %v1144, %v4743
  %v5404 = vsel %vm5358, %v1145, %v4745
  %v5405 = vsel %vm5358, %v1146, %v4747
  %v5406 = vsel %vm5358, %v1147, %v4749
  %v5407 = vsel %vm5358, %v1148, %v4751
  %v5408 = vsel %vm5358, %v1149, %v4753
  %v5409 = vsel %vm5358, %v1150, %v4755
  %v5410 = vsel %vm5358, %v1151, %v4757
  %v5411 = vsel %vm5358, %v1152, %v4759
  %v5412 = vsel %vm5358, %v1153, %v4761
  %v5413 = vsel %vm5358, %v1154, %v4763
  %v5414 = vsel %vm5358, %v1155, %v4765
  %v5415 = vsel %vm5358, %v1156, %v4767
  %v5416 = vsel %vm5358, %v1157, %v4769
  %v5417 = vsel %vm5358, %v1158, %v4771
  %v5418 = vsel %vm5358, %v1159, %v4773
  %v5419 = vsel %vm5358, %v1160, %v4775
  %v5420 = vsel %vm5358, %v1161, %v4777
  %v5421 = vsel %vm5358, %v1162, %v4779
  %v5422 = vsel %vm5358, %v1163, %v4781
  %vm5423 = vcmask 48128
  %v5424 = vsel %vm5423, %v5359, %v4911
  %v5425 = vsel %vm5423, %v5360, %v4913
  %v5426 = vsel %vm5423, %v5361, %v4915
  %v5427 = vsel %vm5423, %v5362, %v4917
  %v5428 = vsel %vm5423, %v5363, %v4919
  %v5429 = vsel %vm5423, %v5364, %v4921
  %v5430 = vsel %vm5423, %v5365, %v4923
  %v5431 = vsel %vm5423, %v5366, %v4925
  %v5432 = vsel %vm5423, %v5367, %v4927
  %v5433 = vsel %vm5423, %v5368, %v4929
  %v5434 = vsel %vm5423, %v5369, %v4931
  %v5435 = vsel %vm5423, %v5370, %v4933
  %v5436 = vsel %vm5423, %v5371, %v4935
  %v5437 = vsel %vm5423, %v5372, %v4937
  %v5438 = vsel %vm5423, %v5373, %v4939
  %v5439 = vsel %vm5423, %v5374, %v4941
  %v5440 = vsel %vm5423, %v5375, %v4943
  %v5441 = vsel %vm5423, %v5376, %v4945
  %v5442 = vsel %vm5423, %v5377, %v4947
  %v5443 = vsel %vm5423, %v5378, %v4949
  %v5444 = vsel %vm5423, %v5379, %v4951
  %v5445 = vsel %vm5423, %v5380, %v4953
  %v5446 = vsel %vm5423, %v5381, %v4955
  %v5447 = vsel %vm5423, %v5382, %v4957
  %v5448 = vsel %vm5423, %v5383, %v4959
  %v5449 = vsel %vm5423, %v5384, %v4961
  %v5450 = vsel %vm5423, %v5385, %v4963
  %v5451 = vsel %vm5423, %v5386, %v4965
  %v5452 = vsel %vm5423, %v5387, %v4967
  %v5453 = vsel %vm5423, %v5388, %v4969
  %v5454 = vsel %vm5423, %v5389, %v4971
  %v5455 = vsel %vm5423, %v5390, %v4973
  %v5456 = vsel %vm5423, %v5391, %v4975
  %v5457 = vsel %vm5423, %v5392, %v4977
  %v5458 = vsel %vm5423, %v5393, %v4979
  %v5459 = vsel %vm5423, %v5394, %v4981
  %v5460 = vsel %vm5423, %v5395, %v4983
  %v5461 = vsel %vm5423, %v5396, %v4985
  %v5462 = vsel %vm5423, %v5397, %v4987
  %v5463 = vsel %vm5423, %v5398, %v4989
  %v5464 = vsel %vm5423, %v5399, %v4991
  %v5465 = vsel %vm5423, %v5400, %v4993
  %v5466 = vsel %vm5423, %v5401, %v4995
  %v5467 = vsel %vm5423, %v5402, %v4997
  %v5468 = vsel %vm5423, %v5403, %v4999
  %v5469 = vsel %vm5423, %v5404, %v5001
  %v5470 = vsel %vm5423, %v5405, %v5003
  %v5471 = vsel %vm5423, %v5406, %v5005
  %v5472 = vsel %vm5423, %v5407, %v5007
  %v5473 = vsel %vm5423, %v5408, %v5009
  %v5474 = vsel %vm5423, %v5409, %v5011
  %v5475 = vsel %vm5423, %v5410, %v5013
  %v5476 = vsel %vm5423, %v5411, %v5015
  %v5477 = vsel %vm5423, %v5412, %v5017
  %v5478 = vsel %vm5423, %v5413, %v5019
  %v5479 = vsel %vm5423, %v5414, %v5021
  %v5480 = vsel %vm5423, %v5415, %v5023
  %v5481 = vsel %vm5423, %v5416, %v5025
  %v5482 = vsel %vm5423, %v5417, %v5027
  %v5483 = vsel %vm5423, %v5418, %v5029
  %v5484 = vsel %vm5423, %v5419, %v5031
  %v5485 = vsel %vm5423, %v5420, %v5033
  %v5486 = vsel %vm5423, %v5421, %v5035
  %v5487 = vsel %vm5423, %v5422, %v5037
  %vm5488 = vcmask 72704
  %v5489 = vsel %vm5488, %v5424, %v5167
  %v5490 = vsel %vm5488, %v5425, %v5169
  %v5491 = vsel %vm5488, %v5426, %v5171
  %v5492 = vsel %vm5488, %v5427, %v5173
  %v5493 = vsel %vm5488, %v5428, %v5175
  %v5494 = vsel %vm5488, %v5429, %v5177
  %v5495 = vsel %vm5488, %v5430, %v5179
  %v5496 = vsel %vm5488, %v5431, %v5181
  %v5497 = vsel %vm5488, %v5432, %v5183
  %v5498 = vsel %vm5488, %v5433, %v5185
  %v5499 = vsel %vm5488, %v5434, %v5187
  %v5500 = vsel %vm5488, %v5435, %v5189
  %v5501 = vsel %vm5488, %v5436, %v5191
  %v5502 = vsel %vm5488, %v5437, %v5193
  %v5503 = vsel %vm5488, %v5438, %v5195
  %v5504 = vsel %vm5488, %v5439, %v5197
  %v5505 = vsel %vm5488, %v5440, %v5199
  %v5506 = vsel %vm5488, %v5441, %v5201
  %v5507 = vsel %vm5488, %v5442, %v5203
  %v5508 = vsel %vm5488, %v5443, %v5205
  %v5509 = vsel %vm5488, %v5444, %v5207
  %v5510 = vsel %vm5488, %v5445, %v5209
  %v5511 = vsel %vm5488, %v5446, %v5211
  %v5512 = vsel %vm5488, %v5447, %v5213
  %v5513 = vsel %vm5488, %v5448, %v5215
  %v5514 = vsel %vm5488, %v5449, %v5217
  %v5515 = vsel %vm5488, %v5450, %v5219
  %v5516 = vsel %vm5488, %v5451, %v5221
  %v5517 = vsel %vm5488, %v5452, %v5223
  %v5518 = vsel %vm5488, %v5453, %v5225
  %v5519 = vsel %vm5488, %v5454, %v5227
  %v5520 = vsel %vm5488, %v5455, %v5229
  %v5521 = vsel %vm5488, %v5456, %v5231
  %v5522 = vsel %vm5488, %v5457, %v5233
  %v5523 = vsel %vm5488, %v5458, %v5235
  %v5524 = vsel %vm5488, %v5459, %v5237
  %v5525 = vsel %vm5488, %v5460, %v5239
  %v5526 = vsel %vm5488, %v5461, %v5241
  %v5527 = vsel %vm5488, %v5462, %v5243
  %v5528 = vsel %vm5488, %v5463, %v5245
  %v5529 = vsel %vm5488, %v5464, %v5247
  %v5530 = vsel %vm5488, %v5465, %v5249
  %v5531 = vsel %vm5488, %v5466, %v5251
  %v5532 = vsel %vm5488, %v5467, %v5253
  %v5533 = vsel %vm5488, %v5468, %v5255
  %v5534 = vsel %vm5488, %v5469, %v5257
  %v5535 = vsel %vm5488, %v5470, %v5259
  %v5536 = vsel %vm5488, %v5471, %v5261
  %v5537 = vsel %vm5488, %v5472, %v5263
  %v5538 = vsel %vm5488, %v5473, %v5265
  %v5539 = vsel %vm5488, %v5474, %v5267
  %v5540 = vsel %vm5488, %v5475, %v5269
  %v5541 = vsel %vm5488, %v5476, %v5271
  %v5542 = vsel %vm5488, %v5477, %v5273
  %v5543 = vsel %vm5488, %v5478, %v5275
  %v5544 = vsel %vm5488, %v5479, %v5277
  %v5545 = vsel %vm5488, %v5480, %v5279
  %v5546 = vsel %vm5488, %v5481, %v5281
  %v5547 = vsel %vm5488, %v5482, %v5283
  %v5548 = vsel %vm5488, %v5483, %v5285
  %v5549 = vsel %vm5488, %v5484, %v5287
  %v5550 = vsel %vm5488, %v5485, %v5289
  %v5551 = vsel %vm5488, %v5486, %v5291
  %v5552 = vsel %vm5488, %v5487, %v5293
  %vm5553 = vcmask 97280
  %5554 = vst.msk [vmem:[%s5] sm:$0xff] %vm5553, %v5489
  %5555 = vst.msk [vmem:[%s5 + $0x8] sm:$0xff] %vm5553, %v5490
  %5556 = vst.msk [vmem:[%s5 + $0x10] sm:$0xff] %vm5553, %v5491
  %5557 = vst.msk [vmem:[%s5 + $0x18] sm:$0xff] %vm5553, %v5492
  %5558 = vst.msk [vmem:[%s5 + $0x20] sm:$0xff] %vm5553, %v5493
  %5559 = vst.msk [vmem:[%s5 + $0x28] sm:$0xff] %vm5553, %v5494
  %5560 = vst.msk [vmem:[%s5 + $0x30] sm:$0xff] %vm5553, %v5495
  %5561 = vst.msk [vmem:[%s5 + $0x38] sm:$0xff] %vm5553, %v5496
  %5562 = vst.msk [vmem:[%s5 + $0x40] sm:$0xff] %vm5553, %v5497
  %5563 = vst.msk [vmem:[%s5 + $0x48] sm:$0xff] %vm5553, %v5498
  %5564 = vst.msk [vmem:[%s5 + $0x50] sm:$0xff] %vm5553, %v5499
  %5565 = vst.msk [vmem:[%s5 + $0x58] sm:$0xff] %vm5553, %v5500
  %5566 = vst.msk [vmem:[%s5 + $0x60] sm:$0xff] %vm5553, %v5501
  %5567 = vst.msk [vmem:[%s5 + $0x68] sm:$0xff] %vm5553, %v5502
  %5568 = vst.msk [vmem:[%s5 + $0x70] sm:$0xff] %vm5553, %v5503
  %5569 = vst.msk [vmem:[%s5 + $0x78] sm:$0xff] %vm5553, %v5504
  %5570 = vst.msk [vmem:[%s5 + $0x80] sm:$0xff] %vm5553, %v5505
  %5571 = vst.msk [vmem:[%s5 + $0x88] sm:$0xff] %vm5553, %v5506
  %5572 = vst.msk [vmem:[%s5 + $0x90] sm:$0xff] %vm5553, %v5507
  %5573 = vst.msk [vmem:[%s5 + $0x98] sm:$0xff] %vm5553, %v5508
  %5574 = vst.msk [vmem:[%s5 + $0xa0] sm:$0xff] %vm5553, %v5509
  %5575 = vst.msk [vmem:[%s5 + $0xa8] sm:$0xff] %vm5553, %v5510
  %5576 = vst.msk [vmem:[%s5 + $0xb0] sm:$0xff] %vm5553, %v5511
  %5577 = vst.msk [vmem:[%s5 + $0xb8] sm:$0xff] %vm5553, %v5512
  %5578 = vst.msk [vmem:[%s5 + $0xc0] sm:$0xff] %vm5553, %v5513
  %5579 = vst.msk [vmem:[%s5 + $0xc8] sm:$0xff] %vm5553, %v5514
  %5580 = vst.msk [vmem:[%s5 + $0xd0] sm:$0xff] %vm5553, %v5515
  %5581 = vst.msk [vmem:[%s5 + $0xd8] sm:$0xff] %vm5553, %v5516
  %5582 = vst.msk [vmem:[%s5 + $0xe0] sm:$0xff] %vm5553, %v5517
  %5583 = vst.msk [vmem:[%s5 + $0xe8] sm:$0xff] %vm5553, %v5518
  %5584 = vst.msk [vmem:[%s5 + $0xf0] sm:$0xff] %vm5553, %v5519
  %5585 = vst.msk [vmem:[%s5 + $0xf8] sm:$0xff] %vm5553, %v5520
  %5586 = vst.msk [vmem:[%s5 + $0x100] sm:$0xff] %vm5553, %v5521
  %5587 = vst.msk [vmem:[%s5 + $0x108] sm:$0xff] %vm5553, %v5522
  %5588 = vst.msk [vmem:[%s5 + $0x110] sm:$0xff] %vm5553, %v5523
  %5589 = vst.msk [vmem:[%s5 + $0x118] sm:$0xff] %vm5553, %v5524
  %5590 = vst.msk [vmem:[%s5 + $0x120] sm:$0xff] %vm5553, %v5525
  %5591 = vst.msk [vmem:[%s5 + $0x128] sm:$0xff] %vm5553, %v5526
  %5592 = vst.msk [vmem:[%s5 + $0x130] sm:$0xff] %vm5553, %v5527
  %5593 = vst.msk [vmem:[%s5 + $0x138] sm:$0xff] %vm5553, %v5528
  %5594 = vst.msk [vmem:[%s5 + $0x140] sm:$0xff] %vm5553, %v5529
  %5595 = vst.msk [vmem:[%s5 + $0x148] sm:$0xff] %vm5553, %v5530
  %5596 = vst.msk [vmem:[%s5 + $0x150] sm:$0xff] %vm5553, %v5531
  %5597 = vst.msk [vmem:[%s5 + $0x158] sm:$0xff] %vm5553, %v5532
  %5598 = vst.msk [vmem:[%s5 + $0x160] sm:$0xff] %vm5553, %v5533
  %5599 = vst.msk [vmem:[%s5 + $0x168] sm:$0xff] %vm5553, %v5534
  %5600 = vst.msk [vmem:[%s5 + $0x170] sm:$0xff] %vm5553, %v5535
  %5601 = vst.msk [vmem:[%s5 + $0x178] sm:$0xff] %vm5553, %v5536
  %5602 = vst.msk [vmem:[%s5 + $0x180] sm:$0xff] %vm5553, %v5537
  %5603 = vst.msk [vmem:[%s5 + $0x188] sm:$0xff] %vm5553, %v5538
  %5604 = vst.msk [vmem:[%s5 + $0x190] sm:$0xff] %vm5553, %v5539
  %5605 = vst.msk [vmem:[%s5 + $0x198] sm:$0xff] %vm5553, %v5540
  %5606 = vst.msk [vmem:[%s5 + $0x1a0] sm:$0xff] %vm5553, %v5541
  %5607 = vst.msk [vmem:[%s5 + $0x1a8] sm:$0xff] %vm5553, %v5542
  %5608 = vst.msk [vmem:[%s5 + $0x1b0] sm:$0xff] %vm5553, %v5543
  %5609 = vst.msk [vmem:[%s5 + $0x1b8] sm:$0xff] %vm5553, %v5544
  %5610 = vst.msk [vmem:[%s5 + $0x1c0] sm:$0xff] %vm5553, %v5545
  %5611 = vst.msk [vmem:[%s5 + $0x1c8] sm:$0xff] %vm5553, %v5546
  %5612 = vst.msk [vmem:[%s5 + $0x1d0] sm:$0xff] %vm5553, %v5547
  %5613 = vst.msk [vmem:[%s5 + $0x1d8] sm:$0xff] %vm5553, %v5548
  %5614 = vst.msk [vmem:[%s5 + $0x1e0] sm:$0xff] %vm5553, %v5549
  %5615 = vst.msk [vmem:[%s5 + $0x1e8] sm:$0xff] %vm5553, %v5550
  %5616 = vst.msk [vmem:[%s5 + $0x1f0] sm:$0xff] %vm5553, %v5551
  %5617 = vst.msk [vmem:[%s5 + $0x1f8] sm:$0xff] %vm5553, %v5552
  // Predicated region
  $region22: #{unet_forward.15} parent=0 // pred_check
    _
  $region23: #{unet_forward.15} parent=0 // pred_check_branch
    %5619 = sbr.rel (0) target = $region25
  $region24: #{unet_forward.15} parent=0 // pred_region
    _
  $region25: #{unet_forward.15} parent=0 // pred_fallthru
    _
  // Predicated region
  $region26: #{unet_forward.15} parent=0 // pred_check
    _
  $region27: #{unet_forward.15} parent=0 // pred_check_branch
    %5621 = sbr.rel (0) target = $region29
  $region28: #{unet_forward.15} parent=0 // pred_region
    _
  $region29: #{unet_forward.15} parent=0 // pred_fallthru
    _

</llo_original>
